<compile_context>
chip_gen: v5e
topology: v5e:2x2
jax: 0.10.0
libtpu: 0.0.40
codegen_flags: <defaults>
</compile_context>

<pallas_src>
import functools

import numpy as np

import jax
import jax.numpy as jnp
from jax.experimental import pallas as pl
from jax.experimental.pallas import tpu as pltpu

NUM_FEATURES = 16
CONV_CHANNELS = [32, 32, 32, 1]
KERNEL_SIZES = [3, 3, 3, 3]

# TODO(synk): RNNLayer / ConvNN sources were not provided; assumed a
# single-layer bidirectional LSTM (hidden=num_features) and Conv2d(k, pad=k//2)
# + ReLU per layer (no ReLU after the final 1-channel layer).  Dropout=0 and
# eval-mode BatchNorm at default running stats are identity and omitted.
# Note: the reference forward explicitly sums the two LSTM directions
# ([..., :F] + [..., F:]), which is exactly what the kernel emits.


# --------------------------- bidirectional LSTM -----------------------------

def bilstm_kernel(x_ref, wih_ref, whh_ref, b_ref, out_ref, gx_s, hf_s, hb_s):
    """Merged-direction bidirectional LSTM.

    x_ref:   (B, T, F+1)   inputs (batch-major, as produced by the wrapper).
    wih_ref: (F+1, 8H)     input->gate weights, both directions fused; columns
                           are 4 gate blocks of width 2H, each [fwd H | bwd H].
    whh_ref: (2H, 8H)      hidden->gate weights, block structured so h_fwd only
                           feeds forward columns and h_bwd only backward ones.
    b_ref:   (1, 8H)       fused gate bias.
    out_ref: (B, T, H)     h_fwd(t) + h_bwd(t), already in the conv layout.
    """
    B, T, _ = x_ref.shape
    H = out_ref.shape[2]
    W = 2 * H                    # per-gate block width (fwd | bwd)
    G = 8 * H                    # fused gate width (=128 for H=16)

    wih = wih_ref[...]
    whh = whh_ref[...]
    bias = b_ref[...]

    # Hoisted input projection: one lane-dense (T, F+1) @ (F+1, 8H) matmul per
    # batch row, done once, outside the serial recurrence.
    for b in range(B):
        gx_s[:, b, :] = (
            jnp.dot(x_ref[b], wih, preferred_element_type=jnp.float32) + bias)

    # Column belongs to the forward direction iff (lane mod 2H) < H.
    lane = jax.lax.broadcasted_iota(jnp.int32, (1, G), 1)
    fwd_mask = (lane % W) < H

    h0 = jnp.zeros((B, W), jnp.float32)      # [h_fwd | h_bwd]
    c0 = jnp.zeros((B, W), jnp.float32)      # [c_fwd | c_bwd]

    def step(s, carry):
        h, c = carry
        # Forward direction consumes time s, backward consumes time T-1-s.
        gx = jnp.where(fwd_mask, gx_s[s], gx_s[T - 1 - s])
        gates = gx + jnp.dot(h, whh, preferred_element_type=jnp.float32)
        i = jax.nn.sigmoid(gates[:, 0 * W:1 * W])
        f = jax.nn.sigmoid(gates[:, 1 * W:2 * W])
        g = jnp.tanh(gates[:, 2 * W:3 * W])
        o = jax.nn.sigmoid(gates[:, 3 * W:4 * W])
        c = f * c + i * g
        h = o * jnp.tanh(c)
        hf_s[s] = h[:, :H]                   # forward hidden at time s
        hb_s[T - 1 - s] = h[:, H:]           # backward hidden at time T-1-s
        return (h, c)

    jax.lax.fori_loop(0, T, step, (h0, c0))

    # Single bulk combine + store, emitted directly in (B, T, H) conv layout.
    for b in range(B):
        out_ref[b] = hf_s[:, b, :] + hb_s[:, b, :]


def bilstm(x_btf, params):
    B, T, _ = x_btf.shape
    H = params["whh_cat"].shape[0] // 2
    vmem = pl.BlockSpec(memory_space=pltpu.MemorySpace.VMEM)
    return pl.pallas_call(
        bilstm_kernel,
        out_shape=jax.ShapeDtypeStruct((B, T, H), jnp.float32),
        in_specs=[vmem, vmem, vmem, vmem],
        out_specs=vmem,
        scratch_shapes=[pltpu.VMEM((T, B, 8 * H), jnp.float32),
                        pltpu.VMEM((T, B, H), jnp.float32),
                        pltpu.VMEM((T, B, H), jnp.float32)],
    )(x_btf, params["wih_cat"], params["whh_cat"], params["b_cat"])


# ------------------------------ fused conv stack ----------------------------

def conv_stack_kernel(y_ref, *rest, num_layers):
    """All conv layers for one batch element (grid is over batch).

    y_ref: (T, F) single-channel input (LSTM output for this batch element).
    rest:  band_0, bias_0, ..., band_{L-1}, bias_{L-1}, out_ref, x0_s, ping, pong
           band_l : (k, F*Cin_l, F*Cout_l)  banded weights (feature-axis tap
                    shift + zero padding folded into the matrix).
           bias_l : (1, F*Cout_l)           per-channel bias tiled over F.
    out_ref: (T, F) -- final 1-channel layer, stored without a channel axis.
    """
    wrefs = rest[:2 * num_layers]
    out_ref = rest[2 * num_layers]
    x0_s, ping, pong = rest[2 * num_layers + 1:]

    T, _ = y_ref.shape

    # Time-axis "same" padding lives in the scratch buffers: rows 0 and T+1
    # stay zero, rows 1..T hold the activations.
    x0_s[...] = jnp.zeros_like(x0_s)
    ping[...] = jnp.zeros_like(ping)
    pong[...] = jnp.zeros_like(pong)
    x0_s[1:T + 1, :] = y_ref[...]

    def layer(src, band_ref, bias_ref, relu):
        k = band_ref.shape[0]
        acc = jnp.dot(src[0:T, :], band_ref[0],
                      preferred_element_type=jnp.float32)
        for dt in range(1, k):
            acc = acc + jnp.dot(src[dt:dt + T, :], band_ref[dt],
                                preferred_element_type=jnp.float32)
        acc = acc + bias_ref[...]
        return jnp.maximum(acc, 0.0) if relu else acc

    bufs = (ping, pong)
    cur = x0_s
    for l in range(num_layers):
        band_ref, bias_ref = wrefs[2 * l], wrefs[2 * l + 1]
        last = l == num_layers - 1
        acc = layer(cur, band_ref, bias_ref, relu=not last)
        if last:
            out_ref[...] = acc               # (T, F), lane-dense, no C=1 axis
        else:
            dst = bufs[l % 2]
            dst[1:T + 1, :] = acc
            cur = dst


def conv_stack(y_btf, params):
    B, T, F = y_btf.shape
    layers = params["conv_bands"]            # [(band, bias), ...]
    C = layers[0][0].shape[2] // F           # intermediate channel count (32)
    Tp = T + 2

    in_specs = [pl.BlockSpec((None, T, F), lambda b: (b, 0, 0))]
    args = [y_btf]
    for band, bias in layers:
        in_specs.append(pl.BlockSpec(band.shape, lambda b: (0, 0, 0)))
        in_specs.append(pl.BlockSpec(bias.shape, lambda b: (0, 0)))
        args.append(band)
        args.append(bias)

    grid_spec = pltpu.PrefetchScalarGridSpec(
        num_scalar_prefetch=0,
        grid=(B,),
        in_specs=in_specs,
        out_specs=pl.BlockSpec((None, T, F), lambda b: (b, 0, 0)),
        scratch_shapes=[pltpu.VMEM((Tp, F), jnp.float32),
                        pltpu.VMEM((Tp, F * C), jnp.float32),
                        pltpu.VMEM((Tp, F * C), jnp.float32)],
    )
    # TODO(synk): for production-size T, add a T-tile grid axis (with a halo of
    # k//2 rows) and shrink tiles ~2x on v7x (64 MiB VMEM).
    return pl.pallas_call(
        functools.partial(conv_stack_kernel, num_layers=len(layers)),
        out_shape=jax.ShapeDtypeStruct((B, T, F), jnp.float32),
        grid_spec=grid_spec,
        compiler_params=pltpu.CompilerParams(
            dimension_semantics=("parallel",)),   # v7x: batch across both TCs
    )(*args)


# ------------------------- repeat_with_tatums glue ---------------------------

def repeat_with_tatums(features, tatum_frames, total_frames):
    """features: (B, N, C); tatum_frames: (B, N+1) with tatum_frames[:, 0] == 0.
    Returns (B, total_frames, C); frames past tatum_frames[i, -1] are zero
    padded (matches repeat_interleave + pad_sequence)."""
    t_idx = jnp.arange(total_frames, dtype=jnp.int32)

    def per_batch(feat_i, tf_i):
        idx = jnp.searchsorted(tf_i[1:], t_idx, side="right")
        idx = jnp.clip(idx, 0, feat_i.shape[0] - 1)
        rep = feat_i[idx]                                  # (T, C)
        valid = (t_idx < tf_i[-1])[:, None]
        return jnp.where(valid, rep, jnp.zeros_like(rep))

    return jax.vmap(per_batch)(features, tatum_frames)


# ------------------------------ parameters -----------------------------------

def _combine_lstm_weights(wih_f, whh_f, b_f, wih_b, whh_b, b_b, H):
    """Pack both LSTM directions into one fused-gate weight set.

    Fused gate layout (width 8H): 4 gate blocks [i | f | g | o], each of width
    2H split as [forward H | backward H].  whh is block-diagonal per direction
    so the two recurrences stay independent inside a single matmul."""
    in_dim = wih_f.shape[0]
    wih = jnp.zeros((in_dim, 8 * H), jnp.float32)
    whh = jnp.zeros((2 * H, 8 * H), jnp.float32)
    b = jnp.zeros((1, 8 * H), jnp.float32)
    for g in range(4):
        src = slice(g * H, (g + 1) * H)
        dst_f = slice(g * 2 * H, g * 2 * H + H)
        dst_b = slice(g * 2 * H + H, (g + 1) * 2 * H)
        wih = wih.at[:, dst_f].set(wih_f[:, src])
        wih = wih.at[:, dst_b].set(wih_b[:, src])
        whh = whh.at[:H, dst_f].set(whh_f[:, src])
        whh = whh.at[H:, dst_b].set(whh_b[:, src])
        b = b.at[:, dst_f].set(b_f[:, src])
        b = b.at[:, dst_b].set(b_b[:, src])
    return wih, whh, b


def _make_conv_band(w, b, num_feat):
    """Fold the feature-axis tap shift + zero padding of a (k,k,Cin,Cout) conv
    into banded matrices: band[dt][fi*Cin+ci, fo*Cout+co] = w[dt, fi-fo+pad,
    ci, co] where valid, 0 elsewhere.  Bias is tiled over the feature axis."""
    k, _, cin, cout = w.shape
    pad = k // 2
    sel = np.zeros((k, num_feat, num_feat), np.float32)
    for df in range(k):
        for fo in range(num_feat):
            fi = fo + df - pad
            if 0 <= fi < num_feat:
                sel[df, fi, fo] = 1.0
    band = jnp.einsum("dxy,tdio->txiyo", jnp.asarray(sel), w)
    band = band.reshape(k, num_feat * cin, num_feat * cout)
    bias = jnp.tile(b, num_feat).reshape(1, num_feat * cout)
    return band, bias


def init_params(key, num_features, conv_channels, kernel_sizes):
    if conv_channels[-1] != 1:
        raise ValueError("the output must be 1 channel")
    H = num_features
    in_dim = num_features + 1
    keys = jax.random.split(key, 6 + 2 * len(conv_channels))

    def u(kk, shape, scale):
        return jax.random.uniform(kk, shape, jnp.float32, -scale, scale)

    k_lstm = 1.0 / float(H) ** 0.5
    wih_f = u(keys[0], (in_dim, 4 * H), k_lstm)
    whh_f = u(keys[1], (H, 4 * H), k_lstm)
    b_f = u(keys[2], (1, 4 * H), k_lstm)
    wih_b = u(keys[3], (in_dim, 4 * H), k_lstm)
    whh_b = u(keys[4], (H, 4 * H), k_lstm)
    b_b = u(keys[5], (1, 4 * H), k_lstm)
    wih_cat, whh_cat, b_cat = _combine_lstm_weights(
        wih_f, whh_f, b_f, wih_b, whh_b, b_b, H)

    conv_bands = []
    cin = 1
    ki = 6
    for cout, ks in zip(conv_channels, kernel_sizes):
        k_conv = 1.0 / float(cin * ks * ks) ** 0.5
        w = u(keys[ki], (ks, ks, cin, cout), k_conv); ki += 1
        b = u(keys[ki], (cout,), k_conv); ki += 1
        conv_bands.append(_make_conv_band(w, b, num_features))
        cin = cout

    return {"wih_cat": wih_cat, "whh_cat": whh_cat, "b_cat": b_cat,
            "conv_bands": conv_bands}


# ------------------------------- forward -------------------------------------

def lstmcnn_forward(params, pitch_rendered, onset, tatum_frames, total_frames):
    pr = repeat_with_tatums(pitch_rendered, tatum_frames, total_frames)     # (B,T,F)
    on = repeat_with_tatums(onset[:, :, None], tatum_frames, total_frames)  # (B,T,1)
    x = jnp.concatenate([pr, on], axis=-1).astype(jnp.float32)              # (B,T,F+1)

    h_sum = bilstm(x, params)          # (B, T, F) = h_fwd(t) + h_bwd(t)
    return conv_stack(h_sum, params)   # (B, T, F)


if __name__ == "__main__":
    B, N_TATUMS, F = 2, 6, NUM_FEATURES
    key = jax.random.PRNGKey(0)
    k1, k2, k3 = jax.random.split(key, 3)

    pitch_rendered = jax.random.normal(k1, (B, N_TATUMS, F), jnp.float32)
    onset = jax.random.uniform(k2, (B, N_TATUMS), dtype=jnp.float32)
    tatum_frames = jnp.array([[0, 2, 4, 7, 9, 12, 14],
                              [0, 1, 4, 6, 8, 10, 12]], dtype=jnp.int32)
    total_frames = int(tatum_frames[:, -1].max())                           # 14

    params = init_params(k3, F, CONV_CHANNELS, KERNEL_SIZES)

    fwd = jax.jit(lstmcnn_forward, static_argnums=(4,))
    out = fwd(params, pitch_rendered, onset, tatum_frames, total_frames)
    out = jax.block_until_ready(out)
    assert out.shape == (B, total_frames, F), out.shape
    assert bool(jnp.all(jnp.isfinite(out)))
    print("KERNEL_OK")
</pallas_src>

<mosaic_0001>
module attributes {stable_mosaic.version = 11 : i64} {
  func.func @bilstm_kernel(%arg0: memref<2x14x17xf32, #tpu.memory_space<vmem>>, %arg1: memref<17x128xf32, #tpu.memory_space<vmem>>, %arg2: memref<32x128xf32, #tpu.memory_space<vmem>>, %arg3: memref<1x128xf32, #tpu.memory_space<vmem>>, %arg4: memref<2x14x16xf32, #tpu.memory_space<vmem>>, %arg5: memref<14x2x128xf32, #tpu.memory_space<vmem>>, %arg6: memref<14x2x16xf32, #tpu.memory_space<vmem>>, %arg7: memref<14x2x16xf32, #tpu.memory_space<vmem>>) attributes {dimension_semantics = [], scalar_prefetch = 0 : i64, scratch_operands = 3 : i64, tpu.core_type = #tpu.core_type<tc>} {
    %c0 = arith.constant 0 : index
    %c0_0 = arith.constant 0 : index
    %0 = vector.load %arg1[%c0, %c0_0] : memref<17x128xf32, #tpu.memory_space<vmem>>, vector<17x128xf32>
    %c0_1 = arith.constant 0 : index
    %c0_2 = arith.constant 0 : index
    %1 = vector.load %arg2[%c0_1, %c0_2] : memref<32x128xf32, #tpu.memory_space<vmem>>, vector<32x128xf32>
    %c0_3 = arith.constant 0 : index
    %c0_4 = arith.constant 0 : index
    %2 = vector.load %arg3[%c0_3, %c0_4] : memref<1x128xf32, #tpu.memory_space<vmem>>, vector<1x128xf32>
    %c0_5 = arith.constant 0 : index
    %c0_6 = arith.constant 0 : index
    %c0_7 = arith.constant 0 : index
    %3 = vector.load %arg0[%c0_5, %c0_6, %c0_7] : memref<2x14x17xf32, #tpu.memory_space<vmem>>, vector<1x14x17xf32>
    %4 = vector.shape_cast %3 : vector<1x14x17xf32> to vector<14x17xf32>
    %cst = arith.constant dense<0.000000e+00> : vector<14x128xf32>
    %5 = tpu.matmul %4, %0, %cst {dimension_numbers = #tpu.dot_dimension_numbers<[1], [0], [0], [1], [0, 0, 1, 1], [], []>} : vector<14x17xf32>, vector<17x128xf32>, vector<14x128xf32> -> vector<14x128xf32>
    %6 = vector.broadcast %2 : vector<1x128xf32> to vector<14x128xf32>
    %7 = arith.addf %5, %6 : vector<14x128xf32>
    %c0_8 = arith.constant 0 : index
    %c0_9 = arith.constant 0 : index
    %c0_10 = arith.constant 0 : index
    %8 = vector.load %arg5[%c0_8, %c0_9, %c0_10] : memref<14x2x128xf32, #tpu.memory_space<vmem>>, vector<14x1x128xf32>
    %9 = vector.shape_cast %8 : vector<14x1x128xf32> to vector<14x128xf32>
    %10 = vector.shape_cast %7 : vector<14x128xf32> to vector<14x1x128xf32>
    tpu.vector_store %arg5[%c0_8, %c0_9, %c0_10], %10 {strides = array<i32>} : memref<14x2x128xf32, #tpu.memory_space<vmem>>, vector<14x1x128xf32>,
    %c1 = arith.constant 1 : index
    %c0_11 = arith.constant 0 : index
    %c0_12 = arith.constant 0 : index
    %11 = vector.load %arg0[%c1, %c0_11, %c0_12] : memref<2x14x17xf32, #tpu.memory_space<vmem>>, vector<1x14x17xf32>
    %12 = vector.shape_cast %11 : vector<1x14x17xf32> to vector<14x17xf32>
    %cst_13 = arith.constant dense<0.000000e+00> : vector<14x128xf32>
    %13 = tpu.matmul %12, %0, %cst_13 {dimension_numbers = #tpu.dot_dimension_numbers<[1], [0], [0], [1], [0, 0, 1, 1], [], []>} : vector<14x17xf32>, vector<17x128xf32>, vector<14x128xf32> -> vector<14x128xf32>
    %14 = vector.broadcast %2 : vector<1x128xf32> to vector<14x128xf32>
    %15 = arith.addf %13, %14 : vector<14x128xf32>
    %c0_14 = arith.constant 0 : index
    %c1_15 = arith.constant 1 : index
    %c0_16 = arith.constant 0 : index
    %16 = vector.load %arg5[%c0_14, %c1_15, %c0_16] : memref<14x2x128xf32, #tpu.memory_space<vmem>>, vector<14x1x128xf32>
    %17 = vector.shape_cast %16 : vector<14x1x128xf32> to vector<14x128xf32>
    %18 = vector.shape_cast %15 : vector<14x128xf32> to vector<14x1x128xf32>
    tpu.vector_store %arg5[%c0_14, %c1_15, %c0_16], %18 {strides = array<i32>} : memref<14x2x128xf32, #tpu.memory_space<vmem>>, vector<14x1x128xf32>,
    %19 = tpu.iota {dimensions = array<i32: 1>} : vector<1x128xi32>
    %c32_i32 = arith.constant 32 : i32
    %c0_i32 = arith.constant 0 : i32
    %20 = arith.cmpi eq, %c32_i32, %c0_i32 : i32
    %c1_i32 = arith.constant 1 : i32
    %21 = arith.select %20, %c1_i32, %c32_i32 : i32
    %22 = vector.broadcast %21 : i32 to vector<1x128xi32>
    %23 = arith.remsi %19, %22 : vector<1x128xi32>
    %c0_i32_17 = arith.constant 0 : i32
    %24 = vector.broadcast %c0_i32_17 : i32 to vector<1x128xi32>
    %25 = arith.cmpi ne, %23, %24 : vector<1x128xi32>
    %c0_i32_18 = arith.constant 0 : i32
    %26 = vector.broadcast %c0_i32_18 : i32 to vector<1x128xi32>
    %27 = arith.cmpi slt, %23, %26 : vector<1x128xi32>
    %c0_i32_19 = arith.constant 0 : i32
    %28 = arith.cmpi slt, %21, %c0_i32_19 : i32
    %29 = vector.broadcast %28 : i1 to vector<1x128xi1>
    %30 = vector.broadcast %29 : vector<1x128xi1> to vector<1x128xi1>
    %31 = arith.xori %27, %30 : vector<1x128xi1>
    %32 = arith.andi %31, %25 : vector<1x128xi1>
    %33 = vector.broadcast %21 : i32 to vector<1x128xi32>
    %34 = arith.addi %23, %33 : vector<1x128xi32>
    %35 = arith.select %32, %34, %23 : vector<1x128xi1>, vector<1x128xi32>
    %c16_i32 = arith.constant 16 : i32
    %36 = vector.broadcast %c16_i32 : i32 to vector<1x128xi32>
    %37 = arith.cmpi slt, %35, %36 : vector<1x128xi32>
    %cst_20 = arith.constant 0.000000e+00 : f32
    %38 = vector.broadcast %cst_20 : f32 to vector<2x32xf32>
    %cst_21 = arith.constant 0.000000e+00 : f32
    %39 = vector.broadcast %cst_21 : f32 to vector<2x32xf32>
    %c0_i32_22 = arith.constant 0 : i32
    %c14_i32 = arith.constant 14 : i32
    %40 = arith.addi %c0_i32_22, %c14_i32 : i32
    %c1_i32_23 = arith.constant 1 : i32
    %41:2 = scf.for %arg8 = %c0_i32_22 to %40 step %c1_i32_23 iter_args(%arg9 = %38, %arg10 = %39) -> (vector<2x32xf32>, vector<2x32xf32>)  : i32 {
      %58 = arith.index_cast %arg8 : i32 to index
      %c0_43 = arith.constant 0 : index
      %c0_44 = arith.constant 0 : index
      %59 = vector.load %arg5[%58, %c0_43, %c0_44] : memref<14x2x128xf32, #tpu.memory_space<vmem>>, vector<1x2x128xf32>
      %60 = vector.shape_cast %59 : vector<1x2x128xf32> to vector<2x128xf32>
      %c13_i32 = arith.constant 13 : i32
      %61 = arith.subi %c13_i32, %arg8 : i32
      %62 = arith.index_cast %61 : i32 to index
      %c0_45 = arith.constant 0 : index
      %c0_46 = arith.constant 0 : index
      %63 = vector.load %arg5[%62, %c0_45, %c0_46] : memref<14x2x128xf32, #tpu.memory_space<vmem>>, vector<1x2x128xf32>
      %64 = vector.shape_cast %63 : vector<1x2x128xf32> to vector<2x128xf32>
      %65 = vector.shape_cast %37 : vector<1x128xi1> to vector<1x128xi1>
      %66 = vector.broadcast %65 : vector<1x128xi1> to vector<2x128xi1>
      %67 = arith.select %66, %60, %64 : vector<2x128xi1>, vector<2x128xf32>
      %cst_47 = arith.constant dense<0.000000e+00> : vector<2x128xf32>
      %68 = tpu.matmul %arg9, %1, %cst_47 {dimension_numbers = #tpu.dot_dimension_numbers<[1], [0], [0], [1], [0, 0, 1, 1], [], []>} : vector<2x32xf32>, vector<32x128xf32>, vector<2x128xf32> -> vector<2x128xf32>
      %69 = arith.addf %67, %68 : vector<2x128xf32>
      %70 = vector.extract_strided_slice %69 {offsets = [0, 0], sizes = [2, 32], strides = [1, 1]} : vector<2x128xf32> to vector<2x32xf32>
      %71 = arith.negf %70 : vector<2x32xf32>
      %72 = math.exp %71 : vector<2x32xf32>
      %cst_48 = arith.constant 1.000000e+00 : f32
      %73 = vector.broadcast %cst_48 : f32 to vector<2x32xf32>
      %74 = arith.addf %73, %72 : vector<2x32xf32>
      %75 = arith.divf %73, %74 : vector<2x32xf32>
      %76 = vector.extract_strided_slice %69 {offsets = [0, 32], sizes = [2, 32], strides = [1, 1]} : vector<2x128xf32> to vector<2x32xf32>
      %77 = arith.negf %76 : vector<2x32xf32>
      %78 = math.exp %77 : vector<2x32xf32>
      %cst_49 = arith.constant 1.000000e+00 : f32
      %79 = vector.broadcast %cst_49 : f32 to vector<2x32xf32>
      %80 = arith.addf %79, %78 : vector<2x32xf32>
      %81 = arith.divf %79, %80 : vector<2x32xf32>
      %82 = vector.extract_strided_slice %69 {offsets = [0, 64], sizes = [2, 32], strides = [1, 1]} : vector<2x128xf32> to vector<2x32xf32>
      %83 = math.tanh %82 : vector<2x32xf32>
      %84 = vector.extract_strided_slice %69 {offsets = [0, 96], sizes = [2, 32], strides = [1, 1]} : vector<2x128xf32> to vector<2x32xf32>
      %85 = arith.negf %84 : vector<2x32xf32>
      %86 = math.exp %85 : vector<2x32xf32>
      %cst_50 = arith.constant 1.000000e+00 : f32
      %87 = vector.broadcast %cst_50 : f32 to vector<2x32xf32>
      %88 = arith.addf %87, %86 : vector<2x32xf32>
      %89 = arith.divf %87, %88 : vector<2x32xf32>
      %90 = arith.mulf %81, %arg10 : vector<2x32xf32>
      %91 = arith.mulf %75, %83 : vector<2x32xf32>
      %92 = arith.addf %90, %91 : vector<2x32xf32>
      %93 = math.tanh %92 : vector<2x32xf32>
      %94 = arith.mulf %89, %93 : vector<2x32xf32>
      %95 = vector.extract_strided_slice %94 {offsets = [0, 0], sizes = [2, 16], strides = [1, 1]} : vector<2x32xf32> to vector<2x16xf32>
      %96 = arith.index_cast %arg8 : i32 to index
      %c0_51 = arith.constant 0 : index
      %c0_52 = arith.constant 0 : index
      %97 = vector.load %arg6[%96, %c0_51, %c0_52] : memref<14x2x16xf32, #tpu.memory_space<vmem>>, vector<1x2x16xf32>
      %98 = vector.shape_cast %97 : vector<1x2x16xf32> to vector<2x16xf32>
      %99 = vector.shape_cast %95 : vector<2x16xf32> to vector<1x2x16xf32>
      tpu.vector_store %arg6[%96, %c0_51, %c0_52], %99 {strides = array<i32>} : memref<14x2x16xf32, #tpu.memory_space<vmem>>, vector<1x2x16xf32>,
      %100 = vector.extract_strided_slice %94 {offsets = [0, 16], sizes = [2, 16], strides = [1, 1]} : vector<2x32xf32> to vector<2x16xf32>
      %c13_i32_53 = arith.constant 13 : i32
      %101 = arith.subi %c13_i32_53, %arg8 : i32
      %102 = arith.index_cast %101 : i32 to index
      %c0_54 = arith.constant 0 : index
      %c0_55 = arith.constant 0 : index
      %103 = vector.load %arg7[%102, %c0_54, %c0_55] : memref<14x2x16xf32, #tpu.memory_space<vmem>>, vector<1x2x16xf32>
      %104 = vector.shape_cast %103 : vector<1x2x16xf32> to vector<2x16xf32>
      %105 = vector.shape_cast %100 : vector<2x16xf32> to vector<1x2x16xf32>
      tpu.vector_store %arg7[%102, %c0_54, %c0_55], %105 {strides = array<i32>} : memref<14x2x16xf32, #tpu.memory_space<vmem>>, vector<1x2x16xf32>,
      scf.yield %94, %92 : vector<2x32xf32>, vector<2x32xf32>
    }
    %c14_i32_24 = arith.constant 14 : i32
    %c0_25 = arith.constant 0 : index
    %c0_26 = arith.constant 0 : index
    %c0_27 = arith.constant 0 : index
    %42 = vector.load %arg6[%c0_25, %c0_26, %c0_27] : memref<14x2x16xf32, #tpu.memory_space<vmem>>, vector<14x1x16xf32>
    %43 = vector.shape_cast %42 : vector<14x1x16xf32> to vector<14x16xf32>
    %c0_28 = arith.constant 0 : index
    %c0_29 = arith.constant 0 : index
    %c0_30 = arith.constant 0 : index
    %44 = vector.load %arg7[%c0_28, %c0_29, %c0_30] : memref<14x2x16xf32, #tpu.memory_space<vmem>>, vector<14x1x16xf32>
    %45 = vector.shape_cast %44 : vector<14x1x16xf32> to vector<14x16xf32>
    %46 = arith.addf %43, %45 : vector<14x16xf32>
    %c0_31 = arith.constant 0 : index
    %c0_32 = arith.constant 0 : index
    %c0_33 = arith.constant 0 : index
    %47 = vector.load %arg4[%c0_31, %c0_32, %c0_33] : memref<2x14x16xf32, #tpu.memory_space<vmem>>, vector<1x14x16xf32>
    %48 = vector.shape_cast %47 : vector<1x14x16xf32> to vector<14x16xf32>
    %49 = vector.shape_cast %46 : vector<14x16xf32> to vector<1x14x16xf32>
    tpu.vector_store %arg4[%c0_31, %c0_32, %c0_33], %49 {strides = array<i32>} : memref<2x14x16xf32, #tpu.memory_space<vmem>>, vector<1x14x16xf32>,
    %c0_34 = arith.constant 0 : index
    %c1_35 = arith.constant 1 : index
    %c0_36 = arith.constant 0 : index
    %50 = vector.load %arg6[%c0_34, %c1_35, %c0_36] : memref<14x2x16xf32, #tpu.memory_space<vmem>>, vector<14x1x16xf32>
    %51 = vector.shape_cast %50 : vector<14x1x16xf32> to vector<14x16xf32>
    %c0_37 = arith.constant 0 : index
    %c1_38 = arith.constant 1 : index
    %c0_39 = arith.constant 0 : index
    %52 = vector.load %arg7[%c0_37, %c1_38, %c0_39] : memref<14x2x16xf32, #tpu.memory_space<vmem>>, vector<14x1x16xf32>
    %53 = vector.shape_cast %52 : vector<14x1x16xf32> to vector<14x16xf32>
    %54 = arith.addf %51, %53 : vector<14x16xf32>
    %c1_40 = arith.constant 1 : index
    %c0_41 = arith.constant 0 : index
    %c0_42 = arith.constant 0 : index
    %55 = vector.load %arg4[%c1_40, %c0_41, %c0_42] : memref<2x14x16xf32, #tpu.memory_space<vmem>>, vector<1x14x16xf32>
    %56 = vector.shape_cast %55 : vector<1x14x16xf32> to vector<14x16xf32>
    %57 = vector.shape_cast %54 : vector<14x16xf32> to vector<1x14x16xf32>
    tpu.vector_store %arg4[%c1_40, %c0_41, %c0_42], %57 {strides = array<i32>} : memref<2x14x16xf32, #tpu.memory_space<vmem>>, vector<1x14x16xf32>,
    return
  }
}

module attributes {stable_mosaic.version = 11 : i64} {
  func.func @conv_stack_kernel(%arg0: i32, %arg1: memref<1x14x16xf32, #tpu.memory_space<vmem>>, %arg2: memref<3x16x512xf32, #tpu.memory_space<vmem>>, %arg3: memref<1x512xf32, #tpu.memory_space<vmem>>, %arg4: memref<3x512x512xf32, #tpu.memory_space<vmem>>, %arg5: memref<1x512xf32, #tpu.memory_space<vmem>>, %arg6: memref<3x512x512xf32, #tpu.memory_space<vmem>>, %arg7: memref<1x512xf32, #tpu.memory_space<vmem>>, %arg8: memref<3x512x16xf32, #tpu.memory_space<vmem>>, %arg9: memref<1x16xf32, #tpu.memory_space<vmem>>, %arg10: memref<1x14x16xf32, #tpu.memory_space<vmem>>, %arg11: memref<16x16xf32, #tpu.memory_space<vmem>>, %arg12: memref<16x512xf32, #tpu.memory_space<vmem>>, %arg13: memref<16x512xf32, #tpu.memory_space<vmem>>) attributes {dimension_semantics = [#tpu.dimension_semantics<parallel>], iteration_bounds = array<i64: 2>, scalar_prefetch = 0 : i64, scratch_operands = 3 : i64, tpu.core_type = #tpu.core_type<tc>, window_params = [{transform_indices = @transform_0, window_bounds = array<i64: 1, 14, 16>}, {pipeline_mode = #tpu.pipeline_mode<synchronous>, transform_indices = @transform_1, window_bounds = array<i64: 3, 16, 512>}, {pipeline_mode = #tpu.pipeline_mode<synchronous>, transform_indices = @transform_2, window_bounds = array<i64: 1, 512>}, {pipeline_mode = #tpu.pipeline_mode<synchronous>, transform_indices = @transform_3, window_bounds = array<i64: 3, 512, 512>}, {pipeline_mode = #tpu.pipeline_mode<synchronous>, transform_indices = @transform_4, window_bounds = array<i64: 1, 512>}, {pipeline_mode = #tpu.pipeline_mode<synchronous>, transform_indices = @transform_5, window_bounds = array<i64: 3, 512, 512>}, {pipeline_mode = #tpu.pipeline_mode<synchronous>, transform_indices = @transform_6, window_bounds = array<i64: 1, 512>}, {pipeline_mode = #tpu.pipeline_mode<synchronous>, transform_indices = @transform_7, window_bounds = array<i64: 3, 512, 16>}, {pipeline_mode = #tpu.pipeline_mode<synchronous>, transform_indices = @transform_8, window_bounds = array<i64: 1, 16>}, {transform_indices = @transform_9, window_bounds = array<i64: 1, 14, 16>}]} {
    %cst = arith.constant 0.000000e+00 : f32
    %0 = vector.broadcast %cst : f32 to vector<16x16xf32>
    %c0 = arith.constant 0 : index
    %c0_0 = arith.constant 0 : index
    %1 = vector.load %arg11[%c0, %c0_0] : memref<16x16xf32, #tpu.memory_space<vmem>>, vector<16x16xf32>
    tpu.vector_store %arg11[%c0, %c0_0], %0 {strides = array<i32>} : memref<16x16xf32, #tpu.memory_space<vmem>>, vector<16x16xf32>,
    %cst_1 = arith.constant 0.000000e+00 : f32
    %2 = vector.broadcast %cst_1 : f32 to vector<16x512xf32>
    %c0_2 = arith.constant 0 : index
    %c0_3 = arith.constant 0 : index
    %3 = vector.load %arg12[%c0_2, %c0_3] : memref<16x512xf32, #tpu.memory_space<vmem>>, vector<16x512xf32>
    tpu.vector_store %arg12[%c0_2, %c0_3], %2 {strides = array<i32>} : memref<16x512xf32, #tpu.memory_space<vmem>>, vector<16x512xf32>,
    %cst_4 = arith.constant 0.000000e+00 : f32
    %4 = vector.broadcast %cst_4 : f32 to vector<16x512xf32>
    %c0_5 = arith.constant 0 : index
    %c0_6 = arith.constant 0 : index
    %5 = vector.load %arg13[%c0_5, %c0_6] : memref<16x512xf32, #tpu.memory_space<vmem>>, vector<16x512xf32>
    tpu.vector_store %arg13[%c0_5, %c0_6], %4 {strides = array<i32>} : memref<16x512xf32, #tpu.memory_space<vmem>>, vector<16x512xf32>,
    %c0_7 = arith.constant 0 : index
    %c0_8 = arith.constant 0 : index
    %c0_9 = arith.constant 0 : index
    %6 = vector.load %arg1[%c0_7, %c0_8, %c0_9] : memref<1x14x16xf32, #tpu.memory_space<vmem>>, vector<1x14x16xf32>
    %7 = vector.shape_cast %6 : vector<1x14x16xf32> to vector<14x16xf32>
    %c1 = arith.constant 1 : index
    %c0_10 = arith.constant 0 : index
    %8 = vector.load %arg11[%c1, %c0_10] : memref<16x16xf32, #tpu.memory_space<vmem>>, vector<14x16xf32>
    tpu.vector_store %arg11[%c1, %c0_10], %7 {strides = array<i32>} : memref<16x16xf32, #tpu.memory_space<vmem>>, vector<14x16xf32>,
    %c0_11 = arith.constant 0 : index
    %c0_12 = arith.constant 0 : index
    %9 = vector.load %arg11[%c0_11, %c0_12] : memref<16x16xf32, #tpu.memory_space<vmem>>, vector<14x16xf32>
    %c0_13 = arith.constant 0 : index
    %c0_14 = arith.constant 0 : index
    %c0_15 = arith.constant 0 : index
    %10 = vector.load %arg2[%c0_13, %c0_14, %c0_15] : memref<3x16x512xf32, #tpu.memory_space<vmem>>, vector<1x16x512xf32>
    %11 = vector.shape_cast %10 : vector<1x16x512xf32> to vector<16x512xf32>
    %cst_16 = arith.constant dense<0.000000e+00> : vector<14x512xf32>
    %12 = tpu.matmul %9, %11, %cst_16 {dimension_numbers = #tpu.dot_dimension_numbers<[1], [0], [0], [1], [0, 0, 1, 1], [], []>} : vector<14x16xf32>, vector<16x512xf32>, vector<14x512xf32> -> vector<14x512xf32>
    %c1_17 = arith.constant 1 : index
    %c0_18 = arith.constant 0 : index
    %13 = vector.load %arg11[%c1_17, %c0_18] : memref<16x16xf32, #tpu.memory_space<vmem>>, vector<14x16xf32>
    %c1_19 = arith.constant 1 : index
    %c0_20 = arith.constant 0 : index
    %c0_21 = arith.constant 0 : index
    %14 = vector.load %arg2[%c1_19, %c0_20, %c0_21] : memref<3x16x512xf32, #tpu.memory_space<vmem>>, vector<1x16x512xf32>
    %15 = vector.shape_cast %14 : vector<1x16x512xf32> to vector<16x512xf32>
    %cst_22 = arith.constant dense<0.000000e+00> : vector<14x512xf32>
    %16 = tpu.matmul %13, %15, %cst_22 {dimension_numbers = #tpu.dot_dimension_numbers<[1], [0], [0], [1], [0, 0, 1, 1], [], []>} : vector<14x16xf32>, vector<16x512xf32>, vector<14x512xf32> -> vector<14x512xf32>
    %17 = arith.addf %12, %16 : vector<14x512xf32>
    %c2 = arith.constant 2 : index
    %c0_23 = arith.constant 0 : index
    %18 = vector.load %arg11[%c2, %c0_23] : memref<16x16xf32, #tpu.memory_space<vmem>>, vector<14x16xf32>
    %c2_24 = arith.constant 2 : index
    %c0_25 = arith.constant 0 : index
    %c0_26 = arith.constant 0 : index
    %19 = vector.load %arg2[%c2_24, %c0_25, %c0_26] : memref<3x16x512xf32, #tpu.memory_space<vmem>>, vector<1x16x512xf32>
    %20 = vector.shape_cast %19 : vector<1x16x512xf32> to vector<16x512xf32>
    %cst_27 = arith.constant dense<0.000000e+00> : vector<14x512xf32>
    %21 = tpu.matmul %18, %20, %cst_27 {dimension_numbers = #tpu.dot_dimension_numbers<[1], [0], [0], [1], [0, 0, 1, 1], [], []>} : vector<14x16xf32>, vector<16x512xf32>, vector<14x512xf32> -> vector<14x512xf32>
    %22 = arith.addf %17, %21 : vector<14x512xf32>
    %c0_28 = arith.constant 0 : index
    %c0_29 = arith.constant 0 : index
    %23 = vector.load %arg3[%c0_28, %c0_29] : memref<1x512xf32, #tpu.memory_space<vmem>>, vector<1x512xf32>
    %24 = vector.broadcast %23 : vector<1x512xf32> to vector<14x512xf32>
    %25 = arith.addf %22, %24 : vector<14x512xf32>
    %cst_30 = arith.constant 0.000000e+00 : f32
    %26 = vector.broadcast %cst_30 : f32 to vector<14x512xf32>
    %27 = arith.maximumf %25, %26 : vector<14x512xf32>
    %c1_31 = arith.constant 1 : index
    %c0_32 = arith.constant 0 : index
    %28 = vector.load %arg12[%c1_31, %c0_32] : memref<16x512xf32, #tpu.memory_space<vmem>>, vector<14x512xf32>
    tpu.vector_store %arg12[%c1_31, %c0_32], %27 {strides = array<i32>} : memref<16x512xf32, #tpu.memory_space<vmem>>, vector<14x512xf32>,
    %c0_33 = arith.constant 0 : index
    %c0_34 = arith.constant 0 : index
    %29 = vector.load %arg12[%c0_33, %c0_34] : memref<16x512xf32, #tpu.memory_space<vmem>>, vector<14x512xf32>
    %c0_35 = arith.constant 0 : index
    %c0_36 = arith.constant 0 : index
    %c0_37 = arith.constant 0 : index
    %30 = vector.load %arg4[%c0_35, %c0_36, %c0_37] : memref<3x512x512xf32, #tpu.memory_space<vmem>>, vector<1x512x512xf32>
    %31 = vector.shape_cast %30 : vector<1x512x512xf32> to vector<512x512xf32>
    %cst_38 = arith.constant dense<0.000000e+00> : vector<14x512xf32>
    %32 = tpu.matmul %29, %31, %cst_38 {dimension_numbers = #tpu.dot_dimension_numbers<[1], [0], [0], [1], [0, 0, 1, 1], [], []>} : vector<14x512xf32>, vector<512x512xf32>, vector<14x512xf32> -> vector<14x512xf32>
    %c1_39 = arith.constant 1 : index
    %c0_40 = arith.constant 0 : index
    %33 = vector.load %arg12[%c1_39, %c0_40] : memref<16x512xf32, #tpu.memory_space<vmem>>, vector<14x512xf32>
    %c1_41 = arith.constant 1 : index
    %c0_42 = arith.constant 0 : index
    %c0_43 = arith.constant 0 : index
    %34 = vector.load %arg4[%c1_41, %c0_42, %c0_43] : memref<3x512x512xf32, #tpu.memory_space<vmem>>, vector<1x512x512xf32>
    %35 = vector.shape_cast %34 : vector<1x512x512xf32> to vector<512x512xf32>
    %cst_44 = arith.constant dense<0.000000e+00> : vector<14x512xf32>
    %36 = tpu.matmul %33, %35, %cst_44 {dimension_numbers = #tpu.dot_dimension_numbers<[1], [0], [0], [1], [0, 0, 1, 1], [], []>} : vector<14x512xf32>, vector<512x512xf32>, vector<14x512xf32> -> vector<14x512xf32>
    %37 = arith.addf %32, %36 : vector<14x512xf32>
    %c2_45 = arith.constant 2 : index
    %c0_46 = arith.constant 0 : index
    %38 = vector.load %arg12[%c2_45, %c0_46] : memref<16x512xf32, #tpu.memory_space<vmem>>, vector<14x512xf32>
    %c2_47 = arith.constant 2 : index
    %c0_48 = arith.constant 0 : index
    %c0_49 = arith.constant 0 : index
    %39 = vector.load %arg4[%c2_47, %c0_48, %c0_49] : memref<3x512x512xf32, #tpu.memory_space<vmem>>, vector<1x512x512xf32>
    %40 = vector.shape_cast %39 : vector<1x512x512xf32> to vector<512x512xf32>
    %cst_50 = arith.constant dense<0.000000e+00> : vector<14x512xf32>
    %41 = tpu.matmul %38, %40, %cst_50 {dimension_numbers = #tpu.dot_dimension_numbers<[1], [0], [0], [1], [0, 0, 1, 1], [], []>} : vector<14x512xf32>, vector<512x512xf32>, vector<14x512xf32> -> vector<14x512xf32>
    %42 = arith.addf %37, %41 : vector<14x512xf32>
    %c0_51 = arith.constant 0 : index
    %c0_52 = arith.constant 0 : index
    %43 = vector.load %arg5[%c0_51, %c0_52] : memref<1x512xf32, #tpu.memory_space<vmem>>, vector<1x512xf32>
    %44 = vector.broadcast %43 : vector<1x512xf32> to vector<14x512xf32>
    %45 = arith.addf %42, %44 : vector<14x512xf32>
    %cst_53 = arith.constant 0.000000e+00 : f32
    %46 = vector.broadcast %cst_53 : f32 to vector<14x512xf32>
    %47 = arith.maximumf %45, %46 : vector<14x512xf32>
    %c1_54 = arith.constant 1 : index
    %c0_55 = arith.constant 0 : index
    %48 = vector.load %arg13[%c1_54, %c0_55] : memref<16x512xf32, #tpu.memory_space<vmem>>, vector<14x512xf32>
    tpu.vector_store %arg13[%c1_54, %c0_55], %47 {strides = array<i32>} : memref<16x512xf32, #tpu.memory_space<vmem>>, vector<14x512xf32>,
    %c0_56 = arith.constant 0 : index
    %c0_57 = arith.constant 0 : index
    %49 = vector.load %arg13[%c0_56, %c0_57] : memref<16x512xf32, #tpu.memory_space<vmem>>, vector<14x512xf32>
    %c0_58 = arith.constant 0 : index
    %c0_59 = arith.constant 0 : index
    %c0_60 = arith.constant 0 : index
    %50 = vector.load %arg6[%c0_58, %c0_59, %c0_60] : memref<3x512x512xf32, #tpu.memory_space<vmem>>, vector<1x512x512xf32>
    %51 = vector.shape_cast %50 : vector<1x512x512xf32> to vector<512x512xf32>
    %cst_61 = arith.constant dense<0.000000e+00> : vector<14x512xf32>
    %52 = tpu.matmul %49, %51, %cst_61 {dimension_numbers = #tpu.dot_dimension_numbers<[1], [0], [0], [1], [0, 0, 1, 1], [], []>} : vector<14x512xf32>, vector<512x512xf32>, vector<14x512xf32> -> vector<14x512xf32>
    %c1_62 = arith.constant 1 : index
    %c0_63 = arith.constant 0 : index
    %53 = vector.load %arg13[%c1_62, %c0_63] : memref<16x512xf32, #tpu.memory_space<vmem>>, vector<14x512xf32>
    %c1_64 = arith.constant 1 : index
    %c0_65 = arith.constant 0 : index
    %c0_66 = arith.constant 0 : index
    %54 = vector.load %arg6[%c1_64, %c0_65, %c0_66] : memref<3x512x512xf32, #tpu.memory_space<vmem>>, vector<1x512x512xf32>
    %55 = vector.shape_cast %54 : vector<1x512x512xf32> to vector<512x512xf32>
    %cst_67 = arith.constant dense<0.000000e+00> : vector<14x512xf32>
    %56 = tpu.matmul %53, %55, %cst_67 {dimension_numbers = #tpu.dot_dimension_numbers<[1], [0], [0], [1], [0, 0, 1, 1], [], []>} : vector<14x512xf32>, vector<512x512xf32>, vector<14x512xf32> -> vector<14x512xf32>
    %57 = arith.addf %52, %56 : vector<14x512xf32>
    %c2_68 = arith.constant 2 : index
    %c0_69 = arith.constant 0 : index
    %58 = vector.load %arg13[%c2_68, %c0_69] : memref<16x512xf32, #tpu.memory_space<vmem>>, vector<14x512xf32>
    %c2_70 = arith.constant 2 : index
    %c0_71 = arith.constant 0 : index
    %c0_72 = arith.constant 0 : index
    %59 = vector.load %arg6[%c2_70, %c0_71, %c0_72] : memref<3x512x512xf32, #tpu.memory_space<vmem>>, vector<1x512x512xf32>
    %60 = vector.shape_cast %59 : vector<1x512x512xf32> to vector<512x512xf32>
    %cst_73 = arith.constant dense<0.000000e+00> : vector<14x512xf32>
    %61 = tpu.matmul %58, %60, %cst_73 {dimension_numbers = #tpu.dot_dimension_numbers<[1], [0], [0], [1], [0, 0, 1, 1], [], []>} : vector<14x512xf32>, vector<512x512xf32>, vector<14x512xf32> -> vector<14x512xf32>
    %62 = arith.addf %57, %61 : vector<14x512xf32>
    %c0_74 = arith.constant 0 : index
    %c0_75 = arith.constant 0 : index
    %63 = vector.load %arg7[%c0_74, %c0_75] : memref<1x512xf32, #tpu.memory_space<vmem>>, vector<1x512xf32>
    %64 = vector.broadcast %63 : vector<1x512xf32> to vector<14x512xf32>
    %65 = arith.addf %62, %64 : vector<14x512xf32>
    %cst_76 = arith.constant 0.000000e+00 : f32
    %66 = vector.broadcast %cst_76 : f32 to vector<14x512xf32>
    %67 = arith.maximumf %65, %66 : vector<14x512xf32>
    %c1_77 = arith.constant 1 : index
    %c0_78 = arith.constant 0 : index
    %68 = vector.load %arg12[%c1_77, %c0_78] : memref<16x512xf32, #tpu.memory_space<vmem>>, vector<14x512xf32>
    tpu.vector_store %arg12[%c1_77, %c0_78], %67 {strides = array<i32>} : memref<16x512xf32, #tpu.memory_space<vmem>>, vector<14x512xf32>,
    %c0_79 = arith.constant 0 : index
    %c0_80 = arith.constant 0 : index
    %69 = vector.load %arg12[%c0_79, %c0_80] : memref<16x512xf32, #tpu.memory_space<vmem>>, vector<14x512xf32>
    %c0_81 = arith.constant 0 : index
    %c0_82 = arith.constant 0 : index
    %c0_83 = arith.constant 0 : index
    %70 = vector.load %arg8[%c0_81, %c0_82, %c0_83] : memref<3x512x16xf32, #tpu.memory_space<vmem>>, vector<1x512x16xf32>
    %71 = vector.shape_cast %70 : vector<1x512x16xf32> to vector<512x16xf32>
    %cst_84 = arith.constant dense<0.000000e+00> : vector<14x16xf32>
    %72 = tpu.matmul %69, %71, %cst_84 {dimension_numbers = #tpu.dot_dimension_numbers<[1], [0], [0], [1], [0, 0, 1, 1], [], []>} : vector<14x512xf32>, vector<512x16xf32>, vector<14x16xf32> -> vector<14x16xf32>
    %c1_85 = arith.constant 1 : index
    %c0_86 = arith.constant 0 : index
    %73 = vector.load %arg12[%c1_85, %c0_86] : memref<16x512xf32, #tpu.memory_space<vmem>>, vector<14x512xf32>
    %c1_87 = arith.constant 1 : index
    %c0_88 = arith.constant 0 : index
    %c0_89 = arith.constant 0 : index
    %74 = vector.load %arg8[%c1_87, %c0_88, %c0_89] : memref<3x512x16xf32, #tpu.memory_space<vmem>>, vector<1x512x16xf32>
    %75 = vector.shape_cast %74 : vector<1x512x16xf32> to vector<512x16xf32>
    %cst_90 = arith.constant dense<0.000000e+00> : vector<14x16xf32>
    %76 = tpu.matmul %73, %75, %cst_90 {dimension_numbers = #tpu.dot_dimension_numbers<[1], [0], [0], [1], [0, 0, 1, 1], [], []>} : vector<14x512xf32>, vector<512x16xf32>, vector<14x16xf32> -> vector<14x16xf32>
    %77 = arith.addf %72, %76 : vector<14x16xf32>
    %c2_91 = arith.constant 2 : index
    %c0_92 = arith.constant 0 : index
    %78 = vector.load %arg12[%c2_91, %c0_92] : memref<16x512xf32, #tpu.memory_space<vmem>>, vector<14x512xf32>
    %c2_93 = arith.constant 2 : index
    %c0_94 = arith.constant 0 : index
    %c0_95 = arith.constant 0 : index
    %79 = vector.load %arg8[%c2_93, %c0_94, %c0_95] : memref<3x512x16xf32, #tpu.memory_space<vmem>>, vector<1x512x16xf32>
    %80 = vector.shape_cast %79 : vector<1x512x16xf32> to vector<512x16xf32>
    %cst_96 = arith.constant dense<0.000000e+00> : vector<14x16xf32>
    %81 = tpu.matmul %78, %80, %cst_96 {dimension_numbers = #tpu.dot_dimension_numbers<[1], [0], [0], [1], [0, 0, 1, 1], [], []>} : vector<14x512xf32>, vector<512x16xf32>, vector<14x16xf32> -> vector<14x16xf32>
    %82 = arith.addf %77, %81 : vector<14x16xf32>
    %c0_97 = arith.constant 0 : index
    %c0_98 = arith.constant 0 : index
    %83 = vector.load %arg9[%c0_97, %c0_98] : memref<1x16xf32, #tpu.memory_space<vmem>>, vector<1x16xf32>
    %84 = vector.broadcast %83 : vector<1x16xf32> to vector<14x16xf32>
    %85 = arith.addf %82, %84 : vector<14x16xf32>
    %c0_99 = arith.constant 0 : index
    %c0_100 = arith.constant 0 : index
    %c0_101 = arith.constant 0 : index
    %86 = vector.load %arg10[%c0_99, %c0_100, %c0_101] : memref<1x14x16xf32, #tpu.memory_space<vmem>>, vector<1x14x16xf32>
    %87 = vector.shape_cast %86 : vector<1x14x16xf32> to vector<14x16xf32>
    %88 = vector.shape_cast %85 : vector<14x16xf32> to vector<1x14x16xf32>
    tpu.vector_store %arg10[%c0_99, %c0_100, %c0_101], %88 {strides = array<i32>} : memref<1x14x16xf32, #tpu.memory_space<vmem>>, vector<1x14x16xf32>,
    return
  }
  func.func @transform_0(%arg0: i32) -> (i32, i32, i32) {
    %c0_i32 = arith.constant 0 : i32
    %c0_i32_0 = arith.constant 0 : i32
    %c0_i32_1 = arith.constant 0 : i32
    return %arg0, %c0_i32, %c0_i32_0 : i32, i32, i32
  }
  func.func @transform_1(%arg0: i32) -> (i32, i32, i32) {
    %c0_i32 = arith.constant 0 : i32
    %c0_i32_0 = arith.constant 0 : i32
    %c0_i32_1 = arith.constant 0 : i32
    %c0_i32_2 = arith.constant 0 : i32
    return %c0_i32, %c0_i32_0, %c0_i32_1 : i32, i32, i32
  }
  func.func @transform_2(%arg0: i32) -> (i32, i32) {
    %c0_i32 = arith.constant 0 : i32
    %c0_i32_0 = arith.constant 0 : i32
    %c0_i32_1 = arith.constant 0 : i32
    return %c0_i32, %c0_i32_0 : i32, i32
  }
  func.func @transform_3(%arg0: i32) -> (i32, i32, i32) {
    %c0_i32 = arith.constant 0 : i32
    %c0_i32_0 = arith.constant 0 : i32
    %c0_i32_1 = arith.constant 0 : i32
    %c0_i32_2 = arith.constant 0 : i32
    return %c0_i32, %c0_i32_0, %c0_i32_1 : i32, i32, i32
  }
  func.func @transform_4(%arg0: i32) -> (i32, i32) {
    %c0_i32 = arith.constant 0 : i32
    %c0_i32_0 = arith.constant 0 : i32
    %c0_i32_1 = arith.constant 0 : i32
    return %c0_i32, %c0_i32_0 : i32, i32
  }
  func.func @transform_5(%arg0: i32) -> (i32, i32, i32) {
    %c0_i32 = arith.constant 0 : i32
    %c0_i32_0 = arith.constant 0 : i32
    %c0_i32_1 = arith.constant 0 : i32
    %c0_i32_2 = arith.constant 0 : i32
    return %c0_i32, %c0_i32_0, %c0_i32_1 : i32, i32, i32
  }
  func.func @transform_6(%arg0: i32) -> (i32, i32) {
    %c0_i32 = arith.constant 0 : i32
    %c0_i32_0 = arith.constant 0 : i32
    %c0_i32_1 = arith.constant 0 : i32
    return %c0_i32, %c0_i32_0 : i32, i32
  }
  func.func @transform_7(%arg0: i32) -> (i32, i32, i32) {
    %c0_i32 = arith.constant 0 : i32
    %c0_i32_0 = arith.constant 0 : i32
    %c0_i32_1 = arith.constant 0 : i32
    %c0_i32_2 = arith.constant 0 : i32
    return %c0_i32, %c0_i32_0, %c0_i32_1 : i32, i32, i32
  }
  func.func @transform_8(%arg0: i32) -> (i32, i32) {
    %c0_i32 = arith.constant 0 : i32
    %c0_i32_0 = arith.constant 0 : i32
    %c0_i32_1 = arith.constant 0 : i32
    return %c0_i32, %c0_i32_0 : i32, i32
  }
  func.func @transform_9(%arg0: i32) -> (i32, i32, i32) {
    %c0_i32 = arith.constant 0 : i32
    %c0_i32_0 = arith.constant 0 : i32
    %c0_i32_1 = arith.constant 0 : i32
    return %arg0, %c0_i32, %c0_i32_0 : i32, i32, i32
  }
}

</mosaic_0001>

<llo_original>
// kernel: custom-call.7
$region0: #{custom-call.7}
  %s0 = inlined_call_operand.vmem [shape: u32[2,14], index: 0, kind: output, shape index: {}]

// kernel: squeeze.7
$region0: #{squeeze.7}
  %s0 = inlined_call_operand.vmem [shape: s32[28], index: 0, kind: input, shape index: {}]
  %s1 = inlined_call_operand.vmem [shape: s32[2,14], index: 1, kind: output, shape index: {}]
  $region1: #{squeeze.7} parent=0
    #allocation0 [shape = 'u8[4096]{0}', space=vmem, size = 0x1000, scoped, tag = 'scoped mem for output reshape']
    #allocation1 [shape = 'u8[4096]{0}', space=vmem, size = 0x1000, scoped, tag = 'scoped mem for input reshape']
    %s3 = ssub.s32 2, 1
    %v4 = vld [vmem:[%s0] sm:%s3]
    %5 = vst [vmem:[#allocation1] sm:%s3] %v4
    %v6 = vld [vmem:[#allocation1] sm:$0x1]
    %vm7 = vcmask 113664
    %8 = vst.msk [vmem:[#allocation0] sm:$0x1] %vm7, %v6
    %v9 = vld [vmem:[#allocation1] sm:$0x1]
    %10 = vrot.lane.b32.xlu0 %v9, 114
    %v11 = vpop.permute.xlu0 %10
    %vm12 = vcmask 113664
    %s13 = scalar_lea.vmem [#allocation0], 1
    %14 = vst.msk [vmem:[%s13] sm:$0x1] %vm12, %v11
    %s16 = ssub.s32 4, 1
    %v17 = vld [vmem:[#allocation0] sm:%s16]
    %s19 = ssub.s32 4, 1
    %20 = vst [vmem:[%s1] sm:%s19] %v17

// kernel: lstmcnn_forward.2
$region0: #{lstmcnn_forward.2}
  #allocation0 [shape = 'u32[]', space=smem, size = 0x4, offset = 0x4, fixed_abs, tag = 'smem constant byte address 0x4 - core index']
  #allocation1 [shape = 'u32[72,128]{1,0:T(1,128)}', space=vmem, size = 0x9000, scoped, tag = 'internal scratch']
  #allocation2 [shape = 'f32[14,2,128]{2,1,0:T(2,128)}', space=vmem, size = 0x3800, scoped, tag = 'scratch operand']
  #allocation3 [shape = 'f32[14,2,16]{2,1,0:T(2,128)}', space=vmem, size = 0x3800, scoped, tag = 'scratch operand']
  #allocation4 [shape = 'f32[14,2,16]{2,1,0:T(2,128)}', space=vmem, size = 0x3800, scoped, tag = 'scratch operand']
  %s0 = inlined_call_operand.vmem [shape: f32[2,14,17], index: 0, kind: input, shape index: {}]
  %s1 = inlined_call_operand.hbm [shape: f32[17,128], index: 1, kind: input, shape index: {}]
  %s2 = inlined_call_operand.hbm [shape: f32[32,128], index: 2, kind: input, shape index: {}]
  %s3 = inlined_call_operand.hbm [shape: f32[1,128], index: 3, kind: input, shape index: {}]
  %s4 = inlined_call_operand.vmem [shape: f32[2,14,16], index: 4, kind: output, shape index: {}]
  %s5 = sld [smem:[#allocation0]]
  $region45: #{lstmcnn_forward.2} parent=0
    _
  %s7 = ssub.s32 1, %s5
  %s8 = scalar_select 0, %s7, %s5
  $region1: #{lstmcnn_forward.2} parent=0
    #allocation5 [shape = 'u8[12288]{0}', space=vmem, size = 0x3000, scoped, tag = 'input window, operand 1, single buffered']
    #allocation6 [shape = 's32[1]{0}', space=sflag, size = 0x4, scoped, tag = 'scoped memory for lstmcnn_forward.2']
    #allocation7 [shape = 'u8[16384]{0}', space=vmem, size = 0x4000, scoped, tag = 'input window, operand 2, single buffered']
    #allocation8 [shape = 's32[1]{0}', space=sflag, size = 0x4, scoped, tag = 'scoped memory for lstmcnn_forward.2']
    #allocation9 [shape = 'u8[512]{0}', space=vmem, size = 0x400, scoped, tag = 'input window, operand 3, single buffered']
    %9 = vsyncpa [#allocation6], 0
    %10 = vsyncpa [#allocation8], 0
    // Predicated region
    $region2: #{lstmcnn_forward.2} parent=1 // pred_check
      _
    $region3: #{lstmcnn_forward.2} parent=1 // pred_check_branch
      %12 = sbr.rel (0) target = $region5
    $region4: #{lstmcnn_forward.2} parent=1 // pred_region
      _
    $region5: #{lstmcnn_forward.2} parent=1 // pred_fallthru
      _
    // Predicated region
    $region6: #{lstmcnn_forward.2} parent=1 // pred_check
      _
    $region7: #{lstmcnn_forward.2} parent=1 // pred_check_branch
      %14 = sbr.rel (0) target = $region9
    $region8: #{lstmcnn_forward.2} parent=1 // pred_region
      %16 = vsyncadd [#allocation6], 0
      %s17 = sshll.u32 %s1, 4
      %s18 = int_to_ptr.hbm [resolvable:$true] %s17
      %s19 = sshll.u32 [#allocation5], 4
      %s20 = int_to_ptr.vmem [resolvable:$true] %s19
      %25 = dma.hbm_to_vmem [thread:$0]  %s18, 384, %s20, [#allocation6], 128, 128, 8
    $region9: #{lstmcnn_forward.2} parent=1 // pred_fallthru
      _
    // Predicated region
    $region10: #{lstmcnn_forward.2} parent=1 // pred_check
      _
    $region11: #{lstmcnn_forward.2} parent=1 // pred_check_branch
      %27 = sbr.rel (0) target = $region13
    $region12: #{lstmcnn_forward.2} parent=1 // pred_region
      %29 = vsyncadd [#allocation8], 0
      %s30 = sshll.u32 %s2, 4
      %s31 = int_to_ptr.hbm [resolvable:$true] %s30
      %s32 = sshll.u32 [#allocation7], 4
      %s33 = int_to_ptr.vmem [resolvable:$true] %s32
      %38 = dma.hbm_to_vmem [thread:$0]  %s31, 512, %s33, [#allocation8], 128, 128, 8
    $region13: #{lstmcnn_forward.2} parent=1 // pred_fallthru
      _
    // Predicated region
    $region14: #{lstmcnn_forward.2} parent=1 // pred_check
      _
    $region15: #{lstmcnn_forward.2} parent=1 // pred_check_branch
      %40 = sbr.rel (0) target = $region17
    $region16: #{lstmcnn_forward.2} parent=1 // pred_region
      %42 = vsyncadd [#allocation8], 0
      %s44 = sshll.u32 %s3, 4
      %s45 = int_to_ptr.hbm [resolvable:$true] %s44
      %s46 = sshll.u32 [#allocation9], 4
      %s47 = int_to_ptr.vmem [resolvable:$true] %s46
      %49 = dma.hbm_to_vmem [thread:$0]  %s45, 16, %s47, [#allocation8]
    $region17: #{lstmcnn_forward.2} parent=1 // pred_fallthru
      _
    // Predicated region
    $region18: #{lstmcnn_forward.2} parent=1 // pred_check
      _
    $region19: #{lstmcnn_forward.2} parent=1 // pred_check_branch
      %51 = sbr.rel (0) target = $region21
    $region20: #{lstmcnn_forward.2} parent=1 // pred_region
      %53 = dma.done [#allocation6], 384
    $region21: #{lstmcnn_forward.2} parent=1 // pred_fallthru
      _
    // Predicated region
    $region22: #{lstmcnn_forward.2} parent=1 // pred_check
      _
    $region23: #{lstmcnn_forward.2} parent=1 // pred_check_branch
      %55 = sbr.rel (0) target = $region25
    $region24: #{lstmcnn_forward.2} parent=1 // pred_region
      %57 = dma.done [#allocation8], 512
    $region25: #{lstmcnn_forward.2} parent=1 // pred_fallthru
      _
    // Predicated region
    $region26: #{lstmcnn_forward.2} parent=1 // pred_check
      _
    $region27: #{lstmcnn_forward.2} parent=1 // pred_check_branch
      %59 = sbr.rel (0) target = $region29
    $region28: #{lstmcnn_forward.2} parent=1 // pred_region
      %61 = dma.done [#allocation8], 16
    $region29: #{lstmcnn_forward.2} parent=1 // pred_fallthru
      _
    %v62 = vld [vmem:[#allocation5] sm:$0xff]
    %v63 = vld [vmem:[#allocation5 + $0x8] sm:$0xff]
    %v64 = vld [vmem:[#allocation5 + $0x10] sm:$0x1]
    %v65 = vld [vmem:[#allocation7] sm:$0xff]
    %v66 = vld [vmem:[#allocation7 + $0x8] sm:$0xff]
    %v67 = vld [vmem:[#allocation7 + $0x10] sm:$0xff]
    %v68 = vld [vmem:[#allocation7 + $0x18] sm:$0xff]
    %v69 = vld [vmem:[#allocation9] sm:$0x1]
    %v70 = vld [vmem:[%s0] sm:$0xff]
    %v71 = vld [vmem:[%s0 + $0x8] sm:$0x3f]
    %v73 = vperm.slane %v69, 0
    %vm75 = vcmask 138240
    %v77 = vsel %vm75, %v70, 0
    %v80 = vsel %vm75, %v71, 0
    %vm82 = vcmask 1040384
    %v84 = vsel %vm82, %v64, 0
    %86 = vmatpush.msra.mxu0 0.0
    %87 = vmatpush.msra.mxu0 0.0
    %88 = vmatpush.msra.mxu0 0.0
    %89 = vmatpush.msra.mxu0 0.0
    %90 = vmatpush.msra.mxu0 0.0
    %91 = vmatpush.msra.mxu0 0.0
    %92 = vmatpush.msra.mxu0 0.0
    %93 = vmatpush.msra.mxu0 0.0
    %94 = vmatpush.msra.mxu0 0.0
    %95 = vmatpush.msra.mxu0 0.0
    %96 = vmatpush.msra.mxu0 0.0
    %97 = vmatpush.msra.mxu0 0.0
    %98 = vmatpush.msra.mxu0 0.0
    %99 = vmatpush.msra.mxu0 %v84
    %100 = vmatpush.msra.mxu0 %v63
    %101 = vmatpush.msra.mxu0 %v62
    %102 = vmatmul.f32.gmra.mxu0 %v77
    %v103 = vpop.f32.mrf.mxu0
    %v104 = vadd.f32 %v73, %v103
    %105 = vmatmul.f32.gmra.mxu0 %v80
    %v106 = vpop.f32.mrf.mxu0
    %v107 = vadd.f32 %v73, %v106
    %108 = vdwg.mxu0
    %v111 = vrot.slane %v104, 1
    %v112 = vrot.slane %v104, 2
    %v113 = vrot.slane %v104, 3
    %v114 = vrot.slane %v104, 4
    %v115 = vrot.slane %v104, 5
    %v116 = vrot.slane %v104, 6
    %v117 = vrot.slane %v104, 7
    %v118 = vrot.slane %v107, 1
    %v119 = vrot.slane %v107, 2
    %v120 = vrot.slane %v107, 3
    %v121 = vrot.slane %v107, 4
    %v122 = vrot.slane %v107, 5
    %135 = vst [vmem:[#allocation2] sm:$0x1] %v104
    %136 = vst [vmem:[#allocation2 + $0x2] sm:$0x1] %v111
    %137 = vst [vmem:[#allocation2 + $0x4] sm:$0x1] %v112
    %138 = vst [vmem:[#allocation2 + $0x6] sm:$0x1] %v113
    %139 = vst [vmem:[#allocation2 + $0x8] sm:$0x1] %v114
    %140 = vst [vmem:[#allocation2 + $0xa] sm:$0x1] %v115
    %141 = vst [vmem:[#allocation2 + $0xc] sm:$0x1] %v116
    %142 = vst [vmem:[#allocation2 + $0xe] sm:$0x1] %v117
    %143 = vst [vmem:[#allocation2 + $0x10] sm:$0x1] %v107
    %144 = vst [vmem:[#allocation2 + $0x12] sm:$0x1] %v118
    %145 = vst [vmem:[#allocation2 + $0x14] sm:$0x1] %v119
    %146 = vst [vmem:[#allocation2 + $0x16] sm:$0x1] %v120
    %147 = vst [vmem:[#allocation2 + $0x18] sm:$0x1] %v121
    %148 = vst [vmem:[#allocation2 + $0x1a] sm:$0x1] %v122
    %s149 = scalar_lea.vmem %s0, 16
    %v150 = vld [vmem:[%s149] sm:$0xff]
    %v151 = vld [vmem:[%s149 + $0x8] sm:$0x3f]
    %v153 = vsel %vm75, %v150, 0
    %v156 = vsel %vm75, %v151, 0
    %158 = vmatpush.msra.mxu0 0.0
    %159 = vmatpush.msra.mxu0 0.0
    %160 = vmatpush.msra.mxu0 0.0
    %161 = vmatpush.msra.mxu0 0.0
    %162 = vmatpush.msra.mxu0 0.0
    %163 = vmatpush.msra.mxu0 0.0
    %164 = vmatpush.msra.mxu0 0.0
    %165 = vmatpush.msra.mxu0 0.0
    %166 = vmatpush.msra.mxu0 0.0
    %167 = vmatpush.msra.mxu0 0.0
    %168 = vmatpush.msra.mxu0 0.0
    %169 = vmatpush.msra.mxu0 0.0
    %170 = vmatpush.msra.mxu0 0.0
    %171 = vmatpush.msra.mxu0 %v84
    %172 = vmatpush.msra.mxu0 %v63
    %173 = vmatpush.msra.mxu0 %v62
    %174 = vmatmul.f32.gmra.mxu0 %v153
    %v175 = vpop.f32.mrf.mxu0
    %v176 = vadd.f32 %v73, %v175
    %177 = vmatmul.f32.gmra.mxu0 %v156
    %v178 = vpop.f32.mrf.mxu0
    %v179 = vadd.f32 %v73, %v178
    %180 = vdwg.mxu0
    %v183 = vrot.slane %v176, 1
    %v184 = vrot.slane %v176, 2
    %v185 = vrot.slane %v176, 3
    %v186 = vrot.slane %v176, 4
    %v187 = vrot.slane %v176, 5
    %v188 = vrot.slane %v176, 6
    %v189 = vrot.slane %v176, 7
    %v190 = vrot.slane %v179, 1
    %v191 = vrot.slane %v179, 2
    %v192 = vrot.slane %v179, 3
    %v193 = vrot.slane %v179, 4
    %v194 = vrot.slane %v179, 5
    %207 = vst [vmem:[#allocation2 + $0x1] sm:$0x1] %v176
    %208 = vst [vmem:[#allocation2 + $0x3] sm:$0x1] %v183
    %209 = vst [vmem:[#allocation2 + $0x5] sm:$0x1] %v184
    %210 = vst [vmem:[#allocation2 + $0x7] sm:$0x1] %v185
    %211 = vst [vmem:[#allocation2 + $0x9] sm:$0x1] %v186
    %212 = vst [vmem:[#allocation2 + $0xb] sm:$0x1] %v187
    %213 = vst [vmem:[#allocation2 + $0xd] sm:$0x1] %v188
    %214 = vst [vmem:[#allocation2 + $0xf] sm:$0x1] %v189
    %215 = vst [vmem:[#allocation2 + $0x11] sm:$0x1] %v179
    %216 = vst [vmem:[#allocation2 + $0x13] sm:$0x1] %v190
    %217 = vst [vmem:[#allocation2 + $0x15] sm:$0x1] %v191
    %218 = vst [vmem:[#allocation2 + $0x17] sm:$0x1] %v192
    %219 = vst [vmem:[#allocation2 + $0x19] sm:$0x1] %v193
    %220 = vst [vmem:[#allocation2 + $0x1b] sm:$0x1] %v194
    %v221 = vlaneseq
    %v222 = vand.u32 %v221, 127
    %vm223 = vcmp.lt.s32.totalorder %v222, 0
    %v224 = vsub.s32 0, %v222
    %v225 = vsel %vm223, %v224, %v222
    %v226 = vshrl.u32 %v225, 5
    %v227 = vand.u32 %v225, 31
    %v228 = vsub.s32 0, %v227
    %v229 = vsel %vm223, %v228, %v227
    %vm230 = vcmp.ne.s32.totalorder %v229, 0
    %vm231 = vcmp.lt.s32.totalorder %v229, 0
    %vm232 = vmand %vm231, %vm230
    %v233 = vadd.s32 %v229, 32
    %v234 = vsel %vm232, %v233, %v229
    %vm235 = vcmp.lt.s32.totalorder %v234, 16
    loop: start=0, step=1, limit=14
    $region30: #{lstmcnn_forward.2} parent=1 // loop_pre_header
      _
    $region31: #{lstmcnn_forward.2} parent=1 // loop_header
      %s237 = sphi 0, %s241
      %p238 = scmp.ge.s32.totalorder %s237, 14
      %v242 = vphi 0.0, %v317
      %v243 = vphi 0.0, %v311
    $region32: #{lstmcnn_forward.2} parent=1 // loop_header_branch
      %240 = sbr.rel (%p238) target = $region36
    $region33: #{lstmcnn_forward.2} parent=1 // loop_body
      %s244 = smul.u32 %s237, 2
      %s245 = scalar_lea.vmem [#allocation2], %s244
      %v246 = vld [vmem:[%s245] sm:$0x3]
      %s247 = ssub.s32 13, %s237
      %s248 = smul.u32 %s247, 2
      %s249 = scalar_lea.vmem [#allocation2], %s248
      %v250 = vld [vmem:[%s249] sm:$0x3]
      %v251 = vsel %vm235, 1, 0
      %vm252 = vcmp.eq.s32.totalorder %v251, 1
      %v253 = vsel %vm252, %v246, %v250
      %255 = vrot.lane.b32.xlu0 %v242, 32
      %v256 = vpop.permute.xlu0 %255
      %vm257 = vcmask 261120
      %v258 = vsel %vm257, %v256, 0
      %260 = vmatpush.msra.mxu0 0.0
      %261 = vmatpush.msra.mxu0 0.0
      %262 = vmatpush.msra.mxu0 0.0
      %263 = vmatpush.msra.mxu0 0.0
      %264 = vmatpush.msra.mxu0 0.0
      %265 = vmatpush.msra.mxu0 0.0
      %266 = vmatpush.msra.mxu0 0.0
      %267 = vmatpush.msra.mxu0 0.0
      %268 = vmatpush.msra.mxu0 0.0
      %269 = vmatpush.msra.mxu0 0.0
      %270 = vmatpush.msra.mxu0 0.0
      %271 = vmatpush.msra.mxu0 0.0
      %272 = vmatpush.msra.mxu0 %v68
      %273 = vmatpush.msra.mxu0 %v67
      %274 = vmatpush.msra.mxu0 %v66
      %275 = vmatpush.msra.mxu0 %v65
      %276 = vmatmul.f32.gmra.mxu0 %v258
      %v277 = vpop.f32.mrf.mxu0
      %v278 = vadd.f32 0.0, %v277
      %279 = vdwg.mxu0
      %v280 = vadd.f32 %v253, %v278
      %v281 = vxor.u32 %v280, 2147483648
      %v282 = vmul.f32 %v281, 1.442695
      %v283 = vpow.pop %v282
      %v284 = vadd.f32 %v283, 1.0
      %v285 = vrcp.pop %v284
      %v286 = vmul.f32 %v284, %v285
      %v287 = vsub.f32 1.0, %v286
      %v288 = vmul.f32 %v285, %v287
      %v289 = vadd.f32 %v285, %v288
      %vm290 = vweird.f32 %v284
      %vm291 = vweird.f32 %v285
      %vm292 = vmor %vm290, %vm291
      %v293 = vsel %vm292, %v285, %v289
      %v294 = vand.u32 2147483647, %v284
      %vm295 = vcmp.eq.f32.partialorder %v294, 8.507059e+37
      %v296 = vand.u32 %v284, 2147483648
      %v297 = vor.u32 1.1754944e-38, %v296
      %v298 = vsel %vm295, %v297, %v293
      %v299 = vmul.f32 1.0, %v298
      %v300 = vtanh.pop %v280
      %v301 = vmul.f32 %v299, %v243
      %303 = vrot.lane.b32.xlu0 %v300, 64
      %v304 = vpop.permute.xlu0 %303
      %v306 = vmul.f32 %v299, %v304
      %308 = vrot.lane.b32.xlu0 %v306, 32
      %v309 = vpop.permute.xlu0 %308
      %v311 = vadd.f32 %v301, %v309
      %v312 = vtanh.pop %v311
      %314 = vrot.lane.b32.xlu0 %v312, 64
      %v315 = vpop.permute.xlu0 %314
      %v317 = vmul.f32 %v299, %v315
      %319 = vrot.lane.b32.xlu0 %v317, 32
      %v320 = vpop.permute.xlu0 %319
      %s322 = scalar_lea.vmem [#allocation3], %s244
      %vm323 = vcmask 123904
      %324 = vst.msk [vmem:[%s322] sm:$0x3] %vm323, %v320
      %325 = vrot.lane.b32.xlu0 %v317, 16
      %v326 = vpop.permute.xlu0 %325
      %s328 = scalar_lea.vmem [#allocation4], %s248
      %329 = vst.msk [vmem:[%s328] sm:$0x3] %vm323, %v326
    $region34: #{lstmcnn_forward.2} parent=1 // loop_footer
      %s241 = sadd.s32 1, %s237
    $region35: #{lstmcnn_forward.2} parent=1 // loop_footer_branch
      %236 = sbr.rel target = $region31
    $region36: #{lstmcnn_forward.2} parent=1 // loop_exit
      _
    %v330 = vld [vmem:[#allocation3] sm:$0x1]
    %v331 = vld [vmem:[#allocation3 + $0x2] sm:$0x1]
    %v332 = vld [vmem:[#allocation3 + $0x4] sm:$0x1]
    %v333 = vld [vmem:[#allocation3 + $0x6] sm:$0x1]
    %v334 = vld [vmem:[#allocation3 + $0x8] sm:$0x1]
    %v335 = vld [vmem:[#allocation3 + $0xa] sm:$0x1]
    %v336 = vld [vmem:[#allocation3 + $0xc] sm:$0x1]
    %v337 = vld [vmem:[#allocation3 + $0xe] sm:$0x1]
    %v338 = vld [vmem:[#allocation3 + $0x10] sm:$0x1]
    %v339 = vld [vmem:[#allocation3 + $0x12] sm:$0x1]
    %v340 = vld [vmem:[#allocation3 + $0x14] sm:$0x1]
    %v341 = vld [vmem:[#allocation3 + $0x16] sm:$0x1]
    %v342 = vld [vmem:[#allocation3 + $0x18] sm:$0x1]
    %v343 = vld [vmem:[#allocation3 + $0x1a] sm:$0x1]
    %v344 = vld [vmem:[#allocation4] sm:$0x1]
    %v345 = vld [vmem:[#allocation4 + $0x2] sm:$0x1]
    %v346 = vld [vmem:[#allocation4 + $0x4] sm:$0x1]
    %v347 = vld [vmem:[#allocation4 + $0x6] sm:$0x1]
    %v348 = vld [vmem:[#allocation4 + $0x8] sm:$0x1]
    %v349 = vld [vmem:[#allocation4 + $0xa] sm:$0x1]
    %v350 = vld [vmem:[#allocation4 + $0xc] sm:$0x1]
    %v351 = vld [vmem:[#allocation4 + $0xe] sm:$0x1]
    %v352 = vld [vmem:[#allocation4 + $0x10] sm:$0x1]
    %v353 = vld [vmem:[#allocation4 + $0x12] sm:$0x1]
    %v354 = vld [vmem:[#allocation4 + $0x14] sm:$0x1]
    %v355 = vld [vmem:[#allocation4 + $0x16] sm:$0x1]
    %v356 = vld [vmem:[#allocation4 + $0x18] sm:$0x1]
    %v357 = vld [vmem:[#allocation4 + $0x1a] sm:$0x1]
    %v358 = vadd.f32 %v330, %v344
    %v359 = vadd.f32 %v331, %v345
    %v360 = vadd.f32 %v332, %v346
    %v361 = vadd.f32 %v333, %v347
    %v362 = vadd.f32 %v334, %v348
    %v363 = vadd.f32 %v335, %v349
    %v364 = vadd.f32 %v336, %v350
    %v365 = vadd.f32 %v337, %v351
    %v366 = vadd.f32 %v338, %v352
    %v367 = vadd.f32 %v339, %v353
    %v368 = vadd.f32 %v340, %v354
    %v369 = vadd.f32 %v341, %v355
    %v370 = vadd.f32 %v342, %v356
    %v371 = vadd.f32 %v343, %v357
    %v386 = vrot.slane %v359, 7
    %vm387 = vcmask 1041409
    %v388 = vsel %vm387, %v386, %v358
    %v389 = vrot.slane %v360, 6
    %vm390 = vcmask 1042434
    %v391 = vsel %vm390, %v389, %v388
    %v392 = vrot.slane %v361, 5
    %vm393 = vcmask 1043459
    %v394 = vsel %vm393, %v392, %v391
    %v395 = vrot.slane %v362, 4
    %vm396 = vcmask 1044484
    %v397 = vsel %vm396, %v395, %v394
    %v398 = vrot.slane %v363, 3
    %vm399 = vcmask 1045509
    %v400 = vsel %vm399, %v398, %v397
    %v401 = vrot.slane %v364, 2
    %vm402 = vcmask 1046534
    %v403 = vsel %vm402, %v401, %v400
    %v404 = vrot.slane %v365, 1
    %vm405 = vcmask 1047559
    %v406 = vsel %vm405, %v404, %v403
    %v407 = vrot.slane %v367, 7
    %v408 = vsel %vm387, %v407, %v366
    %v409 = vrot.slane %v368, 6
    %v410 = vsel %vm390, %v409, %v408
    %v411 = vrot.slane %v369, 5
    %v412 = vsel %vm393, %v411, %v410
    %v413 = vrot.slane %v370, 4
    %v414 = vsel %vm396, %v413, %v412
    %v415 = vrot.slane %v371, 3
    %v416 = vsel %vm399, %v415, %v414
    %vm419 = vcmask 130048
    %420 = vst.msk [vmem:[%s4] sm:$0xff] %vm419, %v406
    %vm421 = vcmask 128000
    %422 = vst.msk [vmem:[%s4 + $0x8] sm:$0x3f] %vm421, %v416
    %v423 = vld [vmem:[#allocation3 + $0x1] sm:$0x1]
    %v424 = vld [vmem:[#allocation3 + $0x3] sm:$0x1]
    %v425 = vld [vmem:[#allocation3 + $0x5] sm:$0x1]
    %v426 = vld [vmem:[#allocation3 + $0x7] sm:$0x1]
    %v427 = vld [vmem:[#allocation3 + $0x9] sm:$0x1]
    %v428 = vld [vmem:[#allocation3 + $0xb] sm:$0x1]
    %v429 = vld [vmem:[#allocation3 + $0xd] sm:$0x1]
    %v430 = vld [vmem:[#allocation3 + $0xf] sm:$0x1]
    %v431 = vld [vmem:[#allocation3 + $0x11] sm:$0x1]
    %v432 = vld [vmem:[#allocation3 + $0x13] sm:$0x1]
    %v433 = vld [vmem:[#allocation3 + $0x15] sm:$0x1]
    %v434 = vld [vmem:[#allocation3 + $0x17] sm:$0x1]
    %v435 = vld [vmem:[#allocation3 + $0x19] sm:$0x1]
    %v436 = vld [vmem:[#allocation3 + $0x1b] sm:$0x1]
    %v437 = vld [vmem:[#allocation4 + $0x1] sm:$0x1]
    %v438 = vld [vmem:[#allocation4 + $0x3] sm:$0x1]
    %v439 = vld [vmem:[#allocation4 + $0x5] sm:$0x1]
    %v440 = vld [vmem:[#allocation4 + $0x7] sm:$0x1]
    %v441 = vld [vmem:[#allocation4 + $0x9] sm:$0x1]
    %v442 = vld [vmem:[#allocation4 + $0xb] sm:$0x1]
    %v443 = vld [vmem:[#allocation4 + $0xd] sm:$0x1]
    %v444 = vld [vmem:[#allocation4 + $0xf] sm:$0x1]
    %v445 = vld [vmem:[#allocation4 + $0x11] sm:$0x1]
    %v446 = vld [vmem:[#allocation4 + $0x13] sm:$0x1]
    %v447 = vld [vmem:[#allocation4 + $0x15] sm:$0x1]
    %v448 = vld [vmem:[#allocation4 + $0x17] sm:$0x1]
    %v449 = vld [vmem:[#allocation4 + $0x19] sm:$0x1]
    %v450 = vld [vmem:[#allocation4 + $0x1b] sm:$0x1]
    %v451 = vadd.f32 %v423, %v437
    %v452 = vadd.f32 %v424, %v438
    %v453 = vadd.f32 %v425, %v439
    %v454 = vadd.f32 %v426, %v440
    %v455 = vadd.f32 %v427, %v441
    %v456 = vadd.f32 %v428, %v442
    %v457 = vadd.f32 %v429, %v443
    %v458 = vadd.f32 %v430, %v444
    %v459 = vadd.f32 %v431, %v445
    %v460 = vadd.f32 %v432, %v446
    %v461 = vadd.f32 %v433, %v447
    %v462 = vadd.f32 %v434, %v448
    %v463 = vadd.f32 %v435, %v449
    %v464 = vadd.f32 %v436, %v450
    %v479 = vrot.slane %v452, 7
    %v480 = vsel %vm387, %v479, %v451
    %v481 = vrot.slane %v453, 6
    %v482 = vsel %vm390, %v481, %v480
    %v483 = vrot.slane %v454, 5
    %v484 = vsel %vm393, %v483, %v482
    %v485 = vrot.slane %v455, 4
    %v486 = vsel %vm396, %v485, %v484
    %v487 = vrot.slane %v456, 3
    %v488 = vsel %vm399, %v487, %v486
    %v489 = vrot.slane %v457, 2
    %v490 = vsel %vm402, %v489, %v488
    %v491 = vrot.slane %v458, 1
    %v492 = vsel %vm405, %v491, %v490
    %v493 = vrot.slane %v460, 7
    %v494 = vsel %vm387, %v493, %v459
    %v495 = vrot.slane %v461, 6
    %v496 = vsel %vm390, %v495, %v494
    %v497 = vrot.slane %v462, 5
    %v498 = vsel %vm393, %v497, %v496
    %v499 = vrot.slane %v463, 4
    %v500 = vsel %vm396, %v499, %v498
    %v501 = vrot.slane %v464, 3
    %v502 = vsel %vm399, %v501, %v500
    %s505 = scalar_lea.vmem %s4, 16
    %506 = vst.msk [vmem:[%s505] sm:$0xff] %vm419, %v492
    %507 = vst.msk [vmem:[%s505 + $0x8] sm:$0x3f] %vm421, %v502
    // Predicated region
    $region37: #{lstmcnn_forward.2} parent=1 // pred_check
      _
    $region38: #{lstmcnn_forward.2} parent=1 // pred_check_branch
      %509 = sbr.rel (0) target = $region40
    $region39: #{lstmcnn_forward.2} parent=1 // pred_region
      _
    $region40: #{lstmcnn_forward.2} parent=1 // pred_fallthru
      _
    // Predicated region
    $region41: #{lstmcnn_forward.2} parent=1 // pred_check
      _
    $region42: #{lstmcnn_forward.2} parent=1 // pred_check_branch
      %511 = sbr.rel (0) target = $region44
    $region43: #{lstmcnn_forward.2} parent=1 // pred_region
      _
    $region44: #{lstmcnn_forward.2} parent=1 // pred_fallthru
      _
    %512 = vsyncpa [#allocation6], 1
    %513 = vsyncpa [#allocation8], 1

// kernel: lstmcnn_forward.3
$region0: #{lstmcnn_forward.3}
  #allocation0 [shape = 'u32[]', space=smem, size = 0x4, offset = 0x4, fixed_abs, tag = 'smem constant byte address 0x4 - core index']
  #allocation1 [shape = 'u32[72,128]{1,0:T(1,128)}', space=vmem, size = 0x9000, scoped, tag = 'internal scratch']
  #allocation2 [shape = 'f32[16,16]{1,0:T(8,128)}', space=vmem, size = 0x2000, scoped, tag = 'scratch operand']
  #allocation3 [shape = 'f32[16,512]{1,0:T(8,128)}', space=vmem, size = 0x8000, scoped, tag = 'scratch operand']
  #allocation4 [shape = 'f32[16,512]{1,0:T(8,128)}', space=vmem, size = 0x8000, scoped, tag = 'scratch operand']
  %s0 = inlined_call_operand.vmem [shape: f32[2,14,16], index: 0, kind: input, shape index: {}]
  %s1 = inlined_call_operand.vmem [shape: f32[3,16,512], index: 1, kind: input, shape index: {}]
  %s2 = inlined_call_operand.vmem [shape: f32[1,512], index: 2, kind: input, shape index: {}]
  %s3 = inlined_call_operand.vmem [shape: f32[3,512,512], index: 3, kind: input, shape index: {}]
  %s4 = inlined_call_operand.vmem [shape: f32[1,512], index: 4, kind: input, shape index: {}]
  %s5 = inlined_call_operand.hbm [shape: f32[3,512,512], index: 5, kind: input, shape index: {}]
  %s6 = inlined_call_operand.vmem [shape: f32[1,512], index: 6, kind: input, shape index: {}]
  %s7 = inlined_call_operand.vmem [shape: f32[3,512,16], index: 7, kind: input, shape index: {}]
  %s8 = inlined_call_operand.vmem [shape: f32[1,16], index: 8, kind: input, shape index: {}]
  %s9 = inlined_call_operand.vmem [shape: f32[2,14,16], index: 9, kind: output, shape index: {}]
  %s10 = sld [smem:[#allocation0]]
  $region73: #{lstmcnn_forward.3} parent=0
    _
  %s12 = ssub.s32 1, %s10
  %s13 = scalar_select 0, %s12, %s10
  $region1: #{lstmcnn_forward.3} parent=0
    #allocation5 [shape = 'u8[3145728]{0}', space=vmem, size = 0x300000, scoped, tag = 'input window, operand 5, single buffered']
    #allocation6 [shape = 's32[2]{0}', space=sflag, size = 0x8, scoped, tag = 'scoped memory for lstmcnn_forward.3']
    %14 = vsyncpa [#allocation6], 0
    loop: start=0, step=1, limit=4
    $region2: #{lstmcnn_forward.3} parent=1 // loop_pre_header
      _
    $region3: #{lstmcnn_forward.3} parent=1 // loop_header
      %s16 = sphi 0, %s20
      %p17 = scmp.ge.s32.totalorder %s16, 4
      %s26 = sphi 0, %s28
      %s29 = sphi 0, %s26
      %s30 = sphi 0, %s29
      %s46 = sphi 0, %s30
      %s50 = sphi 0, %s50
      %s52 = sphi 0, %s50
      %s53 = sphi 0, %s52
      %s67 = sphi 0, %s53
      %s71 = sphi 0, %s71
      %s73 = sphi 0, %s71
      %s74 = sphi 0, %s73
      %s88 = sphi 0, %s74
      %s92 = sphi 0, %s92
      %s94 = sphi 0, %s92
      %s95 = sphi 0, %s94
      %s109 = sphi 0, %s95
      %s113 = sphi 0, %s113
      %s115 = sphi 0, %s113
      %s116 = sphi 0, %s115
      %s130 = sphi 0, %s116
      %s134 = sphi 0, %s134
      %s136 = sphi 0, %s134
      %s137 = sphi 0, %s136
      %s151 = sphi 0, %s137
      %s155 = sphi 0, %s155
      %s157 = sphi 0, %s155
      %s158 = sphi 0, %s157
      %s172 = sphi 0, %s158
      %s176 = sphi 0, %s176
      %s178 = sphi 0, %s176
      %s179 = sphi 0, %s178
      %s193 = sphi 0, %s179
      %s197 = sphi 0, %s197
      %s199 = sphi 0, %s197
      %s200 = sphi 0, %s199
      %s214 = sphi 0, %s200
      %s220 = sphi 0, %s222
      %s223 = sphi 0, %s220
      %s224 = sphi 0, %s223
      %s240 = sphi 0, %s224
    $region4: #{lstmcnn_forward.3} parent=1 // loop_header_branch
      %19 = sbr.rel (%p17) target = $region8
    $region5: #{lstmcnn_forward.3} parent=1 // loop_body
      %s21 = ssub.s32 %s16, 1
      %s22 = ssub.s32 %s16, 2
      %s23 = sadd.s32 %s16, 1
      %s24 = ssub.s32 %s16, %s23
      %p25 = scmp.eq.s32.totalorder %s24, 0
      %s27 = sadd.s32 %s26, 1
      %s28 = scalar_select %p25, %s26, %s27
      %p31 = pneg %p25
      %p32 = scmp.eq.s32.totalorder %s16, 1
      %p33 = por %p31, %p32
      %p34 = scmp.ne.s32.totalorder %s26, %s29
      %p35 = scmp.eq.s32.totalorder %s16, 0
      %p36 = por %p34, %p35
      %p37 = scmp.ne.s32.totalorder %s26, %s29
      %p38 = scmp.eq.s32.totalorder %s21, 1
      %p39 = por %p37, %p38
      %p40 = scmp.ne.s32.totalorder %s29, %s30
      %p41 = scmp.eq.s32.totalorder %s21, 0
      %p42 = por %p40, %p41
      %p43 = scmp.ne.s32.totalorder %s29, %s30
      %p44 = scmp.eq.s32.totalorder %s22, 1
      %p45 = por %p43, %p44
      %p47 = scmp.ne.s32.totalorder %s30, %s46
      %p48 = scmp.eq.s32.totalorder %s22, 0
      %p49 = por %p47, %p48
      %s51 = sadd.s32 %s50, 1
      %p54 = scmp.eq.s32.totalorder %s16, 1
      %p55 = scmp.ne.s32.totalorder %s50, %s52
      %p56 = scmp.eq.s32.totalorder %s16, 0
      %p57 = por %p55, %p56
      %p58 = scmp.ne.s32.totalorder %s50, %s52
      %p59 = scmp.eq.s32.totalorder %s21, 1
      %p60 = por %p58, %p59
      %p61 = scmp.ne.s32.totalorder %s52, %s53
      %p62 = scmp.eq.s32.totalorder %s21, 0
      %p63 = por %p61, %p62
      %p64 = scmp.ne.s32.totalorder %s52, %s53
      %p65 = scmp.eq.s32.totalorder %s22, 1
      %p66 = por %p64, %p65
      %p68 = scmp.ne.s32.totalorder %s53, %s67
      %p69 = scmp.eq.s32.totalorder %s22, 0
      %p70 = por %p68, %p69
      %s72 = sadd.s32 %s71, 1
      %p75 = scmp.eq.s32.totalorder %s16, 1
      %p76 = scmp.ne.s32.totalorder %s71, %s73
      %p77 = scmp.eq.s32.totalorder %s16, 0
      %p78 = por %p76, %p77
      %p79 = scmp.ne.s32.totalorder %s71, %s73
      %p80 = scmp.eq.s32.totalorder %s21, 1
      %p81 = por %p79, %p80
      %p82 = scmp.ne.s32.totalorder %s73, %s74
      %p83 = scmp.eq.s32.totalorder %s21, 0
      %p84 = por %p82, %p83
      %p85 = scmp.ne.s32.totalorder %s73, %s74
      %p86 = scmp.eq.s32.totalorder %s22, 1
      %p87 = por %p85, %p86
      %p89 = scmp.ne.s32.totalorder %s74, %s88
      %p90 = scmp.eq.s32.totalorder %s22, 0
      %p91 = por %p89, %p90
      %s93 = sadd.s32 %s92, 1
      %p96 = scmp.eq.s32.totalorder %s16, 1
      %p97 = scmp.ne.s32.totalorder %s92, %s94
      %p98 = scmp.eq.s32.totalorder %s16, 0
      %p99 = por %p97, %p98
      %p100 = scmp.ne.s32.totalorder %s92, %s94
      %p101 = scmp.eq.s32.totalorder %s21, 1
      %p102 = por %p100, %p101
      %p103 = scmp.ne.s32.totalorder %s94, %s95
      %p104 = scmp.eq.s32.totalorder %s21, 0
      %p105 = por %p103, %p104
      %p106 = scmp.ne.s32.totalorder %s94, %s95
      %p107 = scmp.eq.s32.totalorder %s22, 1
      %p108 = por %p106, %p107
      %p110 = scmp.ne.s32.totalorder %s95, %s109
      %p111 = scmp.eq.s32.totalorder %s22, 0
      %p112 = por %p110, %p111
      %s114 = sadd.s32 %s113, 1
      %p117 = scmp.eq.s32.totalorder %s16, 1
      %p118 = scmp.ne.s32.totalorder %s113, %s115
      %p119 = scmp.eq.s32.totalorder %s16, 0
      %p120 = por %p118, %p119
      %p121 = scmp.ne.s32.totalorder %s113, %s115
      %p122 = scmp.eq.s32.totalorder %s21, 1
      %p123 = por %p121, %p122
      %p124 = scmp.ne.s32.totalorder %s115, %s116
      %p125 = scmp.eq.s32.totalorder %s21, 0
      %p126 = por %p124, %p125
      %p127 = scmp.ne.s32.totalorder %s115, %s116
      %p128 = scmp.eq.s32.totalorder %s22, 1
      %p129 = por %p127, %p128
      %p131 = scmp.ne.s32.totalorder %s116, %s130
      %p132 = scmp.eq.s32.totalorder %s22, 0
      %p133 = por %p131, %p132
      %s135 = sadd.s32 %s134, 1
      %p138 = scmp.eq.s32.totalorder %s16, 1
      %p139 = scmp.ne.s32.totalorder %s134, %s136
      %p140 = scmp.eq.s32.totalorder %s16, 0
      %p141 = por %p139, %p140
      %p142 = scmp.ne.s32.totalorder %s134, %s136
      %p143 = scmp.eq.s32.totalorder %s21, 1
      %p144 = por %p142, %p143
      %p145 = scmp.ne.s32.totalorder %s136, %s137
      %p146 = scmp.eq.s32.totalorder %s21, 0
      %p147 = por %p145, %p146
      %p148 = scmp.ne.s32.totalorder %s136, %s137
      %p149 = scmp.eq.s32.totalorder %s22, 1
      %p150 = por %p148, %p149
      %p152 = scmp.ne.s32.totalorder %s137, %s151
      %p153 = scmp.eq.s32.totalorder %s22, 0
      %p154 = por %p152, %p153
      %s156 = sadd.s32 %s155, 1
      %p159 = scmp.eq.s32.totalorder %s16, 1
      %p160 = scmp.ne.s32.totalorder %s155, %s157
      %p161 = scmp.eq.s32.totalorder %s16, 0
      %p162 = por %p160, %p161
      %p163 = scmp.ne.s32.totalorder %s155, %s157
      %p164 = scmp.eq.s32.totalorder %s21, 1
      %p165 = por %p163, %p164
      %p166 = scmp.ne.s32.totalorder %s157, %s158
      %p167 = scmp.eq.s32.totalorder %s21, 0
      %p168 = por %p166, %p167
      %p169 = scmp.ne.s32.totalorder %s157, %s158
      %p170 = scmp.eq.s32.totalorder %s22, 1
      %p171 = por %p169, %p170
      %p173 = scmp.ne.s32.totalorder %s158, %s172
      %p174 = scmp.eq.s32.totalorder %s22, 0
      %p175 = por %p173, %p174
      %s177 = sadd.s32 %s176, 1
      %p180 = scmp.eq.s32.totalorder %s16, 1
      %p181 = scmp.ne.s32.totalorder %s176, %s178
      %p182 = scmp.eq.s32.totalorder %s16, 0
      %p183 = por %p181, %p182
      %p184 = scmp.ne.s32.totalorder %s176, %s178
      %p185 = scmp.eq.s32.totalorder %s21, 1
      %p186 = por %p184, %p185
      %p187 = scmp.ne.s32.totalorder %s178, %s179
      %p188 = scmp.eq.s32.totalorder %s21, 0
      %p189 = por %p187, %p188
      %p190 = scmp.ne.s32.totalorder %s178, %s179
      %p191 = scmp.eq.s32.totalorder %s22, 1
      %p192 = por %p190, %p191
      %p194 = scmp.ne.s32.totalorder %s179, %s193
      %p195 = scmp.eq.s32.totalorder %s22, 0
      %p196 = por %p194, %p195
      %s198 = sadd.s32 %s197, 1
      %p201 = scmp.eq.s32.totalorder %s16, 1
      %p202 = scmp.ne.s32.totalorder %s197, %s199
      %p203 = scmp.eq.s32.totalorder %s16, 0
      %p204 = por %p202, %p203
      %p205 = scmp.ne.s32.totalorder %s197, %s199
      %p206 = scmp.eq.s32.totalorder %s21, 1
      %p207 = por %p205, %p206
      %p208 = scmp.ne.s32.totalorder %s199, %s200
      %p209 = scmp.eq.s32.totalorder %s21, 0
      %p210 = por %p208, %p209
      %p211 = scmp.ne.s32.totalorder %s199, %s200
      %p212 = scmp.eq.s32.totalorder %s22, 1
      %p213 = por %p211, %p212
      %p215 = scmp.ne.s32.totalorder %s200, %s214
      %p216 = scmp.eq.s32.totalorder %s22, 0
      %p217 = por %p215, %p216
      %s218 = ssub.s32 %s16, %s23
      %p219 = scmp.eq.s32.totalorder %s218, 0
      %s221 = sadd.s32 %s220, 1
      %s222 = scalar_select %p219, %s220, %s221
      %p225 = pneg %p219
      %p226 = scmp.eq.s32.totalorder %s16, 1
      %p227 = por %p225, %p226
      %p228 = scmp.ne.s32.totalorder %s220, %s223
      %p229 = scmp.eq.s32.totalorder %s16, 0
      %p230 = por %p228, %p229
      %p231 = scmp.ne.s32.totalorder %s220, %s223
      %p232 = scmp.eq.s32.totalorder %s21, 1
      %p233 = por %p231, %p232
      %p234 = scmp.ne.s32.totalorder %s223, %s224
      %p235 = scmp.eq.s32.totalorder %s21, 0
      %p236 = por %p234, %p235
      %p237 = scmp.ne.s32.totalorder %s223, %s224
      %p238 = scmp.eq.s32.totalorder %s22, 1
      %p239 = por %p237, %p238
      %p241 = scmp.ne.s32.totalorder %s224, %s240
      %p242 = scmp.eq.s32.totalorder %s22, 0
      %p243 = por %p241, %p242
      %p244 = scmp.le.s32.totalorder 1, %s16
      %p245 = scmp.lt.s32.totalorder %s16, 3
      %p246 = pnand %p244, %p245
      %p247 = pneg %p246
      // Predicated region
      $region9: #{lstmcnn_forward.3} parent=5 // pred_check
        _
      $region10: #{lstmcnn_forward.3} parent=5 // pred_check_branch
        %249 = sbr.rel (%p246) target = $region12
      $region11: #{lstmcnn_forward.3} parent=5 // pred_region
        %s250 = ssub.s32 %s16, 1
        // Predicated region
        $region13: #{lstmcnn_forward.3} parent=11 // pred_check
          %p251 = pneg %p63
        $region14: #{lstmcnn_forward.3} parent=11 // pred_check_branch
          %253 = sbr.rel (%p251) target = $region16
        $region15: #{lstmcnn_forward.3} parent=11 // pred_region
          _
        $region16: #{lstmcnn_forward.3} parent=11 // pred_fallthru
          _
        // Predicated region
        $region17: #{lstmcnn_forward.3} parent=11 // pred_check
          %p254 = pneg %p84
        $region18: #{lstmcnn_forward.3} parent=11 // pred_check_branch
          %256 = sbr.rel (%p254) target = $region20
        $region19: #{lstmcnn_forward.3} parent=11 // pred_region
          _
        $region20: #{lstmcnn_forward.3} parent=11 // pred_fallthru
          _
        // Predicated region
        $region21: #{lstmcnn_forward.3} parent=11 // pred_check
          %p257 = pneg %p105
        $region22: #{lstmcnn_forward.3} parent=11 // pred_check_branch
          %259 = sbr.rel (%p257) target = $region24
        $region23: #{lstmcnn_forward.3} parent=11 // pred_region
          _
        $region24: #{lstmcnn_forward.3} parent=11 // pred_fallthru
          _
        // Predicated region
        $region25: #{lstmcnn_forward.3} parent=11 // pred_check
          %p260 = pneg %p126
        $region26: #{lstmcnn_forward.3} parent=11 // pred_check_branch
          %262 = sbr.rel (%p260) target = $region28
        $region27: #{lstmcnn_forward.3} parent=11 // pred_region
          _
        $region28: #{lstmcnn_forward.3} parent=11 // pred_fallthru
          _
        // Predicated region
        $region29: #{lstmcnn_forward.3} parent=11 // pred_check
          %p263 = pneg %p147
        $region30: #{lstmcnn_forward.3} parent=11 // pred_check_branch
          %265 = sbr.rel (%p263) target = $region32
        $region31: #{lstmcnn_forward.3} parent=11 // pred_region
          %267 = vsyncadd [#allocation6], 0
          %s268 = sshll.u32 %s5, 4
          %s269 = int_to_ptr.hbm [resolvable:$true] %s268
          %s270 = sshll.u32 [#allocation5], 4
          %s271 = int_to_ptr.vmem [resolvable:$true] %s270
          %276 = dma.hbm_to_vmem [thread:$0]  %s269, 98304, %s271, [#allocation6], 512, 512, 32
        $region32: #{lstmcnn_forward.3} parent=11 // pred_fallthru
          _
        // Predicated region
        $region33: #{lstmcnn_forward.3} parent=11 // pred_check
          %p277 = pneg %p168
        $region34: #{lstmcnn_forward.3} parent=11 // pred_check_branch
          %279 = sbr.rel (%p277) target = $region36
        $region35: #{lstmcnn_forward.3} parent=11 // pred_region
          _
        $region36: #{lstmcnn_forward.3} parent=11 // pred_fallthru
          _
        // Predicated region
        $region37: #{lstmcnn_forward.3} parent=11 // pred_check
          %p280 = pneg %p189
        $region38: #{lstmcnn_forward.3} parent=11 // pred_check_branch
          %282 = sbr.rel (%p280) target = $region40
        $region39: #{lstmcnn_forward.3} parent=11 // pred_region
          _
        $region40: #{lstmcnn_forward.3} parent=11 // pred_fallthru
          _
        // Predicated region
        $region41: #{lstmcnn_forward.3} parent=11 // pred_check
          %p283 = pneg %p210
        $region42: #{lstmcnn_forward.3} parent=11 // pred_check_branch
          %285 = sbr.rel (%p283) target = $region44
        $region43: #{lstmcnn_forward.3} parent=11 // pred_region
          _
        $region44: #{lstmcnn_forward.3} parent=11 // pred_fallthru
          _
      $region12: #{lstmcnn_forward.3} parent=5 // pred_fallthru
        _
      %p286 = scmp.lt.s32.totalorder %s16, 2
      // Predicated region
      $region45: #{lstmcnn_forward.3} parent=5 // pred_check
        %p287 = pneg %p286
      $region46: #{lstmcnn_forward.3} parent=5 // pred_check_branch
        %289 = sbr.rel (%p287) target = $region48
      $region47: #{lstmcnn_forward.3} parent=5 // pred_region
        // Predicated region
        $region49: #{lstmcnn_forward.3} parent=47 // pred_check
          %p290 = pneg %p36
        $region50: #{lstmcnn_forward.3} parent=47 // pred_check_branch
          %292 = sbr.rel (%p290) target = $region52
        $region51: #{lstmcnn_forward.3} parent=47 // pred_region
          %p293 = scmp.lt.s32.totalorder %s16, 1
          %s294 = scalar_select %p293, %s16, 1
          %s295 = smul.addr %s294, 2
          %s296 = smul.addr %s295, 8
          %s297 = scalar_lea.vmem %s0, %s296
        $region52: #{lstmcnn_forward.3} parent=47 // pred_fallthru
          _
      $region48: #{lstmcnn_forward.3} parent=5 // pred_fallthru
        _
      %p298 = scmp.le.s32.totalorder 1, %s16
      %p299 = scmp.lt.s32.totalorder %s16, 3
      %p300 = pnand %p298, %p299
      %p301 = pneg %p300
      // Predicated region
      $region53: #{lstmcnn_forward.3} parent=5 // pred_check
        _
      $region54: #{lstmcnn_forward.3} parent=5 // pred_check_branch
        %303 = sbr.rel (%p300) target = $region56
      $region55: #{lstmcnn_forward.3} parent=5 // pred_region
        %s304 = ssub.s32 %s16, 1
        // Predicated region
        $region57: #{lstmcnn_forward.3} parent=55 // pred_check
          %p305 = pneg %p147
        $region58: #{lstmcnn_forward.3} parent=55 // pred_check_branch
          %307 = sbr.rel (%p305) target = $region60
        $region59: #{lstmcnn_forward.3} parent=55 // pred_region
          %309 = dma.done [#allocation6], 98304
        $region60: #{lstmcnn_forward.3} parent=55 // pred_fallthru
          _
        %p310 = scmp.lt.s32.totalorder %s21, 1
        %s311 = scalar_select %p310, %s21, 1
        %s312 = smul.addr %s311, 2
        %s313 = smul.addr %s312, 8
        %s314 = scalar_lea.vmem %s0, %s313
        %p315 = pneg %p42
        %p316 = pneg %p39
        %p317 = pneg %p63
        %p318 = pneg %p60
        %p319 = pneg %p84
        %p320 = pneg %p81
        %p321 = pneg %p105
        %p322 = pneg %p102
        %p323 = pneg %p126
        %p324 = pneg %p123
        %p325 = pneg %p147
        %p326 = pneg %p144
        %p327 = pneg %p168
        %p328 = pneg %p165
        %p329 = pneg %p189
        %p330 = pneg %p186
        %p331 = pneg %p210
        %p332 = pneg %p207
        %p333 = pneg %p236
        %p334 = pneg %p233
        %p335 = scmp.lt.s32.totalorder %s21, 1
        %s336 = scalar_select %p335, %s21, 1
        %s337 = smul.addr %s336, 2
        %s338 = smul.addr %s337, 8
        %s339 = scalar_lea.vmem %s9, %s338
        %p340 = scmp.lt.s32.totalorder %s21, 1
        %s341 = scalar_select %p340, %s21, 1
        %s342 = smul.addr %s341, 2
        %s343 = smul.addr %s342, 8
        %s344 = scalar_lea.vmem %s0, %s343
        %p345 = scmp.lt.s32.totalorder %s21, 1
        %s346 = scalar_select %p345, %s21, 1
        %s347 = smul.addr %s346, 2
        %s348 = smul.addr %s347, 8
        %s349 = scalar_lea.vmem %s9, %s348
        %vm350 = vcmask 130048
        %351 = vst.msk [vmem:[#allocation2] sm:$0xff] %vm350, 0.0
        %352 = vst.msk [vmem:[#allocation2 + $0x8] sm:$0xff] %vm350, 0.0
        %353 = vst [vmem:[#allocation3] sm:$0xff] 0.0
        %354 = vst [vmem:[#allocation3 + $0x8] sm:$0xff] 0.0
        %355 = vst [vmem:[#allocation3 + $0x10] sm:$0xff] 0.0
        %356 = vst [vmem:[#allocation3 + $0x18] sm:$0xff] 0.0
        %357 = vst [vmem:[#allocation3 + $0x20] sm:$0xff] 0.0
        %358 = vst [vmem:[#allocation3 + $0x28] sm:$0xff] 0.0
        %359 = vst [vmem:[#allocation3 + $0x30] sm:$0xff] 0.0
        %360 = vst [vmem:[#allocation3 + $0x38] sm:$0xff] 0.0
        %361 = vst [vmem:[#allocation4] sm:$0xff] 0.0
        %362 = vst [vmem:[#allocation4 + $0x8] sm:$0xff] 0.0
        %363 = vst [vmem:[#allocation4 + $0x10] sm:$0xff] 0.0
        %364 = vst [vmem:[#allocation4 + $0x18] sm:$0xff] 0.0
        %365 = vst [vmem:[#allocation4 + $0x20] sm:$0xff] 0.0
        %366 = vst [vmem:[#allocation4 + $0x28] sm:$0xff] 0.0
        %367 = vst [vmem:[#allocation4 + $0x30] sm:$0xff] 0.0
        %368 = vst [vmem:[#allocation4 + $0x38] sm:$0xff] 0.0
        %v369 = vld [vmem:[%s344] sm:$0xff]
        %v370 = vld [vmem:[%s344 + $0x8] sm:$0x3f]
        %371 = vst.msk [vmem:[#allocation2 + $0x1] sm:$0xff] %vm350, %v369
        %vm372 = vcmask 128000
        %373 = vst.msk [vmem:[#allocation2 + $0x9] sm:$0x3f] %vm372, %v370
        %v374 = vld [vmem:[#allocation2] sm:$0xff]
        %v375 = vld [vmem:[#allocation2 + $0x8] sm:$0x3f]
        %v376 = vld [vmem:[%s1] sm:$0xff]
        %v377 = vld [vmem:[%s1 + $0x8] sm:$0xff]
        %v378 = vld [vmem:[%s1 + $0x10] sm:$0xff]
        %v379 = vld [vmem:[%s1 + $0x18] sm:$0xff]
        %v380 = vld [vmem:[%s1 + $0x20] sm:$0xff]
        %v381 = vld [vmem:[%s1 + $0x28] sm:$0xff]
        %v382 = vld [vmem:[%s1 + $0x30] sm:$0xff]
        %v383 = vld [vmem:[%s1 + $0x38] sm:$0xff]
        %v384 = vld [vmem:[#allocation2 + $0x1] sm:$0xff]
        %v385 = vld [vmem:[#allocation2 + $0x9] sm:$0x3f]
        %s386 = scalar_lea.vmem %s1, 64
        %v387 = vld [vmem:[%s386] sm:$0xff]
        %v388 = vld [vmem:[%s386 + $0x8] sm:$0xff]
        %v389 = vld [vmem:[%s386 + $0x10] sm:$0xff]
        %v390 = vld [vmem:[%s386 + $0x18] sm:$0xff]
        %v391 = vld [vmem:[%s386 + $0x20] sm:$0xff]
        %v392 = vld [vmem:[%s386 + $0x28] sm:$0xff]
        %v393 = vld [vmem:[%s386 + $0x30] sm:$0xff]
        %v394 = vld [vmem:[%s386 + $0x38] sm:$0xff]
        %v396 = vsel %vm350, %v384, 0
        %v399 = vsel %vm350, %v385, 0
        %401 = vmatpush.msra.mxu0 0.0
        %402 = vmatpush.msra.mxu0 0.0
        %403 = vmatpush.msra.mxu0 0.0
        %404 = vmatpush.msra.mxu0 0.0
        %405 = vmatpush.msra.mxu0 0.0
        %406 = vmatpush.msra.mxu0 0.0
        %407 = vmatpush.msra.mxu0 0.0
        %408 = vmatpush.msra.mxu0 0.0
        %409 = vmatpush.msra.mxu0 0.0
        %410 = vmatpush.msra.mxu0 0.0
        %411 = vmatpush.msra.mxu0 0.0
        %412 = vmatpush.msra.mxu0 0.0
        %413 = vmatpush.msra.mxu0 0.0
        %414 = vmatpush.msra.mxu0 0.0
        %415 = vmatpush.msra.mxu0 %v391
        %416 = vmatpush.msra.mxu0 %v387
        %417 = vmatmul.f32.gmra.mxu0 %v396
        %v418 = vpop.f32.mrf.mxu0
        %v419 = vadd.f32 0.0, %v418
        %420 = vmatmul.f32.gmra.mxu0 %v399
        %v421 = vpop.f32.mrf.mxu0
        %v422 = vadd.f32 0.0, %v421
        %423 = vdwg.mxu0
        %424 = vmatpush.msra.mxu0 0.0
        %425 = vmatpush.msra.mxu0 0.0
        %426 = vmatpush.msra.mxu0 0.0
        %427 = vmatpush.msra.mxu0 0.0
        %428 = vmatpush.msra.mxu0 0.0
        %429 = vmatpush.msra.mxu0 0.0
        %430 = vmatpush.msra.mxu0 0.0
        %431 = vmatpush.msra.mxu0 0.0
        %432 = vmatpush.msra.mxu0 0.0
        %433 = vmatpush.msra.mxu0 0.0
        %434 = vmatpush.msra.mxu0 0.0
        %435 = vmatpush.msra.mxu0 0.0
        %436 = vmatpush.msra.mxu0 0.0
        %437 = vmatpush.msra.mxu0 0.0
        %438 = vmatpush.msra.mxu0 %v392
        %439 = vmatpush.msra.mxu0 %v388
        %440 = vmatmul.f32.gmra.mxu0 %v396
        %v441 = vpop.f32.mrf.mxu0
        %v442 = vadd.f32 0.0, %v441
        %443 = vmatmul.f32.gmra.mxu0 %v399
        %v444 = vpop.f32.mrf.mxu0
        %v445 = vadd.f32 0.0, %v444
        %446 = vdwg.mxu0
        %447 = vmatpush.msra.mxu0 0.0
        %448 = vmatpush.msra.mxu0 0.0
        %449 = vmatpush.msra.mxu0 0.0
        %450 = vmatpush.msra.mxu0 0.0
        %451 = vmatpush.msra.mxu0 0.0
        %452 = vmatpush.msra.mxu0 0.0
        %453 = vmatpush.msra.mxu0 0.0
        %454 = vmatpush.msra.mxu0 0.0
        %455 = vmatpush.msra.mxu0 0.0
        %456 = vmatpush.msra.mxu0 0.0
        %457 = vmatpush.msra.mxu0 0.0
        %458 = vmatpush.msra.mxu0 0.0
        %459 = vmatpush.msra.mxu0 0.0
        %460 = vmatpush.msra.mxu0 0.0
        %461 = vmatpush.msra.mxu0 %v393
        %462 = vmatpush.msra.mxu0 %v389
        %463 = vmatmul.f32.gmra.mxu0 %v396
        %v464 = vpop.f32.mrf.mxu0
        %v465 = vadd.f32 0.0, %v464
        %466 = vmatmul.f32.gmra.mxu0 %v399
        %v467 = vpop.f32.mrf.mxu0
        %v468 = vadd.f32 0.0, %v467
        %469 = vdwg.mxu0
        %470 = vmatpush.msra.mxu0 0.0
        %471 = vmatpush.msra.mxu0 0.0
        %472 = vmatpush.msra.mxu0 0.0
        %473 = vmatpush.msra.mxu0 0.0
        %474 = vmatpush.msra.mxu0 0.0
        %475 = vmatpush.msra.mxu0 0.0
        %476 = vmatpush.msra.mxu0 0.0
        %477 = vmatpush.msra.mxu0 0.0
        %478 = vmatpush.msra.mxu0 0.0
        %479 = vmatpush.msra.mxu0 0.0
        %480 = vmatpush.msra.mxu0 0.0
        %481 = vmatpush.msra.mxu0 0.0
        %482 = vmatpush.msra.mxu0 0.0
        %483 = vmatpush.msra.mxu0 0.0
        %484 = vmatpush.msra.mxu0 %v394
        %485 = vmatpush.msra.mxu0 %v390
        %486 = vmatmul.f32.gmra.mxu0 %v396
        %v487 = vpop.f32.mrf.mxu0
        %v488 = vadd.f32 0.0, %v487
        %489 = vmatmul.f32.gmra.mxu0 %v399
        %v490 = vpop.f32.mrf.mxu0
        %v491 = vadd.f32 0.0, %v490
        %492 = vdwg.mxu0
        %v494 = vsel %vm350, %v374, 0
        %v497 = vsel %vm350, %v375, 0
        %499 = vmatpush.msra.mxu0 0.0
        %500 = vmatpush.msra.mxu0 0.0
        %501 = vmatpush.msra.mxu0 0.0
        %502 = vmatpush.msra.mxu0 0.0
        %503 = vmatpush.msra.mxu0 0.0
        %504 = vmatpush.msra.mxu0 0.0
        %505 = vmatpush.msra.mxu0 0.0
        %506 = vmatpush.msra.mxu0 0.0
        %507 = vmatpush.msra.mxu0 0.0
        %508 = vmatpush.msra.mxu0 0.0
        %509 = vmatpush.msra.mxu0 0.0
        %510 = vmatpush.msra.mxu0 0.0
        %511 = vmatpush.msra.mxu0 0.0
        %512 = vmatpush.msra.mxu0 0.0
        %513 = vmatpush.msra.mxu0 %v380
        %514 = vmatpush.msra.mxu0 %v376
        %515 = vmatmul.f32.gmra.mxu0 %v494
        %v516 = vpop.f32.mrf.mxu0
        %v517 = vadd.f32 %v419, %v516
        %518 = vmatmul.f32.gmra.mxu0 %v497
        %v519 = vpop.f32.mrf.mxu0
        %v520 = vadd.f32 %v422, %v519
        %521 = vdwg.mxu0
        %522 = vmatpush.msra.mxu0 0.0
        %523 = vmatpush.msra.mxu0 0.0
        %524 = vmatpush.msra.mxu0 0.0
        %525 = vmatpush.msra.mxu0 0.0
        %526 = vmatpush.msra.mxu0 0.0
        %527 = vmatpush.msra.mxu0 0.0
        %528 = vmatpush.msra.mxu0 0.0
        %529 = vmatpush.msra.mxu0 0.0
        %530 = vmatpush.msra.mxu0 0.0
        %531 = vmatpush.msra.mxu0 0.0
        %532 = vmatpush.msra.mxu0 0.0
        %533 = vmatpush.msra.mxu0 0.0
        %534 = vmatpush.msra.mxu0 0.0
        %535 = vmatpush.msra.mxu0 0.0
        %536 = vmatpush.msra.mxu0 %v381
        %537 = vmatpush.msra.mxu0 %v377
        %538 = vmatmul.f32.gmra.mxu0 %v494
        %v539 = vpop.f32.mrf.mxu0
        %v540 = vadd.f32 %v442, %v539
        %541 = vmatmul.f32.gmra.mxu0 %v497
        %v542 = vpop.f32.mrf.mxu0
        %v543 = vadd.f32 %v445, %v542
        %544 = vdwg.mxu0
        %545 = vmatpush.msra.mxu0 0.0
        %546 = vmatpush.msra.mxu0 0.0
        %547 = vmatpush.msra.mxu0 0.0
        %548 = vmatpush.msra.mxu0 0.0
        %549 = vmatpush.msra.mxu0 0.0
        %550 = vmatpush.msra.mxu0 0.0
        %551 = vmatpush.msra.mxu0 0.0
        %552 = vmatpush.msra.mxu0 0.0
        %553 = vmatpush.msra.mxu0 0.0
        %554 = vmatpush.msra.mxu0 0.0
        %555 = vmatpush.msra.mxu0 0.0
        %556 = vmatpush.msra.mxu0 0.0
        %557 = vmatpush.msra.mxu0 0.0
        %558 = vmatpush.msra.mxu0 0.0
        %559 = vmatpush.msra.mxu0 %v382
        %560 = vmatpush.msra.mxu0 %v378
        %561 = vmatmul.f32.gmra.mxu0 %v494
        %v562 = vpop.f32.mrf.mxu0
        %v563 = vadd.f32 %v465, %v562
        %564 = vmatmul.f32.gmra.mxu0 %v497
        %v565 = vpop.f32.mrf.mxu0
        %v566 = vadd.f32 %v468, %v565
        %567 = vdwg.mxu0
        %568 = vmatpush.msra.mxu0 0.0
        %569 = vmatpush.msra.mxu0 0.0
        %570 = vmatpush.msra.mxu0 0.0
        %571 = vmatpush.msra.mxu0 0.0
        %572 = vmatpush.msra.mxu0 0.0
        %573 = vmatpush.msra.mxu0 0.0
        %574 = vmatpush.msra.mxu0 0.0
        %575 = vmatpush.msra.mxu0 0.0
        %576 = vmatpush.msra.mxu0 0.0
        %577 = vmatpush.msra.mxu0 0.0
        %578 = vmatpush.msra.mxu0 0.0
        %579 = vmatpush.msra.mxu0 0.0
        %580 = vmatpush.msra.mxu0 0.0
        %581 = vmatpush.msra.mxu0 0.0
        %582 = vmatpush.msra.mxu0 %v383
        %583 = vmatpush.msra.mxu0 %v379
        %584 = vmatmul.f32.gmra.mxu0 %v494
        %v585 = vpop.f32.mrf.mxu0
        %v586 = vadd.f32 %v488, %v585
        %587 = vmatmul.f32.gmra.mxu0 %v497
        %v588 = vpop.f32.mrf.mxu0
        %v589 = vadd.f32 %v491, %v588
        %590 = vdwg.mxu0
        %v591 = vld [vmem:[#allocation2 + $0x2] sm:$0xff]
        %v592 = vld [vmem:[#allocation2 + $0xa] sm:$0x3f]
        %s593 = scalar_lea.vmem %s1, 128
        %v594 = vld [vmem:[%s593] sm:$0xff]
        %v595 = vld [vmem:[%s593 + $0x8] sm:$0xff]
        %v596 = vld [vmem:[%s593 + $0x10] sm:$0xff]
        %v597 = vld [vmem:[%s593 + $0x18] sm:$0xff]
        %v598 = vld [vmem:[%s593 + $0x20] sm:$0xff]
        %v599 = vld [vmem:[%s593 + $0x28] sm:$0xff]
        %v600 = vld [vmem:[%s593 + $0x30] sm:$0xff]
        %v601 = vld [vmem:[%s593 + $0x38] sm:$0xff]
        %v603 = vsel %vm350, %v591, 0
        %v606 = vsel %vm350, %v592, 0
        %608 = vmatpush.msra.mxu0 0.0
        %609 = vmatpush.msra.mxu0 0.0
        %610 = vmatpush.msra.mxu0 0.0
        %611 = vmatpush.msra.mxu0 0.0
        %612 = vmatpush.msra.mxu0 0.0
        %613 = vmatpush.msra.mxu0 0.0
        %614 = vmatpush.msra.mxu0 0.0
        %615 = vmatpush.msra.mxu0 0.0
        %616 = vmatpush.msra.mxu0 0.0
        %617 = vmatpush.msra.mxu0 0.0
        %618 = vmatpush.msra.mxu0 0.0
        %619 = vmatpush.msra.mxu0 0.0
        %620 = vmatpush.msra.mxu0 0.0
        %621 = vmatpush.msra.mxu0 0.0
        %622 = vmatpush.msra.mxu0 %v598
        %623 = vmatpush.msra.mxu0 %v594
        %624 = vmatmul.f32.gmra.mxu0 %v603
        %v625 = vpop.f32.mrf.mxu0
        %v626 = vadd.f32 0.0, %v625
        %627 = vmatmul.f32.gmra.mxu0 %v606
        %v628 = vpop.f32.mrf.mxu0
        %v629 = vadd.f32 0.0, %v628
        %630 = vdwg.mxu0
        %631 = vmatpush.msra.mxu0 0.0
        %632 = vmatpush.msra.mxu0 0.0
        %633 = vmatpush.msra.mxu0 0.0
        %634 = vmatpush.msra.mxu0 0.0
        %635 = vmatpush.msra.mxu0 0.0
        %636 = vmatpush.msra.mxu0 0.0
        %637 = vmatpush.msra.mxu0 0.0
        %638 = vmatpush.msra.mxu0 0.0
        %639 = vmatpush.msra.mxu0 0.0
        %640 = vmatpush.msra.mxu0 0.0
        %641 = vmatpush.msra.mxu0 0.0
        %642 = vmatpush.msra.mxu0 0.0
        %643 = vmatpush.msra.mxu0 0.0
        %644 = vmatpush.msra.mxu0 0.0
        %645 = vmatpush.msra.mxu0 %v599
        %646 = vmatpush.msra.mxu0 %v595
        %647 = vmatmul.f32.gmra.mxu0 %v603
        %v648 = vpop.f32.mrf.mxu0
        %v649 = vadd.f32 0.0, %v648
        %650 = vmatmul.f32.gmra.mxu0 %v606
        %v651 = vpop.f32.mrf.mxu0
        %v652 = vadd.f32 0.0, %v651
        %653 = vdwg.mxu0
        %654 = vmatpush.msra.mxu0 0.0
        %655 = vmatpush.msra.mxu0 0.0
        %656 = vmatpush.msra.mxu0 0.0
        %657 = vmatpush.msra.mxu0 0.0
        %658 = vmatpush.msra.mxu0 0.0
        %659 = vmatpush.msra.mxu0 0.0
        %660 = vmatpush.msra.mxu0 0.0
        %661 = vmatpush.msra.mxu0 0.0
        %662 = vmatpush.msra.mxu0 0.0
        %663 = vmatpush.msra.mxu0 0.0
        %664 = vmatpush.msra.mxu0 0.0
        %665 = vmatpush.msra.mxu0 0.0
        %666 = vmatpush.msra.mxu0 0.0
        %667 = vmatpush.msra.mxu0 0.0
        %668 = vmatpush.msra.mxu0 %v600
        %669 = vmatpush.msra.mxu0 %v596
        %670 = vmatmul.f32.gmra.mxu0 %v603
        %v671 = vpop.f32.mrf.mxu0
        %v672 = vadd.f32 0.0, %v671
        %673 = vmatmul.f32.gmra.mxu0 %v606
        %v674 = vpop.f32.mrf.mxu0
        %v675 = vadd.f32 0.0, %v674
        %676 = vdwg.mxu0
        %677 = vmatpush.msra.mxu0 0.0
        %678 = vmatpush.msra.mxu0 0.0
        %679 = vmatpush.msra.mxu0 0.0
        %680 = vmatpush.msra.mxu0 0.0
        %681 = vmatpush.msra.mxu0 0.0
        %682 = vmatpush.msra.mxu0 0.0
        %683 = vmatpush.msra.mxu0 0.0
        %684 = vmatpush.msra.mxu0 0.0
        %685 = vmatpush.msra.mxu0 0.0
        %686 = vmatpush.msra.mxu0 0.0
        %687 = vmatpush.msra.mxu0 0.0
        %688 = vmatpush.msra.mxu0 0.0
        %689 = vmatpush.msra.mxu0 0.0
        %690 = vmatpush.msra.mxu0 0.0
        %691 = vmatpush.msra.mxu0 %v601
        %692 = vmatpush.msra.mxu0 %v597
        %693 = vmatmul.f32.gmra.mxu0 %v603
        %v694 = vpop.f32.mrf.mxu0
        %v695 = vadd.f32 0.0, %v694
        %696 = vmatmul.f32.gmra.mxu0 %v606
        %v697 = vpop.f32.mrf.mxu0
        %v698 = vadd.f32 0.0, %v697
        %699 = vdwg.mxu0
        %v700 = vadd.f32 %v517, %v626
        %v701 = vadd.f32 %v540, %v649
        %v702 = vadd.f32 %v563, %v672
        %v703 = vadd.f32 %v586, %v695
        %v704 = vadd.f32 %v520, %v629
        %v705 = vadd.f32 %v543, %v652
        %v706 = vadd.f32 %v566, %v675
        %v707 = vadd.f32 %v589, %v698
        %v708 = vld [vmem:[%s2] sm:$0xf]
        %v710 = vperm.slane %v708, 0
        %v711 = vperm.slane %v708, 1
        %v712 = vperm.slane %v708, 2
        %v713 = vperm.slane %v708, 3
        %v718 = vadd.f32 %v700, %v710
        %v719 = vadd.f32 %v701, %v711
        %v720 = vadd.f32 %v702, %v712
        %v721 = vadd.f32 %v703, %v713
        %v722 = vadd.f32 %v704, %v710
        %v723 = vadd.f32 %v705, %v711
        %v724 = vadd.f32 %v706, %v712
        %v725 = vadd.f32 %v707, %v713
        %v726 = vmax.f32 %v718, 0.0
        %v727 = vmax.f32 %v719, 0.0
        %v728 = vmax.f32 %v720, 0.0
        %v729 = vmax.f32 %v721, 0.0
        %v730 = vmax.f32 %v722, 0.0
        %v731 = vmax.f32 %v723, 0.0
        %v732 = vmax.f32 %v724, 0.0
        %v733 = vmax.f32 %v725, 0.0
        %vm742 = vcmask 1040384
        %v743 = vrot.slane %v726, 7
        %v744 = vrot.slane %v727, 7
        %v745 = vrot.slane %v728, 7
        %v746 = vrot.slane %v729, 7
        %v747 = vrot.slane %v730, 7
        %v748 = vsel %vm742, %v743, %v747
        %v749 = vrot.slane %v731, 7
        %v750 = vsel %vm742, %v744, %v749
        %v751 = vrot.slane %v732, 7
        %v752 = vsel %vm742, %v745, %v751
        %v753 = vrot.slane %v733, 7
        %v754 = vsel %vm742, %v746, %v753
        %763 = vst [vmem:[#allocation3] sm:$0xfe] %v743
        %764 = vst [vmem:[#allocation3 + $0x8] sm:$0xfe] %v744
        %765 = vst [vmem:[#allocation3 + $0x10] sm:$0xfe] %v745
        %766 = vst [vmem:[#allocation3 + $0x18] sm:$0xfe] %v746
        %767 = vst [vmem:[#allocation3 + $0x20] sm:$0x7f] %v748
        %768 = vst [vmem:[#allocation3 + $0x28] sm:$0x7f] %v750
        %769 = vst [vmem:[#allocation3 + $0x30] sm:$0x7f] %v752
        %770 = vst [vmem:[#allocation3 + $0x38] sm:$0x7f] %v754
        %v771 = vld [vmem:[#allocation3] sm:$0xff]
        %v772 = vld [vmem:[#allocation3 + $0x8] sm:$0xff]
        %v773 = vld [vmem:[#allocation3 + $0x10] sm:$0xff]
        %v774 = vld [vmem:[#allocation3 + $0x18] sm:$0xff]
        %v775 = vld [vmem:[#allocation3 + $0x20] sm:$0x3f]
        %v776 = vld [vmem:[#allocation3 + $0x28] sm:$0x3f]
        %v777 = vld [vmem:[#allocation3 + $0x30] sm:$0x3f]
        %v778 = vld [vmem:[#allocation3 + $0x38] sm:$0x3f]
        %v779 = vld [vmem:[%s3] sm:$0xff]
        %v780 = vld [vmem:[%s3 + $0x8] sm:$0xff]
        %v781 = vld [vmem:[%s3 + $0x10] sm:$0xff]
        %v782 = vld [vmem:[%s3 + $0x18] sm:$0xff]
        %v783 = vld [vmem:[%s3 + $0x20] sm:$0xff]
        %v784 = vld [vmem:[%s3 + $0x28] sm:$0xff]
        %v785 = vld [vmem:[%s3 + $0x30] sm:$0xff]
        %v786 = vld [vmem:[%s3 + $0x38] sm:$0xff]
        %v787 = vld [vmem:[%s3 + $0x40] sm:$0xff]
        %v788 = vld [vmem:[%s3 + $0x48] sm:$0xff]
        %v789 = vld [vmem:[%s3 + $0x50] sm:$0xff]
        %v790 = vld [vmem:[%s3 + $0x58] sm:$0xff]
        %v791 = vld [vmem:[%s3 + $0x60] sm:$0xff]
        %v792 = vld [vmem:[%s3 + $0x68] sm:$0xff]
        %v793 = vld [vmem:[%s3 + $0x70] sm:$0xff]
        %v794 = vld [vmem:[%s3 + $0x78] sm:$0xff]
        %v795 = vld [vmem:[%s3 + $0x80] sm:$0xff]
        %v796 = vld [vmem:[%s3 + $0x88] sm:$0xff]
        %v797 = vld [vmem:[%s3 + $0x90] sm:$0xff]
        %v798 = vld [vmem:[%s3 + $0x98] sm:$0xff]
        %v799 = vld [vmem:[%s3 + $0xa0] sm:$0xff]
        %v800 = vld [vmem:[%s3 + $0xa8] sm:$0xff]
        %v801 = vld [vmem:[%s3 + $0xb0] sm:$0xff]
        %v802 = vld [vmem:[%s3 + $0xb8] sm:$0xff]
        %v803 = vld [vmem:[%s3 + $0xc0] sm:$0xff]
        %v804 = vld [vmem:[%s3 + $0xc8] sm:$0xff]
        %v805 = vld [vmem:[%s3 + $0xd0] sm:$0xff]
        %v806 = vld [vmem:[%s3 + $0xd8] sm:$0xff]
        %v807 = vld [vmem:[%s3 + $0xe0] sm:$0xff]
        %v808 = vld [vmem:[%s3 + $0xe8] sm:$0xff]
        %v809 = vld [vmem:[%s3 + $0xf0] sm:$0xff]
        %v810 = vld [vmem:[%s3 + $0xf8] sm:$0xff]
        %v811 = vld [vmem:[%s3 + $0x100] sm:$0xff]
        %v812 = vld [vmem:[%s3 + $0x108] sm:$0xff]
        %v813 = vld [vmem:[%s3 + $0x110] sm:$0xff]
        %v814 = vld [vmem:[%s3 + $0x118] sm:$0xff]
        %v815 = vld [vmem:[%s3 + $0x120] sm:$0xff]
        %v816 = vld [vmem:[%s3 + $0x128] sm:$0xff]
        %v817 = vld [vmem:[%s3 + $0x130] sm:$0xff]
        %v818 = vld [vmem:[%s3 + $0x138] sm:$0xff]
        %v819 = vld [vmem:[%s3 + $0x140] sm:$0xff]
        %v820 = vld [vmem:[%s3 + $0x148] sm:$0xff]
        %v821 = vld [vmem:[%s3 + $0x150] sm:$0xff]
        %v822 = vld [vmem:[%s3 + $0x158] sm:$0xff]
        %v823 = vld [vmem:[%s3 + $0x160] sm:$0xff]
        %v824 = vld [vmem:[%s3 + $0x168] sm:$0xff]
        %v825 = vld [vmem:[%s3 + $0x170] sm:$0xff]
        %v826 = vld [vmem:[%s3 + $0x178] sm:$0xff]
        %v827 = vld [vmem:[%s3 + $0x180] sm:$0xff]
        %v828 = vld [vmem:[%s3 + $0x188] sm:$0xff]
        %v829 = vld [vmem:[%s3 + $0x190] sm:$0xff]
        %v830 = vld [vmem:[%s3 + $0x198] sm:$0xff]
        %v831 = vld [vmem:[%s3 + $0x1a0] sm:$0xff]
        %v832 = vld [vmem:[%s3 + $0x1a8] sm:$0xff]
        %v833 = vld [vmem:[%s3 + $0x1b0] sm:$0xff]
        %v834 = vld [vmem:[%s3 + $0x1b8] sm:$0xff]
        %v835 = vld [vmem:[%s3 + $0x1c0] sm:$0xff]
        %v836 = vld [vmem:[%s3 + $0x1c8] sm:$0xff]
        %v837 = vld [vmem:[%s3 + $0x1d0] sm:$0xff]
        %v838 = vld [vmem:[%s3 + $0x1d8] sm:$0xff]
        %v839 = vld [vmem:[%s3 + $0x1e0] sm:$0xff]
        %v840 = vld [vmem:[%s3 + $0x1e8] sm:$0xff]
        %v841 = vld [vmem:[%s3 + $0x1f0] sm:$0xff]
        %v842 = vld [vmem:[%s3 + $0x1f8] sm:$0xff]
        %v843 = vld [vmem:[%s3 + $0x200] sm:$0xff]
        %v844 = vld [vmem:[%s3 + $0x208] sm:$0xff]
        %v845 = vld [vmem:[%s3 + $0x210] sm:$0xff]
        %v846 = vld [vmem:[%s3 + $0x218] sm:$0xff]
        %v847 = vld [vmem:[%s3 + $0x220] sm:$0xff]
        %v848 = vld [vmem:[%s3 + $0x228] sm:$0xff]
        %v849 = vld [vmem:[%s3 + $0x230] sm:$0xff]
        %v850 = vld [vmem:[%s3 + $0x238] sm:$0xff]
        %v851 = vld [vmem:[%s3 + $0x240] sm:$0xff]
        %v852 = vld [vmem:[%s3 + $0x248] sm:$0xff]
        %v853 = vld [vmem:[%s3 + $0x250] sm:$0xff]
        %v854 = vld [vmem:[%s3 + $0x258] sm:$0xff]
        %v855 = vld [vmem:[%s3 + $0x260] sm:$0xff]
        %v856 = vld [vmem:[%s3 + $0x268] sm:$0xff]
        %v857 = vld [vmem:[%s3 + $0x270] sm:$0xff]
        %v858 = vld [vmem:[%s3 + $0x278] sm:$0xff]
        %v859 = vld [vmem:[%s3 + $0x280] sm:$0xff]
        %v860 = vld [vmem:[%s3 + $0x288] sm:$0xff]
        %v861 = vld [vmem:[%s3 + $0x290] sm:$0xff]
        %v862 = vld [vmem:[%s3 + $0x298] sm:$0xff]
        %v863 = vld [vmem:[%s3 + $0x2a0] sm:$0xff]
        %v864 = vld [vmem:[%s3 + $0x2a8] sm:$0xff]
        %v865 = vld [vmem:[%s3 + $0x2b0] sm:$0xff]
        %v866 = vld [vmem:[%s3 + $0x2b8] sm:$0xff]
        %v867 = vld [vmem:[%s3 + $0x2c0] sm:$0xff]
        %v868 = vld [vmem:[%s3 + $0x2c8] sm:$0xff]
        %v869 = vld [vmem:[%s3 + $0x2d0] sm:$0xff]
        %v870 = vld [vmem:[%s3 + $0x2d8] sm:$0xff]
        %v871 = vld [vmem:[%s3 + $0x2e0] sm:$0xff]
        %v872 = vld [vmem:[%s3 + $0x2e8] sm:$0xff]
        %v873 = vld [vmem:[%s3 + $0x2f0] sm:$0xff]
        %v874 = vld [vmem:[%s3 + $0x2f8] sm:$0xff]
        %v875 = vld [vmem:[%s3 + $0x300] sm:$0xff]
        %v876 = vld [vmem:[%s3 + $0x308] sm:$0xff]
        %v877 = vld [vmem:[%s3 + $0x310] sm:$0xff]
        %v878 = vld [vmem:[%s3 + $0x318] sm:$0xff]
        %v879 = vld [vmem:[%s3 + $0x320] sm:$0xff]
        %v880 = vld [vmem:[%s3 + $0x328] sm:$0xff]
        %v881 = vld [vmem:[%s3 + $0x330] sm:$0xff]
        %v882 = vld [vmem:[%s3 + $0x338] sm:$0xff]
        %v883 = vld [vmem:[%s3 + $0x340] sm:$0xff]
        %v884 = vld [vmem:[%s3 + $0x348] sm:$0xff]
        %v885 = vld [vmem:[%s3 + $0x350] sm:$0xff]
        %v886 = vld [vmem:[%s3 + $0x358] sm:$0xff]
        %v887 = vld [vmem:[%s3 + $0x360] sm:$0xff]
        %v888 = vld [vmem:[%s3 + $0x368] sm:$0xff]
        %v889 = vld [vmem:[%s3 + $0x370] sm:$0xff]
        %v890 = vld [vmem:[%s3 + $0x378] sm:$0xff]
        %v891 = vld [vmem:[%s3 + $0x380] sm:$0xff]
        %v892 = vld [vmem:[%s3 + $0x388] sm:$0xff]
        %v893 = vld [vmem:[%s3 + $0x390] sm:$0xff]
        %v894 = vld [vmem:[%s3 + $0x398] sm:$0xff]
        %v895 = vld [vmem:[%s3 + $0x3a0] sm:$0xff]
        %v896 = vld [vmem:[%s3 + $0x3a8] sm:$0xff]
        %v897 = vld [vmem:[%s3 + $0x3b0] sm:$0xff]
        %v898 = vld [vmem:[%s3 + $0x3b8] sm:$0xff]
        %v899 = vld [vmem:[%s3 + $0x3c0] sm:$0xff]
        %v900 = vld [vmem:[%s3 + $0x3c8] sm:$0xff]
        %v901 = vld [vmem:[%s3 + $0x3d0] sm:$0xff]
        %v902 = vld [vmem:[%s3 + $0x3d8] sm:$0xff]
        %v903 = vld [vmem:[%s3 + $0x3e0] sm:$0xff]
        %v904 = vld [vmem:[%s3 + $0x3e8] sm:$0xff]
        %v905 = vld [vmem:[%s3 + $0x3f0] sm:$0xff]
        %v906 = vld [vmem:[%s3 + $0x3f8] sm:$0xff]
        %v907 = vld [vmem:[%s3 + $0x400] sm:$0xff]
        %v908 = vld [vmem:[%s3 + $0x408] sm:$0xff]
        %v909 = vld [vmem:[%s3 + $0x410] sm:$0xff]
        %v910 = vld [vmem:[%s3 + $0x418] sm:$0xff]
        %v911 = vld [vmem:[%s3 + $0x420] sm:$0xff]
        %v912 = vld [vmem:[%s3 + $0x428] sm:$0xff]
        %v913 = vld [vmem:[%s3 + $0x430] sm:$0xff]
        %v914 = vld [vmem:[%s3 + $0x438] sm:$0xff]
        %v915 = vld [vmem:[%s3 + $0x440] sm:$0xff]
        %v916 = vld [vmem:[%s3 + $0x448] sm:$0xff]
        %v917 = vld [vmem:[%s3 + $0x450] sm:$0xff]
        %v918 = vld [vmem:[%s3 + $0x458] sm:$0xff]
        %v919 = vld [vmem:[%s3 + $0x460] sm:$0xff]
        %v920 = vld [vmem:[%s3 + $0x468] sm:$0xff]
        %v921 = vld [vmem:[%s3 + $0x470] sm:$0xff]
        %v922 = vld [vmem:[%s3 + $0x478] sm:$0xff]
        %v923 = vld [vmem:[%s3 + $0x480] sm:$0xff]
        %v924 = vld [vmem:[%s3 + $0x488] sm:$0xff]
        %v925 = vld [vmem:[%s3 + $0x490] sm:$0xff]
        %v926 = vld [vmem:[%s3 + $0x498] sm:$0xff]
        %v927 = vld [vmem:[%s3 + $0x4a0] sm:$0xff]
        %v928 = vld [vmem:[%s3 + $0x4a8] sm:$0xff]
        %v929 = vld [vmem:[%s3 + $0x4b0] sm:$0xff]
        %v930 = vld [vmem:[%s3 + $0x4b8] sm:$0xff]
        %v931 = vld [vmem:[%s3 + $0x4c0] sm:$0xff]
        %v932 = vld [vmem:[%s3 + $0x4c8] sm:$0xff]
        %v933 = vld [vmem:[%s3 + $0x4d0] sm:$0xff]
        %v934 = vld [vmem:[%s3 + $0x4d8] sm:$0xff]
        %v935 = vld [vmem:[%s3 + $0x4e0] sm:$0xff]
        %v936 = vld [vmem:[%s3 + $0x4e8] sm:$0xff]
        %v937 = vld [vmem:[%s3 + $0x4f0] sm:$0xff]
        %v938 = vld [vmem:[%s3 + $0x4f8] sm:$0xff]
        %v939 = vld [vmem:[%s3 + $0x500] sm:$0xff]
        %v940 = vld [vmem:[%s3 + $0x508] sm:$0xff]
        %v941 = vld [vmem:[%s3 + $0x510] sm:$0xff]
        %v942 = vld [vmem:[%s3 + $0x518] sm:$0xff]
        %v943 = vld [vmem:[%s3 + $0x520] sm:$0xff]
        %v944 = vld [vmem:[%s3 + $0x528] sm:$0xff]
        %v945 = vld [vmem:[%s3 + $0x530] sm:$0xff]
        %v946 = vld [vmem:[%s3 + $0x538] sm:$0xff]
        %v947 = vld [vmem:[%s3 + $0x540] sm:$0xff]
        %v948 = vld [vmem:[%s3 + $0x548] sm:$0xff]
        %v949 = vld [vmem:[%s3 + $0x550] sm:$0xff]
        %v950 = vld [vmem:[%s3 + $0x558] sm:$0xff]
        %v951 = vld [vmem:[%s3 + $0x560] sm:$0xff]
        %v952 = vld [vmem:[%s3 + $0x568] sm:$0xff]
        %v953 = vld [vmem:[%s3 + $0x570] sm:$0xff]
        %v954 = vld [vmem:[%s3 + $0x578] sm:$0xff]
        %v955 = vld [vmem:[%s3 + $0x580] sm:$0xff]
        %v956 = vld [vmem:[%s3 + $0x588] sm:$0xff]
        %v957 = vld [vmem:[%s3 + $0x590] sm:$0xff]
        %v958 = vld [vmem:[%s3 + $0x598] sm:$0xff]
        %v959 = vld [vmem:[%s3 + $0x5a0] sm:$0xff]
        %v960 = vld [vmem:[%s3 + $0x5a8] sm:$0xff]
        %v961 = vld [vmem:[%s3 + $0x5b0] sm:$0xff]
        %v962 = vld [vmem:[%s3 + $0x5b8] sm:$0xff]
        %v963 = vld [vmem:[%s3 + $0x5c0] sm:$0xff]
        %v964 = vld [vmem:[%s3 + $0x5c8] sm:$0xff]
        %v965 = vld [vmem:[%s3 + $0x5d0] sm:$0xff]
        %v966 = vld [vmem:[%s3 + $0x5d8] sm:$0xff]
        %v967 = vld [vmem:[%s3 + $0x5e0] sm:$0xff]
        %v968 = vld [vmem:[%s3 + $0x5e8] sm:$0xff]
        %v969 = vld [vmem:[%s3 + $0x5f0] sm:$0xff]
        %v970 = vld [vmem:[%s3 + $0x5f8] sm:$0xff]
        %v971 = vld [vmem:[%s3 + $0x600] sm:$0xff]
        %v972 = vld [vmem:[%s3 + $0x608] sm:$0xff]
        %v973 = vld [vmem:[%s3 + $0x610] sm:$0xff]
        %v974 = vld [vmem:[%s3 + $0x618] sm:$0xff]
        %v975 = vld [vmem:[%s3 + $0x620] sm:$0xff]
        %v976 = vld [vmem:[%s3 + $0x628] sm:$0xff]
        %v977 = vld [vmem:[%s3 + $0x630] sm:$0xff]
        %v978 = vld [vmem:[%s3 + $0x638] sm:$0xff]
        %v979 = vld [vmem:[%s3 + $0x640] sm:$0xff]
        %v980 = vld [vmem:[%s3 + $0x648] sm:$0xff]
        %v981 = vld [vmem:[%s3 + $0x650] sm:$0xff]
        %v982 = vld [vmem:[%s3 + $0x658] sm:$0xff]
        %v983 = vld [vmem:[%s3 + $0x660] sm:$0xff]
        %v984 = vld [vmem:[%s3 + $0x668] sm:$0xff]
        %v985 = vld [vmem:[%s3 + $0x670] sm:$0xff]
        %v986 = vld [vmem:[%s3 + $0x678] sm:$0xff]
        %v987 = vld [vmem:[%s3 + $0x680] sm:$0xff]
        %v988 = vld [vmem:[%s3 + $0x688] sm:$0xff]
        %v989 = vld [vmem:[%s3 + $0x690] sm:$0xff]
        %v990 = vld [vmem:[%s3 + $0x698] sm:$0xff]
        %v991 = vld [vmem:[%s3 + $0x6a0] sm:$0xff]
        %v992 = vld [vmem:[%s3 + $0x6a8] sm:$0xff]
        %v993 = vld [vmem:[%s3 + $0x6b0] sm:$0xff]
        %v994 = vld [vmem:[%s3 + $0x6b8] sm:$0xff]
        %v995 = vld [vmem:[%s3 + $0x6c0] sm:$0xff]
        %v996 = vld [vmem:[%s3 + $0x6c8] sm:$0xff]
        %v997 = vld [vmem:[%s3 + $0x6d0] sm:$0xff]
        %v998 = vld [vmem:[%s3 + $0x6d8] sm:$0xff]
        %v999 = vld [vmem:[%s3 + $0x6e0] sm:$0xff]
        %v1000 = vld [vmem:[%s3 + $0x6e8] sm:$0xff]
        %v1001 = vld [vmem:[%s3 + $0x6f0] sm:$0xff]
        %v1002 = vld [vmem:[%s3 + $0x6f8] sm:$0xff]
        %v1003 = vld [vmem:[%s3 + $0x700] sm:$0xff]
        %v1004 = vld [vmem:[%s3 + $0x708] sm:$0xff]
        %v1005 = vld [vmem:[%s3 + $0x710] sm:$0xff]
        %v1006 = vld [vmem:[%s3 + $0x718] sm:$0xff]
        %v1007 = vld [vmem:[%s3 + $0x720] sm:$0xff]
        %v1008 = vld [vmem:[%s3 + $0x728] sm:$0xff]
        %v1009 = vld [vmem:[%s3 + $0x730] sm:$0xff]
        %v1010 = vld [vmem:[%s3 + $0x738] sm:$0xff]
        %v1011 = vld [vmem:[%s3 + $0x740] sm:$0xff]
        %v1012 = vld [vmem:[%s3 + $0x748] sm:$0xff]
        %v1013 = vld [vmem:[%s3 + $0x750] sm:$0xff]
        %v1014 = vld [vmem:[%s3 + $0x758] sm:$0xff]
        %v1015 = vld [vmem:[%s3 + $0x760] sm:$0xff]
        %v1016 = vld [vmem:[%s3 + $0x768] sm:$0xff]
        %v1017 = vld [vmem:[%s3 + $0x770] sm:$0xff]
        %v1018 = vld [vmem:[%s3 + $0x778] sm:$0xff]
        %v1019 = vld [vmem:[%s3 + $0x780] sm:$0xff]
        %v1020 = vld [vmem:[%s3 + $0x788] sm:$0xff]
        %v1021 = vld [vmem:[%s3 + $0x790] sm:$0xff]
        %v1022 = vld [vmem:[%s3 + $0x798] sm:$0xff]
        %v1023 = vld [vmem:[%s3 + $0x7a0] sm:$0xff]
        %v1024 = vld [vmem:[%s3 + $0x7a8] sm:$0xff]
        %v1025 = vld [vmem:[%s3 + $0x7b0] sm:$0xff]
        %v1026 = vld [vmem:[%s3 + $0x7b8] sm:$0xff]
        %v1027 = vld [vmem:[%s3 + $0x7c0] sm:$0xff]
        %v1028 = vld [vmem:[%s3 + $0x7c8] sm:$0xff]
        %v1029 = vld [vmem:[%s3 + $0x7d0] sm:$0xff]
        %v1030 = vld [vmem:[%s3 + $0x7d8] sm:$0xff]
        %v1031 = vld [vmem:[%s3 + $0x7e0] sm:$0xff]
        %v1032 = vld [vmem:[%s3 + $0x7e8] sm:$0xff]
        %v1033 = vld [vmem:[%s3 + $0x7f0] sm:$0xff]
        %v1034 = vld [vmem:[%s3 + $0x7f8] sm:$0xff]
        %v1035 = vld [vmem:[#allocation3] sm:$0xfe]
        %v1036 = vld [vmem:[#allocation3 + $0x8] sm:$0xfe]
        %v1037 = vld [vmem:[#allocation3 + $0x10] sm:$0xfe]
        %v1038 = vld [vmem:[#allocation3 + $0x18] sm:$0xfe]
        %v1039 = vld [vmem:[#allocation3 + $0x20] sm:$0x7f]
        %v1040 = vld [vmem:[#allocation3 + $0x28] sm:$0x7f]
        %v1041 = vld [vmem:[#allocation3 + $0x30] sm:$0x7f]
        %v1042 = vld [vmem:[#allocation3 + $0x38] sm:$0x7f]
        %s1043 = scalar_lea.vmem %s3, 2048
        %v1044 = vld [vmem:[%s1043] sm:$0xff]
        %v1045 = vld [vmem:[%s1043 + $0x8] sm:$0xff]
        %v1046 = vld [vmem:[%s1043 + $0x10] sm:$0xff]
        %v1047 = vld [vmem:[%s1043 + $0x18] sm:$0xff]
        %v1048 = vld [vmem:[%s1043 + $0x20] sm:$0xff]
        %v1049 = vld [vmem:[%s1043 + $0x28] sm:$0xff]
        %v1050 = vld [vmem:[%s1043 + $0x30] sm:$0xff]
        %v1051 = vld [vmem:[%s1043 + $0x38] sm:$0xff]
        %v1052 = vld [vmem:[%s1043 + $0x40] sm:$0xff]
        %v1053 = vld [vmem:[%s1043 + $0x48] sm:$0xff]
        %v1054 = vld [vmem:[%s1043 + $0x50] sm:$0xff]
        %v1055 = vld [vmem:[%s1043 + $0x58] sm:$0xff]
        %v1056 = vld [vmem:[%s1043 + $0x60] sm:$0xff]
        %v1057 = vld [vmem:[%s1043 + $0x68] sm:$0xff]
        %v1058 = vld [vmem:[%s1043 + $0x70] sm:$0xff]
        %v1059 = vld [vmem:[%s1043 + $0x78] sm:$0xff]
        %v1060 = vld [vmem:[%s1043 + $0x80] sm:$0xff]
        %v1061 = vld [vmem:[%s1043 + $0x88] sm:$0xff]
        %v1062 = vld [vmem:[%s1043 + $0x90] sm:$0xff]
        %v1063 = vld [vmem:[%s1043 + $0x98] sm:$0xff]
        %v1064 = vld [vmem:[%s1043 + $0xa0] sm:$0xff]
        %v1065 = vld [vmem:[%s1043 + $0xa8] sm:$0xff]
        %v1066 = vld [vmem:[%s1043 + $0xb0] sm:$0xff]
        %v1067 = vld [vmem:[%s1043 + $0xb8] sm:$0xff]
        %v1068 = vld [vmem:[%s1043 + $0xc0] sm:$0xff]
        %v1069 = vld [vmem:[%s1043 + $0xc8] sm:$0xff]
        %v1070 = vld [vmem:[%s1043 + $0xd0] sm:$0xff]
        %v1071 = vld [vmem:[%s1043 + $0xd8] sm:$0xff]
        %v1072 = vld [vmem:[%s1043 + $0xe0] sm:$0xff]
        %v1073 = vld [vmem:[%s1043 + $0xe8] sm:$0xff]
        %v1074 = vld [vmem:[%s1043 + $0xf0] sm:$0xff]
        %v1075 = vld [vmem:[%s1043 + $0xf8] sm:$0xff]
        %v1076 = vld [vmem:[%s1043 + $0x100] sm:$0xff]
        %v1077 = vld [vmem:[%s1043 + $0x108] sm:$0xff]
        %v1078 = vld [vmem:[%s1043 + $0x110] sm:$0xff]
        %v1079 = vld [vmem:[%s1043 + $0x118] sm:$0xff]
        %v1080 = vld [vmem:[%s1043 + $0x120] sm:$0xff]
        %v1081 = vld [vmem:[%s1043 + $0x128] sm:$0xff]
        %v1082 = vld [vmem:[%s1043 + $0x130] sm:$0xff]
        %v1083 = vld [vmem:[%s1043 + $0x138] sm:$0xff]
        %v1084 = vld [vmem:[%s1043 + $0x140] sm:$0xff]
        %v1085 = vld [vmem:[%s1043 + $0x148] sm:$0xff]
        %v1086 = vld [vmem:[%s1043 + $0x150] sm:$0xff]
        %v1087 = vld [vmem:[%s1043 + $0x158] sm:$0xff]
        %v1088 = vld [vmem:[%s1043 + $0x160] sm:$0xff]
        %v1089 = vld [vmem:[%s1043 + $0x168] sm:$0xff]
        %v1090 = vld [vmem:[%s1043 + $0x170] sm:$0xff]
        %v1091 = vld [vmem:[%s1043 + $0x178] sm:$0xff]
        %v1092 = vld [vmem:[%s1043 + $0x180] sm:$0xff]
        %v1093 = vld [vmem:[%s1043 + $0x188] sm:$0xff]
        %v1094 = vld [vmem:[%s1043 + $0x190] sm:$0xff]
        %v1095 = vld [vmem:[%s1043 + $0x198] sm:$0xff]
        %v1096 = vld [vmem:[%s1043 + $0x1a0] sm:$0xff]
        %v1097 = vld [vmem:[%s1043 + $0x1a8] sm:$0xff]
        %v1098 = vld [vmem:[%s1043 + $0x1b0] sm:$0xff]
        %v1099 = vld [vmem:[%s1043 + $0x1b8] sm:$0xff]
        %v1100 = vld [vmem:[%s1043 + $0x1c0] sm:$0xff]
        %v1101 = vld [vmem:[%s1043 + $0x1c8] sm:$0xff]
        %v1102 = vld [vmem:[%s1043 + $0x1d0] sm:$0xff]
        %v1103 = vld [vmem:[%s1043 + $0x1d8] sm:$0xff]
        %v1104 = vld [vmem:[%s1043 + $0x1e0] sm:$0xff]
        %v1105 = vld [vmem:[%s1043 + $0x1e8] sm:$0xff]
        %v1106 = vld [vmem:[%s1043 + $0x1f0] sm:$0xff]
        %v1107 = vld [vmem:[%s1043 + $0x1f8] sm:$0xff]
        %v1108 = vld [vmem:[%s1043 + $0x200] sm:$0xff]
        %v1109 = vld [vmem:[%s1043 + $0x208] sm:$0xff]
        %v1110 = vld [vmem:[%s1043 + $0x210] sm:$0xff]
        %v1111 = vld [vmem:[%s1043 + $0x218] sm:$0xff]
        %v1112 = vld [vmem:[%s1043 + $0x220] sm:$0xff]
        %v1113 = vld [vmem:[%s1043 + $0x228] sm:$0xff]
        %v1114 = vld [vmem:[%s1043 + $0x230] sm:$0xff]
        %v1115 = vld [vmem:[%s1043 + $0x238] sm:$0xff]
        %v1116 = vld [vmem:[%s1043 + $0x240] sm:$0xff]
        %v1117 = vld [vmem:[%s1043 + $0x248] sm:$0xff]
        %v1118 = vld [vmem:[%s1043 + $0x250] sm:$0xff]
        %v1119 = vld [vmem:[%s1043 + $0x258] sm:$0xff]
        %v1120 = vld [vmem:[%s1043 + $0x260] sm:$0xff]
        %v1121 = vld [vmem:[%s1043 + $0x268] sm:$0xff]
        %v1122 = vld [vmem:[%s1043 + $0x270] sm:$0xff]
        %v1123 = vld [vmem:[%s1043 + $0x278] sm:$0xff]
        %v1124 = vld [vmem:[%s1043 + $0x280] sm:$0xff]
        %v1125 = vld [vmem:[%s1043 + $0x288] sm:$0xff]
        %v1126 = vld [vmem:[%s1043 + $0x290] sm:$0xff]
        %v1127 = vld [vmem:[%s1043 + $0x298] sm:$0xff]
        %v1128 = vld [vmem:[%s1043 + $0x2a0] sm:$0xff]
        %v1129 = vld [vmem:[%s1043 + $0x2a8] sm:$0xff]
        %v1130 = vld [vmem:[%s1043 + $0x2b0] sm:$0xff]
        %v1131 = vld [vmem:[%s1043 + $0x2b8] sm:$0xff]
        %v1132 = vld [vmem:[%s1043 + $0x2c0] sm:$0xff]
        %v1133 = vld [vmem:[%s1043 + $0x2c8] sm:$0xff]
        %v1134 = vld [vmem:[%s1043 + $0x2d0] sm:$0xff]
        %v1135 = vld [vmem:[%s1043 + $0x2d8] sm:$0xff]
        %v1136 = vld [vmem:[%s1043 + $0x2e0] sm:$0xff]
        %v1137 = vld [vmem:[%s1043 + $0x2e8] sm:$0xff]
        %v1138 = vld [vmem:[%s1043 + $0x2f0] sm:$0xff]
        %v1139 = vld [vmem:[%s1043 + $0x2f8] sm:$0xff]
        %v1140 = vld [vmem:[%s1043 + $0x300] sm:$0xff]
        %v1141 = vld [vmem:[%s1043 + $0x308] sm:$0xff]
        %v1142 = vld [vmem:[%s1043 + $0x310] sm:$0xff]
        %v1143 = vld [vmem:[%s1043 + $0x318] sm:$0xff]
        %v1144 = vld [vmem:[%s1043 + $0x320] sm:$0xff]
        %v1145 = vld [vmem:[%s1043 + $0x328] sm:$0xff]
        %v1146 = vld [vmem:[%s1043 + $0x330] sm:$0xff]
        %v1147 = vld [vmem:[%s1043 + $0x338] sm:$0xff]
        %v1148 = vld [vmem:[%s1043 + $0x340] sm:$0xff]
        %v1149 = vld [vmem:[%s1043 + $0x348] sm:$0xff]
        %v1150 = vld [vmem:[%s1043 + $0x350] sm:$0xff]
        %v1151 = vld [vmem:[%s1043 + $0x358] sm:$0xff]
        %v1152 = vld [vmem:[%s1043 + $0x360] sm:$0xff]
        %v1153 = vld [vmem:[%s1043 + $0x368] sm:$0xff]
        %v1154 = vld [vmem:[%s1043 + $0x370] sm:$0xff]
        %v1155 = vld [vmem:[%s1043 + $0x378] sm:$0xff]
        %v1156 = vld [vmem:[%s1043 + $0x380] sm:$0xff]
        %v1157 = vld [vmem:[%s1043 + $0x388] sm:$0xff]
        %v1158 = vld [vmem:[%s1043 + $0x390] sm:$0xff]
        %v1159 = vld [vmem:[%s1043 + $0x398] sm:$0xff]
        %v1160 = vld [vmem:[%s1043 + $0x3a0] sm:$0xff]
        %v1161 = vld [vmem:[%s1043 + $0x3a8] sm:$0xff]
        %v1162 = vld [vmem:[%s1043 + $0x3b0] sm:$0xff]
        %v1163 = vld [vmem:[%s1043 + $0x3b8] sm:$0xff]
        %v1164 = vld [vmem:[%s1043 + $0x3c0] sm:$0xff]
        %v1165 = vld [vmem:[%s1043 + $0x3c8] sm:$0xff]
        %v1166 = vld [vmem:[%s1043 + $0x3d0] sm:$0xff]
        %v1167 = vld [vmem:[%s1043 + $0x3d8] sm:$0xff]
        %v1168 = vld [vmem:[%s1043 + $0x3e0] sm:$0xff]
        %v1169 = vld [vmem:[%s1043 + $0x3e8] sm:$0xff]
        %v1170 = vld [vmem:[%s1043 + $0x3f0] sm:$0xff]
        %v1171 = vld [vmem:[%s1043 + $0x3f8] sm:$0xff]
        %v1172 = vld [vmem:[%s1043 + $0x400] sm:$0xff]
        %v1173 = vld [vmem:[%s1043 + $0x408] sm:$0xff]
        %v1174 = vld [vmem:[%s1043 + $0x410] sm:$0xff]
        %v1175 = vld [vmem:[%s1043 + $0x418] sm:$0xff]
        %v1176 = vld [vmem:[%s1043 + $0x420] sm:$0xff]
        %v1177 = vld [vmem:[%s1043 + $0x428] sm:$0xff]
        %v1178 = vld [vmem:[%s1043 + $0x430] sm:$0xff]
        %v1179 = vld [vmem:[%s1043 + $0x438] sm:$0xff]
        %v1180 = vld [vmem:[%s1043 + $0x440] sm:$0xff]
        %v1181 = vld [vmem:[%s1043 + $0x448] sm:$0xff]
        %v1182 = vld [vmem:[%s1043 + $0x450] sm:$0xff]
        %v1183 = vld [vmem:[%s1043 + $0x458] sm:$0xff]
        %v1184 = vld [vmem:[%s1043 + $0x460] sm:$0xff]
        %v1185 = vld [vmem:[%s1043 + $0x468] sm:$0xff]
        %v1186 = vld [vmem:[%s1043 + $0x470] sm:$0xff]
        %v1187 = vld [vmem:[%s1043 + $0x478] sm:$0xff]
        %v1188 = vld [vmem:[%s1043 + $0x480] sm:$0xff]
        %v1189 = vld [vmem:[%s1043 + $0x488] sm:$0xff]
        %v1190 = vld [vmem:[%s1043 + $0x490] sm:$0xff]
        %v1191 = vld [vmem:[%s1043 + $0x498] sm:$0xff]
        %v1192 = vld [vmem:[%s1043 + $0x4a0] sm:$0xff]
        %v1193 = vld [vmem:[%s1043 + $0x4a8] sm:$0xff]
        %v1194 = vld [vmem:[%s1043 + $0x4b0] sm:$0xff]
        %v1195 = vld [vmem:[%s1043 + $0x4b8] sm:$0xff]
        %v1196 = vld [vmem:[%s1043 + $0x4c0] sm:$0xff]
        %v1197 = vld [vmem:[%s1043 + $0x4c8] sm:$0xff]
        %v1198 = vld [vmem:[%s1043 + $0x4d0] sm:$0xff]
        %v1199 = vld [vmem:[%s1043 + $0x4d8] sm:$0xff]
        %v1200 = vld [vmem:[%s1043 + $0x4e0] sm:$0xff]
        %v1201 = vld [vmem:[%s1043 + $0x4e8] sm:$0xff]
        %v1202 = vld [vmem:[%s1043 + $0x4f0] sm:$0xff]
        %v1203 = vld [vmem:[%s1043 + $0x4f8] sm:$0xff]
        %v1204 = vld [vmem:[%s1043 + $0x500] sm:$0xff]
        %v1205 = vld [vmem:[%s1043 + $0x508] sm:$0xff]
        %v1206 = vld [vmem:[%s1043 + $0x510] sm:$0xff]
        %v1207 = vld [vmem:[%s1043 + $0x518] sm:$0xff]
        %v1208 = vld [vmem:[%s1043 + $0x520] sm:$0xff]
        %v1209 = vld [vmem:[%s1043 + $0x528] sm:$0xff]
        %v1210 = vld [vmem:[%s1043 + $0x530] sm:$0xff]
        %v1211 = vld [vmem:[%s1043 + $0x538] sm:$0xff]
        %v1212 = vld [vmem:[%s1043 + $0x540] sm:$0xff]
        %v1213 = vld [vmem:[%s1043 + $0x548] sm:$0xff]
        %v1214 = vld [vmem:[%s1043 + $0x550] sm:$0xff]
        %v1215 = vld [vmem:[%s1043 + $0x558] sm:$0xff]
        %v1216 = vld [vmem:[%s1043 + $0x560] sm:$0xff]
        %v1217 = vld [vmem:[%s1043 + $0x568] sm:$0xff]
        %v1218 = vld [vmem:[%s1043 + $0x570] sm:$0xff]
        %v1219 = vld [vmem:[%s1043 + $0x578] sm:$0xff]
        %v1220 = vld [vmem:[%s1043 + $0x580] sm:$0xff]
        %v1221 = vld [vmem:[%s1043 + $0x588] sm:$0xff]
        %v1222 = vld [vmem:[%s1043 + $0x590] sm:$0xff]
        %v1223 = vld [vmem:[%s1043 + $0x598] sm:$0xff]
        %v1224 = vld [vmem:[%s1043 + $0x5a0] sm:$0xff]
        %v1225 = vld [vmem:[%s1043 + $0x5a8] sm:$0xff]
        %v1226 = vld [vmem:[%s1043 + $0x5b0] sm:$0xff]
        %v1227 = vld [vmem:[%s1043 + $0x5b8] sm:$0xff]
        %v1228 = vld [vmem:[%s1043 + $0x5c0] sm:$0xff]
        %v1229 = vld [vmem:[%s1043 + $0x5c8] sm:$0xff]
        %v1230 = vld [vmem:[%s1043 + $0x5d0] sm:$0xff]
        %v1231 = vld [vmem:[%s1043 + $0x5d8] sm:$0xff]
        %v1232 = vld [vmem:[%s1043 + $0x5e0] sm:$0xff]
        %v1233 = vld [vmem:[%s1043 + $0x5e8] sm:$0xff]
        %v1234 = vld [vmem:[%s1043 + $0x5f0] sm:$0xff]
        %v1235 = vld [vmem:[%s1043 + $0x5f8] sm:$0xff]
        %v1236 = vld [vmem:[%s1043 + $0x600] sm:$0xff]
        %v1237 = vld [vmem:[%s1043 + $0x608] sm:$0xff]
        %v1238 = vld [vmem:[%s1043 + $0x610] sm:$0xff]
        %v1239 = vld [vmem:[%s1043 + $0x618] sm:$0xff]
        %v1240 = vld [vmem:[%s1043 + $0x620] sm:$0xff]
        %v1241 = vld [vmem:[%s1043 + $0x628] sm:$0xff]
        %v1242 = vld [vmem:[%s1043 + $0x630] sm:$0xff]
        %v1243 = vld [vmem:[%s1043 + $0x638] sm:$0xff]
        %v1244 = vld [vmem:[%s1043 + $0x640] sm:$0xff]
        %v1245 = vld [vmem:[%s1043 + $0x648] sm:$0xff]
        %v1246 = vld [vmem:[%s1043 + $0x650] sm:$0xff]
        %v1247 = vld [vmem:[%s1043 + $0x658] sm:$0xff]
        %v1248 = vld [vmem:[%s1043 + $0x660] sm:$0xff]
        %v1249 = vld [vmem:[%s1043 + $0x668] sm:$0xff]
        %v1250 = vld [vmem:[%s1043 + $0x670] sm:$0xff]
        %v1251 = vld [vmem:[%s1043 + $0x678] sm:$0xff]
        %v1252 = vld [vmem:[%s1043 + $0x680] sm:$0xff]
        %v1253 = vld [vmem:[%s1043 + $0x688] sm:$0xff]
        %v1254 = vld [vmem:[%s1043 + $0x690] sm:$0xff]
        %v1255 = vld [vmem:[%s1043 + $0x698] sm:$0xff]
        %v1256 = vld [vmem:[%s1043 + $0x6a0] sm:$0xff]
        %v1257 = vld [vmem:[%s1043 + $0x6a8] sm:$0xff]
        %v1258 = vld [vmem:[%s1043 + $0x6b0] sm:$0xff]
        %v1259 = vld [vmem:[%s1043 + $0x6b8] sm:$0xff]
        %v1260 = vld [vmem:[%s1043 + $0x6c0] sm:$0xff]
        %v1261 = vld [vmem:[%s1043 + $0x6c8] sm:$0xff]
        %v1262 = vld [vmem:[%s1043 + $0x6d0] sm:$0xff]
        %v1263 = vld [vmem:[%s1043 + $0x6d8] sm:$0xff]
        %v1264 = vld [vmem:[%s1043 + $0x6e0] sm:$0xff]
        %v1265 = vld [vmem:[%s1043 + $0x6e8] sm:$0xff]
        %v1266 = vld [vmem:[%s1043 + $0x6f0] sm:$0xff]
        %v1267 = vld [vmem:[%s1043 + $0x6f8] sm:$0xff]
        %v1268 = vld [vmem:[%s1043 + $0x700] sm:$0xff]
        %v1269 = vld [vmem:[%s1043 + $0x708] sm:$0xff]
        %v1270 = vld [vmem:[%s1043 + $0x710] sm:$0xff]
        %v1271 = vld [vmem:[%s1043 + $0x718] sm:$0xff]
        %v1272 = vld [vmem:[%s1043 + $0x720] sm:$0xff]
        %v1273 = vld [vmem:[%s1043 + $0x728] sm:$0xff]
        %v1274 = vld [vmem:[%s1043 + $0x730] sm:$0xff]
        %v1275 = vld [vmem:[%s1043 + $0x738] sm:$0xff]
        %v1276 = vld [vmem:[%s1043 + $0x740] sm:$0xff]
        %v1277 = vld [vmem:[%s1043 + $0x748] sm:$0xff]
        %v1278 = vld [vmem:[%s1043 + $0x750] sm:$0xff]
        %v1279 = vld [vmem:[%s1043 + $0x758] sm:$0xff]
        %v1280 = vld [vmem:[%s1043 + $0x760] sm:$0xff]
        %v1281 = vld [vmem:[%s1043 + $0x768] sm:$0xff]
        %v1282 = vld [vmem:[%s1043 + $0x770] sm:$0xff]
        %v1283 = vld [vmem:[%s1043 + $0x778] sm:$0xff]
        %v1284 = vld [vmem:[%s1043 + $0x780] sm:$0xff]
        %v1285 = vld [vmem:[%s1043 + $0x788] sm:$0xff]
        %v1286 = vld [vmem:[%s1043 + $0x790] sm:$0xff]
        %v1287 = vld [vmem:[%s1043 + $0x798] sm:$0xff]
        %v1288 = vld [vmem:[%s1043 + $0x7a0] sm:$0xff]
        %v1289 = vld [vmem:[%s1043 + $0x7a8] sm:$0xff]
        %v1290 = vld [vmem:[%s1043 + $0x7b0] sm:$0xff]
        %v1291 = vld [vmem:[%s1043 + $0x7b8] sm:$0xff]
        %v1292 = vld [vmem:[%s1043 + $0x7c0] sm:$0xff]
        %v1293 = vld [vmem:[%s1043 + $0x7c8] sm:$0xff]
        %v1294 = vld [vmem:[%s1043 + $0x7d0] sm:$0xff]
        %v1295 = vld [vmem:[%s1043 + $0x7d8] sm:$0xff]
        %v1296 = vld [vmem:[%s1043 + $0x7e0] sm:$0xff]
        %v1297 = vld [vmem:[%s1043 + $0x7e8] sm:$0xff]
        %v1298 = vld [vmem:[%s1043 + $0x7f0] sm:$0xff]
        %v1299 = vld [vmem:[%s1043 + $0x7f8] sm:$0xff]
        %vm1308 = vcmask 1046528
        %v1309 = vrot.slane %v1035, 1
        %v1310 = vrot.slane %v1039, 1
        %v1311 = vsel %vm1308, %v1309, %v1310
        %v1312 = vrot.slane %v1036, 1
        %v1313 = vrot.slane %v1040, 1
        %v1314 = vsel %vm1308, %v1312, %v1313
        %v1315 = vrot.slane %v1037, 1
        %v1316 = vrot.slane %v1041, 1
        %v1317 = vsel %vm1308, %v1315, %v1316
        %v1318 = vrot.slane %v1038, 1
        %v1319 = vrot.slane %v1042, 1
        %v1320 = vsel %vm1308, %v1318, %v1319
        %1329 = vmatpush.msra.mxu0 %v1104
        %1330 = vmatpush.msra.mxu0 %v1100
        %1331 = vmatpush.msra.mxu0 %v1096
        %1332 = vmatpush.msra.mxu0 %v1092
        %1333 = vmatpush.msra.mxu0 %v1088
        %1334 = vmatpush.msra.mxu0 %v1084
        %1335 = vmatpush.msra.mxu0 %v1080
        %1336 = vmatpush.msra.mxu0 %v1076
        %1337 = vmatpush.msra.mxu0 %v1072
        %1338 = vmatpush.msra.mxu0 %v1068
        %1339 = vmatpush.msra.mxu0 %v1064
        %1340 = vmatpush.msra.mxu0 %v1060
        %1341 = vmatpush.msra.mxu0 %v1056
        %1342 = vmatpush.msra.mxu0 %v1052
        %1343 = vmatpush.msra.mxu0 %v1048
        %1344 = vmatpush.msra.mxu0 %v1044
        %1345 = vmatmul.f32.gmra.mxu0 %v1311
        %v1346 = vpop.f32.mrf.mxu0
        %v1347 = vadd.f32 0.0, %v1346
        %1348 = vmatmul.f32.gmra.mxu0 %v1310
        %v1349 = vpop.f32.mrf.mxu0
        %v1350 = vadd.f32 0.0, %v1349
        %1351 = vdwg.mxu0
        %1352 = vmatpush.msra.mxu0 %v1168
        %1353 = vmatpush.msra.mxu0 %v1164
        %1354 = vmatpush.msra.mxu0 %v1160
        %1355 = vmatpush.msra.mxu0 %v1156
        %1356 = vmatpush.msra.mxu0 %v1152
        %1357 = vmatpush.msra.mxu0 %v1148
        %1358 = vmatpush.msra.mxu0 %v1144
        %1359 = vmatpush.msra.mxu0 %v1140
        %1360 = vmatpush.msra.mxu0 %v1136
        %1361 = vmatpush.msra.mxu0 %v1132
        %1362 = vmatpush.msra.mxu0 %v1128
        %1363 = vmatpush.msra.mxu0 %v1124
        %1364 = vmatpush.msra.mxu0 %v1120
        %1365 = vmatpush.msra.mxu0 %v1116
        %1366 = vmatpush.msra.mxu0 %v1112
        %1367 = vmatpush.msra.mxu0 %v1108
        %1368 = vmatmul.f32.gmra.mxu0 %v1314
        %v1369 = vpop.f32.mrf.mxu0
        %v1370 = vadd.f32 %v1347, %v1369
        %1371 = vmatmul.f32.gmra.mxu0 %v1313
        %v1372 = vpop.f32.mrf.mxu0
        %v1373 = vadd.f32 %v1350, %v1372
        %1374 = vdwg.mxu0
        %1375 = vmatpush.msra.mxu0 %v1232
        %1376 = vmatpush.msra.mxu0 %v1228
        %1377 = vmatpush.msra.mxu0 %v1224
        %1378 = vmatpush.msra.mxu0 %v1220
        %1379 = vmatpush.msra.mxu0 %v1216
        %1380 = vmatpush.msra.mxu0 %v1212
        %1381 = vmatpush.msra.mxu0 %v1208
        %1382 = vmatpush.msra.mxu0 %v1204
        %1383 = vmatpush.msra.mxu0 %v1200
        %1384 = vmatpush.msra.mxu0 %v1196
        %1385 = vmatpush.msra.mxu0 %v1192
        %1386 = vmatpush.msra.mxu0 %v1188
        %1387 = vmatpush.msra.mxu0 %v1184
        %1388 = vmatpush.msra.mxu0 %v1180
        %1389 = vmatpush.msra.mxu0 %v1176
        %1390 = vmatpush.msra.mxu0 %v1172
        %1391 = vmatmul.f32.gmra.mxu0 %v1317
        %v1392 = vpop.f32.mrf.mxu0
        %v1393 = vadd.f32 %v1370, %v1392
        %1394 = vmatmul.f32.gmra.mxu0 %v1316
        %v1395 = vpop.f32.mrf.mxu0
        %v1396 = vadd.f32 %v1373, %v1395
        %1397 = vdwg.mxu0
        %1398 = vmatpush.msra.mxu0 %v1296
        %1399 = vmatpush.msra.mxu0 %v1292
        %1400 = vmatpush.msra.mxu0 %v1288
        %1401 = vmatpush.msra.mxu0 %v1284
        %1402 = vmatpush.msra.mxu0 %v1280
        %1403 = vmatpush.msra.mxu0 %v1276
        %1404 = vmatpush.msra.mxu0 %v1272
        %1405 = vmatpush.msra.mxu0 %v1268
        %1406 = vmatpush.msra.mxu0 %v1264
        %1407 = vmatpush.msra.mxu0 %v1260
        %1408 = vmatpush.msra.mxu0 %v1256
        %1409 = vmatpush.msra.mxu0 %v1252
        %1410 = vmatpush.msra.mxu0 %v1248
        %1411 = vmatpush.msra.mxu0 %v1244
        %1412 = vmatpush.msra.mxu0 %v1240
        %1413 = vmatpush.msra.mxu0 %v1236
        %1414 = vmatmul.f32.gmra.mxu0 %v1320
        %v1415 = vpop.f32.mrf.mxu0
        %v1416 = vadd.f32 %v1393, %v1415
        %1417 = vmatmul.f32.gmra.mxu0 %v1319
        %v1418 = vpop.f32.mrf.mxu0
        %v1419 = vadd.f32 %v1396, %v1418
        %1420 = vdwg.mxu0
        %1421 = vmatpush.msra.mxu0 %v1105
        %1422 = vmatpush.msra.mxu0 %v1101
        %1423 = vmatpush.msra.mxu0 %v1097
        %1424 = vmatpush.msra.mxu0 %v1093
        %1425 = vmatpush.msra.mxu0 %v1089
        %1426 = vmatpush.msra.mxu0 %v1085
        %1427 = vmatpush.msra.mxu0 %v1081
        %1428 = vmatpush.msra.mxu0 %v1077
        %1429 = vmatpush.msra.mxu0 %v1073
        %1430 = vmatpush.msra.mxu0 %v1069
        %1431 = vmatpush.msra.mxu0 %v1065
        %1432 = vmatpush.msra.mxu0 %v1061
        %1433 = vmatpush.msra.mxu0 %v1057
        %1434 = vmatpush.msra.mxu0 %v1053
        %1435 = vmatpush.msra.mxu0 %v1049
        %1436 = vmatpush.msra.mxu0 %v1045
        %1437 = vmatmul.f32.gmra.mxu0 %v1311
        %v1438 = vpop.f32.mrf.mxu0
        %v1439 = vadd.f32 0.0, %v1438
        %1440 = vmatmul.f32.gmra.mxu0 %v1310
        %v1441 = vpop.f32.mrf.mxu0
        %v1442 = vadd.f32 0.0, %v1441
        %1443 = vdwg.mxu0
        %1444 = vmatpush.msra.mxu0 %v1169
        %1445 = vmatpush.msra.mxu0 %v1165
        %1446 = vmatpush.msra.mxu0 %v1161
        %1447 = vmatpush.msra.mxu0 %v1157
        %1448 = vmatpush.msra.mxu0 %v1153
        %1449 = vmatpush.msra.mxu0 %v1149
        %1450 = vmatpush.msra.mxu0 %v1145
        %1451 = vmatpush.msra.mxu0 %v1141
        %1452 = vmatpush.msra.mxu0 %v1137
        %1453 = vmatpush.msra.mxu0 %v1133
        %1454 = vmatpush.msra.mxu0 %v1129
        %1455 = vmatpush.msra.mxu0 %v1125
        %1456 = vmatpush.msra.mxu0 %v1121
        %1457 = vmatpush.msra.mxu0 %v1117
        %1458 = vmatpush.msra.mxu0 %v1113
        %1459 = vmatpush.msra.mxu0 %v1109
        %1460 = vmatmul.f32.gmra.mxu0 %v1314
        %v1461 = vpop.f32.mrf.mxu0
        %v1462 = vadd.f32 %v1439, %v1461
        %1463 = vmatmul.f32.gmra.mxu0 %v1313
        %v1464 = vpop.f32.mrf.mxu0
        %v1465 = vadd.f32 %v1442, %v1464
        %1466 = vdwg.mxu0
        %1467 = vmatpush.msra.mxu0 %v1233
        %1468 = vmatpush.msra.mxu0 %v1229
        %1469 = vmatpush.msra.mxu0 %v1225
        %1470 = vmatpush.msra.mxu0 %v1221
        %1471 = vmatpush.msra.mxu0 %v1217
        %1472 = vmatpush.msra.mxu0 %v1213
        %1473 = vmatpush.msra.mxu0 %v1209
        %1474 = vmatpush.msra.mxu0 %v1205
        %1475 = vmatpush.msra.mxu0 %v1201
        %1476 = vmatpush.msra.mxu0 %v1197
        %1477 = vmatpush.msra.mxu0 %v1193
        %1478 = vmatpush.msra.mxu0 %v1189
        %1479 = vmatpush.msra.mxu0 %v1185
        %1480 = vmatpush.msra.mxu0 %v1181
        %1481 = vmatpush.msra.mxu0 %v1177
        %1482 = vmatpush.msra.mxu0 %v1173
        %1483 = vmatmul.f32.gmra.mxu0 %v1317
        %v1484 = vpop.f32.mrf.mxu0
        %v1485 = vadd.f32 %v1462, %v1484
        %1486 = vmatmul.f32.gmra.mxu0 %v1316
        %v1487 = vpop.f32.mrf.mxu0
        %v1488 = vadd.f32 %v1465, %v1487
        %1489 = vdwg.mxu0
        %1490 = vmatpush.msra.mxu0 %v1297
        %1491 = vmatpush.msra.mxu0 %v1293
        %1492 = vmatpush.msra.mxu0 %v1289
        %1493 = vmatpush.msra.mxu0 %v1285
        %1494 = vmatpush.msra.mxu0 %v1281
        %1495 = vmatpush.msra.mxu0 %v1277
        %1496 = vmatpush.msra.mxu0 %v1273
        %1497 = vmatpush.msra.mxu0 %v1269
        %1498 = vmatpush.msra.mxu0 %v1265
        %1499 = vmatpush.msra.mxu0 %v1261
        %1500 = vmatpush.msra.mxu0 %v1257
        %1501 = vmatpush.msra.mxu0 %v1253
        %1502 = vmatpush.msra.mxu0 %v1249
        %1503 = vmatpush.msra.mxu0 %v1245
        %1504 = vmatpush.msra.mxu0 %v1241
        %1505 = vmatpush.msra.mxu0 %v1237
        %1506 = vmatmul.f32.gmra.mxu0 %v1320
        %v1507 = vpop.f32.mrf.mxu0
        %v1508 = vadd.f32 %v1485, %v1507
        %1509 = vmatmul.f32.gmra.mxu0 %v1319
        %v1510 = vpop.f32.mrf.mxu0
        %v1511 = vadd.f32 %v1488, %v1510
        %1512 = vdwg.mxu0
        %1513 = vmatpush.msra.mxu0 %v1106
        %1514 = vmatpush.msra.mxu0 %v1102
        %1515 = vmatpush.msra.mxu0 %v1098
        %1516 = vmatpush.msra.mxu0 %v1094
        %1517 = vmatpush.msra.mxu0 %v1090
        %1518 = vmatpush.msra.mxu0 %v1086
        %1519 = vmatpush.msra.mxu0 %v1082
        %1520 = vmatpush.msra.mxu0 %v1078
        %1521 = vmatpush.msra.mxu0 %v1074
        %1522 = vmatpush.msra.mxu0 %v1070
        %1523 = vmatpush.msra.mxu0 %v1066
        %1524 = vmatpush.msra.mxu0 %v1062
        %1525 = vmatpush.msra.mxu0 %v1058
        %1526 = vmatpush.msra.mxu0 %v1054
        %1527 = vmatpush.msra.mxu0 %v1050
        %1528 = vmatpush.msra.mxu0 %v1046
        %1529 = vmatmul.f32.gmra.mxu0 %v1311
        %v1530 = vpop.f32.mrf.mxu0
        %v1531 = vadd.f32 0.0, %v1530
        %1532 = vmatmul.f32.gmra.mxu0 %v1310
        %v1533 = vpop.f32.mrf.mxu0
        %v1534 = vadd.f32 0.0, %v1533
        %1535 = vdwg.mxu0
        %1536 = vmatpush.msra.mxu0 %v1170
        %1537 = vmatpush.msra.mxu0 %v1166
        %1538 = vmatpush.msra.mxu0 %v1162
        %1539 = vmatpush.msra.mxu0 %v1158
        %1540 = vmatpush.msra.mxu0 %v1154
        %1541 = vmatpush.msra.mxu0 %v1150
        %1542 = vmatpush.msra.mxu0 %v1146
        %1543 = vmatpush.msra.mxu0 %v1142
        %1544 = vmatpush.msra.mxu0 %v1138
        %1545 = vmatpush.msra.mxu0 %v1134
        %1546 = vmatpush.msra.mxu0 %v1130
        %1547 = vmatpush.msra.mxu0 %v1126
        %1548 = vmatpush.msra.mxu0 %v1122
        %1549 = vmatpush.msra.mxu0 %v1118
        %1550 = vmatpush.msra.mxu0 %v1114
        %1551 = vmatpush.msra.mxu0 %v1110
        %1552 = vmatmul.f32.gmra.mxu0 %v1314
        %v1553 = vpop.f32.mrf.mxu0
        %v1554 = vadd.f32 %v1531, %v1553
        %1555 = vmatmul.f32.gmra.mxu0 %v1313
        %v1556 = vpop.f32.mrf.mxu0
        %v1557 = vadd.f32 %v1534, %v1556
        %1558 = vdwg.mxu0
        %1559 = vmatpush.msra.mxu0 %v1234
        %1560 = vmatpush.msra.mxu0 %v1230
        %1561 = vmatpush.msra.mxu0 %v1226
        %1562 = vmatpush.msra.mxu0 %v1222
        %1563 = vmatpush.msra.mxu0 %v1218
        %1564 = vmatpush.msra.mxu0 %v1214
        %1565 = vmatpush.msra.mxu0 %v1210
        %1566 = vmatpush.msra.mxu0 %v1206
        %1567 = vmatpush.msra.mxu0 %v1202
        %1568 = vmatpush.msra.mxu0 %v1198
        %1569 = vmatpush.msra.mxu0 %v1194
        %1570 = vmatpush.msra.mxu0 %v1190
        %1571 = vmatpush.msra.mxu0 %v1186
        %1572 = vmatpush.msra.mxu0 %v1182
        %1573 = vmatpush.msra.mxu0 %v1178
        %1574 = vmatpush.msra.mxu0 %v1174
        %1575 = vmatmul.f32.gmra.mxu0 %v1317
        %v1576 = vpop.f32.mrf.mxu0
        %v1577 = vadd.f32 %v1554, %v1576
        %1578 = vmatmul.f32.gmra.mxu0 %v1316
        %v1579 = vpop.f32.mrf.mxu0
        %v1580 = vadd.f32 %v1557, %v1579
        %1581 = vdwg.mxu0
        %1582 = vmatpush.msra.mxu0 %v1298
        %1583 = vmatpush.msra.mxu0 %v1294
        %1584 = vmatpush.msra.mxu0 %v1290
        %1585 = vmatpush.msra.mxu0 %v1286
        %1586 = vmatpush.msra.mxu0 %v1282
        %1587 = vmatpush.msra.mxu0 %v1278
        %1588 = vmatpush.msra.mxu0 %v1274
        %1589 = vmatpush.msra.mxu0 %v1270
        %1590 = vmatpush.msra.mxu0 %v1266
        %1591 = vmatpush.msra.mxu0 %v1262
        %1592 = vmatpush.msra.mxu0 %v1258
        %1593 = vmatpush.msra.mxu0 %v1254
        %1594 = vmatpush.msra.mxu0 %v1250
        %1595 = vmatpush.msra.mxu0 %v1246
        %1596 = vmatpush.msra.mxu0 %v1242
        %1597 = vmatpush.msra.mxu0 %v1238
        %1598 = vmatmul.f32.gmra.mxu0 %v1320
        %v1599 = vpop.f32.mrf.mxu0
        %v1600 = vadd.f32 %v1577, %v1599
        %1601 = vmatmul.f32.gmra.mxu0 %v1319
        %v1602 = vpop.f32.mrf.mxu0
        %v1603 = vadd.f32 %v1580, %v1602
        %1604 = vdwg.mxu0
        %1605 = vmatpush.msra.mxu0 %v1107
        %1606 = vmatpush.msra.mxu0 %v1103
        %1607 = vmatpush.msra.mxu0 %v1099
        %1608 = vmatpush.msra.mxu0 %v1095
        %1609 = vmatpush.msra.mxu0 %v1091
        %1610 = vmatpush.msra.mxu0 %v1087
        %1611 = vmatpush.msra.mxu0 %v1083
        %1612 = vmatpush.msra.mxu0 %v1079
        %1613 = vmatpush.msra.mxu0 %v1075
        %1614 = vmatpush.msra.mxu0 %v1071
        %1615 = vmatpush.msra.mxu0 %v1067
        %1616 = vmatpush.msra.mxu0 %v1063
        %1617 = vmatpush.msra.mxu0 %v1059
        %1618 = vmatpush.msra.mxu0 %v1055
        %1619 = vmatpush.msra.mxu0 %v1051
        %1620 = vmatpush.msra.mxu0 %v1047
        %1621 = vmatmul.f32.gmra.mxu0 %v1311
        %v1622 = vpop.f32.mrf.mxu0
        %v1623 = vadd.f32 0.0, %v1622
        %1624 = vmatmul.f32.gmra.mxu0 %v1310
        %v1625 = vpop.f32.mrf.mxu0
        %v1626 = vadd.f32 0.0, %v1625
        %1627 = vdwg.mxu0
        %1628 = vmatpush.msra.mxu0 %v1171
        %1629 = vmatpush.msra.mxu0 %v1167
        %1630 = vmatpush.msra.mxu0 %v1163
        %1631 = vmatpush.msra.mxu0 %v1159
        %1632 = vmatpush.msra.mxu0 %v1155
        %1633 = vmatpush.msra.mxu0 %v1151
        %1634 = vmatpush.msra.mxu0 %v1147
        %1635 = vmatpush.msra.mxu0 %v1143
        %1636 = vmatpush.msra.mxu0 %v1139
        %1637 = vmatpush.msra.mxu0 %v1135
        %1638 = vmatpush.msra.mxu0 %v1131
        %1639 = vmatpush.msra.mxu0 %v1127
        %1640 = vmatpush.msra.mxu0 %v1123
        %1641 = vmatpush.msra.mxu0 %v1119
        %1642 = vmatpush.msra.mxu0 %v1115
        %1643 = vmatpush.msra.mxu0 %v1111
        %1644 = vmatmul.f32.gmra.mxu0 %v1314
        %v1645 = vpop.f32.mrf.mxu0
        %v1646 = vadd.f32 %v1623, %v1645
        %1647 = vmatmul.f32.gmra.mxu0 %v1313
        %v1648 = vpop.f32.mrf.mxu0
        %v1649 = vadd.f32 %v1626, %v1648
        %1650 = vdwg.mxu0
        %1651 = vmatpush.msra.mxu0 %v1235
        %1652 = vmatpush.msra.mxu0 %v1231
        %1653 = vmatpush.msra.mxu0 %v1227
        %1654 = vmatpush.msra.mxu0 %v1223
        %1655 = vmatpush.msra.mxu0 %v1219
        %1656 = vmatpush.msra.mxu0 %v1215
        %1657 = vmatpush.msra.mxu0 %v1211
        %1658 = vmatpush.msra.mxu0 %v1207
        %1659 = vmatpush.msra.mxu0 %v1203
        %1660 = vmatpush.msra.mxu0 %v1199
        %1661 = vmatpush.msra.mxu0 %v1195
        %1662 = vmatpush.msra.mxu0 %v1191
        %1663 = vmatpush.msra.mxu0 %v1187
        %1664 = vmatpush.msra.mxu0 %v1183
        %1665 = vmatpush.msra.mxu0 %v1179
        %1666 = vmatpush.msra.mxu0 %v1175
        %1667 = vmatmul.f32.gmra.mxu0 %v1317
        %v1668 = vpop.f32.mrf.mxu0
        %v1669 = vadd.f32 %v1646, %v1668
        %1670 = vmatmul.f32.gmra.mxu0 %v1316
        %v1671 = vpop.f32.mrf.mxu0
        %v1672 = vadd.f32 %v1649, %v1671
        %1673 = vdwg.mxu0
        %1674 = vmatpush.msra.mxu0 %v1299
        %1675 = vmatpush.msra.mxu0 %v1295
        %1676 = vmatpush.msra.mxu0 %v1291
        %1677 = vmatpush.msra.mxu0 %v1287
        %1678 = vmatpush.msra.mxu0 %v1283
        %1679 = vmatpush.msra.mxu0 %v1279
        %1680 = vmatpush.msra.mxu0 %v1275
        %1681 = vmatpush.msra.mxu0 %v1271
        %1682 = vmatpush.msra.mxu0 %v1267
        %1683 = vmatpush.msra.mxu0 %v1263
        %1684 = vmatpush.msra.mxu0 %v1259
        %1685 = vmatpush.msra.mxu0 %v1255
        %1686 = vmatpush.msra.mxu0 %v1251
        %1687 = vmatpush.msra.mxu0 %v1247
        %1688 = vmatpush.msra.mxu0 %v1243
        %1689 = vmatpush.msra.mxu0 %v1239
        %1690 = vmatmul.f32.gmra.mxu0 %v1320
        %v1691 = vpop.f32.mrf.mxu0
        %v1692 = vadd.f32 %v1669, %v1691
        %1693 = vmatmul.f32.gmra.mxu0 %v1319
        %v1694 = vpop.f32.mrf.mxu0
        %v1695 = vadd.f32 %v1672, %v1694
        %1696 = vdwg.mxu0
        %1697 = vmatpush.msra.mxu0 %v839
        %1698 = vmatpush.msra.mxu0 %v835
        %1699 = vmatpush.msra.mxu0 %v831
        %1700 = vmatpush.msra.mxu0 %v827
        %1701 = vmatpush.msra.mxu0 %v823
        %1702 = vmatpush.msra.mxu0 %v819
        %1703 = vmatpush.msra.mxu0 %v815
        %1704 = vmatpush.msra.mxu0 %v811
        %1705 = vmatpush.msra.mxu0 %v807
        %1706 = vmatpush.msra.mxu0 %v803
        %1707 = vmatpush.msra.mxu0 %v799
        %1708 = vmatpush.msra.mxu0 %v795
        %1709 = vmatpush.msra.mxu0 %v791
        %1710 = vmatpush.msra.mxu0 %v787
        %1711 = vmatpush.msra.mxu0 %v783
        %1712 = vmatpush.msra.mxu0 %v779
        %1713 = vmatmul.f32.gmra.mxu0 %v771
        %v1714 = vpop.f32.mrf.mxu0
        %v1715 = vadd.f32 %v1416, %v1714
        %1716 = vmatmul.f32.gmra.mxu0 %v775
        %v1717 = vpop.f32.mrf.mxu0
        %v1718 = vadd.f32 %v1419, %v1717
        %1719 = vdwg.mxu0
        %1720 = vmatpush.msra.mxu0 %v903
        %1721 = vmatpush.msra.mxu0 %v899
        %1722 = vmatpush.msra.mxu0 %v895
        %1723 = vmatpush.msra.mxu0 %v891
        %1724 = vmatpush.msra.mxu0 %v887
        %1725 = vmatpush.msra.mxu0 %v883
        %1726 = vmatpush.msra.mxu0 %v879
        %1727 = vmatpush.msra.mxu0 %v875
        %1728 = vmatpush.msra.mxu0 %v871
        %1729 = vmatpush.msra.mxu0 %v867
        %1730 = vmatpush.msra.mxu0 %v863
        %1731 = vmatpush.msra.mxu0 %v859
        %1732 = vmatpush.msra.mxu0 %v855
        %1733 = vmatpush.msra.mxu0 %v851
        %1734 = vmatpush.msra.mxu0 %v847
        %1735 = vmatpush.msra.mxu0 %v843
        %1736 = vmatmul.f32.gmra.mxu0 %v772
        %v1737 = vpop.f32.mrf.mxu0
        %v1738 = vadd.f32 %v1715, %v1737
        %1739 = vmatmul.f32.gmra.mxu0 %v776
        %v1740 = vpop.f32.mrf.mxu0
        %v1741 = vadd.f32 %v1718, %v1740
        %1742 = vdwg.mxu0
        %1743 = vmatpush.msra.mxu0 %v967
        %1744 = vmatpush.msra.mxu0 %v963
        %1745 = vmatpush.msra.mxu0 %v959
        %1746 = vmatpush.msra.mxu0 %v955
        %1747 = vmatpush.msra.mxu0 %v951
        %1748 = vmatpush.msra.mxu0 %v947
        %1749 = vmatpush.msra.mxu0 %v943
        %1750 = vmatpush.msra.mxu0 %v939
        %1751 = vmatpush.msra.mxu0 %v935
        %1752 = vmatpush.msra.mxu0 %v931
        %1753 = vmatpush.msra.mxu0 %v927
        %1754 = vmatpush.msra.mxu0 %v923
        %1755 = vmatpush.msra.mxu0 %v919
        %1756 = vmatpush.msra.mxu0 %v915
        %1757 = vmatpush.msra.mxu0 %v911
        %1758 = vmatpush.msra.mxu0 %v907
        %1759 = vmatmul.f32.gmra.mxu0 %v773
        %v1760 = vpop.f32.mrf.mxu0
        %v1761 = vadd.f32 %v1738, %v1760
        %1762 = vmatmul.f32.gmra.mxu0 %v777
        %v1763 = vpop.f32.mrf.mxu0
        %v1764 = vadd.f32 %v1741, %v1763
        %1765 = vdwg.mxu0
        %1766 = vmatpush.msra.mxu0 %v1031
        %1767 = vmatpush.msra.mxu0 %v1027
        %1768 = vmatpush.msra.mxu0 %v1023
        %1769 = vmatpush.msra.mxu0 %v1019
        %1770 = vmatpush.msra.mxu0 %v1015
        %1771 = vmatpush.msra.mxu0 %v1011
        %1772 = vmatpush.msra.mxu0 %v1007
        %1773 = vmatpush.msra.mxu0 %v1003
        %1774 = vmatpush.msra.mxu0 %v999
        %1775 = vmatpush.msra.mxu0 %v995
        %1776 = vmatpush.msra.mxu0 %v991
        %1777 = vmatpush.msra.mxu0 %v987
        %1778 = vmatpush.msra.mxu0 %v983
        %1779 = vmatpush.msra.mxu0 %v979
        %1780 = vmatpush.msra.mxu0 %v975
        %1781 = vmatpush.msra.mxu0 %v971
        %1782 = vmatmul.f32.gmra.mxu0 %v774
        %v1783 = vpop.f32.mrf.mxu0
        %v1784 = vadd.f32 %v1761, %v1783
        %1785 = vmatmul.f32.gmra.mxu0 %v778
        %v1786 = vpop.f32.mrf.mxu0
        %v1787 = vadd.f32 %v1764, %v1786
        %1788 = vdwg.mxu0
        %1789 = vmatpush.msra.mxu0 %v840
        %1790 = vmatpush.msra.mxu0 %v836
        %1791 = vmatpush.msra.mxu0 %v832
        %1792 = vmatpush.msra.mxu0 %v828
        %1793 = vmatpush.msra.mxu0 %v824
        %1794 = vmatpush.msra.mxu0 %v820
        %1795 = vmatpush.msra.mxu0 %v816
        %1796 = vmatpush.msra.mxu0 %v812
        %1797 = vmatpush.msra.mxu0 %v808
        %1798 = vmatpush.msra.mxu0 %v804
        %1799 = vmatpush.msra.mxu0 %v800
        %1800 = vmatpush.msra.mxu0 %v796
        %1801 = vmatpush.msra.mxu0 %v792
        %1802 = vmatpush.msra.mxu0 %v788
        %1803 = vmatpush.msra.mxu0 %v784
        %1804 = vmatpush.msra.mxu0 %v780
        %1805 = vmatmul.f32.gmra.mxu0 %v771
        %v1806 = vpop.f32.mrf.mxu0
        %v1807 = vadd.f32 %v1508, %v1806
        %1808 = vmatmul.f32.gmra.mxu0 %v775
        %v1809 = vpop.f32.mrf.mxu0
        %v1810 = vadd.f32 %v1511, %v1809
        %1811 = vdwg.mxu0
        %1812 = vmatpush.msra.mxu0 %v904
        %1813 = vmatpush.msra.mxu0 %v900
        %1814 = vmatpush.msra.mxu0 %v896
        %1815 = vmatpush.msra.mxu0 %v892
        %1816 = vmatpush.msra.mxu0 %v888
        %1817 = vmatpush.msra.mxu0 %v884
        %1818 = vmatpush.msra.mxu0 %v880
        %1819 = vmatpush.msra.mxu0 %v876
        %1820 = vmatpush.msra.mxu0 %v872
        %1821 = vmatpush.msra.mxu0 %v868
        %1822 = vmatpush.msra.mxu0 %v864
        %1823 = vmatpush.msra.mxu0 %v860
        %1824 = vmatpush.msra.mxu0 %v856
        %1825 = vmatpush.msra.mxu0 %v852
        %1826 = vmatpush.msra.mxu0 %v848
        %1827 = vmatpush.msra.mxu0 %v844
        %1828 = vmatmul.f32.gmra.mxu0 %v772
        %v1829 = vpop.f32.mrf.mxu0
        %v1830 = vadd.f32 %v1807, %v1829
        %1831 = vmatmul.f32.gmra.mxu0 %v776
        %v1832 = vpop.f32.mrf.mxu0
        %v1833 = vadd.f32 %v1810, %v1832
        %1834 = vdwg.mxu0
        %1835 = vmatpush.msra.mxu0 %v968
        %1836 = vmatpush.msra.mxu0 %v964
        %1837 = vmatpush.msra.mxu0 %v960
        %1838 = vmatpush.msra.mxu0 %v956
        %1839 = vmatpush.msra.mxu0 %v952
        %1840 = vmatpush.msra.mxu0 %v948
        %1841 = vmatpush.msra.mxu0 %v944
        %1842 = vmatpush.msra.mxu0 %v940
        %1843 = vmatpush.msra.mxu0 %v936
        %1844 = vmatpush.msra.mxu0 %v932
        %1845 = vmatpush.msra.mxu0 %v928
        %1846 = vmatpush.msra.mxu0 %v924
        %1847 = vmatpush.msra.mxu0 %v920
        %1848 = vmatpush.msra.mxu0 %v916
        %1849 = vmatpush.msra.mxu0 %v912
        %1850 = vmatpush.msra.mxu0 %v908
        %1851 = vmatmul.f32.gmra.mxu0 %v773
        %v1852 = vpop.f32.mrf.mxu0
        %v1853 = vadd.f32 %v1830, %v1852
        %1854 = vmatmul.f32.gmra.mxu0 %v777
        %v1855 = vpop.f32.mrf.mxu0
        %v1856 = vadd.f32 %v1833, %v1855
        %1857 = vdwg.mxu0
        %1858 = vmatpush.msra.mxu0 %v1032
        %1859 = vmatpush.msra.mxu0 %v1028
        %1860 = vmatpush.msra.mxu0 %v1024
        %1861 = vmatpush.msra.mxu0 %v1020
        %1862 = vmatpush.msra.mxu0 %v1016
        %1863 = vmatpush.msra.mxu0 %v1012
        %1864 = vmatpush.msra.mxu0 %v1008
        %1865 = vmatpush.msra.mxu0 %v1004
        %1866 = vmatpush.msra.mxu0 %v1000
        %1867 = vmatpush.msra.mxu0 %v996
        %1868 = vmatpush.msra.mxu0 %v992
        %1869 = vmatpush.msra.mxu0 %v988
        %1870 = vmatpush.msra.mxu0 %v984
        %1871 = vmatpush.msra.mxu0 %v980
        %1872 = vmatpush.msra.mxu0 %v976
        %1873 = vmatpush.msra.mxu0 %v972
        %1874 = vmatmul.f32.gmra.mxu0 %v774
        %v1875 = vpop.f32.mrf.mxu0
        %v1876 = vadd.f32 %v1853, %v1875
        %1877 = vmatmul.f32.gmra.mxu0 %v778
        %v1878 = vpop.f32.mrf.mxu0
        %v1879 = vadd.f32 %v1856, %v1878
        %1880 = vdwg.mxu0
        %1881 = vmatpush.msra.mxu0 %v841
        %1882 = vmatpush.msra.mxu0 %v837
        %1883 = vmatpush.msra.mxu0 %v833
        %1884 = vmatpush.msra.mxu0 %v829
        %1885 = vmatpush.msra.mxu0 %v825
        %1886 = vmatpush.msra.mxu0 %v821
        %1887 = vmatpush.msra.mxu0 %v817
        %1888 = vmatpush.msra.mxu0 %v813
        %1889 = vmatpush.msra.mxu0 %v809
        %1890 = vmatpush.msra.mxu0 %v805
        %1891 = vmatpush.msra.mxu0 %v801
        %1892 = vmatpush.msra.mxu0 %v797
        %1893 = vmatpush.msra.mxu0 %v793
        %1894 = vmatpush.msra.mxu0 %v789
        %1895 = vmatpush.msra.mxu0 %v785
        %1896 = vmatpush.msra.mxu0 %v781
        %1897 = vmatmul.f32.gmra.mxu0 %v771
        %v1898 = vpop.f32.mrf.mxu0
        %v1899 = vadd.f32 %v1600, %v1898
        %1900 = vmatmul.f32.gmra.mxu0 %v775
        %v1901 = vpop.f32.mrf.mxu0
        %v1902 = vadd.f32 %v1603, %v1901
        %1903 = vdwg.mxu0
        %1904 = vmatpush.msra.mxu0 %v905
        %1905 = vmatpush.msra.mxu0 %v901
        %1906 = vmatpush.msra.mxu0 %v897
        %1907 = vmatpush.msra.mxu0 %v893
        %1908 = vmatpush.msra.mxu0 %v889
        %1909 = vmatpush.msra.mxu0 %v885
        %1910 = vmatpush.msra.mxu0 %v881
        %1911 = vmatpush.msra.mxu0 %v877
        %1912 = vmatpush.msra.mxu0 %v873
        %1913 = vmatpush.msra.mxu0 %v869
        %1914 = vmatpush.msra.mxu0 %v865
        %1915 = vmatpush.msra.mxu0 %v861
        %1916 = vmatpush.msra.mxu0 %v857
        %1917 = vmatpush.msra.mxu0 %v853
        %1918 = vmatpush.msra.mxu0 %v849
        %1919 = vmatpush.msra.mxu0 %v845
        %1920 = vmatmul.f32.gmra.mxu0 %v772
        %v1921 = vpop.f32.mrf.mxu0
        %v1922 = vadd.f32 %v1899, %v1921
        %1923 = vmatmul.f32.gmra.mxu0 %v776
        %v1924 = vpop.f32.mrf.mxu0
        %v1925 = vadd.f32 %v1902, %v1924
        %1926 = vdwg.mxu0
        %1927 = vmatpush.msra.mxu0 %v969
        %1928 = vmatpush.msra.mxu0 %v965
        %1929 = vmatpush.msra.mxu0 %v961
        %1930 = vmatpush.msra.mxu0 %v957
        %1931 = vmatpush.msra.mxu0 %v953
        %1932 = vmatpush.msra.mxu0 %v949
        %1933 = vmatpush.msra.mxu0 %v945
        %1934 = vmatpush.msra.mxu0 %v941
        %1935 = vmatpush.msra.mxu0 %v937
        %1936 = vmatpush.msra.mxu0 %v933
        %1937 = vmatpush.msra.mxu0 %v929
        %1938 = vmatpush.msra.mxu0 %v925
        %1939 = vmatpush.msra.mxu0 %v921
        %1940 = vmatpush.msra.mxu0 %v917
        %1941 = vmatpush.msra.mxu0 %v913
        %1942 = vmatpush.msra.mxu0 %v909
        %1943 = vmatmul.f32.gmra.mxu0 %v773
        %v1944 = vpop.f32.mrf.mxu0
        %v1945 = vadd.f32 %v1922, %v1944
        %1946 = vmatmul.f32.gmra.mxu0 %v777
        %v1947 = vpop.f32.mrf.mxu0
        %v1948 = vadd.f32 %v1925, %v1947
        %1949 = vdwg.mxu0
        %1950 = vmatpush.msra.mxu0 %v1033
        %1951 = vmatpush.msra.mxu0 %v1029
        %1952 = vmatpush.msra.mxu0 %v1025
        %1953 = vmatpush.msra.mxu0 %v1021
        %1954 = vmatpush.msra.mxu0 %v1017
        %1955 = vmatpush.msra.mxu0 %v1013
        %1956 = vmatpush.msra.mxu0 %v1009
        %1957 = vmatpush.msra.mxu0 %v1005
        %1958 = vmatpush.msra.mxu0 %v1001
        %1959 = vmatpush.msra.mxu0 %v997
        %1960 = vmatpush.msra.mxu0 %v993
        %1961 = vmatpush.msra.mxu0 %v989
        %1962 = vmatpush.msra.mxu0 %v985
        %1963 = vmatpush.msra.mxu0 %v981
        %1964 = vmatpush.msra.mxu0 %v977
        %1965 = vmatpush.msra.mxu0 %v973
        %1966 = vmatmul.f32.gmra.mxu0 %v774
        %v1967 = vpop.f32.mrf.mxu0
        %v1968 = vadd.f32 %v1945, %v1967
        %1969 = vmatmul.f32.gmra.mxu0 %v778
        %v1970 = vpop.f32.mrf.mxu0
        %v1971 = vadd.f32 %v1948, %v1970
        %1972 = vdwg.mxu0
        %1973 = vmatpush.msra.mxu0 %v842
        %1974 = vmatpush.msra.mxu0 %v838
        %1975 = vmatpush.msra.mxu0 %v834
        %1976 = vmatpush.msra.mxu0 %v830
        %1977 = vmatpush.msra.mxu0 %v826
        %1978 = vmatpush.msra.mxu0 %v822
        %1979 = vmatpush.msra.mxu0 %v818
        %1980 = vmatpush.msra.mxu0 %v814
        %1981 = vmatpush.msra.mxu0 %v810
        %1982 = vmatpush.msra.mxu0 %v806
        %1983 = vmatpush.msra.mxu0 %v802
        %1984 = vmatpush.msra.mxu0 %v798
        %1985 = vmatpush.msra.mxu0 %v794
        %1986 = vmatpush.msra.mxu0 %v790
        %1987 = vmatpush.msra.mxu0 %v786
        %1988 = vmatpush.msra.mxu0 %v782
        %1989 = vmatmul.f32.gmra.mxu0 %v771
        %v1990 = vpop.f32.mrf.mxu0
        %v1991 = vadd.f32 %v1692, %v1990
        %1992 = vmatmul.f32.gmra.mxu0 %v775
        %v1993 = vpop.f32.mrf.mxu0
        %v1994 = vadd.f32 %v1695, %v1993
        %1995 = vdwg.mxu0
        %1996 = vmatpush.msra.mxu0 %v906
        %1997 = vmatpush.msra.mxu0 %v902
        %1998 = vmatpush.msra.mxu0 %v898
        %1999 = vmatpush.msra.mxu0 %v894
        %2000 = vmatpush.msra.mxu0 %v890
        %2001 = vmatpush.msra.mxu0 %v886
        %2002 = vmatpush.msra.mxu0 %v882
        %2003 = vmatpush.msra.mxu0 %v878
        %2004 = vmatpush.msra.mxu0 %v874
        %2005 = vmatpush.msra.mxu0 %v870
        %2006 = vmatpush.msra.mxu0 %v866
        %2007 = vmatpush.msra.mxu0 %v862
        %2008 = vmatpush.msra.mxu0 %v858
        %2009 = vmatpush.msra.mxu0 %v854
        %2010 = vmatpush.msra.mxu0 %v850
        %2011 = vmatpush.msra.mxu0 %v846
        %2012 = vmatmul.f32.gmra.mxu0 %v772
        %v2013 = vpop.f32.mrf.mxu0
        %v2014 = vadd.f32 %v1991, %v2013
        %2015 = vmatmul.f32.gmra.mxu0 %v776
        %v2016 = vpop.f32.mrf.mxu0
        %v2017 = vadd.f32 %v1994, %v2016
        %2018 = vdwg.mxu0
        %2019 = vmatpush.msra.mxu0 %v970
        %2020 = vmatpush.msra.mxu0 %v966
        %2021 = vmatpush.msra.mxu0 %v962
        %2022 = vmatpush.msra.mxu0 %v958
        %2023 = vmatpush.msra.mxu0 %v954
        %2024 = vmatpush.msra.mxu0 %v950
        %2025 = vmatpush.msra.mxu0 %v946
        %2026 = vmatpush.msra.mxu0 %v942
        %2027 = vmatpush.msra.mxu0 %v938
        %2028 = vmatpush.msra.mxu0 %v934
        %2029 = vmatpush.msra.mxu0 %v930
        %2030 = vmatpush.msra.mxu0 %v926
        %2031 = vmatpush.msra.mxu0 %v922
        %2032 = vmatpush.msra.mxu0 %v918
        %2033 = vmatpush.msra.mxu0 %v914
        %2034 = vmatpush.msra.mxu0 %v910
        %2035 = vmatmul.f32.gmra.mxu0 %v773
        %v2036 = vpop.f32.mrf.mxu0
        %v2037 = vadd.f32 %v2014, %v2036
        %2038 = vmatmul.f32.gmra.mxu0 %v777
        %v2039 = vpop.f32.mrf.mxu0
        %v2040 = vadd.f32 %v2017, %v2039
        %2041 = vdwg.mxu0
        %2042 = vmatpush.msra.mxu0 %v1034
        %2043 = vmatpush.msra.mxu0 %v1030
        %2044 = vmatpush.msra.mxu0 %v1026
        %2045 = vmatpush.msra.mxu0 %v1022
        %2046 = vmatpush.msra.mxu0 %v1018
        %2047 = vmatpush.msra.mxu0 %v1014
        %2048 = vmatpush.msra.mxu0 %v1010
        %2049 = vmatpush.msra.mxu0 %v1006
        %2050 = vmatpush.msra.mxu0 %v1002
        %2051 = vmatpush.msra.mxu0 %v998
        %2052 = vmatpush.msra.mxu0 %v994
        %2053 = vmatpush.msra.mxu0 %v990
        %2054 = vmatpush.msra.mxu0 %v986
        %2055 = vmatpush.msra.mxu0 %v982
        %2056 = vmatpush.msra.mxu0 %v978
        %2057 = vmatpush.msra.mxu0 %v974
        %2058 = vmatmul.f32.gmra.mxu0 %v774
        %v2059 = vpop.f32.mrf.mxu0
        %v2060 = vadd.f32 %v2037, %v2059
        %2061 = vmatmul.f32.gmra.mxu0 %v778
        %v2062 = vpop.f32.mrf.mxu0
        %v2063 = vadd.f32 %v2040, %v2062
        %2064 = vdwg.mxu0
        %v2065 = vld [vmem:[#allocation3] sm:$0xfc]
        %v2066 = vld [vmem:[#allocation3 + $0x8] sm:$0xfc]
        %v2067 = vld [vmem:[#allocation3 + $0x10] sm:$0xfc]
        %v2068 = vld [vmem:[#allocation3 + $0x18] sm:$0xfc]
        %v2069 = vld [vmem:[#allocation3 + $0x20] sm:$0xff]
        %v2070 = vld [vmem:[#allocation3 + $0x28] sm:$0xff]
        %v2071 = vld [vmem:[#allocation3 + $0x30] sm:$0xff]
        %v2072 = vld [vmem:[#allocation3 + $0x38] sm:$0xff]
        %s2073 = scalar_lea.vmem %s3, 4096
        %v2074 = vld [vmem:[%s2073] sm:$0xff]
        %v2075 = vld [vmem:[%s2073 + $0x8] sm:$0xff]
        %v2076 = vld [vmem:[%s2073 + $0x10] sm:$0xff]
        %v2077 = vld [vmem:[%s2073 + $0x18] sm:$0xff]
        %v2078 = vld [vmem:[%s2073 + $0x20] sm:$0xff]
        %v2079 = vld [vmem:[%s2073 + $0x28] sm:$0xff]
        %v2080 = vld [vmem:[%s2073 + $0x30] sm:$0xff]
        %v2081 = vld [vmem:[%s2073 + $0x38] sm:$0xff]
        %v2082 = vld [vmem:[%s2073 + $0x40] sm:$0xff]
        %v2083 = vld [vmem:[%s2073 + $0x48] sm:$0xff]
        %v2084 = vld [vmem:[%s2073 + $0x50] sm:$0xff]
        %v2085 = vld [vmem:[%s2073 + $0x58] sm:$0xff]
        %v2086 = vld [vmem:[%s2073 + $0x60] sm:$0xff]
        %v2087 = vld [vmem:[%s2073 + $0x68] sm:$0xff]
        %v2088 = vld [vmem:[%s2073 + $0x70] sm:$0xff]
        %v2089 = vld [vmem:[%s2073 + $0x78] sm:$0xff]
        %v2090 = vld [vmem:[%s2073 + $0x80] sm:$0xff]
        %v2091 = vld [vmem:[%s2073 + $0x88] sm:$0xff]
        %v2092 = vld [vmem:[%s2073 + $0x90] sm:$0xff]
        %v2093 = vld [vmem:[%s2073 + $0x98] sm:$0xff]
        %v2094 = vld [vmem:[%s2073 + $0xa0] sm:$0xff]
        %v2095 = vld [vmem:[%s2073 + $0xa8] sm:$0xff]
        %v2096 = vld [vmem:[%s2073 + $0xb0] sm:$0xff]
        %v2097 = vld [vmem:[%s2073 + $0xb8] sm:$0xff]
        %v2098 = vld [vmem:[%s2073 + $0xc0] sm:$0xff]
        %v2099 = vld [vmem:[%s2073 + $0xc8] sm:$0xff]
        %v2100 = vld [vmem:[%s2073 + $0xd0] sm:$0xff]
        %v2101 = vld [vmem:[%s2073 + $0xd8] sm:$0xff]
        %v2102 = vld [vmem:[%s2073 + $0xe0] sm:$0xff]
        %v2103 = vld [vmem:[%s2073 + $0xe8] sm:$0xff]
        %v2104 = vld [vmem:[%s2073 + $0xf0] sm:$0xff]
        %v2105 = vld [vmem:[%s2073 + $0xf8] sm:$0xff]
        %v2106 = vld [vmem:[%s2073 + $0x100] sm:$0xff]
        %v2107 = vld [vmem:[%s2073 + $0x108] sm:$0xff]
        %v2108 = vld [vmem:[%s2073 + $0x110] sm:$0xff]
        %v2109 = vld [vmem:[%s2073 + $0x118] sm:$0xff]
        %v2110 = vld [vmem:[%s2073 + $0x120] sm:$0xff]
        %v2111 = vld [vmem:[%s2073 + $0x128] sm:$0xff]
        %v2112 = vld [vmem:[%s2073 + $0x130] sm:$0xff]
        %v2113 = vld [vmem:[%s2073 + $0x138] sm:$0xff]
        %v2114 = vld [vmem:[%s2073 + $0x140] sm:$0xff]
        %v2115 = vld [vmem:[%s2073 + $0x148] sm:$0xff]
        %v2116 = vld [vmem:[%s2073 + $0x150] sm:$0xff]
        %v2117 = vld [vmem:[%s2073 + $0x158] sm:$0xff]
        %v2118 = vld [vmem:[%s2073 + $0x160] sm:$0xff]
        %v2119 = vld [vmem:[%s2073 + $0x168] sm:$0xff]
        %v2120 = vld [vmem:[%s2073 + $0x170] sm:$0xff]
        %v2121 = vld [vmem:[%s2073 + $0x178] sm:$0xff]
        %v2122 = vld [vmem:[%s2073 + $0x180] sm:$0xff]
        %v2123 = vld [vmem:[%s2073 + $0x188] sm:$0xff]
        %v2124 = vld [vmem:[%s2073 + $0x190] sm:$0xff]
        %v2125 = vld [vmem:[%s2073 + $0x198] sm:$0xff]
        %v2126 = vld [vmem:[%s2073 + $0x1a0] sm:$0xff]
        %v2127 = vld [vmem:[%s2073 + $0x1a8] sm:$0xff]
        %v2128 = vld [vmem:[%s2073 + $0x1b0] sm:$0xff]
        %v2129 = vld [vmem:[%s2073 + $0x1b8] sm:$0xff]
        %v2130 = vld [vmem:[%s2073 + $0x1c0] sm:$0xff]
        %v2131 = vld [vmem:[%s2073 + $0x1c8] sm:$0xff]
        %v2132 = vld [vmem:[%s2073 + $0x1d0] sm:$0xff]
        %v2133 = vld [vmem:[%s2073 + $0x1d8] sm:$0xff]
        %v2134 = vld [vmem:[%s2073 + $0x1e0] sm:$0xff]
        %v2135 = vld [vmem:[%s2073 + $0x1e8] sm:$0xff]
        %v2136 = vld [vmem:[%s2073 + $0x1f0] sm:$0xff]
        %v2137 = vld [vmem:[%s2073 + $0x1f8] sm:$0xff]
        %v2138 = vld [vmem:[%s2073 + $0x200] sm:$0xff]
        %v2139 = vld [vmem:[%s2073 + $0x208] sm:$0xff]
        %v2140 = vld [vmem:[%s2073 + $0x210] sm:$0xff]
        %v2141 = vld [vmem:[%s2073 + $0x218] sm:$0xff]
        %v2142 = vld [vmem:[%s2073 + $0x220] sm:$0xff]
        %v2143 = vld [vmem:[%s2073 + $0x228] sm:$0xff]
        %v2144 = vld [vmem:[%s2073 + $0x230] sm:$0xff]
        %v2145 = vld [vmem:[%s2073 + $0x238] sm:$0xff]
        %v2146 = vld [vmem:[%s2073 + $0x240] sm:$0xff]
        %v2147 = vld [vmem:[%s2073 + $0x248] sm:$0xff]
        %v2148 = vld [vmem:[%s2073 + $0x250] sm:$0xff]
        %v2149 = vld [vmem:[%s2073 + $0x258] sm:$0xff]
        %v2150 = vld [vmem:[%s2073 + $0x260] sm:$0xff]
        %v2151 = vld [vmem:[%s2073 + $0x268] sm:$0xff]
        %v2152 = vld [vmem:[%s2073 + $0x270] sm:$0xff]
        %v2153 = vld [vmem:[%s2073 + $0x278] sm:$0xff]
        %v2154 = vld [vmem:[%s2073 + $0x280] sm:$0xff]
        %v2155 = vld [vmem:[%s2073 + $0x288] sm:$0xff]
        %v2156 = vld [vmem:[%s2073 + $0x290] sm:$0xff]
        %v2157 = vld [vmem:[%s2073 + $0x298] sm:$0xff]
        %v2158 = vld [vmem:[%s2073 + $0x2a0] sm:$0xff]
        %v2159 = vld [vmem:[%s2073 + $0x2a8] sm:$0xff]
        %v2160 = vld [vmem:[%s2073 + $0x2b0] sm:$0xff]
        %v2161 = vld [vmem:[%s2073 + $0x2b8] sm:$0xff]
        %v2162 = vld [vmem:[%s2073 + $0x2c0] sm:$0xff]
        %v2163 = vld [vmem:[%s2073 + $0x2c8] sm:$0xff]
        %v2164 = vld [vmem:[%s2073 + $0x2d0] sm:$0xff]
        %v2165 = vld [vmem:[%s2073 + $0x2d8] sm:$0xff]
        %v2166 = vld [vmem:[%s2073 + $0x2e0] sm:$0xff]
        %v2167 = vld [vmem:[%s2073 + $0x2e8] sm:$0xff]
        %v2168 = vld [vmem:[%s2073 + $0x2f0] sm:$0xff]
        %v2169 = vld [vmem:[%s2073 + $0x2f8] sm:$0xff]
        %v2170 = vld [vmem:[%s2073 + $0x300] sm:$0xff]
        %v2171 = vld [vmem:[%s2073 + $0x308] sm:$0xff]
        %v2172 = vld [vmem:[%s2073 + $0x310] sm:$0xff]
        %v2173 = vld [vmem:[%s2073 + $0x318] sm:$0xff]
        %v2174 = vld [vmem:[%s2073 + $0x320] sm:$0xff]
        %v2175 = vld [vmem:[%s2073 + $0x328] sm:$0xff]
        %v2176 = vld [vmem:[%s2073 + $0x330] sm:$0xff]
        %v2177 = vld [vmem:[%s2073 + $0x338] sm:$0xff]
        %v2178 = vld [vmem:[%s2073 + $0x340] sm:$0xff]
        %v2179 = vld [vmem:[%s2073 + $0x348] sm:$0xff]
        %v2180 = vld [vmem:[%s2073 + $0x350] sm:$0xff]
        %v2181 = vld [vmem:[%s2073 + $0x358] sm:$0xff]
        %v2182 = vld [vmem:[%s2073 + $0x360] sm:$0xff]
        %v2183 = vld [vmem:[%s2073 + $0x368] sm:$0xff]
        %v2184 = vld [vmem:[%s2073 + $0x370] sm:$0xff]
        %v2185 = vld [vmem:[%s2073 + $0x378] sm:$0xff]
        %v2186 = vld [vmem:[%s2073 + $0x380] sm:$0xff]
        %v2187 = vld [vmem:[%s2073 + $0x388] sm:$0xff]
        %v2188 = vld [vmem:[%s2073 + $0x390] sm:$0xff]
        %v2189 = vld [vmem:[%s2073 + $0x398] sm:$0xff]
        %v2190 = vld [vmem:[%s2073 + $0x3a0] sm:$0xff]
        %v2191 = vld [vmem:[%s2073 + $0x3a8] sm:$0xff]
        %v2192 = vld [vmem:[%s2073 + $0x3b0] sm:$0xff]
        %v2193 = vld [vmem:[%s2073 + $0x3b8] sm:$0xff]
        %v2194 = vld [vmem:[%s2073 + $0x3c0] sm:$0xff]
        %v2195 = vld [vmem:[%s2073 + $0x3c8] sm:$0xff]
        %v2196 = vld [vmem:[%s2073 + $0x3d0] sm:$0xff]
        %v2197 = vld [vmem:[%s2073 + $0x3d8] sm:$0xff]
        %v2198 = vld [vmem:[%s2073 + $0x3e0] sm:$0xff]
        %v2199 = vld [vmem:[%s2073 + $0x3e8] sm:$0xff]
        %v2200 = vld [vmem:[%s2073 + $0x3f0] sm:$0xff]
        %v2201 = vld [vmem:[%s2073 + $0x3f8] sm:$0xff]
        %v2202 = vld [vmem:[%s2073 + $0x400] sm:$0xff]
        %v2203 = vld [vmem:[%s2073 + $0x408] sm:$0xff]
        %v2204 = vld [vmem:[%s2073 + $0x410] sm:$0xff]
        %v2205 = vld [vmem:[%s2073 + $0x418] sm:$0xff]
        %v2206 = vld [vmem:[%s2073 + $0x420] sm:$0xff]
        %v2207 = vld [vmem:[%s2073 + $0x428] sm:$0xff]
        %v2208 = vld [vmem:[%s2073 + $0x430] sm:$0xff]
        %v2209 = vld [vmem:[%s2073 + $0x438] sm:$0xff]
        %v2210 = vld [vmem:[%s2073 + $0x440] sm:$0xff]
        %v2211 = vld [vmem:[%s2073 + $0x448] sm:$0xff]
        %v2212 = vld [vmem:[%s2073 + $0x450] sm:$0xff]
        %v2213 = vld [vmem:[%s2073 + $0x458] sm:$0xff]
        %v2214 = vld [vmem:[%s2073 + $0x460] sm:$0xff]
        %v2215 = vld [vmem:[%s2073 + $0x468] sm:$0xff]
        %v2216 = vld [vmem:[%s2073 + $0x470] sm:$0xff]
        %v2217 = vld [vmem:[%s2073 + $0x478] sm:$0xff]
        %v2218 = vld [vmem:[%s2073 + $0x480] sm:$0xff]
        %v2219 = vld [vmem:[%s2073 + $0x488] sm:$0xff]
        %v2220 = vld [vmem:[%s2073 + $0x490] sm:$0xff]
        %v2221 = vld [vmem:[%s2073 + $0x498] sm:$0xff]
        %v2222 = vld [vmem:[%s2073 + $0x4a0] sm:$0xff]
        %v2223 = vld [vmem:[%s2073 + $0x4a8] sm:$0xff]
        %v2224 = vld [vmem:[%s2073 + $0x4b0] sm:$0xff]
        %v2225 = vld [vmem:[%s2073 + $0x4b8] sm:$0xff]
        %v2226 = vld [vmem:[%s2073 + $0x4c0] sm:$0xff]
        %v2227 = vld [vmem:[%s2073 + $0x4c8] sm:$0xff]
        %v2228 = vld [vmem:[%s2073 + $0x4d0] sm:$0xff]
        %v2229 = vld [vmem:[%s2073 + $0x4d8] sm:$0xff]
        %v2230 = vld [vmem:[%s2073 + $0x4e0] sm:$0xff]
        %v2231 = vld [vmem:[%s2073 + $0x4e8] sm:$0xff]
        %v2232 = vld [vmem:[%s2073 + $0x4f0] sm:$0xff]
        %v2233 = vld [vmem:[%s2073 + $0x4f8] sm:$0xff]
        %v2234 = vld [vmem:[%s2073 + $0x500] sm:$0xff]
        %v2235 = vld [vmem:[%s2073 + $0x508] sm:$0xff]
        %v2236 = vld [vmem:[%s2073 + $0x510] sm:$0xff]
        %v2237 = vld [vmem:[%s2073 + $0x518] sm:$0xff]
        %v2238 = vld [vmem:[%s2073 + $0x520] sm:$0xff]
        %v2239 = vld [vmem:[%s2073 + $0x528] sm:$0xff]
        %v2240 = vld [vmem:[%s2073 + $0x530] sm:$0xff]
        %v2241 = vld [vmem:[%s2073 + $0x538] sm:$0xff]
        %v2242 = vld [vmem:[%s2073 + $0x540] sm:$0xff]
        %v2243 = vld [vmem:[%s2073 + $0x548] sm:$0xff]
        %v2244 = vld [vmem:[%s2073 + $0x550] sm:$0xff]
        %v2245 = vld [vmem:[%s2073 + $0x558] sm:$0xff]
        %v2246 = vld [vmem:[%s2073 + $0x560] sm:$0xff]
        %v2247 = vld [vmem:[%s2073 + $0x568] sm:$0xff]
        %v2248 = vld [vmem:[%s2073 + $0x570] sm:$0xff]
        %v2249 = vld [vmem:[%s2073 + $0x578] sm:$0xff]
        %v2250 = vld [vmem:[%s2073 + $0x580] sm:$0xff]
        %v2251 = vld [vmem:[%s2073 + $0x588] sm:$0xff]
        %v2252 = vld [vmem:[%s2073 + $0x590] sm:$0xff]
        %v2253 = vld [vmem:[%s2073 + $0x598] sm:$0xff]
        %v2254 = vld [vmem:[%s2073 + $0x5a0] sm:$0xff]
        %v2255 = vld [vmem:[%s2073 + $0x5a8] sm:$0xff]
        %v2256 = vld [vmem:[%s2073 + $0x5b0] sm:$0xff]
        %v2257 = vld [vmem:[%s2073 + $0x5b8] sm:$0xff]
        %v2258 = vld [vmem:[%s2073 + $0x5c0] sm:$0xff]
        %v2259 = vld [vmem:[%s2073 + $0x5c8] sm:$0xff]
        %v2260 = vld [vmem:[%s2073 + $0x5d0] sm:$0xff]
        %v2261 = vld [vmem:[%s2073 + $0x5d8] sm:$0xff]
        %v2262 = vld [vmem:[%s2073 + $0x5e0] sm:$0xff]
        %v2263 = vld [vmem:[%s2073 + $0x5e8] sm:$0xff]
        %v2264 = vld [vmem:[%s2073 + $0x5f0] sm:$0xff]
        %v2265 = vld [vmem:[%s2073 + $0x5f8] sm:$0xff]
        %v2266 = vld [vmem:[%s2073 + $0x600] sm:$0xff]
        %v2267 = vld [vmem:[%s2073 + $0x608] sm:$0xff]
        %v2268 = vld [vmem:[%s2073 + $0x610] sm:$0xff]
        %v2269 = vld [vmem:[%s2073 + $0x618] sm:$0xff]
        %v2270 = vld [vmem:[%s2073 + $0x620] sm:$0xff]
        %v2271 = vld [vmem:[%s2073 + $0x628] sm:$0xff]
        %v2272 = vld [vmem:[%s2073 + $0x630] sm:$0xff]
        %v2273 = vld [vmem:[%s2073 + $0x638] sm:$0xff]
        %v2274 = vld [vmem:[%s2073 + $0x640] sm:$0xff]
        %v2275 = vld [vmem:[%s2073 + $0x648] sm:$0xff]
        %v2276 = vld [vmem:[%s2073 + $0x650] sm:$0xff]
        %v2277 = vld [vmem:[%s2073 + $0x658] sm:$0xff]
        %v2278 = vld [vmem:[%s2073 + $0x660] sm:$0xff]
        %v2279 = vld [vmem:[%s2073 + $0x668] sm:$0xff]
        %v2280 = vld [vmem:[%s2073 + $0x670] sm:$0xff]
        %v2281 = vld [vmem:[%s2073 + $0x678] sm:$0xff]
        %v2282 = vld [vmem:[%s2073 + $0x680] sm:$0xff]
        %v2283 = vld [vmem:[%s2073 + $0x688] sm:$0xff]
        %v2284 = vld [vmem:[%s2073 + $0x690] sm:$0xff]
        %v2285 = vld [vmem:[%s2073 + $0x698] sm:$0xff]
        %v2286 = vld [vmem:[%s2073 + $0x6a0] sm:$0xff]
        %v2287 = vld [vmem:[%s2073 + $0x6a8] sm:$0xff]
        %v2288 = vld [vmem:[%s2073 + $0x6b0] sm:$0xff]
        %v2289 = vld [vmem:[%s2073 + $0x6b8] sm:$0xff]
        %v2290 = vld [vmem:[%s2073 + $0x6c0] sm:$0xff]
        %v2291 = vld [vmem:[%s2073 + $0x6c8] sm:$0xff]
        %v2292 = vld [vmem:[%s2073 + $0x6d0] sm:$0xff]
        %v2293 = vld [vmem:[%s2073 + $0x6d8] sm:$0xff]
        %v2294 = vld [vmem:[%s2073 + $0x6e0] sm:$0xff]
        %v2295 = vld [vmem:[%s2073 + $0x6e8] sm:$0xff]
        %v2296 = vld [vmem:[%s2073 + $0x6f0] sm:$0xff]
        %v2297 = vld [vmem:[%s2073 + $0x6f8] sm:$0xff]
        %v2298 = vld [vmem:[%s2073 + $0x700] sm:$0xff]
        %v2299 = vld [vmem:[%s2073 + $0x708] sm:$0xff]
        %v2300 = vld [vmem:[%s2073 + $0x710] sm:$0xff]
        %v2301 = vld [vmem:[%s2073 + $0x718] sm:$0xff]
        %v2302 = vld [vmem:[%s2073 + $0x720] sm:$0xff]
        %v2303 = vld [vmem:[%s2073 + $0x728] sm:$0xff]
        %v2304 = vld [vmem:[%s2073 + $0x730] sm:$0xff]
        %v2305 = vld [vmem:[%s2073 + $0x738] sm:$0xff]
        %v2306 = vld [vmem:[%s2073 + $0x740] sm:$0xff]
        %v2307 = vld [vmem:[%s2073 + $0x748] sm:$0xff]
        %v2308 = vld [vmem:[%s2073 + $0x750] sm:$0xff]
        %v2309 = vld [vmem:[%s2073 + $0x758] sm:$0xff]
        %v2310 = vld [vmem:[%s2073 + $0x760] sm:$0xff]
        %v2311 = vld [vmem:[%s2073 + $0x768] sm:$0xff]
        %v2312 = vld [vmem:[%s2073 + $0x770] sm:$0xff]
        %v2313 = vld [vmem:[%s2073 + $0x778] sm:$0xff]
        %v2314 = vld [vmem:[%s2073 + $0x780] sm:$0xff]
        %v2315 = vld [vmem:[%s2073 + $0x788] sm:$0xff]
        %v2316 = vld [vmem:[%s2073 + $0x790] sm:$0xff]
        %v2317 = vld [vmem:[%s2073 + $0x798] sm:$0xff]
        %v2318 = vld [vmem:[%s2073 + $0x7a0] sm:$0xff]
        %v2319 = vld [vmem:[%s2073 + $0x7a8] sm:$0xff]
        %v2320 = vld [vmem:[%s2073 + $0x7b0] sm:$0xff]
        %v2321 = vld [vmem:[%s2073 + $0x7b8] sm:$0xff]
        %v2322 = vld [vmem:[%s2073 + $0x7c0] sm:$0xff]
        %v2323 = vld [vmem:[%s2073 + $0x7c8] sm:$0xff]
        %v2324 = vld [vmem:[%s2073 + $0x7d0] sm:$0xff]
        %v2325 = vld [vmem:[%s2073 + $0x7d8] sm:$0xff]
        %v2326 = vld [vmem:[%s2073 + $0x7e0] sm:$0xff]
        %v2327 = vld [vmem:[%s2073 + $0x7e8] sm:$0xff]
        %v2328 = vld [vmem:[%s2073 + $0x7f0] sm:$0xff]
        %v2329 = vld [vmem:[%s2073 + $0x7f8] sm:$0xff]
        %vm2338 = vcmask 1045504
        %v2339 = vrot.slane %v2065, 2
        %v2340 = vrot.slane %v2069, 2
        %v2341 = vsel %vm2338, %v2339, %v2340
        %v2342 = vrot.slane %v2066, 2
        %v2343 = vrot.slane %v2070, 2
        %v2344 = vsel %vm2338, %v2342, %v2343
        %v2345 = vrot.slane %v2067, 2
        %v2346 = vrot.slane %v2071, 2
        %v2347 = vsel %vm2338, %v2345, %v2346
        %v2348 = vrot.slane %v2068, 2
        %v2349 = vrot.slane %v2072, 2
        %v2350 = vsel %vm2338, %v2348, %v2349
        %2359 = vmatpush.msra.mxu0 %v2134
        %2360 = vmatpush.msra.mxu0 %v2130
        %2361 = vmatpush.msra.mxu0 %v2126
        %2362 = vmatpush.msra.mxu0 %v2122
        %2363 = vmatpush.msra.mxu0 %v2118
        %2364 = vmatpush.msra.mxu0 %v2114
        %2365 = vmatpush.msra.mxu0 %v2110
        %2366 = vmatpush.msra.mxu0 %v2106
        %2367 = vmatpush.msra.mxu0 %v2102
        %2368 = vmatpush.msra.mxu0 %v2098
        %2369 = vmatpush.msra.mxu0 %v2094
        %2370 = vmatpush.msra.mxu0 %v2090
        %2371 = vmatpush.msra.mxu0 %v2086
        %2372 = vmatpush.msra.mxu0 %v2082
        %2373 = vmatpush.msra.mxu0 %v2078
        %2374 = vmatpush.msra.mxu0 %v2074
        %2375 = vmatmul.f32.gmra.mxu0 %v2341
        %v2376 = vpop.f32.mrf.mxu0
        %v2377 = vadd.f32 0.0, %v2376
        %2378 = vmatmul.f32.gmra.mxu0 %v2340
        %v2379 = vpop.f32.mrf.mxu0
        %v2380 = vadd.f32 0.0, %v2379
        %2381 = vdwg.mxu0
        %2382 = vmatpush.msra.mxu0 %v2198
        %2383 = vmatpush.msra.mxu0 %v2194
        %2384 = vmatpush.msra.mxu0 %v2190
        %2385 = vmatpush.msra.mxu0 %v2186
        %2386 = vmatpush.msra.mxu0 %v2182
        %2387 = vmatpush.msra.mxu0 %v2178
        %2388 = vmatpush.msra.mxu0 %v2174
        %2389 = vmatpush.msra.mxu0 %v2170
        %2390 = vmatpush.msra.mxu0 %v2166
        %2391 = vmatpush.msra.mxu0 %v2162
        %2392 = vmatpush.msra.mxu0 %v2158
        %2393 = vmatpush.msra.mxu0 %v2154
        %2394 = vmatpush.msra.mxu0 %v2150
        %2395 = vmatpush.msra.mxu0 %v2146
        %2396 = vmatpush.msra.mxu0 %v2142
        %2397 = vmatpush.msra.mxu0 %v2138
        %2398 = vmatmul.f32.gmra.mxu0 %v2344
        %v2399 = vpop.f32.mrf.mxu0
        %v2400 = vadd.f32 %v2377, %v2399
        %2401 = vmatmul.f32.gmra.mxu0 %v2343
        %v2402 = vpop.f32.mrf.mxu0
        %v2403 = vadd.f32 %v2380, %v2402
        %2404 = vdwg.mxu0
        %2405 = vmatpush.msra.mxu0 %v2262
        %2406 = vmatpush.msra.mxu0 %v2258
        %2407 = vmatpush.msra.mxu0 %v2254
        %2408 = vmatpush.msra.mxu0 %v2250
        %2409 = vmatpush.msra.mxu0 %v2246
        %2410 = vmatpush.msra.mxu0 %v2242
        %2411 = vmatpush.msra.mxu0 %v2238
        %2412 = vmatpush.msra.mxu0 %v2234
        %2413 = vmatpush.msra.mxu0 %v2230
        %2414 = vmatpush.msra.mxu0 %v2226
        %2415 = vmatpush.msra.mxu0 %v2222
        %2416 = vmatpush.msra.mxu0 %v2218
        %2417 = vmatpush.msra.mxu0 %v2214
        %2418 = vmatpush.msra.mxu0 %v2210
        %2419 = vmatpush.msra.mxu0 %v2206
        %2420 = vmatpush.msra.mxu0 %v2202
        %2421 = vmatmul.f32.gmra.mxu0 %v2347
        %v2422 = vpop.f32.mrf.mxu0
        %v2423 = vadd.f32 %v2400, %v2422
        %2424 = vmatmul.f32.gmra.mxu0 %v2346
        %v2425 = vpop.f32.mrf.mxu0
        %v2426 = vadd.f32 %v2403, %v2425
        %2427 = vdwg.mxu0
        %2428 = vmatpush.msra.mxu0 %v2326
        %2429 = vmatpush.msra.mxu0 %v2322
        %2430 = vmatpush.msra.mxu0 %v2318
        %2431 = vmatpush.msra.mxu0 %v2314
        %2432 = vmatpush.msra.mxu0 %v2310
        %2433 = vmatpush.msra.mxu0 %v2306
        %2434 = vmatpush.msra.mxu0 %v2302
        %2435 = vmatpush.msra.mxu0 %v2298
        %2436 = vmatpush.msra.mxu0 %v2294
        %2437 = vmatpush.msra.mxu0 %v2290
        %2438 = vmatpush.msra.mxu0 %v2286
        %2439 = vmatpush.msra.mxu0 %v2282
        %2440 = vmatpush.msra.mxu0 %v2278
        %2441 = vmatpush.msra.mxu0 %v2274
        %2442 = vmatpush.msra.mxu0 %v2270
        %2443 = vmatpush.msra.mxu0 %v2266
        %2444 = vmatmul.f32.gmra.mxu0 %v2350
        %v2445 = vpop.f32.mrf.mxu0
        %v2446 = vadd.f32 %v2423, %v2445
        %2447 = vmatmul.f32.gmra.mxu0 %v2349
        %v2448 = vpop.f32.mrf.mxu0
        %v2449 = vadd.f32 %v2426, %v2448
        %2450 = vdwg.mxu0
        %2451 = vmatpush.msra.mxu0 %v2135
        %2452 = vmatpush.msra.mxu0 %v2131
        %2453 = vmatpush.msra.mxu0 %v2127
        %2454 = vmatpush.msra.mxu0 %v2123
        %2455 = vmatpush.msra.mxu0 %v2119
        %2456 = vmatpush.msra.mxu0 %v2115
        %2457 = vmatpush.msra.mxu0 %v2111
        %2458 = vmatpush.msra.mxu0 %v2107
        %2459 = vmatpush.msra.mxu0 %v2103
        %2460 = vmatpush.msra.mxu0 %v2099
        %2461 = vmatpush.msra.mxu0 %v2095
        %2462 = vmatpush.msra.mxu0 %v2091
        %2463 = vmatpush.msra.mxu0 %v2087
        %2464 = vmatpush.msra.mxu0 %v2083
        %2465 = vmatpush.msra.mxu0 %v2079
        %2466 = vmatpush.msra.mxu0 %v2075
        %2467 = vmatmul.f32.gmra.mxu0 %v2341
        %v2468 = vpop.f32.mrf.mxu0
        %v2469 = vadd.f32 0.0, %v2468
        %2470 = vmatmul.f32.gmra.mxu0 %v2340
        %v2471 = vpop.f32.mrf.mxu0
        %v2472 = vadd.f32 0.0, %v2471
        %2473 = vdwg.mxu0
        %2474 = vmatpush.msra.mxu0 %v2199
        %2475 = vmatpush.msra.mxu0 %v2195
        %2476 = vmatpush.msra.mxu0 %v2191
        %2477 = vmatpush.msra.mxu0 %v2187
        %2478 = vmatpush.msra.mxu0 %v2183
        %2479 = vmatpush.msra.mxu0 %v2179
        %2480 = vmatpush.msra.mxu0 %v2175
        %2481 = vmatpush.msra.mxu0 %v2171
        %2482 = vmatpush.msra.mxu0 %v2167
        %2483 = vmatpush.msra.mxu0 %v2163
        %2484 = vmatpush.msra.mxu0 %v2159
        %2485 = vmatpush.msra.mxu0 %v2155
        %2486 = vmatpush.msra.mxu0 %v2151
        %2487 = vmatpush.msra.mxu0 %v2147
        %2488 = vmatpush.msra.mxu0 %v2143
        %2489 = vmatpush.msra.mxu0 %v2139
        %2490 = vmatmul.f32.gmra.mxu0 %v2344
        %v2491 = vpop.f32.mrf.mxu0
        %v2492 = vadd.f32 %v2469, %v2491
        %2493 = vmatmul.f32.gmra.mxu0 %v2343
        %v2494 = vpop.f32.mrf.mxu0
        %v2495 = vadd.f32 %v2472, %v2494
        %2496 = vdwg.mxu0
        %2497 = vmatpush.msra.mxu0 %v2263
        %2498 = vmatpush.msra.mxu0 %v2259
        %2499 = vmatpush.msra.mxu0 %v2255
        %2500 = vmatpush.msra.mxu0 %v2251
        %2501 = vmatpush.msra.mxu0 %v2247
        %2502 = vmatpush.msra.mxu0 %v2243
        %2503 = vmatpush.msra.mxu0 %v2239
        %2504 = vmatpush.msra.mxu0 %v2235
        %2505 = vmatpush.msra.mxu0 %v2231
        %2506 = vmatpush.msra.mxu0 %v2227
        %2507 = vmatpush.msra.mxu0 %v2223
        %2508 = vmatpush.msra.mxu0 %v2219
        %2509 = vmatpush.msra.mxu0 %v2215
        %2510 = vmatpush.msra.mxu0 %v2211
        %2511 = vmatpush.msra.mxu0 %v2207
        %2512 = vmatpush.msra.mxu0 %v2203
        %2513 = vmatmul.f32.gmra.mxu0 %v2347
        %v2514 = vpop.f32.mrf.mxu0
        %v2515 = vadd.f32 %v2492, %v2514
        %2516 = vmatmul.f32.gmra.mxu0 %v2346
        %v2517 = vpop.f32.mrf.mxu0
        %v2518 = vadd.f32 %v2495, %v2517
        %2519 = vdwg.mxu0
        %2520 = vmatpush.msra.mxu0 %v2327
        %2521 = vmatpush.msra.mxu0 %v2323
        %2522 = vmatpush.msra.mxu0 %v2319
        %2523 = vmatpush.msra.mxu0 %v2315
        %2524 = vmatpush.msra.mxu0 %v2311
        %2525 = vmatpush.msra.mxu0 %v2307
        %2526 = vmatpush.msra.mxu0 %v2303
        %2527 = vmatpush.msra.mxu0 %v2299
        %2528 = vmatpush.msra.mxu0 %v2295
        %2529 = vmatpush.msra.mxu0 %v2291
        %2530 = vmatpush.msra.mxu0 %v2287
        %2531 = vmatpush.msra.mxu0 %v2283
        %2532 = vmatpush.msra.mxu0 %v2279
        %2533 = vmatpush.msra.mxu0 %v2275
        %2534 = vmatpush.msra.mxu0 %v2271
        %2535 = vmatpush.msra.mxu0 %v2267
        %2536 = vmatmul.f32.gmra.mxu0 %v2350
        %v2537 = vpop.f32.mrf.mxu0
        %v2538 = vadd.f32 %v2515, %v2537
        %2539 = vmatmul.f32.gmra.mxu0 %v2349
        %v2540 = vpop.f32.mrf.mxu0
        %v2541 = vadd.f32 %v2518, %v2540
        %2542 = vdwg.mxu0
        %2543 = vmatpush.msra.mxu0 %v2136
        %2544 = vmatpush.msra.mxu0 %v2132
        %2545 = vmatpush.msra.mxu0 %v2128
        %2546 = vmatpush.msra.mxu0 %v2124
        %2547 = vmatpush.msra.mxu0 %v2120
        %2548 = vmatpush.msra.mxu0 %v2116
        %2549 = vmatpush.msra.mxu0 %v2112
        %2550 = vmatpush.msra.mxu0 %v2108
        %2551 = vmatpush.msra.mxu0 %v2104
        %2552 = vmatpush.msra.mxu0 %v2100
        %2553 = vmatpush.msra.mxu0 %v2096
        %2554 = vmatpush.msra.mxu0 %v2092
        %2555 = vmatpush.msra.mxu0 %v2088
        %2556 = vmatpush.msra.mxu0 %v2084
        %2557 = vmatpush.msra.mxu0 %v2080
        %2558 = vmatpush.msra.mxu0 %v2076
        %2559 = vmatmul.f32.gmra.mxu0 %v2341
        %v2560 = vpop.f32.mrf.mxu0
        %v2561 = vadd.f32 0.0, %v2560
        %2562 = vmatmul.f32.gmra.mxu0 %v2340
        %v2563 = vpop.f32.mrf.mxu0
        %v2564 = vadd.f32 0.0, %v2563
        %2565 = vdwg.mxu0
        %2566 = vmatpush.msra.mxu0 %v2200
        %2567 = vmatpush.msra.mxu0 %v2196
        %2568 = vmatpush.msra.mxu0 %v2192
        %2569 = vmatpush.msra.mxu0 %v2188
        %2570 = vmatpush.msra.mxu0 %v2184
        %2571 = vmatpush.msra.mxu0 %v2180
        %2572 = vmatpush.msra.mxu0 %v2176
        %2573 = vmatpush.msra.mxu0 %v2172
        %2574 = vmatpush.msra.mxu0 %v2168
        %2575 = vmatpush.msra.mxu0 %v2164
        %2576 = vmatpush.msra.mxu0 %v2160
        %2577 = vmatpush.msra.mxu0 %v2156
        %2578 = vmatpush.msra.mxu0 %v2152
        %2579 = vmatpush.msra.mxu0 %v2148
        %2580 = vmatpush.msra.mxu0 %v2144
        %2581 = vmatpush.msra.mxu0 %v2140
        %2582 = vmatmul.f32.gmra.mxu0 %v2344
        %v2583 = vpop.f32.mrf.mxu0
        %v2584 = vadd.f32 %v2561, %v2583
        %2585 = vmatmul.f32.gmra.mxu0 %v2343
        %v2586 = vpop.f32.mrf.mxu0
        %v2587 = vadd.f32 %v2564, %v2586
        %2588 = vdwg.mxu0
        %2589 = vmatpush.msra.mxu0 %v2264
        %2590 = vmatpush.msra.mxu0 %v2260
        %2591 = vmatpush.msra.mxu0 %v2256
        %2592 = vmatpush.msra.mxu0 %v2252
        %2593 = vmatpush.msra.mxu0 %v2248
        %2594 = vmatpush.msra.mxu0 %v2244
        %2595 = vmatpush.msra.mxu0 %v2240
        %2596 = vmatpush.msra.mxu0 %v2236
        %2597 = vmatpush.msra.mxu0 %v2232
        %2598 = vmatpush.msra.mxu0 %v2228
        %2599 = vmatpush.msra.mxu0 %v2224
        %2600 = vmatpush.msra.mxu0 %v2220
        %2601 = vmatpush.msra.mxu0 %v2216
        %2602 = vmatpush.msra.mxu0 %v2212
        %2603 = vmatpush.msra.mxu0 %v2208
        %2604 = vmatpush.msra.mxu0 %v2204
        %2605 = vmatmul.f32.gmra.mxu0 %v2347
        %v2606 = vpop.f32.mrf.mxu0
        %v2607 = vadd.f32 %v2584, %v2606
        %2608 = vmatmul.f32.gmra.mxu0 %v2346
        %v2609 = vpop.f32.mrf.mxu0
        %v2610 = vadd.f32 %v2587, %v2609
        %2611 = vdwg.mxu0
        %2612 = vmatpush.msra.mxu0 %v2328
        %2613 = vmatpush.msra.mxu0 %v2324
        %2614 = vmatpush.msra.mxu0 %v2320
        %2615 = vmatpush.msra.mxu0 %v2316
        %2616 = vmatpush.msra.mxu0 %v2312
        %2617 = vmatpush.msra.mxu0 %v2308
        %2618 = vmatpush.msra.mxu0 %v2304
        %2619 = vmatpush.msra.mxu0 %v2300
        %2620 = vmatpush.msra.mxu0 %v2296
        %2621 = vmatpush.msra.mxu0 %v2292
        %2622 = vmatpush.msra.mxu0 %v2288
        %2623 = vmatpush.msra.mxu0 %v2284
        %2624 = vmatpush.msra.mxu0 %v2280
        %2625 = vmatpush.msra.mxu0 %v2276
        %2626 = vmatpush.msra.mxu0 %v2272
        %2627 = vmatpush.msra.mxu0 %v2268
        %2628 = vmatmul.f32.gmra.mxu0 %v2350
        %v2629 = vpop.f32.mrf.mxu0
        %v2630 = vadd.f32 %v2607, %v2629
        %2631 = vmatmul.f32.gmra.mxu0 %v2349
        %v2632 = vpop.f32.mrf.mxu0
        %v2633 = vadd.f32 %v2610, %v2632
        %2634 = vdwg.mxu0
        %2635 = vmatpush.msra.mxu0 %v2137
        %2636 = vmatpush.msra.mxu0 %v2133
        %2637 = vmatpush.msra.mxu0 %v2129
        %2638 = vmatpush.msra.mxu0 %v2125
        %2639 = vmatpush.msra.mxu0 %v2121
        %2640 = vmatpush.msra.mxu0 %v2117
        %2641 = vmatpush.msra.mxu0 %v2113
        %2642 = vmatpush.msra.mxu0 %v2109
        %2643 = vmatpush.msra.mxu0 %v2105
        %2644 = vmatpush.msra.mxu0 %v2101
        %2645 = vmatpush.msra.mxu0 %v2097
        %2646 = vmatpush.msra.mxu0 %v2093
        %2647 = vmatpush.msra.mxu0 %v2089
        %2648 = vmatpush.msra.mxu0 %v2085
        %2649 = vmatpush.msra.mxu0 %v2081
        %2650 = vmatpush.msra.mxu0 %v2077
        %2651 = vmatmul.f32.gmra.mxu0 %v2341
        %v2652 = vpop.f32.mrf.mxu0
        %v2653 = vadd.f32 0.0, %v2652
        %2654 = vmatmul.f32.gmra.mxu0 %v2340
        %v2655 = vpop.f32.mrf.mxu0
        %v2656 = vadd.f32 0.0, %v2655
        %2657 = vdwg.mxu0
        %2658 = vmatpush.msra.mxu0 %v2201
        %2659 = vmatpush.msra.mxu0 %v2197
        %2660 = vmatpush.msra.mxu0 %v2193
        %2661 = vmatpush.msra.mxu0 %v2189
        %2662 = vmatpush.msra.mxu0 %v2185
        %2663 = vmatpush.msra.mxu0 %v2181
        %2664 = vmatpush.msra.mxu0 %v2177
        %2665 = vmatpush.msra.mxu0 %v2173
        %2666 = vmatpush.msra.mxu0 %v2169
        %2667 = vmatpush.msra.mxu0 %v2165
        %2668 = vmatpush.msra.mxu0 %v2161
        %2669 = vmatpush.msra.mxu0 %v2157
        %2670 = vmatpush.msra.mxu0 %v2153
        %2671 = vmatpush.msra.mxu0 %v2149
        %2672 = vmatpush.msra.mxu0 %v2145
        %2673 = vmatpush.msra.mxu0 %v2141
        %2674 = vmatmul.f32.gmra.mxu0 %v2344
        %v2675 = vpop.f32.mrf.mxu0
        %v2676 = vadd.f32 %v2653, %v2675
        %2677 = vmatmul.f32.gmra.mxu0 %v2343
        %v2678 = vpop.f32.mrf.mxu0
        %v2679 = vadd.f32 %v2656, %v2678
        %2680 = vdwg.mxu0
        %2681 = vmatpush.msra.mxu0 %v2265
        %2682 = vmatpush.msra.mxu0 %v2261
        %2683 = vmatpush.msra.mxu0 %v2257
        %2684 = vmatpush.msra.mxu0 %v2253
        %2685 = vmatpush.msra.mxu0 %v2249
        %2686 = vmatpush.msra.mxu0 %v2245
        %2687 = vmatpush.msra.mxu0 %v2241
        %2688 = vmatpush.msra.mxu0 %v2237
        %2689 = vmatpush.msra.mxu0 %v2233
        %2690 = vmatpush.msra.mxu0 %v2229
        %2691 = vmatpush.msra.mxu0 %v2225
        %2692 = vmatpush.msra.mxu0 %v2221
        %2693 = vmatpush.msra.mxu0 %v2217
        %2694 = vmatpush.msra.mxu0 %v2213
        %2695 = vmatpush.msra.mxu0 %v2209
        %2696 = vmatpush.msra.mxu0 %v2205
        %2697 = vmatmul.f32.gmra.mxu0 %v2347
        %v2698 = vpop.f32.mrf.mxu0
        %v2699 = vadd.f32 %v2676, %v2698
        %2700 = vmatmul.f32.gmra.mxu0 %v2346
        %v2701 = vpop.f32.mrf.mxu0
        %v2702 = vadd.f32 %v2679, %v2701
        %2703 = vdwg.mxu0
        %2704 = vmatpush.msra.mxu0 %v2329
        %2705 = vmatpush.msra.mxu0 %v2325
        %2706 = vmatpush.msra.mxu0 %v2321
        %2707 = vmatpush.msra.mxu0 %v2317
        %2708 = vmatpush.msra.mxu0 %v2313
        %2709 = vmatpush.msra.mxu0 %v2309
        %2710 = vmatpush.msra.mxu0 %v2305
        %2711 = vmatpush.msra.mxu0 %v2301
        %2712 = vmatpush.msra.mxu0 %v2297
        %2713 = vmatpush.msra.mxu0 %v2293
        %2714 = vmatpush.msra.mxu0 %v2289
        %2715 = vmatpush.msra.mxu0 %v2285
        %2716 = vmatpush.msra.mxu0 %v2281
        %2717 = vmatpush.msra.mxu0 %v2277
        %2718 = vmatpush.msra.mxu0 %v2273
        %2719 = vmatpush.msra.mxu0 %v2269
        %2720 = vmatmul.f32.gmra.mxu0 %v2350
        %v2721 = vpop.f32.mrf.mxu0
        %v2722 = vadd.f32 %v2699, %v2721
        %2723 = vmatmul.f32.gmra.mxu0 %v2349
        %v2724 = vpop.f32.mrf.mxu0
        %v2725 = vadd.f32 %v2702, %v2724
        %2726 = vdwg.mxu0
        %v2727 = vadd.f32 %v1784, %v2446
        %v2728 = vadd.f32 %v1876, %v2538
        %v2729 = vadd.f32 %v1968, %v2630
        %v2730 = vadd.f32 %v2060, %v2722
        %v2731 = vadd.f32 %v1787, %v2449
        %v2732 = vadd.f32 %v1879, %v2541
        %v2733 = vadd.f32 %v1971, %v2633
        %v2734 = vadd.f32 %v2063, %v2725
        %v2735 = vld [vmem:[%s4] sm:$0xf]
        %v2737 = vperm.slane %v2735, 0
        %v2738 = vperm.slane %v2735, 1
        %v2739 = vperm.slane %v2735, 2
        %v2740 = vperm.slane %v2735, 3
        %v2745 = vadd.f32 %v2727, %v2737
        %v2746 = vadd.f32 %v2728, %v2738
        %v2747 = vadd.f32 %v2729, %v2739
        %v2748 = vadd.f32 %v2730, %v2740
        %v2749 = vadd.f32 %v2731, %v2737
        %v2750 = vadd.f32 %v2732, %v2738
        %v2751 = vadd.f32 %v2733, %v2739
        %v2752 = vadd.f32 %v2734, %v2740
        %v2753 = vmax.f32 %v2745, 0.0
        %v2754 = vmax.f32 %v2746, 0.0
        %v2755 = vmax.f32 %v2747, 0.0
        %v2756 = vmax.f32 %v2748, 0.0
        %v2757 = vmax.f32 %v2749, 0.0
        %v2758 = vmax.f32 %v2750, 0.0
        %v2759 = vmax.f32 %v2751, 0.0
        %v2760 = vmax.f32 %v2752, 0.0
        %v2769 = vrot.slane %v2753, 7
        %v2770 = vrot.slane %v2754, 7
        %v2771 = vrot.slane %v2755, 7
        %v2772 = vrot.slane %v2756, 7
        %v2773 = vrot.slane %v2757, 7
        %v2774 = vsel %vm742, %v2769, %v2773
        %v2775 = vrot.slane %v2758, 7
        %v2776 = vsel %vm742, %v2770, %v2775
        %v2777 = vrot.slane %v2759, 7
        %v2778 = vsel %vm742, %v2771, %v2777
        %v2779 = vrot.slane %v2760, 7
        %v2780 = vsel %vm742, %v2772, %v2779
        %2789 = vst [vmem:[#allocation4] sm:$0xfe] %v2769
        %2790 = vst [vmem:[#allocation4 + $0x8] sm:$0xfe] %v2770
        %2791 = vst [vmem:[#allocation4 + $0x10] sm:$0xfe] %v2771
        %2792 = vst [vmem:[#allocation4 + $0x18] sm:$0xfe] %v2772
        %2793 = vst [vmem:[#allocation4 + $0x20] sm:$0x7f] %v2774
        %2794 = vst [vmem:[#allocation4 + $0x28] sm:$0x7f] %v2776
        %2795 = vst [vmem:[#allocation4 + $0x30] sm:$0x7f] %v2778
        %2796 = vst [vmem:[#allocation4 + $0x38] sm:$0x7f] %v2780
        %v2797 = vld [vmem:[#allocation4] sm:$0xff]
        %v2798 = vld [vmem:[#allocation4 + $0x8] sm:$0xff]
        %v2799 = vld [vmem:[#allocation4 + $0x10] sm:$0xff]
        %v2800 = vld [vmem:[#allocation4 + $0x18] sm:$0xff]
        %v2801 = vld [vmem:[#allocation4 + $0x20] sm:$0x3f]
        %v2802 = vld [vmem:[#allocation4 + $0x28] sm:$0x3f]
        %v2803 = vld [vmem:[#allocation4 + $0x30] sm:$0x3f]
        %v2804 = vld [vmem:[#allocation4 + $0x38] sm:$0x3f]
        %v2805 = vld [vmem:[#allocation5] sm:$0xff]
        %v2806 = vld [vmem:[#allocation5 + $0x8] sm:$0xff]
        %v2807 = vld [vmem:[#allocation5 + $0x10] sm:$0xff]
        %v2808 = vld [vmem:[#allocation5 + $0x18] sm:$0xff]
        %v2809 = vld [vmem:[#allocation5 + $0x20] sm:$0xff]
        %v2810 = vld [vmem:[#allocation5 + $0x28] sm:$0xff]
        %v2811 = vld [vmem:[#allocation5 + $0x30] sm:$0xff]
        %v2812 = vld [vmem:[#allocation5 + $0x38] sm:$0xff]
        %v2813 = vld [vmem:[#allocation5 + $0x40] sm:$0xff]
        %v2814 = vld [vmem:[#allocation5 + $0x48] sm:$0xff]
        %v2815 = vld [vmem:[#allocation5 + $0x50] sm:$0xff]
        %v2816 = vld [vmem:[#allocation5 + $0x58] sm:$0xff]
        %v2817 = vld [vmem:[#allocation5 + $0x60] sm:$0xff]
        %v2818 = vld [vmem:[#allocation5 + $0x68] sm:$0xff]
        %v2819 = vld [vmem:[#allocation5 + $0x70] sm:$0xff]
        %v2820 = vld [vmem:[#allocation5 + $0x78] sm:$0xff]
        %v2821 = vld [vmem:[#allocation5 + $0x80] sm:$0xff]
        %v2822 = vld [vmem:[#allocation5 + $0x88] sm:$0xff]
        %v2823 = vld [vmem:[#allocation5 + $0x90] sm:$0xff]
        %v2824 = vld [vmem:[#allocation5 + $0x98] sm:$0xff]
        %v2825 = vld [vmem:[#allocation5 + $0xa0] sm:$0xff]
        %v2826 = vld [vmem:[#allocation5 + $0xa8] sm:$0xff]
        %v2827 = vld [vmem:[#allocation5 + $0xb0] sm:$0xff]
        %v2828 = vld [vmem:[#allocation5 + $0xb8] sm:$0xff]
        %v2829 = vld [vmem:[#allocation5 + $0xc0] sm:$0xff]
        %v2830 = vld [vmem:[#allocation5 + $0xc8] sm:$0xff]
        %v2831 = vld [vmem:[#allocation5 + $0xd0] sm:$0xff]
        %v2832 = vld [vmem:[#allocation5 + $0xd8] sm:$0xff]
        %v2833 = vld [vmem:[#allocation5 + $0xe0] sm:$0xff]
        %v2834 = vld [vmem:[#allocation5 + $0xe8] sm:$0xff]
        %v2835 = vld [vmem:[#allocation5 + $0xf0] sm:$0xff]
        %v2836 = vld [vmem:[#allocation5 + $0xf8] sm:$0xff]
        %v2837 = vld [vmem:[#allocation5 + $0x100] sm:$0xff]
        %v2838 = vld [vmem:[#allocation5 + $0x108] sm:$0xff]
        %v2839 = vld [vmem:[#allocation5 + $0x110] sm:$0xff]
        %v2840 = vld [vmem:[#allocation5 + $0x118] sm:$0xff]
        %v2841 = vld [vmem:[#allocation5 + $0x120] sm:$0xff]
        %v2842 = vld [vmem:[#allocation5 + $0x128] sm:$0xff]
        %v2843 = vld [vmem:[#allocation5 + $0x130] sm:$0xff]
        %v2844 = vld [vmem:[#allocation5 + $0x138] sm:$0xff]
        %v2845 = vld [vmem:[#allocation5 + $0x140] sm:$0xff]
        %v2846 = vld [vmem:[#allocation5 + $0x148] sm:$0xff]
        %v2847 = vld [vmem:[#allocation5 + $0x150] sm:$0xff]
        %v2848 = vld [vmem:[#allocation5 + $0x158] sm:$0xff]
        %v2849 = vld [vmem:[#allocation5 + $0x160] sm:$0xff]
        %v2850 = vld [vmem:[#allocation5 + $0x168] sm:$0xff]
        %v2851 = vld [vmem:[#allocation5 + $0x170] sm:$0xff]
        %v2852 = vld [vmem:[#allocation5 + $0x178] sm:$0xff]
        %v2853 = vld [vmem:[#allocation5 + $0x180] sm:$0xff]
        %v2854 = vld [vmem:[#allocation5 + $0x188] sm:$0xff]
        %v2855 = vld [vmem:[#allocation5 + $0x190] sm:$0xff]
        %v2856 = vld [vmem:[#allocation5 + $0x198] sm:$0xff]
        %v2857 = vld [vmem:[#allocation5 + $0x1a0] sm:$0xff]
        %v2858 = vld [vmem:[#allocation5 + $0x1a8] sm:$0xff]
        %v2859 = vld [vmem:[#allocation5 + $0x1b0] sm:$0xff]
        %v2860 = vld [vmem:[#allocation5 + $0x1b8] sm:$0xff]
        %v2861 = vld [vmem:[#allocation5 + $0x1c0] sm:$0xff]
        %v2862 = vld [vmem:[#allocation5 + $0x1c8] sm:$0xff]
        %v2863 = vld [vmem:[#allocation5 + $0x1d0] sm:$0xff]
        %v2864 = vld [vmem:[#allocation5 + $0x1d8] sm:$0xff]
        %v2865 = vld [vmem:[#allocation5 + $0x1e0] sm:$0xff]
        %v2866 = vld [vmem:[#allocation5 + $0x1e8] sm:$0xff]
        %v2867 = vld [vmem:[#allocation5 + $0x1f0] sm:$0xff]
        %v2868 = vld [vmem:[#allocation5 + $0x1f8] sm:$0xff]
        %v2869 = vld [vmem:[#allocation5 + $0x200] sm:$0xff]
        %v2870 = vld [vmem:[#allocation5 + $0x208] sm:$0xff]
        %v2871 = vld [vmem:[#allocation5 + $0x210] sm:$0xff]
        %v2872 = vld [vmem:[#allocation5 + $0x218] sm:$0xff]
        %v2873 = vld [vmem:[#allocation5 + $0x220] sm:$0xff]
        %v2874 = vld [vmem:[#allocation5 + $0x228] sm:$0xff]
        %v2875 = vld [vmem:[#allocation5 + $0x230] sm:$0xff]
        %v2876 = vld [vmem:[#allocation5 + $0x238] sm:$0xff]
        %v2877 = vld [vmem:[#allocation5 + $0x240] sm:$0xff]
        %v2878 = vld [vmem:[#allocation5 + $0x248] sm:$0xff]
        %v2879 = vld [vmem:[#allocation5 + $0x250] sm:$0xff]
        %v2880 = vld [vmem:[#allocation5 + $0x258] sm:$0xff]
        %v2881 = vld [vmem:[#allocation5 + $0x260] sm:$0xff]
        %v2882 = vld [vmem:[#allocation5 + $0x268] sm:$0xff]
        %v2883 = vld [vmem:[#allocation5 + $0x270] sm:$0xff]
        %v2884 = vld [vmem:[#allocation5 + $0x278] sm:$0xff]
        %v2885 = vld [vmem:[#allocation5 + $0x280] sm:$0xff]
        %v2886 = vld [vmem:[#allocation5 + $0x288] sm:$0xff]
        %v2887 = vld [vmem:[#allocation5 + $0x290] sm:$0xff]
        %v2888 = vld [vmem:[#allocation5 + $0x298] sm:$0xff]
        %v2889 = vld [vmem:[#allocation5 + $0x2a0] sm:$0xff]
        %v2890 = vld [vmem:[#allocation5 + $0x2a8] sm:$0xff]
        %v2891 = vld [vmem:[#allocation5 + $0x2b0] sm:$0xff]
        %v2892 = vld [vmem:[#allocation5 + $0x2b8] sm:$0xff]
        %v2893 = vld [vmem:[#allocation5 + $0x2c0] sm:$0xff]
        %v2894 = vld [vmem:[#allocation5 + $0x2c8] sm:$0xff]
        %v2895 = vld [vmem:[#allocation5 + $0x2d0] sm:$0xff]
        %v2896 = vld [vmem:[#allocation5 + $0x2d8] sm:$0xff]
        %v2897 = vld [vmem:[#allocation5 + $0x2e0] sm:$0xff]
        %v2898 = vld [vmem:[#allocation5 + $0x2e8] sm:$0xff]
        %v2899 = vld [vmem:[#allocation5 + $0x2f0] sm:$0xff]
        %v2900 = vld [vmem:[#allocation5 + $0x2f8] sm:$0xff]
        %v2901 = vld [vmem:[#allocation5 + $0x300] sm:$0xff]
        %v2902 = vld [vmem:[#allocation5 + $0x308] sm:$0xff]
        %v2903 = vld [vmem:[#allocation5 + $0x310] sm:$0xff]
        %v2904 = vld [vmem:[#allocation5 + $0x318] sm:$0xff]
        %v2905 = vld [vmem:[#allocation5 + $0x320] sm:$0xff]
        %v2906 = vld [vmem:[#allocation5 + $0x328] sm:$0xff]
        %v2907 = vld [vmem:[#allocation5 + $0x330] sm:$0xff]
        %v2908 = vld [vmem:[#allocation5 + $0x338] sm:$0xff]
        %v2909 = vld [vmem:[#allocation5 + $0x340] sm:$0xff]
        %v2910 = vld [vmem:[#allocation5 + $0x348] sm:$0xff]
        %v2911 = vld [vmem:[#allocation5 + $0x350] sm:$0xff]
        %v2912 = vld [vmem:[#allocation5 + $0x358] sm:$0xff]
        %v2913 = vld [vmem:[#allocation5 + $0x360] sm:$0xff]
        %v2914 = vld [vmem:[#allocation5 + $0x368] sm:$0xff]
        %v2915 = vld [vmem:[#allocation5 + $0x370] sm:$0xff]
        %v2916 = vld [vmem:[#allocation5 + $0x378] sm:$0xff]
        %v2917 = vld [vmem:[#allocation5 + $0x380] sm:$0xff]
        %v2918 = vld [vmem:[#allocation5 + $0x388] sm:$0xff]
        %v2919 = vld [vmem:[#allocation5 + $0x390] sm:$0xff]
        %v2920 = vld [vmem:[#allocation5 + $0x398] sm:$0xff]
        %v2921 = vld [vmem:[#allocation5 + $0x3a0] sm:$0xff]
        %v2922 = vld [vmem:[#allocation5 + $0x3a8] sm:$0xff]
        %v2923 = vld [vmem:[#allocation5 + $0x3b0] sm:$0xff]
        %v2924 = vld [vmem:[#allocation5 + $0x3b8] sm:$0xff]
        %v2925 = vld [vmem:[#allocation5 + $0x3c0] sm:$0xff]
        %v2926 = vld [vmem:[#allocation5 + $0x3c8] sm:$0xff]
        %v2927 = vld [vmem:[#allocation5 + $0x3d0] sm:$0xff]
        %v2928 = vld [vmem:[#allocation5 + $0x3d8] sm:$0xff]
        %v2929 = vld [vmem:[#allocation5 + $0x3e0] sm:$0xff]
        %v2930 = vld [vmem:[#allocation5 + $0x3e8] sm:$0xff]
        %v2931 = vld [vmem:[#allocation5 + $0x3f0] sm:$0xff]
        %v2932 = vld [vmem:[#allocation5 + $0x3f8] sm:$0xff]
        %v2933 = vld [vmem:[#allocation5 + $0x400] sm:$0xff]
        %v2934 = vld [vmem:[#allocation5 + $0x408] sm:$0xff]
        %v2935 = vld [vmem:[#allocation5 + $0x410] sm:$0xff]
        %v2936 = vld [vmem:[#allocation5 + $0x418] sm:$0xff]
        %v2937 = vld [vmem:[#allocation5 + $0x420] sm:$0xff]
        %v2938 = vld [vmem:[#allocation5 + $0x428] sm:$0xff]
        %v2939 = vld [vmem:[#allocation5 + $0x430] sm:$0xff]
        %v2940 = vld [vmem:[#allocation5 + $0x438] sm:$0xff]
        %v2941 = vld [vmem:[#allocation5 + $0x440] sm:$0xff]
        %v2942 = vld [vmem:[#allocation5 + $0x448] sm:$0xff]
        %v2943 = vld [vmem:[#allocation5 + $0x450] sm:$0xff]
        %v2944 = vld [vmem:[#allocation5 + $0x458] sm:$0xff]
        %v2945 = vld [vmem:[#allocation5 + $0x460] sm:$0xff]
        %v2946 = vld [vmem:[#allocation5 + $0x468] sm:$0xff]
        %v2947 = vld [vmem:[#allocation5 + $0x470] sm:$0xff]
        %v2948 = vld [vmem:[#allocation5 + $0x478] sm:$0xff]
        %v2949 = vld [vmem:[#allocation5 + $0x480] sm:$0xff]
        %v2950 = vld [vmem:[#allocation5 + $0x488] sm:$0xff]
        %v2951 = vld [vmem:[#allocation5 + $0x490] sm:$0xff]
        %v2952 = vld [vmem:[#allocation5 + $0x498] sm:$0xff]
        %v2953 = vld [vmem:[#allocation5 + $0x4a0] sm:$0xff]
        %v2954 = vld [vmem:[#allocation5 + $0x4a8] sm:$0xff]
        %v2955 = vld [vmem:[#allocation5 + $0x4b0] sm:$0xff]
        %v2956 = vld [vmem:[#allocation5 + $0x4b8] sm:$0xff]
        %v2957 = vld [vmem:[#allocation5 + $0x4c0] sm:$0xff]
        %v2958 = vld [vmem:[#allocation5 + $0x4c8] sm:$0xff]
        %v2959 = vld [vmem:[#allocation5 + $0x4d0] sm:$0xff]
        %v2960 = vld [vmem:[#allocation5 + $0x4d8] sm:$0xff]
        %v2961 = vld [vmem:[#allocation5 + $0x4e0] sm:$0xff]
        %v2962 = vld [vmem:[#allocation5 + $0x4e8] sm:$0xff]
        %v2963 = vld [vmem:[#allocation5 + $0x4f0] sm:$0xff]
        %v2964 = vld [vmem:[#allocation5 + $0x4f8] sm:$0xff]
        %v2965 = vld [vmem:[#allocation5 + $0x500] sm:$0xff]
        %v2966 = vld [vmem:[#allocation5 + $0x508] sm:$0xff]
        %v2967 = vld [vmem:[#allocation5 + $0x510] sm:$0xff]
        %v2968 = vld [vmem:[#allocation5 + $0x518] sm:$0xff]
        %v2969 = vld [vmem:[#allocation5 + $0x520] sm:$0xff]
        %v2970 = vld [vmem:[#allocation5 + $0x528] sm:$0xff]
        %v2971 = vld [vmem:[#allocation5 + $0x530] sm:$0xff]
        %v2972 = vld [vmem:[#allocation5 + $0x538] sm:$0xff]
        %v2973 = vld [vmem:[#allocation5 + $0x540] sm:$0xff]
        %v2974 = vld [vmem:[#allocation5 + $0x548] sm:$0xff]
        %v2975 = vld [vmem:[#allocation5 + $0x550] sm:$0xff]
        %v2976 = vld [vmem:[#allocation5 + $0x558] sm:$0xff]
        %v2977 = vld [vmem:[#allocation5 + $0x560] sm:$0xff]
        %v2978 = vld [vmem:[#allocation5 + $0x568] sm:$0xff]
        %v2979 = vld [vmem:[#allocation5 + $0x570] sm:$0xff]
        %v2980 = vld [vmem:[#allocation5 + $0x578] sm:$0xff]
        %v2981 = vld [vmem:[#allocation5 + $0x580] sm:$0xff]
        %v2982 = vld [vmem:[#allocation5 + $0x588] sm:$0xff]
        %v2983 = vld [vmem:[#allocation5 + $0x590] sm:$0xff]
        %v2984 = vld [vmem:[#allocation5 + $0x598] sm:$0xff]
        %v2985 = vld [vmem:[#allocation5 + $0x5a0] sm:$0xff]
        %v2986 = vld [vmem:[#allocation5 + $0x5a8] sm:$0xff]
        %v2987 = vld [vmem:[#allocation5 + $0x5b0] sm:$0xff]
        %v2988 = vld [vmem:[#allocation5 + $0x5b8] sm:$0xff]
        %v2989 = vld [vmem:[#allocation5 + $0x5c0] sm:$0xff]
        %v2990 = vld [vmem:[#allocation5 + $0x5c8] sm:$0xff]
        %v2991 = vld [vmem:[#allocation5 + $0x5d0] sm:$0xff]
        %v2992 = vld [vmem:[#allocation5 + $0x5d8] sm:$0xff]
        %v2993 = vld [vmem:[#allocation5 + $0x5e0] sm:$0xff]
        %v2994 = vld [vmem:[#allocation5 + $0x5e8] sm:$0xff]
        %v2995 = vld [vmem:[#allocation5 + $0x5f0] sm:$0xff]
        %v2996 = vld [vmem:[#allocation5 + $0x5f8] sm:$0xff]
        %v2997 = vld [vmem:[#allocation5 + $0x600] sm:$0xff]
        %v2998 = vld [vmem:[#allocation5 + $0x608] sm:$0xff]
        %v2999 = vld [vmem:[#allocation5 + $0x610] sm:$0xff]
        %v3000 = vld [vmem:[#allocation5 + $0x618] sm:$0xff]
        %v3001 = vld [vmem:[#allocation5 + $0x620] sm:$0xff]
        %v3002 = vld [vmem:[#allocation5 + $0x628] sm:$0xff]
        %v3003 = vld [vmem:[#allocation5 + $0x630] sm:$0xff]
        %v3004 = vld [vmem:[#allocation5 + $0x638] sm:$0xff]
        %v3005 = vld [vmem:[#allocation5 + $0x640] sm:$0xff]
        %v3006 = vld [vmem:[#allocation5 + $0x648] sm:$0xff]
        %v3007 = vld [vmem:[#allocation5 + $0x650] sm:$0xff]
        %v3008 = vld [vmem:[#allocation5 + $0x658] sm:$0xff]
        %v3009 = vld [vmem:[#allocation5 + $0x660] sm:$0xff]
        %v3010 = vld [vmem:[#allocation5 + $0x668] sm:$0xff]
        %v3011 = vld [vmem:[#allocation5 + $0x670] sm:$0xff]
        %v3012 = vld [vmem:[#allocation5 + $0x678] sm:$0xff]
        %v3013 = vld [vmem:[#allocation5 + $0x680] sm:$0xff]
        %v3014 = vld [vmem:[#allocation5 + $0x688] sm:$0xff]
        %v3015 = vld [vmem:[#allocation5 + $0x690] sm:$0xff]
        %v3016 = vld [vmem:[#allocation5 + $0x698] sm:$0xff]
        %v3017 = vld [vmem:[#allocation5 + $0x6a0] sm:$0xff]
        %v3018 = vld [vmem:[#allocation5 + $0x6a8] sm:$0xff]
        %v3019 = vld [vmem:[#allocation5 + $0x6b0] sm:$0xff]
        %v3020 = vld [vmem:[#allocation5 + $0x6b8] sm:$0xff]
        %v3021 = vld [vmem:[#allocation5 + $0x6c0] sm:$0xff]
        %v3022 = vld [vmem:[#allocation5 + $0x6c8] sm:$0xff]
        %v3023 = vld [vmem:[#allocation5 + $0x6d0] sm:$0xff]
        %v3024 = vld [vmem:[#allocation5 + $0x6d8] sm:$0xff]
        %v3025 = vld [vmem:[#allocation5 + $0x6e0] sm:$0xff]
        %v3026 = vld [vmem:[#allocation5 + $0x6e8] sm:$0xff]
        %v3027 = vld [vmem:[#allocation5 + $0x6f0] sm:$0xff]
        %v3028 = vld [vmem:[#allocation5 + $0x6f8] sm:$0xff]
        %v3029 = vld [vmem:[#allocation5 + $0x700] sm:$0xff]
        %v3030 = vld [vmem:[#allocation5 + $0x708] sm:$0xff]
        %v3031 = vld [vmem:[#allocation5 + $0x710] sm:$0xff]
        %v3032 = vld [vmem:[#allocation5 + $0x718] sm:$0xff]
        %v3033 = vld [vmem:[#allocation5 + $0x720] sm:$0xff]
        %v3034 = vld [vmem:[#allocation5 + $0x728] sm:$0xff]
        %v3035 = vld [vmem:[#allocation5 + $0x730] sm:$0xff]
        %v3036 = vld [vmem:[#allocation5 + $0x738] sm:$0xff]
        %v3037 = vld [vmem:[#allocation5 + $0x740] sm:$0xff]
        %v3038 = vld [vmem:[#allocation5 + $0x748] sm:$0xff]
        %v3039 = vld [vmem:[#allocation5 + $0x750] sm:$0xff]
        %v3040 = vld [vmem:[#allocation5 + $0x758] sm:$0xff]
        %v3041 = vld [vmem:[#allocation5 + $0x760] sm:$0xff]
        %v3042 = vld [vmem:[#allocation5 + $0x768] sm:$0xff]
        %v3043 = vld [vmem:[#allocation5 + $0x770] sm:$0xff]
        %v3044 = vld [vmem:[#allocation5 + $0x778] sm:$0xff]
        %v3045 = vld [vmem:[#allocation5 + $0x780] sm:$0xff]
        %v3046 = vld [vmem:[#allocation5 + $0x788] sm:$0xff]
        %v3047 = vld [vmem:[#allocation5 + $0x790] sm:$0xff]
        %v3048 = vld [vmem:[#allocation5 + $0x798] sm:$0xff]
        %v3049 = vld [vmem:[#allocation5 + $0x7a0] sm:$0xff]
        %v3050 = vld [vmem:[#allocation5 + $0x7a8] sm:$0xff]
        %v3051 = vld [vmem:[#allocation5 + $0x7b0] sm:$0xff]
        %v3052 = vld [vmem:[#allocation5 + $0x7b8] sm:$0xff]
        %v3053 = vld [vmem:[#allocation5 + $0x7c0] sm:$0xff]
        %v3054 = vld [vmem:[#allocation5 + $0x7c8] sm:$0xff]
        %v3055 = vld [vmem:[#allocation5 + $0x7d0] sm:$0xff]
        %v3056 = vld [vmem:[#allocation5 + $0x7d8] sm:$0xff]
        %v3057 = vld [vmem:[#allocation5 + $0x7e0] sm:$0xff]
        %v3058 = vld [vmem:[#allocation5 + $0x7e8] sm:$0xff]
        %v3059 = vld [vmem:[#allocation5 + $0x7f0] sm:$0xff]
        %v3060 = vld [vmem:[#allocation5 + $0x7f8] sm:$0xff]
        %v3061 = vld [vmem:[#allocation4] sm:$0xfe]
        %v3062 = vld [vmem:[#allocation4 + $0x8] sm:$0xfe]
        %v3063 = vld [vmem:[#allocation4 + $0x10] sm:$0xfe]
        %v3064 = vld [vmem:[#allocation4 + $0x18] sm:$0xfe]
        %v3065 = vld [vmem:[#allocation4 + $0x20] sm:$0x7f]
        %v3066 = vld [vmem:[#allocation4 + $0x28] sm:$0x7f]
        %v3067 = vld [vmem:[#allocation4 + $0x30] sm:$0x7f]
        %v3068 = vld [vmem:[#allocation4 + $0x38] sm:$0x7f]
        %s3069 = scalar_lea.vmem [#allocation5], 2048
        %v3070 = vld [vmem:[%s3069] sm:$0xff]
        %v3071 = vld [vmem:[%s3069 + $0x8] sm:$0xff]
        %v3072 = vld [vmem:[%s3069 + $0x10] sm:$0xff]
        %v3073 = vld [vmem:[%s3069 + $0x18] sm:$0xff]
        %v3074 = vld [vmem:[%s3069 + $0x20] sm:$0xff]
        %v3075 = vld [vmem:[%s3069 + $0x28] sm:$0xff]
        %v3076 = vld [vmem:[%s3069 + $0x30] sm:$0xff]
        %v3077 = vld [vmem:[%s3069 + $0x38] sm:$0xff]
        %v3078 = vld [vmem:[%s3069 + $0x40] sm:$0xff]
        %v3079 = vld [vmem:[%s3069 + $0x48] sm:$0xff]
        %v3080 = vld [vmem:[%s3069 + $0x50] sm:$0xff]
        %v3081 = vld [vmem:[%s3069 + $0x58] sm:$0xff]
        %v3082 = vld [vmem:[%s3069 + $0x60] sm:$0xff]
        %v3083 = vld [vmem:[%s3069 + $0x68] sm:$0xff]
        %v3084 = vld [vmem:[%s3069 + $0x70] sm:$0xff]
        %v3085 = vld [vmem:[%s3069 + $0x78] sm:$0xff]
        %v3086 = vld [vmem:[%s3069 + $0x80] sm:$0xff]
        %v3087 = vld [vmem:[%s3069 + $0x88] sm:$0xff]
        %v3088 = vld [vmem:[%s3069 + $0x90] sm:$0xff]
        %v3089 = vld [vmem:[%s3069 + $0x98] sm:$0xff]
        %v3090 = vld [vmem:[%s3069 + $0xa0] sm:$0xff]
        %v3091 = vld [vmem:[%s3069 + $0xa8] sm:$0xff]
        %v3092 = vld [vmem:[%s3069 + $0xb0] sm:$0xff]
        %v3093 = vld [vmem:[%s3069 + $0xb8] sm:$0xff]
        %v3094 = vld [vmem:[%s3069 + $0xc0] sm:$0xff]
        %v3095 = vld [vmem:[%s3069 + $0xc8] sm:$0xff]
        %v3096 = vld [vmem:[%s3069 + $0xd0] sm:$0xff]
        %v3097 = vld [vmem:[%s3069 + $0xd8] sm:$0xff]
        %v3098 = vld [vmem:[%s3069 + $0xe0] sm:$0xff]
        %v3099 = vld [vmem:[%s3069 + $0xe8] sm:$0xff]
        %v3100 = vld [vmem:[%s3069 + $0xf0] sm:$0xff]
        %v3101 = vld [vmem:[%s3069 + $0xf8] sm:$0xff]
        %v3102 = vld [vmem:[%s3069 + $0x100] sm:$0xff]
        %v3103 = vld [vmem:[%s3069 + $0x108] sm:$0xff]
        %v3104 = vld [vmem:[%s3069 + $0x110] sm:$0xff]
        %v3105 = vld [vmem:[%s3069 + $0x118] sm:$0xff]
        %v3106 = vld [vmem:[%s3069 + $0x120] sm:$0xff]
        %v3107 = vld [vmem:[%s3069 + $0x128] sm:$0xff]
        %v3108 = vld [vmem:[%s3069 + $0x130] sm:$0xff]
        %v3109 = vld [vmem:[%s3069 + $0x138] sm:$0xff]
        %v3110 = vld [vmem:[%s3069 + $0x140] sm:$0xff]
        %v3111 = vld [vmem:[%s3069 + $0x148] sm:$0xff]
        %v3112 = vld [vmem:[%s3069 + $0x150] sm:$0xff]
        %v3113 = vld [vmem:[%s3069 + $0x158] sm:$0xff]
        %v3114 = vld [vmem:[%s3069 + $0x160] sm:$0xff]
        %v3115 = vld [vmem:[%s3069 + $0x168] sm:$0xff]
        %v3116 = vld [vmem:[%s3069 + $0x170] sm:$0xff]
        %v3117 = vld [vmem:[%s3069 + $0x178] sm:$0xff]
        %v3118 = vld [vmem:[%s3069 + $0x180] sm:$0xff]
        %v3119 = vld [vmem:[%s3069 + $0x188] sm:$0xff]
        %v3120 = vld [vmem:[%s3069 + $0x190] sm:$0xff]
        %v3121 = vld [vmem:[%s3069 + $0x198] sm:$0xff]
        %v3122 = vld [vmem:[%s3069 + $0x1a0] sm:$0xff]
        %v3123 = vld [vmem:[%s3069 + $0x1a8] sm:$0xff]
        %v3124 = vld [vmem:[%s3069 + $0x1b0] sm:$0xff]
        %v3125 = vld [vmem:[%s3069 + $0x1b8] sm:$0xff]
        %v3126 = vld [vmem:[%s3069 + $0x1c0] sm:$0xff]
        %v3127 = vld [vmem:[%s3069 + $0x1c8] sm:$0xff]
        %v3128 = vld [vmem:[%s3069 + $0x1d0] sm:$0xff]
        %v3129 = vld [vmem:[%s3069 + $0x1d8] sm:$0xff]
        %v3130 = vld [vmem:[%s3069 + $0x1e0] sm:$0xff]
        %v3131 = vld [vmem:[%s3069 + $0x1e8] sm:$0xff]
        %v3132 = vld [vmem:[%s3069 + $0x1f0] sm:$0xff]
        %v3133 = vld [vmem:[%s3069 + $0x1f8] sm:$0xff]
        %v3134 = vld [vmem:[%s3069 + $0x200] sm:$0xff]
        %v3135 = vld [vmem:[%s3069 + $0x208] sm:$0xff]
        %v3136 = vld [vmem:[%s3069 + $0x210] sm:$0xff]
        %v3137 = vld [vmem:[%s3069 + $0x218] sm:$0xff]
        %v3138 = vld [vmem:[%s3069 + $0x220] sm:$0xff]
        %v3139 = vld [vmem:[%s3069 + $0x228] sm:$0xff]
        %v3140 = vld [vmem:[%s3069 + $0x230] sm:$0xff]
        %v3141 = vld [vmem:[%s3069 + $0x238] sm:$0xff]
        %v3142 = vld [vmem:[%s3069 + $0x240] sm:$0xff]
        %v3143 = vld [vmem:[%s3069 + $0x248] sm:$0xff]
        %v3144 = vld [vmem:[%s3069 + $0x250] sm:$0xff]
        %v3145 = vld [vmem:[%s3069 + $0x258] sm:$0xff]
        %v3146 = vld [vmem:[%s3069 + $0x260] sm:$0xff]
        %v3147 = vld [vmem:[%s3069 + $0x268] sm:$0xff]
        %v3148 = vld [vmem:[%s3069 + $0x270] sm:$0xff]
        %v3149 = vld [vmem:[%s3069 + $0x278] sm:$0xff]
        %v3150 = vld [vmem:[%s3069 + $0x280] sm:$0xff]
        %v3151 = vld [vmem:[%s3069 + $0x288] sm:$0xff]
        %v3152 = vld [vmem:[%s3069 + $0x290] sm:$0xff]
        %v3153 = vld [vmem:[%s3069 + $0x298] sm:$0xff]
        %v3154 = vld [vmem:[%s3069 + $0x2a0] sm:$0xff]
        %v3155 = vld [vmem:[%s3069 + $0x2a8] sm:$0xff]
        %v3156 = vld [vmem:[%s3069 + $0x2b0] sm:$0xff]
        %v3157 = vld [vmem:[%s3069 + $0x2b8] sm:$0xff]
        %v3158 = vld [vmem:[%s3069 + $0x2c0] sm:$0xff]
        %v3159 = vld [vmem:[%s3069 + $0x2c8] sm:$0xff]
        %v3160 = vld [vmem:[%s3069 + $0x2d0] sm:$0xff]
        %v3161 = vld [vmem:[%s3069 + $0x2d8] sm:$0xff]
        %v3162 = vld [vmem:[%s3069 + $0x2e0] sm:$0xff]
        %v3163 = vld [vmem:[%s3069 + $0x2e8] sm:$0xff]
        %v3164 = vld [vmem:[%s3069 + $0x2f0] sm:$0xff]
        %v3165 = vld [vmem:[%s3069 + $0x2f8] sm:$0xff]
        %v3166 = vld [vmem:[%s3069 + $0x300] sm:$0xff]
        %v3167 = vld [vmem:[%s3069 + $0x308] sm:$0xff]
        %v3168 = vld [vmem:[%s3069 + $0x310] sm:$0xff]
        %v3169 = vld [vmem:[%s3069 + $0x318] sm:$0xff]
        %v3170 = vld [vmem:[%s3069 + $0x320] sm:$0xff]
        %v3171 = vld [vmem:[%s3069 + $0x328] sm:$0xff]
        %v3172 = vld [vmem:[%s3069 + $0x330] sm:$0xff]
        %v3173 = vld [vmem:[%s3069 + $0x338] sm:$0xff]
        %v3174 = vld [vmem:[%s3069 + $0x340] sm:$0xff]
        %v3175 = vld [vmem:[%s3069 + $0x348] sm:$0xff]
        %v3176 = vld [vmem:[%s3069 + $0x350] sm:$0xff]
        %v3177 = vld [vmem:[%s3069 + $0x358] sm:$0xff]
        %v3178 = vld [vmem:[%s3069 + $0x360] sm:$0xff]
        %v3179 = vld [vmem:[%s3069 + $0x368] sm:$0xff]
        %v3180 = vld [vmem:[%s3069 + $0x370] sm:$0xff]
        %v3181 = vld [vmem:[%s3069 + $0x378] sm:$0xff]
        %v3182 = vld [vmem:[%s3069 + $0x380] sm:$0xff]
        %v3183 = vld [vmem:[%s3069 + $0x388] sm:$0xff]
        %v3184 = vld [vmem:[%s3069 + $0x390] sm:$0xff]
        %v3185 = vld [vmem:[%s3069 + $0x398] sm:$0xff]
        %v3186 = vld [vmem:[%s3069 + $0x3a0] sm:$0xff]
        %v3187 = vld [vmem:[%s3069 + $0x3a8] sm:$0xff]
        %v3188 = vld [vmem:[%s3069 + $0x3b0] sm:$0xff]
        %v3189 = vld [vmem:[%s3069 + $0x3b8] sm:$0xff]
        %v3190 = vld [vmem:[%s3069 + $0x3c0] sm:$0xff]
        %v3191 = vld [vmem:[%s3069 + $0x3c8] sm:$0xff]
        %v3192 = vld [vmem:[%s3069 + $0x3d0] sm:$0xff]
        %v3193 = vld [vmem:[%s3069 + $0x3d8] sm:$0xff]
        %v3194 = vld [vmem:[%s3069 + $0x3e0] sm:$0xff]
        %v3195 = vld [vmem:[%s3069 + $0x3e8] sm:$0xff]
        %v3196 = vld [vmem:[%s3069 + $0x3f0] sm:$0xff]
        %v3197 = vld [vmem:[%s3069 + $0x3f8] sm:$0xff]
        %v3198 = vld [vmem:[%s3069 + $0x400] sm:$0xff]
        %v3199 = vld [vmem:[%s3069 + $0x408] sm:$0xff]
        %v3200 = vld [vmem:[%s3069 + $0x410] sm:$0xff]
        %v3201 = vld [vmem:[%s3069 + $0x418] sm:$0xff]
        %v3202 = vld [vmem:[%s3069 + $0x420] sm:$0xff]
        %v3203 = vld [vmem:[%s3069 + $0x428] sm:$0xff]
        %v3204 = vld [vmem:[%s3069 + $0x430] sm:$0xff]
        %v3205 = vld [vmem:[%s3069 + $0x438] sm:$0xff]
        %v3206 = vld [vmem:[%s3069 + $0x440] sm:$0xff]
        %v3207 = vld [vmem:[%s3069 + $0x448] sm:$0xff]
        %v3208 = vld [vmem:[%s3069 + $0x450] sm:$0xff]
        %v3209 = vld [vmem:[%s3069 + $0x458] sm:$0xff]
        %v3210 = vld [vmem:[%s3069 + $0x460] sm:$0xff]
        %v3211 = vld [vmem:[%s3069 + $0x468] sm:$0xff]
        %v3212 = vld [vmem:[%s3069 + $0x470] sm:$0xff]
        %v3213 = vld [vmem:[%s3069 + $0x478] sm:$0xff]
        %v3214 = vld [vmem:[%s3069 + $0x480] sm:$0xff]
        %v3215 = vld [vmem:[%s3069 + $0x488] sm:$0xff]
        %v3216 = vld [vmem:[%s3069 + $0x490] sm:$0xff]
        %v3217 = vld [vmem:[%s3069 + $0x498] sm:$0xff]
        %v3218 = vld [vmem:[%s3069 + $0x4a0] sm:$0xff]
        %v3219 = vld [vmem:[%s3069 + $0x4a8] sm:$0xff]
        %v3220 = vld [vmem:[%s3069 + $0x4b0] sm:$0xff]
        %v3221 = vld [vmem:[%s3069 + $0x4b8] sm:$0xff]
        %v3222 = vld [vmem:[%s3069 + $0x4c0] sm:$0xff]
        %v3223 = vld [vmem:[%s3069 + $0x4c8] sm:$0xff]
        %v3224 = vld [vmem:[%s3069 + $0x4d0] sm:$0xff]
        %v3225 = vld [vmem:[%s3069 + $0x4d8] sm:$0xff]
        %v3226 = vld [vmem:[%s3069 + $0x4e0] sm:$0xff]
        %v3227 = vld [vmem:[%s3069 + $0x4e8] sm:$0xff]
        %v3228 = vld [vmem:[%s3069 + $0x4f0] sm:$0xff]
        %v3229 = vld [vmem:[%s3069 + $0x4f8] sm:$0xff]
        %v3230 = vld [vmem:[%s3069 + $0x500] sm:$0xff]
        %v3231 = vld [vmem:[%s3069 + $0x508] sm:$0xff]
        %v3232 = vld [vmem:[%s3069 + $0x510] sm:$0xff]
        %v3233 = vld [vmem:[%s3069 + $0x518] sm:$0xff]
        %v3234 = vld [vmem:[%s3069 + $0x520] sm:$0xff]
        %v3235 = vld [vmem:[%s3069 + $0x528] sm:$0xff]
        %v3236 = vld [vmem:[%s3069 + $0x530] sm:$0xff]
        %v3237 = vld [vmem:[%s3069 + $0x538] sm:$0xff]
        %v3238 = vld [vmem:[%s3069 + $0x540] sm:$0xff]
        %v3239 = vld [vmem:[%s3069 + $0x548] sm:$0xff]
        %v3240 = vld [vmem:[%s3069 + $0x550] sm:$0xff]
        %v3241 = vld [vmem:[%s3069 + $0x558] sm:$0xff]
        %v3242 = vld [vmem:[%s3069 + $0x560] sm:$0xff]
        %v3243 = vld [vmem:[%s3069 + $0x568] sm:$0xff]
        %v3244 = vld [vmem:[%s3069 + $0x570] sm:$0xff]
        %v3245 = vld [vmem:[%s3069 + $0x578] sm:$0xff]
        %v3246 = vld [vmem:[%s3069 + $0x580] sm:$0xff]
        %v3247 = vld [vmem:[%s3069 + $0x588] sm:$0xff]
        %v3248 = vld [vmem:[%s3069 + $0x590] sm:$0xff]
        %v3249 = vld [vmem:[%s3069 + $0x598] sm:$0xff]
        %v3250 = vld [vmem:[%s3069 + $0x5a0] sm:$0xff]
        %v3251 = vld [vmem:[%s3069 + $0x5a8] sm:$0xff]
        %v3252 = vld [vmem:[%s3069 + $0x5b0] sm:$0xff]
        %v3253 = vld [vmem:[%s3069 + $0x5b8] sm:$0xff]
        %v3254 = vld [vmem:[%s3069 + $0x5c0] sm:$0xff]
        %v3255 = vld [vmem:[%s3069 + $0x5c8] sm:$0xff]
        %v3256 = vld [vmem:[%s3069 + $0x5d0] sm:$0xff]
        %v3257 = vld [vmem:[%s3069 + $0x5d8] sm:$0xff]
        %v3258 = vld [vmem:[%s3069 + $0x5e0] sm:$0xff]
        %v3259 = vld [vmem:[%s3069 + $0x5e8] sm:$0xff]
        %v3260 = vld [vmem:[%s3069 + $0x5f0] sm:$0xff]
        %v3261 = vld [vmem:[%s3069 + $0x5f8] sm:$0xff]
        %v3262 = vld [vmem:[%s3069 + $0x600] sm:$0xff]
        %v3263 = vld [vmem:[%s3069 + $0x608] sm:$0xff]
        %v3264 = vld [vmem:[%s3069 + $0x610] sm:$0xff]
        %v3265 = vld [vmem:[%s3069 + $0x618] sm:$0xff]
        %v3266 = vld [vmem:[%s3069 + $0x620] sm:$0xff]
        %v3267 = vld [vmem:[%s3069 + $0x628] sm:$0xff]
        %v3268 = vld [vmem:[%s3069 + $0x630] sm:$0xff]
        %v3269 = vld [vmem:[%s3069 + $0x638] sm:$0xff]
        %v3270 = vld [vmem:[%s3069 + $0x640] sm:$0xff]
        %v3271 = vld [vmem:[%s3069 + $0x648] sm:$0xff]
        %v3272 = vld [vmem:[%s3069 + $0x650] sm:$0xff]
        %v3273 = vld [vmem:[%s3069 + $0x658] sm:$0xff]
        %v3274 = vld [vmem:[%s3069 + $0x660] sm:$0xff]
        %v3275 = vld [vmem:[%s3069 + $0x668] sm:$0xff]
        %v3276 = vld [vmem:[%s3069 + $0x670] sm:$0xff]
        %v3277 = vld [vmem:[%s3069 + $0x678] sm:$0xff]
        %v3278 = vld [vmem:[%s3069 + $0x680] sm:$0xff]
        %v3279 = vld [vmem:[%s3069 + $0x688] sm:$0xff]
        %v3280 = vld [vmem:[%s3069 + $0x690] sm:$0xff]
        %v3281 = vld [vmem:[%s3069 + $0x698] sm:$0xff]
        %v3282 = vld [vmem:[%s3069 + $0x6a0] sm:$0xff]
        %v3283 = vld [vmem:[%s3069 + $0x6a8] sm:$0xff]
        %v3284 = vld [vmem:[%s3069 + $0x6b0] sm:$0xff]
        %v3285 = vld [vmem:[%s3069 + $0x6b8] sm:$0xff]
        %v3286 = vld [vmem:[%s3069 + $0x6c0] sm:$0xff]
        %v3287 = vld [vmem:[%s3069 + $0x6c8] sm:$0xff]
        %v3288 = vld [vmem:[%s3069 + $0x6d0] sm:$0xff]
        %v3289 = vld [vmem:[%s3069 + $0x6d8] sm:$0xff]
        %v3290 = vld [vmem:[%s3069 + $0x6e0] sm:$0xff]
        %v3291 = vld [vmem:[%s3069 + $0x6e8] sm:$0xff]
        %v3292 = vld [vmem:[%s3069 + $0x6f0] sm:$0xff]
        %v3293 = vld [vmem:[%s3069 + $0x6f8] sm:$0xff]
        %v3294 = vld [vmem:[%s3069 + $0x700] sm:$0xff]
        %v3295 = vld [vmem:[%s3069 + $0x708] sm:$0xff]
        %v3296 = vld [vmem:[%s3069 + $0x710] sm:$0xff]
        %v3297 = vld [vmem:[%s3069 + $0x718] sm:$0xff]
        %v3298 = vld [vmem:[%s3069 + $0x720] sm:$0xff]
        %v3299 = vld [vmem:[%s3069 + $0x728] sm:$0xff]
        %v3300 = vld [vmem:[%s3069 + $0x730] sm:$0xff]
        %v3301 = vld [vmem:[%s3069 + $0x738] sm:$0xff]
        %v3302 = vld [vmem:[%s3069 + $0x740] sm:$0xff]
        %v3303 = vld [vmem:[%s3069 + $0x748] sm:$0xff]
        %v3304 = vld [vmem:[%s3069 + $0x750] sm:$0xff]
        %v3305 = vld [vmem:[%s3069 + $0x758] sm:$0xff]
        %v3306 = vld [vmem:[%s3069 + $0x760] sm:$0xff]
        %v3307 = vld [vmem:[%s3069 + $0x768] sm:$0xff]
        %v3308 = vld [vmem:[%s3069 + $0x770] sm:$0xff]
        %v3309 = vld [vmem:[%s3069 + $0x778] sm:$0xff]
        %v3310 = vld [vmem:[%s3069 + $0x780] sm:$0xff]
        %v3311 = vld [vmem:[%s3069 + $0x788] sm:$0xff]
        %v3312 = vld [vmem:[%s3069 + $0x790] sm:$0xff]
        %v3313 = vld [vmem:[%s3069 + $0x798] sm:$0xff]
        %v3314 = vld [vmem:[%s3069 + $0x7a0] sm:$0xff]
        %v3315 = vld [vmem:[%s3069 + $0x7a8] sm:$0xff]
        %v3316 = vld [vmem:[%s3069 + $0x7b0] sm:$0xff]
        %v3317 = vld [vmem:[%s3069 + $0x7b8] sm:$0xff]
        %v3318 = vld [vmem:[%s3069 + $0x7c0] sm:$0xff]
        %v3319 = vld [vmem:[%s3069 + $0x7c8] sm:$0xff]
        %v3320 = vld [vmem:[%s3069 + $0x7d0] sm:$0xff]
        %v3321 = vld [vmem:[%s3069 + $0x7d8] sm:$0xff]
        %v3322 = vld [vmem:[%s3069 + $0x7e0] sm:$0xff]
        %v3323 = vld [vmem:[%s3069 + $0x7e8] sm:$0xff]
        %v3324 = vld [vmem:[%s3069 + $0x7f0] sm:$0xff]
        %v3325 = vld [vmem:[%s3069 + $0x7f8] sm:$0xff]
        %v3334 = vrot.slane %v3061, 1
        %v3335 = vrot.slane %v3065, 1
        %v3336 = vsel %vm1308, %v3334, %v3335
        %v3337 = vrot.slane %v3062, 1
        %v3338 = vrot.slane %v3066, 1
        %v3339 = vsel %vm1308, %v3337, %v3338
        %v3340 = vrot.slane %v3063, 1
        %v3341 = vrot.slane %v3067, 1
        %v3342 = vsel %vm1308, %v3340, %v3341
        %v3343 = vrot.slane %v3064, 1
        %v3344 = vrot.slane %v3068, 1
        %v3345 = vsel %vm1308, %v3343, %v3344
        %3354 = vmatpush.msra.mxu0 %v3130
        %3355 = vmatpush.msra.mxu0 %v3126
        %3356 = vmatpush.msra.mxu0 %v3122
        %3357 = vmatpush.msra.mxu0 %v3118
        %3358 = vmatpush.msra.mxu0 %v3114
        %3359 = vmatpush.msra.mxu0 %v3110
        %3360 = vmatpush.msra.mxu0 %v3106
        %3361 = vmatpush.msra.mxu0 %v3102
        %3362 = vmatpush.msra.mxu0 %v3098
        %3363 = vmatpush.msra.mxu0 %v3094
        %3364 = vmatpush.msra.mxu0 %v3090
        %3365 = vmatpush.msra.mxu0 %v3086
        %3366 = vmatpush.msra.mxu0 %v3082
        %3367 = vmatpush.msra.mxu0 %v3078
        %3368 = vmatpush.msra.mxu0 %v3074
        %3369 = vmatpush.msra.mxu0 %v3070
        %3370 = vmatmul.f32.gmra.mxu0 %v3336
        %v3371 = vpop.f32.mrf.mxu0
        %v3372 = vadd.f32 0.0, %v3371
        %3373 = vmatmul.f32.gmra.mxu0 %v3335
        %v3374 = vpop.f32.mrf.mxu0
        %v3375 = vadd.f32 0.0, %v3374
        %3376 = vdwg.mxu0
        %3377 = vmatpush.msra.mxu0 %v3194
        %3378 = vmatpush.msra.mxu0 %v3190
        %3379 = vmatpush.msra.mxu0 %v3186
        %3380 = vmatpush.msra.mxu0 %v3182
        %3381 = vmatpush.msra.mxu0 %v3178
        %3382 = vmatpush.msra.mxu0 %v3174
        %3383 = vmatpush.msra.mxu0 %v3170
        %3384 = vmatpush.msra.mxu0 %v3166
        %3385 = vmatpush.msra.mxu0 %v3162
        %3386 = vmatpush.msra.mxu0 %v3158
        %3387 = vmatpush.msra.mxu0 %v3154
        %3388 = vmatpush.msra.mxu0 %v3150
        %3389 = vmatpush.msra.mxu0 %v3146
        %3390 = vmatpush.msra.mxu0 %v3142
        %3391 = vmatpush.msra.mxu0 %v3138
        %3392 = vmatpush.msra.mxu0 %v3134
        %3393 = vmatmul.f32.gmra.mxu0 %v3339
        %v3394 = vpop.f32.mrf.mxu0
        %v3395 = vadd.f32 %v3372, %v3394
        %3396 = vmatmul.f32.gmra.mxu0 %v3338
        %v3397 = vpop.f32.mrf.mxu0
        %v3398 = vadd.f32 %v3375, %v3397
        %3399 = vdwg.mxu0
        %3400 = vmatpush.msra.mxu0 %v3258
        %3401 = vmatpush.msra.mxu0 %v3254
        %3402 = vmatpush.msra.mxu0 %v3250
        %3403 = vmatpush.msra.mxu0 %v3246
        %3404 = vmatpush.msra.mxu0 %v3242
        %3405 = vmatpush.msra.mxu0 %v3238
        %3406 = vmatpush.msra.mxu0 %v3234
        %3407 = vmatpush.msra.mxu0 %v3230
        %3408 = vmatpush.msra.mxu0 %v3226
        %3409 = vmatpush.msra.mxu0 %v3222
        %3410 = vmatpush.msra.mxu0 %v3218
        %3411 = vmatpush.msra.mxu0 %v3214
        %3412 = vmatpush.msra.mxu0 %v3210
        %3413 = vmatpush.msra.mxu0 %v3206
        %3414 = vmatpush.msra.mxu0 %v3202
        %3415 = vmatpush.msra.mxu0 %v3198
        %3416 = vmatmul.f32.gmra.mxu0 %v3342
        %v3417 = vpop.f32.mrf.mxu0
        %v3418 = vadd.f32 %v3395, %v3417
        %3419 = vmatmul.f32.gmra.mxu0 %v3341
        %v3420 = vpop.f32.mrf.mxu0
        %v3421 = vadd.f32 %v3398, %v3420
        %3422 = vdwg.mxu0
        %3423 = vmatpush.msra.mxu0 %v3322
        %3424 = vmatpush.msra.mxu0 %v3318
        %3425 = vmatpush.msra.mxu0 %v3314
        %3426 = vmatpush.msra.mxu0 %v3310
        %3427 = vmatpush.msra.mxu0 %v3306
        %3428 = vmatpush.msra.mxu0 %v3302
        %3429 = vmatpush.msra.mxu0 %v3298
        %3430 = vmatpush.msra.mxu0 %v3294
        %3431 = vmatpush.msra.mxu0 %v3290
        %3432 = vmatpush.msra.mxu0 %v3286
        %3433 = vmatpush.msra.mxu0 %v3282
        %3434 = vmatpush.msra.mxu0 %v3278
        %3435 = vmatpush.msra.mxu0 %v3274
        %3436 = vmatpush.msra.mxu0 %v3270
        %3437 = vmatpush.msra.mxu0 %v3266
        %3438 = vmatpush.msra.mxu0 %v3262
        %3439 = vmatmul.f32.gmra.mxu0 %v3345
        %v3440 = vpop.f32.mrf.mxu0
        %v3441 = vadd.f32 %v3418, %v3440
        %3442 = vmatmul.f32.gmra.mxu0 %v3344
        %v3443 = vpop.f32.mrf.mxu0
        %v3444 = vadd.f32 %v3421, %v3443
        %3445 = vdwg.mxu0
        %3446 = vmatpush.msra.mxu0 %v3131
        %3447 = vmatpush.msra.mxu0 %v3127
        %3448 = vmatpush.msra.mxu0 %v3123
        %3449 = vmatpush.msra.mxu0 %v3119
        %3450 = vmatpush.msra.mxu0 %v3115
        %3451 = vmatpush.msra.mxu0 %v3111
        %3452 = vmatpush.msra.mxu0 %v3107
        %3453 = vmatpush.msra.mxu0 %v3103
        %3454 = vmatpush.msra.mxu0 %v3099
        %3455 = vmatpush.msra.mxu0 %v3095
        %3456 = vmatpush.msra.mxu0 %v3091
        %3457 = vmatpush.msra.mxu0 %v3087
        %3458 = vmatpush.msra.mxu0 %v3083
        %3459 = vmatpush.msra.mxu0 %v3079
        %3460 = vmatpush.msra.mxu0 %v3075
        %3461 = vmatpush.msra.mxu0 %v3071
        %3462 = vmatmul.f32.gmra.mxu0 %v3336
        %v3463 = vpop.f32.mrf.mxu0
        %v3464 = vadd.f32 0.0, %v3463
        %3465 = vmatmul.f32.gmra.mxu0 %v3335
        %v3466 = vpop.f32.mrf.mxu0
        %v3467 = vadd.f32 0.0, %v3466
        %3468 = vdwg.mxu0
        %3469 = vmatpush.msra.mxu0 %v3195
        %3470 = vmatpush.msra.mxu0 %v3191
        %3471 = vmatpush.msra.mxu0 %v3187
        %3472 = vmatpush.msra.mxu0 %v3183
        %3473 = vmatpush.msra.mxu0 %v3179
        %3474 = vmatpush.msra.mxu0 %v3175
        %3475 = vmatpush.msra.mxu0 %v3171
        %3476 = vmatpush.msra.mxu0 %v3167
        %3477 = vmatpush.msra.mxu0 %v3163
        %3478 = vmatpush.msra.mxu0 %v3159
        %3479 = vmatpush.msra.mxu0 %v3155
        %3480 = vmatpush.msra.mxu0 %v3151
        %3481 = vmatpush.msra.mxu0 %v3147
        %3482 = vmatpush.msra.mxu0 %v3143
        %3483 = vmatpush.msra.mxu0 %v3139
        %3484 = vmatpush.msra.mxu0 %v3135
        %3485 = vmatmul.f32.gmra.mxu0 %v3339
        %v3486 = vpop.f32.mrf.mxu0
        %v3487 = vadd.f32 %v3464, %v3486
        %3488 = vmatmul.f32.gmra.mxu0 %v3338
        %v3489 = vpop.f32.mrf.mxu0
        %v3490 = vadd.f32 %v3467, %v3489
        %3491 = vdwg.mxu0
        %3492 = vmatpush.msra.mxu0 %v3259
        %3493 = vmatpush.msra.mxu0 %v3255
        %3494 = vmatpush.msra.mxu0 %v3251
        %3495 = vmatpush.msra.mxu0 %v3247
        %3496 = vmatpush.msra.mxu0 %v3243
        %3497 = vmatpush.msra.mxu0 %v3239
        %3498 = vmatpush.msra.mxu0 %v3235
        %3499 = vmatpush.msra.mxu0 %v3231
        %3500 = vmatpush.msra.mxu0 %v3227
        %3501 = vmatpush.msra.mxu0 %v3223
        %3502 = vmatpush.msra.mxu0 %v3219
        %3503 = vmatpush.msra.mxu0 %v3215
        %3504 = vmatpush.msra.mxu0 %v3211
        %3505 = vmatpush.msra.mxu0 %v3207
        %3506 = vmatpush.msra.mxu0 %v3203
        %3507 = vmatpush.msra.mxu0 %v3199
        %3508 = vmatmul.f32.gmra.mxu0 %v3342
        %v3509 = vpop.f32.mrf.mxu0
        %v3510 = vadd.f32 %v3487, %v3509
        %3511 = vmatmul.f32.gmra.mxu0 %v3341
        %v3512 = vpop.f32.mrf.mxu0
        %v3513 = vadd.f32 %v3490, %v3512
        %3514 = vdwg.mxu0
        %3515 = vmatpush.msra.mxu0 %v3323
        %3516 = vmatpush.msra.mxu0 %v3319
        %3517 = vmatpush.msra.mxu0 %v3315
        %3518 = vmatpush.msra.mxu0 %v3311
        %3519 = vmatpush.msra.mxu0 %v3307
        %3520 = vmatpush.msra.mxu0 %v3303
        %3521 = vmatpush.msra.mxu0 %v3299
        %3522 = vmatpush.msra.mxu0 %v3295
        %3523 = vmatpush.msra.mxu0 %v3291
        %3524 = vmatpush.msra.mxu0 %v3287
        %3525 = vmatpush.msra.mxu0 %v3283
        %3526 = vmatpush.msra.mxu0 %v3279
        %3527 = vmatpush.msra.mxu0 %v3275
        %3528 = vmatpush.msra.mxu0 %v3271
        %3529 = vmatpush.msra.mxu0 %v3267
        %3530 = vmatpush.msra.mxu0 %v3263
        %3531 = vmatmul.f32.gmra.mxu0 %v3345
        %v3532 = vpop.f32.mrf.mxu0
        %v3533 = vadd.f32 %v3510, %v3532
        %3534 = vmatmul.f32.gmra.mxu0 %v3344
        %v3535 = vpop.f32.mrf.mxu0
        %v3536 = vadd.f32 %v3513, %v3535
        %3537 = vdwg.mxu0
        %3538 = vmatpush.msra.mxu0 %v3132
        %3539 = vmatpush.msra.mxu0 %v3128
        %3540 = vmatpush.msra.mxu0 %v3124
        %3541 = vmatpush.msra.mxu0 %v3120
        %3542 = vmatpush.msra.mxu0 %v3116
        %3543 = vmatpush.msra.mxu0 %v3112
        %3544 = vmatpush.msra.mxu0 %v3108
        %3545 = vmatpush.msra.mxu0 %v3104
        %3546 = vmatpush.msra.mxu0 %v3100
        %3547 = vmatpush.msra.mxu0 %v3096
        %3548 = vmatpush.msra.mxu0 %v3092
        %3549 = vmatpush.msra.mxu0 %v3088
        %3550 = vmatpush.msra.mxu0 %v3084
        %3551 = vmatpush.msra.mxu0 %v3080
        %3552 = vmatpush.msra.mxu0 %v3076
        %3553 = vmatpush.msra.mxu0 %v3072
        %3554 = vmatmul.f32.gmra.mxu0 %v3336
        %v3555 = vpop.f32.mrf.mxu0
        %v3556 = vadd.f32 0.0, %v3555
        %3557 = vmatmul.f32.gmra.mxu0 %v3335
        %v3558 = vpop.f32.mrf.mxu0
        %v3559 = vadd.f32 0.0, %v3558
        %3560 = vdwg.mxu0
        %3561 = vmatpush.msra.mxu0 %v3196
        %3562 = vmatpush.msra.mxu0 %v3192
        %3563 = vmatpush.msra.mxu0 %v3188
        %3564 = vmatpush.msra.mxu0 %v3184
        %3565 = vmatpush.msra.mxu0 %v3180
        %3566 = vmatpush.msra.mxu0 %v3176
        %3567 = vmatpush.msra.mxu0 %v3172
        %3568 = vmatpush.msra.mxu0 %v3168
        %3569 = vmatpush.msra.mxu0 %v3164
        %3570 = vmatpush.msra.mxu0 %v3160
        %3571 = vmatpush.msra.mxu0 %v3156
        %3572 = vmatpush.msra.mxu0 %v3152
        %3573 = vmatpush.msra.mxu0 %v3148
        %3574 = vmatpush.msra.mxu0 %v3144
        %3575 = vmatpush.msra.mxu0 %v3140
        %3576 = vmatpush.msra.mxu0 %v3136
        %3577 = vmatmul.f32.gmra.mxu0 %v3339
        %v3578 = vpop.f32.mrf.mxu0
        %v3579 = vadd.f32 %v3556, %v3578
        %3580 = vmatmul.f32.gmra.mxu0 %v3338
        %v3581 = vpop.f32.mrf.mxu0
        %v3582 = vadd.f32 %v3559, %v3581
        %3583 = vdwg.mxu0
        %3584 = vmatpush.msra.mxu0 %v3260
        %3585 = vmatpush.msra.mxu0 %v3256
        %3586 = vmatpush.msra.mxu0 %v3252
        %3587 = vmatpush.msra.mxu0 %v3248
        %3588 = vmatpush.msra.mxu0 %v3244
        %3589 = vmatpush.msra.mxu0 %v3240
        %3590 = vmatpush.msra.mxu0 %v3236
        %3591 = vmatpush.msra.mxu0 %v3232
        %3592 = vmatpush.msra.mxu0 %v3228
        %3593 = vmatpush.msra.mxu0 %v3224
        %3594 = vmatpush.msra.mxu0 %v3220
        %3595 = vmatpush.msra.mxu0 %v3216
        %3596 = vmatpush.msra.mxu0 %v3212
        %3597 = vmatpush.msra.mxu0 %v3208
        %3598 = vmatpush.msra.mxu0 %v3204
        %3599 = vmatpush.msra.mxu0 %v3200
        %3600 = vmatmul.f32.gmra.mxu0 %v3342
        %v3601 = vpop.f32.mrf.mxu0
        %v3602 = vadd.f32 %v3579, %v3601
        %3603 = vmatmul.f32.gmra.mxu0 %v3341
        %v3604 = vpop.f32.mrf.mxu0
        %v3605 = vadd.f32 %v3582, %v3604
        %3606 = vdwg.mxu0
        %3607 = vmatpush.msra.mxu0 %v3324
        %3608 = vmatpush.msra.mxu0 %v3320
        %3609 = vmatpush.msra.mxu0 %v3316
        %3610 = vmatpush.msra.mxu0 %v3312
        %3611 = vmatpush.msra.mxu0 %v3308
        %3612 = vmatpush.msra.mxu0 %v3304
        %3613 = vmatpush.msra.mxu0 %v3300
        %3614 = vmatpush.msra.mxu0 %v3296
        %3615 = vmatpush.msra.mxu0 %v3292
        %3616 = vmatpush.msra.mxu0 %v3288
        %3617 = vmatpush.msra.mxu0 %v3284
        %3618 = vmatpush.msra.mxu0 %v3280
        %3619 = vmatpush.msra.mxu0 %v3276
        %3620 = vmatpush.msra.mxu0 %v3272
        %3621 = vmatpush.msra.mxu0 %v3268
        %3622 = vmatpush.msra.mxu0 %v3264
        %3623 = vmatmul.f32.gmra.mxu0 %v3345
        %v3624 = vpop.f32.mrf.mxu0
        %v3625 = vadd.f32 %v3602, %v3624
        %3626 = vmatmul.f32.gmra.mxu0 %v3344
        %v3627 = vpop.f32.mrf.mxu0
        %v3628 = vadd.f32 %v3605, %v3627
        %3629 = vdwg.mxu0
        %3630 = vmatpush.msra.mxu0 %v3133
        %3631 = vmatpush.msra.mxu0 %v3129
        %3632 = vmatpush.msra.mxu0 %v3125
        %3633 = vmatpush.msra.mxu0 %v3121
        %3634 = vmatpush.msra.mxu0 %v3117
        %3635 = vmatpush.msra.mxu0 %v3113
        %3636 = vmatpush.msra.mxu0 %v3109
        %3637 = vmatpush.msra.mxu0 %v3105
        %3638 = vmatpush.msra.mxu0 %v3101
        %3639 = vmatpush.msra.mxu0 %v3097
        %3640 = vmatpush.msra.mxu0 %v3093
        %3641 = vmatpush.msra.mxu0 %v3089
        %3642 = vmatpush.msra.mxu0 %v3085
        %3643 = vmatpush.msra.mxu0 %v3081
        %3644 = vmatpush.msra.mxu0 %v3077
        %3645 = vmatpush.msra.mxu0 %v3073
        %3646 = vmatmul.f32.gmra.mxu0 %v3336
        %v3647 = vpop.f32.mrf.mxu0
        %v3648 = vadd.f32 0.0, %v3647
        %3649 = vmatmul.f32.gmra.mxu0 %v3335
        %v3650 = vpop.f32.mrf.mxu0
        %v3651 = vadd.f32 0.0, %v3650
        %3652 = vdwg.mxu0
        %3653 = vmatpush.msra.mxu0 %v3197
        %3654 = vmatpush.msra.mxu0 %v3193
        %3655 = vmatpush.msra.mxu0 %v3189
        %3656 = vmatpush.msra.mxu0 %v3185
        %3657 = vmatpush.msra.mxu0 %v3181
        %3658 = vmatpush.msra.mxu0 %v3177
        %3659 = vmatpush.msra.mxu0 %v3173
        %3660 = vmatpush.msra.mxu0 %v3169
        %3661 = vmatpush.msra.mxu0 %v3165
        %3662 = vmatpush.msra.mxu0 %v3161
        %3663 = vmatpush.msra.mxu0 %v3157
        %3664 = vmatpush.msra.mxu0 %v3153
        %3665 = vmatpush.msra.mxu0 %v3149
        %3666 = vmatpush.msra.mxu0 %v3145
        %3667 = vmatpush.msra.mxu0 %v3141
        %3668 = vmatpush.msra.mxu0 %v3137
        %3669 = vmatmul.f32.gmra.mxu0 %v3339
        %v3670 = vpop.f32.mrf.mxu0
        %v3671 = vadd.f32 %v3648, %v3670
        %3672 = vmatmul.f32.gmra.mxu0 %v3338
        %v3673 = vpop.f32.mrf.mxu0
        %v3674 = vadd.f32 %v3651, %v3673
        %3675 = vdwg.mxu0
        %3676 = vmatpush.msra.mxu0 %v3261
        %3677 = vmatpush.msra.mxu0 %v3257
        %3678 = vmatpush.msra.mxu0 %v3253
        %3679 = vmatpush.msra.mxu0 %v3249
        %3680 = vmatpush.msra.mxu0 %v3245
        %3681 = vmatpush.msra.mxu0 %v3241
        %3682 = vmatpush.msra.mxu0 %v3237
        %3683 = vmatpush.msra.mxu0 %v3233
        %3684 = vmatpush.msra.mxu0 %v3229
        %3685 = vmatpush.msra.mxu0 %v3225
        %3686 = vmatpush.msra.mxu0 %v3221
        %3687 = vmatpush.msra.mxu0 %v3217
        %3688 = vmatpush.msra.mxu0 %v3213
        %3689 = vmatpush.msra.mxu0 %v3209
        %3690 = vmatpush.msra.mxu0 %v3205
        %3691 = vmatpush.msra.mxu0 %v3201
        %3692 = vmatmul.f32.gmra.mxu0 %v3342
        %v3693 = vpop.f32.mrf.mxu0
        %v3694 = vadd.f32 %v3671, %v3693
        %3695 = vmatmul.f32.gmra.mxu0 %v3341
        %v3696 = vpop.f32.mrf.mxu0
        %v3697 = vadd.f32 %v3674, %v3696
        %3698 = vdwg.mxu0
        %3699 = vmatpush.msra.mxu0 %v3325
        %3700 = vmatpush.msra.mxu0 %v3321
        %3701 = vmatpush.msra.mxu0 %v3317
        %3702 = vmatpush.msra.mxu0 %v3313
        %3703 = vmatpush.msra.mxu0 %v3309
        %3704 = vmatpush.msra.mxu0 %v3305
        %3705 = vmatpush.msra.mxu0 %v3301
        %3706 = vmatpush.msra.mxu0 %v3297
        %3707 = vmatpush.msra.mxu0 %v3293
        %3708 = vmatpush.msra.mxu0 %v3289
        %3709 = vmatpush.msra.mxu0 %v3285
        %3710 = vmatpush.msra.mxu0 %v3281
        %3711 = vmatpush.msra.mxu0 %v3277
        %3712 = vmatpush.msra.mxu0 %v3273
        %3713 = vmatpush.msra.mxu0 %v3269
        %3714 = vmatpush.msra.mxu0 %v3265
        %3715 = vmatmul.f32.gmra.mxu0 %v3345
        %v3716 = vpop.f32.mrf.mxu0
        %v3717 = vadd.f32 %v3694, %v3716
        %3718 = vmatmul.f32.gmra.mxu0 %v3344
        %v3719 = vpop.f32.mrf.mxu0
        %v3720 = vadd.f32 %v3697, %v3719
        %3721 = vdwg.mxu0
        %3722 = vmatpush.msra.mxu0 %v2865
        %3723 = vmatpush.msra.mxu0 %v2861
        %3724 = vmatpush.msra.mxu0 %v2857
        %3725 = vmatpush.msra.mxu0 %v2853
        %3726 = vmatpush.msra.mxu0 %v2849
        %3727 = vmatpush.msra.mxu0 %v2845
        %3728 = vmatpush.msra.mxu0 %v2841
        %3729 = vmatpush.msra.mxu0 %v2837
        %3730 = vmatpush.msra.mxu0 %v2833
        %3731 = vmatpush.msra.mxu0 %v2829
        %3732 = vmatpush.msra.mxu0 %v2825
        %3733 = vmatpush.msra.mxu0 %v2821
        %3734 = vmatpush.msra.mxu0 %v2817
        %3735 = vmatpush.msra.mxu0 %v2813
        %3736 = vmatpush.msra.mxu0 %v2809
        %3737 = vmatpush.msra.mxu0 %v2805
        %3738 = vmatmul.f32.gmra.mxu0 %v2797
        %v3739 = vpop.f32.mrf.mxu0
        %v3740 = vadd.f32 %v3441, %v3739
        %3741 = vmatmul.f32.gmra.mxu0 %v2801
        %v3742 = vpop.f32.mrf.mxu0
        %v3743 = vadd.f32 %v3444, %v3742
        %3744 = vdwg.mxu0
        %3745 = vmatpush.msra.mxu0 %v2929
        %3746 = vmatpush.msra.mxu0 %v2925
        %3747 = vmatpush.msra.mxu0 %v2921
        %3748 = vmatpush.msra.mxu0 %v2917
        %3749 = vmatpush.msra.mxu0 %v2913
        %3750 = vmatpush.msra.mxu0 %v2909
        %3751 = vmatpush.msra.mxu0 %v2905
        %3752 = vmatpush.msra.mxu0 %v2901
        %3753 = vmatpush.msra.mxu0 %v2897
        %3754 = vmatpush.msra.mxu0 %v2893
        %3755 = vmatpush.msra.mxu0 %v2889
        %3756 = vmatpush.msra.mxu0 %v2885
        %3757 = vmatpush.msra.mxu0 %v2881
        %3758 = vmatpush.msra.mxu0 %v2877
        %3759 = vmatpush.msra.mxu0 %v2873
        %3760 = vmatpush.msra.mxu0 %v2869
        %3761 = vmatmul.f32.gmra.mxu0 %v2798
        %v3762 = vpop.f32.mrf.mxu0
        %v3763 = vadd.f32 %v3740, %v3762
        %3764 = vmatmul.f32.gmra.mxu0 %v2802
        %v3765 = vpop.f32.mrf.mxu0
        %v3766 = vadd.f32 %v3743, %v3765
        %3767 = vdwg.mxu0
        %3768 = vmatpush.msra.mxu0 %v2993
        %3769 = vmatpush.msra.mxu0 %v2989
        %3770 = vmatpush.msra.mxu0 %v2985
        %3771 = vmatpush.msra.mxu0 %v2981
        %3772 = vmatpush.msra.mxu0 %v2977
        %3773 = vmatpush.msra.mxu0 %v2973
        %3774 = vmatpush.msra.mxu0 %v2969
        %3775 = vmatpush.msra.mxu0 %v2965
        %3776 = vmatpush.msra.mxu0 %v2961
        %3777 = vmatpush.msra.mxu0 %v2957
        %3778 = vmatpush.msra.mxu0 %v2953
        %3779 = vmatpush.msra.mxu0 %v2949
        %3780 = vmatpush.msra.mxu0 %v2945
        %3781 = vmatpush.msra.mxu0 %v2941
        %3782 = vmatpush.msra.mxu0 %v2937
        %3783 = vmatpush.msra.mxu0 %v2933
        %3784 = vmatmul.f32.gmra.mxu0 %v2799
        %v3785 = vpop.f32.mrf.mxu0
        %v3786 = vadd.f32 %v3763, %v3785
        %3787 = vmatmul.f32.gmra.mxu0 %v2803
        %v3788 = vpop.f32.mrf.mxu0
        %v3789 = vadd.f32 %v3766, %v3788
        %3790 = vdwg.mxu0
        %3791 = vmatpush.msra.mxu0 %v3057
        %3792 = vmatpush.msra.mxu0 %v3053
        %3793 = vmatpush.msra.mxu0 %v3049
        %3794 = vmatpush.msra.mxu0 %v3045
        %3795 = vmatpush.msra.mxu0 %v3041
        %3796 = vmatpush.msra.mxu0 %v3037
        %3797 = vmatpush.msra.mxu0 %v3033
        %3798 = vmatpush.msra.mxu0 %v3029
        %3799 = vmatpush.msra.mxu0 %v3025
        %3800 = vmatpush.msra.mxu0 %v3021
        %3801 = vmatpush.msra.mxu0 %v3017
        %3802 = vmatpush.msra.mxu0 %v3013
        %3803 = vmatpush.msra.mxu0 %v3009
        %3804 = vmatpush.msra.mxu0 %v3005
        %3805 = vmatpush.msra.mxu0 %v3001
        %3806 = vmatpush.msra.mxu0 %v2997
        %3807 = vmatmul.f32.gmra.mxu0 %v2800
        %v3808 = vpop.f32.mrf.mxu0
        %v3809 = vadd.f32 %v3786, %v3808
        %3810 = vmatmul.f32.gmra.mxu0 %v2804
        %v3811 = vpop.f32.mrf.mxu0
        %v3812 = vadd.f32 %v3789, %v3811
        %3813 = vdwg.mxu0
        %3814 = vmatpush.msra.mxu0 %v2866
        %3815 = vmatpush.msra.mxu0 %v2862
        %3816 = vmatpush.msra.mxu0 %v2858
        %3817 = vmatpush.msra.mxu0 %v2854
        %3818 = vmatpush.msra.mxu0 %v2850
        %3819 = vmatpush.msra.mxu0 %v2846
        %3820 = vmatpush.msra.mxu0 %v2842
        %3821 = vmatpush.msra.mxu0 %v2838
        %3822 = vmatpush.msra.mxu0 %v2834
        %3823 = vmatpush.msra.mxu0 %v2830
        %3824 = vmatpush.msra.mxu0 %v2826
        %3825 = vmatpush.msra.mxu0 %v2822
        %3826 = vmatpush.msra.mxu0 %v2818
        %3827 = vmatpush.msra.mxu0 %v2814
        %3828 = vmatpush.msra.mxu0 %v2810
        %3829 = vmatpush.msra.mxu0 %v2806
        %3830 = vmatmul.f32.gmra.mxu0 %v2797
        %v3831 = vpop.f32.mrf.mxu0
        %v3832 = vadd.f32 %v3533, %v3831
        %3833 = vmatmul.f32.gmra.mxu0 %v2801
        %v3834 = vpop.f32.mrf.mxu0
        %v3835 = vadd.f32 %v3536, %v3834
        %3836 = vdwg.mxu0
        %3837 = vmatpush.msra.mxu0 %v2930
        %3838 = vmatpush.msra.mxu0 %v2926
        %3839 = vmatpush.msra.mxu0 %v2922
        %3840 = vmatpush.msra.mxu0 %v2918
        %3841 = vmatpush.msra.mxu0 %v2914
        %3842 = vmatpush.msra.mxu0 %v2910
        %3843 = vmatpush.msra.mxu0 %v2906
        %3844 = vmatpush.msra.mxu0 %v2902
        %3845 = vmatpush.msra.mxu0 %v2898
        %3846 = vmatpush.msra.mxu0 %v2894
        %3847 = vmatpush.msra.mxu0 %v2890
        %3848 = vmatpush.msra.mxu0 %v2886
        %3849 = vmatpush.msra.mxu0 %v2882
        %3850 = vmatpush.msra.mxu0 %v2878
        %3851 = vmatpush.msra.mxu0 %v2874
        %3852 = vmatpush.msra.mxu0 %v2870
        %3853 = vmatmul.f32.gmra.mxu0 %v2798
        %v3854 = vpop.f32.mrf.mxu0
        %v3855 = vadd.f32 %v3832, %v3854
        %3856 = vmatmul.f32.gmra.mxu0 %v2802
        %v3857 = vpop.f32.mrf.mxu0
        %v3858 = vadd.f32 %v3835, %v3857
        %3859 = vdwg.mxu0
        %3860 = vmatpush.msra.mxu0 %v2994
        %3861 = vmatpush.msra.mxu0 %v2990
        %3862 = vmatpush.msra.mxu0 %v2986
        %3863 = vmatpush.msra.mxu0 %v2982
        %3864 = vmatpush.msra.mxu0 %v2978
        %3865 = vmatpush.msra.mxu0 %v2974
        %3866 = vmatpush.msra.mxu0 %v2970
        %3867 = vmatpush.msra.mxu0 %v2966
        %3868 = vmatpush.msra.mxu0 %v2962
        %3869 = vmatpush.msra.mxu0 %v2958
        %3870 = vmatpush.msra.mxu0 %v2954
        %3871 = vmatpush.msra.mxu0 %v2950
        %3872 = vmatpush.msra.mxu0 %v2946
        %3873 = vmatpush.msra.mxu0 %v2942
        %3874 = vmatpush.msra.mxu0 %v2938
        %3875 = vmatpush.msra.mxu0 %v2934
        %3876 = vmatmul.f32.gmra.mxu0 %v2799
        %v3877 = vpop.f32.mrf.mxu0
        %v3878 = vadd.f32 %v3855, %v3877
        %3879 = vmatmul.f32.gmra.mxu0 %v2803
        %v3880 = vpop.f32.mrf.mxu0
        %v3881 = vadd.f32 %v3858, %v3880
        %3882 = vdwg.mxu0
        %3883 = vmatpush.msra.mxu0 %v3058
        %3884 = vmatpush.msra.mxu0 %v3054
        %3885 = vmatpush.msra.mxu0 %v3050
        %3886 = vmatpush.msra.mxu0 %v3046
        %3887 = vmatpush.msra.mxu0 %v3042
        %3888 = vmatpush.msra.mxu0 %v3038
        %3889 = vmatpush.msra.mxu0 %v3034
        %3890 = vmatpush.msra.mxu0 %v3030
        %3891 = vmatpush.msra.mxu0 %v3026
        %3892 = vmatpush.msra.mxu0 %v3022
        %3893 = vmatpush.msra.mxu0 %v3018
        %3894 = vmatpush.msra.mxu0 %v3014
        %3895 = vmatpush.msra.mxu0 %v3010
        %3896 = vmatpush.msra.mxu0 %v3006
        %3897 = vmatpush.msra.mxu0 %v3002
        %3898 = vmatpush.msra.mxu0 %v2998
        %3899 = vmatmul.f32.gmra.mxu0 %v2800
        %v3900 = vpop.f32.mrf.mxu0
        %v3901 = vadd.f32 %v3878, %v3900
        %3902 = vmatmul.f32.gmra.mxu0 %v2804
        %v3903 = vpop.f32.mrf.mxu0
        %v3904 = vadd.f32 %v3881, %v3903
        %3905 = vdwg.mxu0
        %3906 = vmatpush.msra.mxu0 %v2867
        %3907 = vmatpush.msra.mxu0 %v2863
        %3908 = vmatpush.msra.mxu0 %v2859
        %3909 = vmatpush.msra.mxu0 %v2855
        %3910 = vmatpush.msra.mxu0 %v2851
        %3911 = vmatpush.msra.mxu0 %v2847
        %3912 = vmatpush.msra.mxu0 %v2843
        %3913 = vmatpush.msra.mxu0 %v2839
        %3914 = vmatpush.msra.mxu0 %v2835
        %3915 = vmatpush.msra.mxu0 %v2831
        %3916 = vmatpush.msra.mxu0 %v2827
        %3917 = vmatpush.msra.mxu0 %v2823
        %3918 = vmatpush.msra.mxu0 %v2819
        %3919 = vmatpush.msra.mxu0 %v2815
        %3920 = vmatpush.msra.mxu0 %v2811
        %3921 = vmatpush.msra.mxu0 %v2807
        %3922 = vmatmul.f32.gmra.mxu0 %v2797
        %v3923 = vpop.f32.mrf.mxu0
        %v3924 = vadd.f32 %v3625, %v3923
        %3925 = vmatmul.f32.gmra.mxu0 %v2801
        %v3926 = vpop.f32.mrf.mxu0
        %v3927 = vadd.f32 %v3628, %v3926
        %3928 = vdwg.mxu0
        %3929 = vmatpush.msra.mxu0 %v2931
        %3930 = vmatpush.msra.mxu0 %v2927
        %3931 = vmatpush.msra.mxu0 %v2923
        %3932 = vmatpush.msra.mxu0 %v2919
        %3933 = vmatpush.msra.mxu0 %v2915
        %3934 = vmatpush.msra.mxu0 %v2911
        %3935 = vmatpush.msra.mxu0 %v2907
        %3936 = vmatpush.msra.mxu0 %v2903
        %3937 = vmatpush.msra.mxu0 %v2899
        %3938 = vmatpush.msra.mxu0 %v2895
        %3939 = vmatpush.msra.mxu0 %v2891
        %3940 = vmatpush.msra.mxu0 %v2887
        %3941 = vmatpush.msra.mxu0 %v2883
        %3942 = vmatpush.msra.mxu0 %v2879
        %3943 = vmatpush.msra.mxu0 %v2875
        %3944 = vmatpush.msra.mxu0 %v2871
        %3945 = vmatmul.f32.gmra.mxu0 %v2798
        %v3946 = vpop.f32.mrf.mxu0
        %v3947 = vadd.f32 %v3924, %v3946
        %3948 = vmatmul.f32.gmra.mxu0 %v2802
        %v3949 = vpop.f32.mrf.mxu0
        %v3950 = vadd.f32 %v3927, %v3949
        %3951 = vdwg.mxu0
        %3952 = vmatpush.msra.mxu0 %v2995
        %3953 = vmatpush.msra.mxu0 %v2991
        %3954 = vmatpush.msra.mxu0 %v2987
        %3955 = vmatpush.msra.mxu0 %v2983
        %3956 = vmatpush.msra.mxu0 %v2979
        %3957 = vmatpush.msra.mxu0 %v2975
        %3958 = vmatpush.msra.mxu0 %v2971
        %3959 = vmatpush.msra.mxu0 %v2967
        %3960 = vmatpush.msra.mxu0 %v2963
        %3961 = vmatpush.msra.mxu0 %v2959
        %3962 = vmatpush.msra.mxu0 %v2955
        %3963 = vmatpush.msra.mxu0 %v2951
        %3964 = vmatpush.msra.mxu0 %v2947
        %3965 = vmatpush.msra.mxu0 %v2943
        %3966 = vmatpush.msra.mxu0 %v2939
        %3967 = vmatpush.msra.mxu0 %v2935
        %3968 = vmatmul.f32.gmra.mxu0 %v2799
        %v3969 = vpop.f32.mrf.mxu0
        %v3970 = vadd.f32 %v3947, %v3969
        %3971 = vmatmul.f32.gmra.mxu0 %v2803
        %v3972 = vpop.f32.mrf.mxu0
        %v3973 = vadd.f32 %v3950, %v3972
        %3974 = vdwg.mxu0
        %3975 = vmatpush.msra.mxu0 %v3059
        %3976 = vmatpush.msra.mxu0 %v3055
        %3977 = vmatpush.msra.mxu0 %v3051
        %3978 = vmatpush.msra.mxu0 %v3047
        %3979 = vmatpush.msra.mxu0 %v3043
        %3980 = vmatpush.msra.mxu0 %v3039
        %3981 = vmatpush.msra.mxu0 %v3035
        %3982 = vmatpush.msra.mxu0 %v3031
        %3983 = vmatpush.msra.mxu0 %v3027
        %3984 = vmatpush.msra.mxu0 %v3023
        %3985 = vmatpush.msra.mxu0 %v3019
        %3986 = vmatpush.msra.mxu0 %v3015
        %3987 = vmatpush.msra.mxu0 %v3011
        %3988 = vmatpush.msra.mxu0 %v3007
        %3989 = vmatpush.msra.mxu0 %v3003
        %3990 = vmatpush.msra.mxu0 %v2999
        %3991 = vmatmul.f32.gmra.mxu0 %v2800
        %v3992 = vpop.f32.mrf.mxu0
        %v3993 = vadd.f32 %v3970, %v3992
        %3994 = vmatmul.f32.gmra.mxu0 %v2804
        %v3995 = vpop.f32.mrf.mxu0
        %v3996 = vadd.f32 %v3973, %v3995
        %3997 = vdwg.mxu0
        %3998 = vmatpush.msra.mxu0 %v2868
        %3999 = vmatpush.msra.mxu0 %v2864
        %4000 = vmatpush.msra.mxu0 %v2860
        %4001 = vmatpush.msra.mxu0 %v2856
        %4002 = vmatpush.msra.mxu0 %v2852
        %4003 = vmatpush.msra.mxu0 %v2848
        %4004 = vmatpush.msra.mxu0 %v2844
        %4005 = vmatpush.msra.mxu0 %v2840
        %4006 = vmatpush.msra.mxu0 %v2836
        %4007 = vmatpush.msra.mxu0 %v2832
        %4008 = vmatpush.msra.mxu0 %v2828
        %4009 = vmatpush.msra.mxu0 %v2824
        %4010 = vmatpush.msra.mxu0 %v2820
        %4011 = vmatpush.msra.mxu0 %v2816
        %4012 = vmatpush.msra.mxu0 %v2812
        %4013 = vmatpush.msra.mxu0 %v2808
        %4014 = vmatmul.f32.gmra.mxu0 %v2797
        %v4015 = vpop.f32.mrf.mxu0
        %v4016 = vadd.f32 %v3717, %v4015
        %4017 = vmatmul.f32.gmra.mxu0 %v2801
        %v4018 = vpop.f32.mrf.mxu0
        %v4019 = vadd.f32 %v3720, %v4018
        %4020 = vdwg.mxu0
        %4021 = vmatpush.msra.mxu0 %v2932
        %4022 = vmatpush.msra.mxu0 %v2928
        %4023 = vmatpush.msra.mxu0 %v2924
        %4024 = vmatpush.msra.mxu0 %v2920
        %4025 = vmatpush.msra.mxu0 %v2916
        %4026 = vmatpush.msra.mxu0 %v2912
        %4027 = vmatpush.msra.mxu0 %v2908
        %4028 = vmatpush.msra.mxu0 %v2904
        %4029 = vmatpush.msra.mxu0 %v2900
        %4030 = vmatpush.msra.mxu0 %v2896
        %4031 = vmatpush.msra.mxu0 %v2892
        %4032 = vmatpush.msra.mxu0 %v2888
        %4033 = vmatpush.msra.mxu0 %v2884
        %4034 = vmatpush.msra.mxu0 %v2880
        %4035 = vmatpush.msra.mxu0 %v2876
        %4036 = vmatpush.msra.mxu0 %v2872
        %4037 = vmatmul.f32.gmra.mxu0 %v2798
        %v4038 = vpop.f32.mrf.mxu0
        %v4039 = vadd.f32 %v4016, %v4038
        %4040 = vmatmul.f32.gmra.mxu0 %v2802
        %v4041 = vpop.f32.mrf.mxu0
        %v4042 = vadd.f32 %v4019, %v4041
        %4043 = vdwg.mxu0
        %4044 = vmatpush.msra.mxu0 %v2996
        %4045 = vmatpush.msra.mxu0 %v2992
        %4046 = vmatpush.msra.mxu0 %v2988
        %4047 = vmatpush.msra.mxu0 %v2984
        %4048 = vmatpush.msra.mxu0 %v2980
        %4049 = vmatpush.msra.mxu0 %v2976
        %4050 = vmatpush.msra.mxu0 %v2972
        %4051 = vmatpush.msra.mxu0 %v2968
        %4052 = vmatpush.msra.mxu0 %v2964
        %4053 = vmatpush.msra.mxu0 %v2960
        %4054 = vmatpush.msra.mxu0 %v2956
        %4055 = vmatpush.msra.mxu0 %v2952
        %4056 = vmatpush.msra.mxu0 %v2948
        %4057 = vmatpush.msra.mxu0 %v2944
        %4058 = vmatpush.msra.mxu0 %v2940
        %4059 = vmatpush.msra.mxu0 %v2936
        %4060 = vmatmul.f32.gmra.mxu0 %v2799
        %v4061 = vpop.f32.mrf.mxu0
        %v4062 = vadd.f32 %v4039, %v4061
        %4063 = vmatmul.f32.gmra.mxu0 %v2803
        %v4064 = vpop.f32.mrf.mxu0
        %v4065 = vadd.f32 %v4042, %v4064
        %4066 = vdwg.mxu0
        %4067 = vmatpush.msra.mxu0 %v3060
        %4068 = vmatpush.msra.mxu0 %v3056
        %4069 = vmatpush.msra.mxu0 %v3052
        %4070 = vmatpush.msra.mxu0 %v3048
        %4071 = vmatpush.msra.mxu0 %v3044
        %4072 = vmatpush.msra.mxu0 %v3040
        %4073 = vmatpush.msra.mxu0 %v3036
        %4074 = vmatpush.msra.mxu0 %v3032
        %4075 = vmatpush.msra.mxu0 %v3028
        %4076 = vmatpush.msra.mxu0 %v3024
        %4077 = vmatpush.msra.mxu0 %v3020
        %4078 = vmatpush.msra.mxu0 %v3016
        %4079 = vmatpush.msra.mxu0 %v3012
        %4080 = vmatpush.msra.mxu0 %v3008
        %4081 = vmatpush.msra.mxu0 %v3004
        %4082 = vmatpush.msra.mxu0 %v3000
        %4083 = vmatmul.f32.gmra.mxu0 %v2800
        %v4084 = vpop.f32.mrf.mxu0
        %v4085 = vadd.f32 %v4062, %v4084
        %4086 = vmatmul.f32.gmra.mxu0 %v2804
        %v4087 = vpop.f32.mrf.mxu0
        %v4088 = vadd.f32 %v4065, %v4087
        %4089 = vdwg.mxu0
        %v4090 = vld [vmem:[#allocation4] sm:$0xfc]
        %v4091 = vld [vmem:[#allocation4 + $0x8] sm:$0xfc]
        %v4092 = vld [vmem:[#allocation4 + $0x10] sm:$0xfc]
        %v4093 = vld [vmem:[#allocation4 + $0x18] sm:$0xfc]
        %v4094 = vld [vmem:[#allocation4 + $0x20] sm:$0xff]
        %v4095 = vld [vmem:[#allocation4 + $0x28] sm:$0xff]
        %v4096 = vld [vmem:[#allocation4 + $0x30] sm:$0xff]
        %v4097 = vld [vmem:[#allocation4 + $0x38] sm:$0xff]
        %s4098 = scalar_lea.vmem [#allocation5], 4096
        %v4099 = vld [vmem:[%s4098] sm:$0xff]
        %v4100 = vld [vmem:[%s4098 + $0x8] sm:$0xff]
        %v4101 = vld [vmem:[%s4098 + $0x10] sm:$0xff]
        %v4102 = vld [vmem:[%s4098 + $0x18] sm:$0xff]
        %v4103 = vld [vmem:[%s4098 + $0x20] sm:$0xff]
        %v4104 = vld [vmem:[%s4098 + $0x28] sm:$0xff]
        %v4105 = vld [vmem:[%s4098 + $0x30] sm:$0xff]
        %v4106 = vld [vmem:[%s4098 + $0x38] sm:$0xff]
        %v4107 = vld [vmem:[%s4098 + $0x40] sm:$0xff]
        %v4108 = vld [vmem:[%s4098 + $0x48] sm:$0xff]
        %v4109 = vld [vmem:[%s4098 + $0x50] sm:$0xff]
        %v4110 = vld [vmem:[%s4098 + $0x58] sm:$0xff]
        %v4111 = vld [vmem:[%s4098 + $0x60] sm:$0xff]
        %v4112 = vld [vmem:[%s4098 + $0x68] sm:$0xff]
        %v4113 = vld [vmem:[%s4098 + $0x70] sm:$0xff]
        %v4114 = vld [vmem:[%s4098 + $0x78] sm:$0xff]
        %v4115 = vld [vmem:[%s4098 + $0x80] sm:$0xff]
        %v4116 = vld [vmem:[%s4098 + $0x88] sm:$0xff]
        %v4117 = vld [vmem:[%s4098 + $0x90] sm:$0xff]
        %v4118 = vld [vmem:[%s4098 + $0x98] sm:$0xff]
        %v4119 = vld [vmem:[%s4098 + $0xa0] sm:$0xff]
        %v4120 = vld [vmem:[%s4098 + $0xa8] sm:$0xff]
        %v4121 = vld [vmem:[%s4098 + $0xb0] sm:$0xff]
        %v4122 = vld [vmem:[%s4098 + $0xb8] sm:$0xff]
        %v4123 = vld [vmem:[%s4098 + $0xc0] sm:$0xff]
        %v4124 = vld [vmem:[%s4098 + $0xc8] sm:$0xff]
        %v4125 = vld [vmem:[%s4098 + $0xd0] sm:$0xff]
        %v4126 = vld [vmem:[%s4098 + $0xd8] sm:$0xff]
        %v4127 = vld [vmem:[%s4098 + $0xe0] sm:$0xff]
        %v4128 = vld [vmem:[%s4098 + $0xe8] sm:$0xff]
        %v4129 = vld [vmem:[%s4098 + $0xf0] sm:$0xff]
        %v4130 = vld [vmem:[%s4098 + $0xf8] sm:$0xff]
        %v4131 = vld [vmem:[%s4098 + $0x100] sm:$0xff]
        %v4132 = vld [vmem:[%s4098 + $0x108] sm:$0xff]
        %v4133 = vld [vmem:[%s4098 + $0x110] sm:$0xff]
        %v4134 = vld [vmem:[%s4098 + $0x118] sm:$0xff]
        %v4135 = vld [vmem:[%s4098 + $0x120] sm:$0xff]
        %v4136 = vld [vmem:[%s4098 + $0x128] sm:$0xff]
        %v4137 = vld [vmem:[%s4098 + $0x130] sm:$0xff]
        %v4138 = vld [vmem:[%s4098 + $0x138] sm:$0xff]
        %v4139 = vld [vmem:[%s4098 + $0x140] sm:$0xff]
        %v4140 = vld [vmem:[%s4098 + $0x148] sm:$0xff]
        %v4141 = vld [vmem:[%s4098 + $0x150] sm:$0xff]
        %v4142 = vld [vmem:[%s4098 + $0x158] sm:$0xff]
        %v4143 = vld [vmem:[%s4098 + $0x160] sm:$0xff]
        %v4144 = vld [vmem:[%s4098 + $0x168] sm:$0xff]
        %v4145 = vld [vmem:[%s4098 + $0x170] sm:$0xff]
        %v4146 = vld [vmem:[%s4098 + $0x178] sm:$0xff]
        %v4147 = vld [vmem:[%s4098 + $0x180] sm:$0xff]
        %v4148 = vld [vmem:[%s4098 + $0x188] sm:$0xff]
        %v4149 = vld [vmem:[%s4098 + $0x190] sm:$0xff]
        %v4150 = vld [vmem:[%s4098 + $0x198] sm:$0xff]
        %v4151 = vld [vmem:[%s4098 + $0x1a0] sm:$0xff]
        %v4152 = vld [vmem:[%s4098 + $0x1a8] sm:$0xff]
        %v4153 = vld [vmem:[%s4098 + $0x1b0] sm:$0xff]
        %v4154 = vld [vmem:[%s4098 + $0x1b8] sm:$0xff]
        %v4155 = vld [vmem:[%s4098 + $0x1c0] sm:$0xff]
        %v4156 = vld [vmem:[%s4098 + $0x1c8] sm:$0xff]
        %v4157 = vld [vmem:[%s4098 + $0x1d0] sm:$0xff]
        %v4158 = vld [vmem:[%s4098 + $0x1d8] sm:$0xff]
        %v4159 = vld [vmem:[%s4098 + $0x1e0] sm:$0xff]
        %v4160 = vld [vmem:[%s4098 + $0x1e8] sm:$0xff]
        %v4161 = vld [vmem:[%s4098 + $0x1f0] sm:$0xff]
        %v4162 = vld [vmem:[%s4098 + $0x1f8] sm:$0xff]
        %v4163 = vld [vmem:[%s4098 + $0x200] sm:$0xff]
        %v4164 = vld [vmem:[%s4098 + $0x208] sm:$0xff]
        %v4165 = vld [vmem:[%s4098 + $0x210] sm:$0xff]
        %v4166 = vld [vmem:[%s4098 + $0x218] sm:$0xff]
        %v4167 = vld [vmem:[%s4098 + $0x220] sm:$0xff]
        %v4168 = vld [vmem:[%s4098 + $0x228] sm:$0xff]
        %v4169 = vld [vmem:[%s4098 + $0x230] sm:$0xff]
        %v4170 = vld [vmem:[%s4098 + $0x238] sm:$0xff]
        %v4171 = vld [vmem:[%s4098 + $0x240] sm:$0xff]
        %v4172 = vld [vmem:[%s4098 + $0x248] sm:$0xff]
        %v4173 = vld [vmem:[%s4098 + $0x250] sm:$0xff]
        %v4174 = vld [vmem:[%s4098 + $0x258] sm:$0xff]
        %v4175 = vld [vmem:[%s4098 + $0x260] sm:$0xff]
        %v4176 = vld [vmem:[%s4098 + $0x268] sm:$0xff]
        %v4177 = vld [vmem:[%s4098 + $0x270] sm:$0xff]
        %v4178 = vld [vmem:[%s4098 + $0x278] sm:$0xff]
        %v4179 = vld [vmem:[%s4098 + $0x280] sm:$0xff]
        %v4180 = vld [vmem:[%s4098 + $0x288] sm:$0xff]
        %v4181 = vld [vmem:[%s4098 + $0x290] sm:$0xff]
        %v4182 = vld [vmem:[%s4098 + $0x298] sm:$0xff]
        %v4183 = vld [vmem:[%s4098 + $0x2a0] sm:$0xff]
        %v4184 = vld [vmem:[%s4098 + $0x2a8] sm:$0xff]
        %v4185 = vld [vmem:[%s4098 + $0x2b0] sm:$0xff]
        %v4186 = vld [vmem:[%s4098 + $0x2b8] sm:$0xff]
        %v4187 = vld [vmem:[%s4098 + $0x2c0] sm:$0xff]
        %v4188 = vld [vmem:[%s4098 + $0x2c8] sm:$0xff]
        %v4189 = vld [vmem:[%s4098 + $0x2d0] sm:$0xff]
        %v4190 = vld [vmem:[%s4098 + $0x2d8] sm:$0xff]
        %v4191 = vld [vmem:[%s4098 + $0x2e0] sm:$0xff]
        %v4192 = vld [vmem:[%s4098 + $0x2e8] sm:$0xff]
        %v4193 = vld [vmem:[%s4098 + $0x2f0] sm:$0xff]
        %v4194 = vld [vmem:[%s4098 + $0x2f8] sm:$0xff]
        %v4195 = vld [vmem:[%s4098 + $0x300] sm:$0xff]
        %v4196 = vld [vmem:[%s4098 + $0x308] sm:$0xff]
        %v4197 = vld [vmem:[%s4098 + $0x310] sm:$0xff]
        %v4198 = vld [vmem:[%s4098 + $0x318] sm:$0xff]
        %v4199 = vld [vmem:[%s4098 + $0x320] sm:$0xff]
        %v4200 = vld [vmem:[%s4098 + $0x328] sm:$0xff]
        %v4201 = vld [vmem:[%s4098 + $0x330] sm:$0xff]
        %v4202 = vld [vmem:[%s4098 + $0x338] sm:$0xff]
        %v4203 = vld [vmem:[%s4098 + $0x340] sm:$0xff]
        %v4204 = vld [vmem:[%s4098 + $0x348] sm:$0xff]
        %v4205 = vld [vmem:[%s4098 + $0x350] sm:$0xff]
        %v4206 = vld [vmem:[%s4098 + $0x358] sm:$0xff]
        %v4207 = vld [vmem:[%s4098 + $0x360] sm:$0xff]
        %v4208 = vld [vmem:[%s4098 + $0x368] sm:$0xff]
        %v4209 = vld [vmem:[%s4098 + $0x370] sm:$0xff]
        %v4210 = vld [vmem:[%s4098 + $0x378] sm:$0xff]
        %v4211 = vld [vmem:[%s4098 + $0x380] sm:$0xff]
        %v4212 = vld [vmem:[%s4098 + $0x388] sm:$0xff]
        %v4213 = vld [vmem:[%s4098 + $0x390] sm:$0xff]
        %v4214 = vld [vmem:[%s4098 + $0x398] sm:$0xff]
        %v4215 = vld [vmem:[%s4098 + $0x3a0] sm:$0xff]
        %v4216 = vld [vmem:[%s4098 + $0x3a8] sm:$0xff]
        %v4217 = vld [vmem:[%s4098 + $0x3b0] sm:$0xff]
        %v4218 = vld [vmem:[%s4098 + $0x3b8] sm:$0xff]
        %v4219 = vld [vmem:[%s4098 + $0x3c0] sm:$0xff]
        %v4220 = vld [vmem:[%s4098 + $0x3c8] sm:$0xff]
        %v4221 = vld [vmem:[%s4098 + $0x3d0] sm:$0xff]
        %v4222 = vld [vmem:[%s4098 + $0x3d8] sm:$0xff]
        %v4223 = vld [vmem:[%s4098 + $0x3e0] sm:$0xff]
        %v4224 = vld [vmem:[%s4098 + $0x3e8] sm:$0xff]
        %v4225 = vld [vmem:[%s4098 + $0x3f0] sm:$0xff]
        %v4226 = vld [vmem:[%s4098 + $0x3f8] sm:$0xff]
        %v4227 = vld [vmem:[%s4098 + $0x400] sm:$0xff]
        %v4228 = vld [vmem:[%s4098 + $0x408] sm:$0xff]
        %v4229 = vld [vmem:[%s4098 + $0x410] sm:$0xff]
        %v4230 = vld [vmem:[%s4098 + $0x418] sm:$0xff]
        %v4231 = vld [vmem:[%s4098 + $0x420] sm:$0xff]
        %v4232 = vld [vmem:[%s4098 + $0x428] sm:$0xff]
        %v4233 = vld [vmem:[%s4098 + $0x430] sm:$0xff]
        %v4234 = vld [vmem:[%s4098 + $0x438] sm:$0xff]
        %v4235 = vld [vmem:[%s4098 + $0x440] sm:$0xff]
        %v4236 = vld [vmem:[%s4098 + $0x448] sm:$0xff]
        %v4237 = vld [vmem:[%s4098 + $0x450] sm:$0xff]
        %v4238 = vld [vmem:[%s4098 + $0x458] sm:$0xff]
        %v4239 = vld [vmem:[%s4098 + $0x460] sm:$0xff]
        %v4240 = vld [vmem:[%s4098 + $0x468] sm:$0xff]
        %v4241 = vld [vmem:[%s4098 + $0x470] sm:$0xff]
        %v4242 = vld [vmem:[%s4098 + $0x478] sm:$0xff]
        %v4243 = vld [vmem:[%s4098 + $0x480] sm:$0xff]
        %v4244 = vld [vmem:[%s4098 + $0x488] sm:$0xff]
        %v4245 = vld [vmem:[%s4098 + $0x490] sm:$0xff]
        %v4246 = vld [vmem:[%s4098 + $0x498] sm:$0xff]
        %v4247 = vld [vmem:[%s4098 + $0x4a0] sm:$0xff]
        %v4248 = vld [vmem:[%s4098 + $0x4a8] sm:$0xff]
        %v4249 = vld [vmem:[%s4098 + $0x4b0] sm:$0xff]
        %v4250 = vld [vmem:[%s4098 + $0x4b8] sm:$0xff]
        %v4251 = vld [vmem:[%s4098 + $0x4c0] sm:$0xff]
        %v4252 = vld [vmem:[%s4098 + $0x4c8] sm:$0xff]
        %v4253 = vld [vmem:[%s4098 + $0x4d0] sm:$0xff]
        %v4254 = vld [vmem:[%s4098 + $0x4d8] sm:$0xff]
        %v4255 = vld [vmem:[%s4098 + $0x4e0] sm:$0xff]
        %v4256 = vld [vmem:[%s4098 + $0x4e8] sm:$0xff]
        %v4257 = vld [vmem:[%s4098 + $0x4f0] sm:$0xff]
        %v4258 = vld [vmem:[%s4098 + $0x4f8] sm:$0xff]
        %v4259 = vld [vmem:[%s4098 + $0x500] sm:$0xff]
        %v4260 = vld [vmem:[%s4098 + $0x508] sm:$0xff]
        %v4261 = vld [vmem:[%s4098 + $0x510] sm:$0xff]
        %v4262 = vld [vmem:[%s4098 + $0x518] sm:$0xff]
        %v4263 = vld [vmem:[%s4098 + $0x520] sm:$0xff]
        %v4264 = vld [vmem:[%s4098 + $0x528] sm:$0xff]
        %v4265 = vld [vmem:[%s4098 + $0x530] sm:$0xff]
        %v4266 = vld [vmem:[%s4098 + $0x538] sm:$0xff]
        %v4267 = vld [vmem:[%s4098 + $0x540] sm:$0xff]
        %v4268 = vld [vmem:[%s4098 + $0x548] sm:$0xff]
        %v4269 = vld [vmem:[%s4098 + $0x550] sm:$0xff]
        %v4270 = vld [vmem:[%s4098 + $0x558] sm:$0xff]
        %v4271 = vld [vmem:[%s4098 + $0x560] sm:$0xff]
        %v4272 = vld [vmem:[%s4098 + $0x568] sm:$0xff]
        %v4273 = vld [vmem:[%s4098 + $0x570] sm:$0xff]
        %v4274 = vld [vmem:[%s4098 + $0x578] sm:$0xff]
        %v4275 = vld [vmem:[%s4098 + $0x580] sm:$0xff]
        %v4276 = vld [vmem:[%s4098 + $0x588] sm:$0xff]
        %v4277 = vld [vmem:[%s4098 + $0x590] sm:$0xff]
        %v4278 = vld [vmem:[%s4098 + $0x598] sm:$0xff]
        %v4279 = vld [vmem:[%s4098 + $0x5a0] sm:$0xff]
        %v4280 = vld [vmem:[%s4098 + $0x5a8] sm:$0xff]
        %v4281 = vld [vmem:[%s4098 + $0x5b0] sm:$0xff]
        %v4282 = vld [vmem:[%s4098 + $0x5b8] sm:$0xff]
        %v4283 = vld [vmem:[%s4098 + $0x5c0] sm:$0xff]
        %v4284 = vld [vmem:[%s4098 + $0x5c8] sm:$0xff]
        %v4285 = vld [vmem:[%s4098 + $0x5d0] sm:$0xff]
        %v4286 = vld [vmem:[%s4098 + $0x5d8] sm:$0xff]
        %v4287 = vld [vmem:[%s4098 + $0x5e0] sm:$0xff]
        %v4288 = vld [vmem:[%s4098 + $0x5e8] sm:$0xff]
        %v4289 = vld [vmem:[%s4098 + $0x5f0] sm:$0xff]
        %v4290 = vld [vmem:[%s4098 + $0x5f8] sm:$0xff]
        %v4291 = vld [vmem:[%s4098 + $0x600] sm:$0xff]
        %v4292 = vld [vmem:[%s4098 + $0x608] sm:$0xff]
        %v4293 = vld [vmem:[%s4098 + $0x610] sm:$0xff]
        %v4294 = vld [vmem:[%s4098 + $0x618] sm:$0xff]
        %v4295 = vld [vmem:[%s4098 + $0x620] sm:$0xff]
        %v4296 = vld [vmem:[%s4098 + $0x628] sm:$0xff]
        %v4297 = vld [vmem:[%s4098 + $0x630] sm:$0xff]
        %v4298 = vld [vmem:[%s4098 + $0x638] sm:$0xff]
        %v4299 = vld [vmem:[%s4098 + $0x640] sm:$0xff]
        %v4300 = vld [vmem:[%s4098 + $0x648] sm:$0xff]
        %v4301 = vld [vmem:[%s4098 + $0x650] sm:$0xff]
        %v4302 = vld [vmem:[%s4098 + $0x658] sm:$0xff]
        %v4303 = vld [vmem:[%s4098 + $0x660] sm:$0xff]
        %v4304 = vld [vmem:[%s4098 + $0x668] sm:$0xff]
        %v4305 = vld [vmem:[%s4098 + $0x670] sm:$0xff]
        %v4306 = vld [vmem:[%s4098 + $0x678] sm:$0xff]
        %v4307 = vld [vmem:[%s4098 + $0x680] sm:$0xff]
        %v4308 = vld [vmem:[%s4098 + $0x688] sm:$0xff]
        %v4309 = vld [vmem:[%s4098 + $0x690] sm:$0xff]
        %v4310 = vld [vmem:[%s4098 + $0x698] sm:$0xff]
        %v4311 = vld [vmem:[%s4098 + $0x6a0] sm:$0xff]
        %v4312 = vld [vmem:[%s4098 + $0x6a8] sm:$0xff]
        %v4313 = vld [vmem:[%s4098 + $0x6b0] sm:$0xff]
        %v4314 = vld [vmem:[%s4098 + $0x6b8] sm:$0xff]
        %v4315 = vld [vmem:[%s4098 + $0x6c0] sm:$0xff]
        %v4316 = vld [vmem:[%s4098 + $0x6c8] sm:$0xff]
        %v4317 = vld [vmem:[%s4098 + $0x6d0] sm:$0xff]
        %v4318 = vld [vmem:[%s4098 + $0x6d8] sm:$0xff]
        %v4319 = vld [vmem:[%s4098 + $0x6e0] sm:$0xff]
        %v4320 = vld [vmem:[%s4098 + $0x6e8] sm:$0xff]
        %v4321 = vld [vmem:[%s4098 + $0x6f0] sm:$0xff]
        %v4322 = vld [vmem:[%s4098 + $0x6f8] sm:$0xff]
        %v4323 = vld [vmem:[%s4098 + $0x700] sm:$0xff]
        %v4324 = vld [vmem:[%s4098 + $0x708] sm:$0xff]
        %v4325 = vld [vmem:[%s4098 + $0x710] sm:$0xff]
        %v4326 = vld [vmem:[%s4098 + $0x718] sm:$0xff]
        %v4327 = vld [vmem:[%s4098 + $0x720] sm:$0xff]
        %v4328 = vld [vmem:[%s4098 + $0x728] sm:$0xff]
        %v4329 = vld [vmem:[%s4098 + $0x730] sm:$0xff]
        %v4330 = vld [vmem:[%s4098 + $0x738] sm:$0xff]
        %v4331 = vld [vmem:[%s4098 + $0x740] sm:$0xff]
        %v4332 = vld [vmem:[%s4098 + $0x748] sm:$0xff]
        %v4333 = vld [vmem:[%s4098 + $0x750] sm:$0xff]
        %v4334 = vld [vmem:[%s4098 + $0x758] sm:$0xff]
        %v4335 = vld [vmem:[%s4098 + $0x760] sm:$0xff]
        %v4336 = vld [vmem:[%s4098 + $0x768] sm:$0xff]
        %v4337 = vld [vmem:[%s4098 + $0x770] sm:$0xff]
        %v4338 = vld [vmem:[%s4098 + $0x778] sm:$0xff]
        %v4339 = vld [vmem:[%s4098 + $0x780] sm:$0xff]
        %v4340 = vld [vmem:[%s4098 + $0x788] sm:$0xff]
        %v4341 = vld [vmem:[%s4098 + $0x790] sm:$0xff]
        %v4342 = vld [vmem:[%s4098 + $0x798] sm:$0xff]
        %v4343 = vld [vmem:[%s4098 + $0x7a0] sm:$0xff]
        %v4344 = vld [vmem:[%s4098 + $0x7a8] sm:$0xff]
        %v4345 = vld [vmem:[%s4098 + $0x7b0] sm:$0xff]
        %v4346 = vld [vmem:[%s4098 + $0x7b8] sm:$0xff]
        %v4347 = vld [vmem:[%s4098 + $0x7c0] sm:$0xff]
        %v4348 = vld [vmem:[%s4098 + $0x7c8] sm:$0xff]
        %v4349 = vld [vmem:[%s4098 + $0x7d0] sm:$0xff]
        %v4350 = vld [vmem:[%s4098 + $0x7d8] sm:$0xff]
        %v4351 = vld [vmem:[%s4098 + $0x7e0] sm:$0xff]
        %v4352 = vld [vmem:[%s4098 + $0x7e8] sm:$0xff]
        %v4353 = vld [vmem:[%s4098 + $0x7f0] sm:$0xff]
        %v4354 = vld [vmem:[%s4098 + $0x7f8] sm:$0xff]
        %v4363 = vrot.slane %v4090, 2
        %v4364 = vrot.slane %v4094, 2
        %v4365 = vsel %vm2338, %v4363, %v4364
        %v4366 = vrot.slane %v4091, 2
        %v4367 = vrot.slane %v4095, 2
        %v4368 = vsel %vm2338, %v4366, %v4367
        %v4369 = vrot.slane %v4092, 2
        %v4370 = vrot.slane %v4096, 2
        %v4371 = vsel %vm2338, %v4369, %v4370
        %v4372 = vrot.slane %v4093, 2
        %v4373 = vrot.slane %v4097, 2
        %v4374 = vsel %vm2338, %v4372, %v4373
        %4383 = vmatpush.msra.mxu0 %v4159
        %4384 = vmatpush.msra.mxu0 %v4155
        %4385 = vmatpush.msra.mxu0 %v4151
        %4386 = vmatpush.msra.mxu0 %v4147
        %4387 = vmatpush.msra.mxu0 %v4143
        %4388 = vmatpush.msra.mxu0 %v4139
        %4389 = vmatpush.msra.mxu0 %v4135
        %4390 = vmatpush.msra.mxu0 %v4131
        %4391 = vmatpush.msra.mxu0 %v4127
        %4392 = vmatpush.msra.mxu0 %v4123
        %4393 = vmatpush.msra.mxu0 %v4119
        %4394 = vmatpush.msra.mxu0 %v4115
        %4395 = vmatpush.msra.mxu0 %v4111
        %4396 = vmatpush.msra.mxu0 %v4107
        %4397 = vmatpush.msra.mxu0 %v4103
        %4398 = vmatpush.msra.mxu0 %v4099
        %4399 = vmatmul.f32.gmra.mxu0 %v4365
        %v4400 = vpop.f32.mrf.mxu0
        %v4401 = vadd.f32 0.0, %v4400
        %4402 = vmatmul.f32.gmra.mxu0 %v4364
        %v4403 = vpop.f32.mrf.mxu0
        %v4404 = vadd.f32 0.0, %v4403
        %4405 = vdwg.mxu0
        %4406 = vmatpush.msra.mxu0 %v4223
        %4407 = vmatpush.msra.mxu0 %v4219
        %4408 = vmatpush.msra.mxu0 %v4215
        %4409 = vmatpush.msra.mxu0 %v4211
        %4410 = vmatpush.msra.mxu0 %v4207
        %4411 = vmatpush.msra.mxu0 %v4203
        %4412 = vmatpush.msra.mxu0 %v4199
        %4413 = vmatpush.msra.mxu0 %v4195
        %4414 = vmatpush.msra.mxu0 %v4191
        %4415 = vmatpush.msra.mxu0 %v4187
        %4416 = vmatpush.msra.mxu0 %v4183
        %4417 = vmatpush.msra.mxu0 %v4179
        %4418 = vmatpush.msra.mxu0 %v4175
        %4419 = vmatpush.msra.mxu0 %v4171
        %4420 = vmatpush.msra.mxu0 %v4167
        %4421 = vmatpush.msra.mxu0 %v4163
        %4422 = vmatmul.f32.gmra.mxu0 %v4368
        %v4423 = vpop.f32.mrf.mxu0
        %v4424 = vadd.f32 %v4401, %v4423
        %4425 = vmatmul.f32.gmra.mxu0 %v4367
        %v4426 = vpop.f32.mrf.mxu0
        %v4427 = vadd.f32 %v4404, %v4426
        %4428 = vdwg.mxu0
        %4429 = vmatpush.msra.mxu0 %v4287
        %4430 = vmatpush.msra.mxu0 %v4283
        %4431 = vmatpush.msra.mxu0 %v4279
        %4432 = vmatpush.msra.mxu0 %v4275
        %4433 = vmatpush.msra.mxu0 %v4271
        %4434 = vmatpush.msra.mxu0 %v4267
        %4435 = vmatpush.msra.mxu0 %v4263
        %4436 = vmatpush.msra.mxu0 %v4259
        %4437 = vmatpush.msra.mxu0 %v4255
        %4438 = vmatpush.msra.mxu0 %v4251
        %4439 = vmatpush.msra.mxu0 %v4247
        %4440 = vmatpush.msra.mxu0 %v4243
        %4441 = vmatpush.msra.mxu0 %v4239
        %4442 = vmatpush.msra.mxu0 %v4235
        %4443 = vmatpush.msra.mxu0 %v4231
        %4444 = vmatpush.msra.mxu0 %v4227
        %4445 = vmatmul.f32.gmra.mxu0 %v4371
        %v4446 = vpop.f32.mrf.mxu0
        %v4447 = vadd.f32 %v4424, %v4446
        %4448 = vmatmul.f32.gmra.mxu0 %v4370
        %v4449 = vpop.f32.mrf.mxu0
        %v4450 = vadd.f32 %v4427, %v4449
        %4451 = vdwg.mxu0
        %4452 = vmatpush.msra.mxu0 %v4351
        %4453 = vmatpush.msra.mxu0 %v4347
        %4454 = vmatpush.msra.mxu0 %v4343
        %4455 = vmatpush.msra.mxu0 %v4339
        %4456 = vmatpush.msra.mxu0 %v4335
        %4457 = vmatpush.msra.mxu0 %v4331
        %4458 = vmatpush.msra.mxu0 %v4327
        %4459 = vmatpush.msra.mxu0 %v4323
        %4460 = vmatpush.msra.mxu0 %v4319
        %4461 = vmatpush.msra.mxu0 %v4315
        %4462 = vmatpush.msra.mxu0 %v4311
        %4463 = vmatpush.msra.mxu0 %v4307
        %4464 = vmatpush.msra.mxu0 %v4303
        %4465 = vmatpush.msra.mxu0 %v4299
        %4466 = vmatpush.msra.mxu0 %v4295
        %4467 = vmatpush.msra.mxu0 %v4291
        %4468 = vmatmul.f32.gmra.mxu0 %v4374
        %v4469 = vpop.f32.mrf.mxu0
        %v4470 = vadd.f32 %v4447, %v4469
        %4471 = vmatmul.f32.gmra.mxu0 %v4373
        %v4472 = vpop.f32.mrf.mxu0
        %v4473 = vadd.f32 %v4450, %v4472
        %4474 = vdwg.mxu0
        %4475 = vmatpush.msra.mxu0 %v4160
        %4476 = vmatpush.msra.mxu0 %v4156
        %4477 = vmatpush.msra.mxu0 %v4152
        %4478 = vmatpush.msra.mxu0 %v4148
        %4479 = vmatpush.msra.mxu0 %v4144
        %4480 = vmatpush.msra.mxu0 %v4140
        %4481 = vmatpush.msra.mxu0 %v4136
        %4482 = vmatpush.msra.mxu0 %v4132
        %4483 = vmatpush.msra.mxu0 %v4128
        %4484 = vmatpush.msra.mxu0 %v4124
        %4485 = vmatpush.msra.mxu0 %v4120
        %4486 = vmatpush.msra.mxu0 %v4116
        %4487 = vmatpush.msra.mxu0 %v4112
        %4488 = vmatpush.msra.mxu0 %v4108
        %4489 = vmatpush.msra.mxu0 %v4104
        %4490 = vmatpush.msra.mxu0 %v4100
        %4491 = vmatmul.f32.gmra.mxu0 %v4365
        %v4492 = vpop.f32.mrf.mxu0
        %v4493 = vadd.f32 0.0, %v4492
        %4494 = vmatmul.f32.gmra.mxu0 %v4364
        %v4495 = vpop.f32.mrf.mxu0
        %v4496 = vadd.f32 0.0, %v4495
        %4497 = vdwg.mxu0
        %4498 = vmatpush.msra.mxu0 %v4224
        %4499 = vmatpush.msra.mxu0 %v4220
        %4500 = vmatpush.msra.mxu0 %v4216
        %4501 = vmatpush.msra.mxu0 %v4212
        %4502 = vmatpush.msra.mxu0 %v4208
        %4503 = vmatpush.msra.mxu0 %v4204
        %4504 = vmatpush.msra.mxu0 %v4200
        %4505 = vmatpush.msra.mxu0 %v4196
        %4506 = vmatpush.msra.mxu0 %v4192
        %4507 = vmatpush.msra.mxu0 %v4188
        %4508 = vmatpush.msra.mxu0 %v4184
        %4509 = vmatpush.msra.mxu0 %v4180
        %4510 = vmatpush.msra.mxu0 %v4176
        %4511 = vmatpush.msra.mxu0 %v4172
        %4512 = vmatpush.msra.mxu0 %v4168
        %4513 = vmatpush.msra.mxu0 %v4164
        %4514 = vmatmul.f32.gmra.mxu0 %v4368
        %v4515 = vpop.f32.mrf.mxu0
        %v4516 = vadd.f32 %v4493, %v4515
        %4517 = vmatmul.f32.gmra.mxu0 %v4367
        %v4518 = vpop.f32.mrf.mxu0
        %v4519 = vadd.f32 %v4496, %v4518
        %4520 = vdwg.mxu0
        %4521 = vmatpush.msra.mxu0 %v4288
        %4522 = vmatpush.msra.mxu0 %v4284
        %4523 = vmatpush.msra.mxu0 %v4280
        %4524 = vmatpush.msra.mxu0 %v4276
        %4525 = vmatpush.msra.mxu0 %v4272
        %4526 = vmatpush.msra.mxu0 %v4268
        %4527 = vmatpush.msra.mxu0 %v4264
        %4528 = vmatpush.msra.mxu0 %v4260
        %4529 = vmatpush.msra.mxu0 %v4256
        %4530 = vmatpush.msra.mxu0 %v4252
        %4531 = vmatpush.msra.mxu0 %v4248
        %4532 = vmatpush.msra.mxu0 %v4244
        %4533 = vmatpush.msra.mxu0 %v4240
        %4534 = vmatpush.msra.mxu0 %v4236
        %4535 = vmatpush.msra.mxu0 %v4232
        %4536 = vmatpush.msra.mxu0 %v4228
        %4537 = vmatmul.f32.gmra.mxu0 %v4371
        %v4538 = vpop.f32.mrf.mxu0
        %v4539 = vadd.f32 %v4516, %v4538
        %4540 = vmatmul.f32.gmra.mxu0 %v4370
        %v4541 = vpop.f32.mrf.mxu0
        %v4542 = vadd.f32 %v4519, %v4541
        %4543 = vdwg.mxu0
        %4544 = vmatpush.msra.mxu0 %v4352
        %4545 = vmatpush.msra.mxu0 %v4348
        %4546 = vmatpush.msra.mxu0 %v4344
        %4547 = vmatpush.msra.mxu0 %v4340
        %4548 = vmatpush.msra.mxu0 %v4336
        %4549 = vmatpush.msra.mxu0 %v4332
        %4550 = vmatpush.msra.mxu0 %v4328
        %4551 = vmatpush.msra.mxu0 %v4324
        %4552 = vmatpush.msra.mxu0 %v4320
        %4553 = vmatpush.msra.mxu0 %v4316
        %4554 = vmatpush.msra.mxu0 %v4312
        %4555 = vmatpush.msra.mxu0 %v4308
        %4556 = vmatpush.msra.mxu0 %v4304
        %4557 = vmatpush.msra.mxu0 %v4300
        %4558 = vmatpush.msra.mxu0 %v4296
        %4559 = vmatpush.msra.mxu0 %v4292
        %4560 = vmatmul.f32.gmra.mxu0 %v4374
        %v4561 = vpop.f32.mrf.mxu0
        %v4562 = vadd.f32 %v4539, %v4561
        %4563 = vmatmul.f32.gmra.mxu0 %v4373
        %v4564 = vpop.f32.mrf.mxu0
        %v4565 = vadd.f32 %v4542, %v4564
        %4566 = vdwg.mxu0
        %4567 = vmatpush.msra.mxu0 %v4161
        %4568 = vmatpush.msra.mxu0 %v4157
        %4569 = vmatpush.msra.mxu0 %v4153
        %4570 = vmatpush.msra.mxu0 %v4149
        %4571 = vmatpush.msra.mxu0 %v4145
        %4572 = vmatpush.msra.mxu0 %v4141
        %4573 = vmatpush.msra.mxu0 %v4137
        %4574 = vmatpush.msra.mxu0 %v4133
        %4575 = vmatpush.msra.mxu0 %v4129
        %4576 = vmatpush.msra.mxu0 %v4125
        %4577 = vmatpush.msra.mxu0 %v4121
        %4578 = vmatpush.msra.mxu0 %v4117
        %4579 = vmatpush.msra.mxu0 %v4113
        %4580 = vmatpush.msra.mxu0 %v4109
        %4581 = vmatpush.msra.mxu0 %v4105
        %4582 = vmatpush.msra.mxu0 %v4101
        %4583 = vmatmul.f32.gmra.mxu0 %v4365
        %v4584 = vpop.f32.mrf.mxu0
        %v4585 = vadd.f32 0.0, %v4584
        %4586 = vmatmul.f32.gmra.mxu0 %v4364
        %v4587 = vpop.f32.mrf.mxu0
        %v4588 = vadd.f32 0.0, %v4587
        %4589 = vdwg.mxu0
        %4590 = vmatpush.msra.mxu0 %v4225
        %4591 = vmatpush.msra.mxu0 %v4221
        %4592 = vmatpush.msra.mxu0 %v4217
        %4593 = vmatpush.msra.mxu0 %v4213
        %4594 = vmatpush.msra.mxu0 %v4209
        %4595 = vmatpush.msra.mxu0 %v4205
        %4596 = vmatpush.msra.mxu0 %v4201
        %4597 = vmatpush.msra.mxu0 %v4197
        %4598 = vmatpush.msra.mxu0 %v4193
        %4599 = vmatpush.msra.mxu0 %v4189
        %4600 = vmatpush.msra.mxu0 %v4185
        %4601 = vmatpush.msra.mxu0 %v4181
        %4602 = vmatpush.msra.mxu0 %v4177
        %4603 = vmatpush.msra.mxu0 %v4173
        %4604 = vmatpush.msra.mxu0 %v4169
        %4605 = vmatpush.msra.mxu0 %v4165
        %4606 = vmatmul.f32.gmra.mxu0 %v4368
        %v4607 = vpop.f32.mrf.mxu0
        %v4608 = vadd.f32 %v4585, %v4607
        %4609 = vmatmul.f32.gmra.mxu0 %v4367
        %v4610 = vpop.f32.mrf.mxu0
        %v4611 = vadd.f32 %v4588, %v4610
        %4612 = vdwg.mxu0
        %4613 = vmatpush.msra.mxu0 %v4289
        %4614 = vmatpush.msra.mxu0 %v4285
        %4615 = vmatpush.msra.mxu0 %v4281
        %4616 = vmatpush.msra.mxu0 %v4277
        %4617 = vmatpush.msra.mxu0 %v4273
        %4618 = vmatpush.msra.mxu0 %v4269
        %4619 = vmatpush.msra.mxu0 %v4265
        %4620 = vmatpush.msra.mxu0 %v4261
        %4621 = vmatpush.msra.mxu0 %v4257
        %4622 = vmatpush.msra.mxu0 %v4253
        %4623 = vmatpush.msra.mxu0 %v4249
        %4624 = vmatpush.msra.mxu0 %v4245
        %4625 = vmatpush.msra.mxu0 %v4241
        %4626 = vmatpush.msra.mxu0 %v4237
        %4627 = vmatpush.msra.mxu0 %v4233
        %4628 = vmatpush.msra.mxu0 %v4229
        %4629 = vmatmul.f32.gmra.mxu0 %v4371
        %v4630 = vpop.f32.mrf.mxu0
        %v4631 = vadd.f32 %v4608, %v4630
        %4632 = vmatmul.f32.gmra.mxu0 %v4370
        %v4633 = vpop.f32.mrf.mxu0
        %v4634 = vadd.f32 %v4611, %v4633
        %4635 = vdwg.mxu0
        %4636 = vmatpush.msra.mxu0 %v4353
        %4637 = vmatpush.msra.mxu0 %v4349
        %4638 = vmatpush.msra.mxu0 %v4345
        %4639 = vmatpush.msra.mxu0 %v4341
        %4640 = vmatpush.msra.mxu0 %v4337
        %4641 = vmatpush.msra.mxu0 %v4333
        %4642 = vmatpush.msra.mxu0 %v4329
        %4643 = vmatpush.msra.mxu0 %v4325
        %4644 = vmatpush.msra.mxu0 %v4321
        %4645 = vmatpush.msra.mxu0 %v4317
        %4646 = vmatpush.msra.mxu0 %v4313
        %4647 = vmatpush.msra.mxu0 %v4309
        %4648 = vmatpush.msra.mxu0 %v4305
        %4649 = vmatpush.msra.mxu0 %v4301
        %4650 = vmatpush.msra.mxu0 %v4297
        %4651 = vmatpush.msra.mxu0 %v4293
        %4652 = vmatmul.f32.gmra.mxu0 %v4374
        %v4653 = vpop.f32.mrf.mxu0
        %v4654 = vadd.f32 %v4631, %v4653
        %4655 = vmatmul.f32.gmra.mxu0 %v4373
        %v4656 = vpop.f32.mrf.mxu0
        %v4657 = vadd.f32 %v4634, %v4656
        %4658 = vdwg.mxu0
        %4659 = vmatpush.msra.mxu0 %v4162
        %4660 = vmatpush.msra.mxu0 %v4158
        %4661 = vmatpush.msra.mxu0 %v4154
        %4662 = vmatpush.msra.mxu0 %v4150
        %4663 = vmatpush.msra.mxu0 %v4146
        %4664 = vmatpush.msra.mxu0 %v4142
        %4665 = vmatpush.msra.mxu0 %v4138
        %4666 = vmatpush.msra.mxu0 %v4134
        %4667 = vmatpush.msra.mxu0 %v4130
        %4668 = vmatpush.msra.mxu0 %v4126
        %4669 = vmatpush.msra.mxu0 %v4122
        %4670 = vmatpush.msra.mxu0 %v4118
        %4671 = vmatpush.msra.mxu0 %v4114
        %4672 = vmatpush.msra.mxu0 %v4110
        %4673 = vmatpush.msra.mxu0 %v4106
        %4674 = vmatpush.msra.mxu0 %v4102
        %4675 = vmatmul.f32.gmra.mxu0 %v4365
        %v4676 = vpop.f32.mrf.mxu0
        %v4677 = vadd.f32 0.0, %v4676
        %4678 = vmatmul.f32.gmra.mxu0 %v4364
        %v4679 = vpop.f32.mrf.mxu0
        %v4680 = vadd.f32 0.0, %v4679
        %4681 = vdwg.mxu0
        %4682 = vmatpush.msra.mxu0 %v4226
        %4683 = vmatpush.msra.mxu0 %v4222
        %4684 = vmatpush.msra.mxu0 %v4218
        %4685 = vmatpush.msra.mxu0 %v4214
        %4686 = vmatpush.msra.mxu0 %v4210
        %4687 = vmatpush.msra.mxu0 %v4206
        %4688 = vmatpush.msra.mxu0 %v4202
        %4689 = vmatpush.msra.mxu0 %v4198
        %4690 = vmatpush.msra.mxu0 %v4194
        %4691 = vmatpush.msra.mxu0 %v4190
        %4692 = vmatpush.msra.mxu0 %v4186
        %4693 = vmatpush.msra.mxu0 %v4182
        %4694 = vmatpush.msra.mxu0 %v4178
        %4695 = vmatpush.msra.mxu0 %v4174
        %4696 = vmatpush.msra.mxu0 %v4170
        %4697 = vmatpush.msra.mxu0 %v4166
        %4698 = vmatmul.f32.gmra.mxu0 %v4368
        %v4699 = vpop.f32.mrf.mxu0
        %v4700 = vadd.f32 %v4677, %v4699
        %4701 = vmatmul.f32.gmra.mxu0 %v4367
        %v4702 = vpop.f32.mrf.mxu0
        %v4703 = vadd.f32 %v4680, %v4702
        %4704 = vdwg.mxu0
        %4705 = vmatpush.msra.mxu0 %v4290
        %4706 = vmatpush.msra.mxu0 %v4286
        %4707 = vmatpush.msra.mxu0 %v4282
        %4708 = vmatpush.msra.mxu0 %v4278
        %4709 = vmatpush.msra.mxu0 %v4274
        %4710 = vmatpush.msra.mxu0 %v4270
        %4711 = vmatpush.msra.mxu0 %v4266
        %4712 = vmatpush.msra.mxu0 %v4262
        %4713 = vmatpush.msra.mxu0 %v4258
        %4714 = vmatpush.msra.mxu0 %v4254
        %4715 = vmatpush.msra.mxu0 %v4250
        %4716 = vmatpush.msra.mxu0 %v4246
        %4717 = vmatpush.msra.mxu0 %v4242
        %4718 = vmatpush.msra.mxu0 %v4238
        %4719 = vmatpush.msra.mxu0 %v4234
        %4720 = vmatpush.msra.mxu0 %v4230
        %4721 = vmatmul.f32.gmra.mxu0 %v4371
        %v4722 = vpop.f32.mrf.mxu0
        %v4723 = vadd.f32 %v4700, %v4722
        %4724 = vmatmul.f32.gmra.mxu0 %v4370
        %v4725 = vpop.f32.mrf.mxu0
        %v4726 = vadd.f32 %v4703, %v4725
        %4727 = vdwg.mxu0
        %4728 = vmatpush.msra.mxu0 %v4354
        %4729 = vmatpush.msra.mxu0 %v4350
        %4730 = vmatpush.msra.mxu0 %v4346
        %4731 = vmatpush.msra.mxu0 %v4342
        %4732 = vmatpush.msra.mxu0 %v4338
        %4733 = vmatpush.msra.mxu0 %v4334
        %4734 = vmatpush.msra.mxu0 %v4330
        %4735 = vmatpush.msra.mxu0 %v4326
        %4736 = vmatpush.msra.mxu0 %v4322
        %4737 = vmatpush.msra.mxu0 %v4318
        %4738 = vmatpush.msra.mxu0 %v4314
        %4739 = vmatpush.msra.mxu0 %v4310
        %4740 = vmatpush.msra.mxu0 %v4306
        %4741 = vmatpush.msra.mxu0 %v4302
        %4742 = vmatpush.msra.mxu0 %v4298
        %4743 = vmatpush.msra.mxu0 %v4294
        %4744 = vmatmul.f32.gmra.mxu0 %v4374
        %v4745 = vpop.f32.mrf.mxu0
        %v4746 = vadd.f32 %v4723, %v4745
        %4747 = vmatmul.f32.gmra.mxu0 %v4373
        %v4748 = vpop.f32.mrf.mxu0
        %v4749 = vadd.f32 %v4726, %v4748
        %4750 = vdwg.mxu0
        %v4751 = vadd.f32 %v3809, %v4470
        %v4752 = vadd.f32 %v3901, %v4562
        %v4753 = vadd.f32 %v3993, %v4654
        %v4754 = vadd.f32 %v4085, %v4746
        %v4755 = vadd.f32 %v3812, %v4473
        %v4756 = vadd.f32 %v3904, %v4565
        %v4757 = vadd.f32 %v3996, %v4657
        %v4758 = vadd.f32 %v4088, %v4749
        %v4759 = vld [vmem:[%s6] sm:$0xf]
        %v4761 = vperm.slane %v4759, 0
        %v4762 = vperm.slane %v4759, 1
        %v4763 = vperm.slane %v4759, 2
        %v4764 = vperm.slane %v4759, 3
        %v4769 = vadd.f32 %v4751, %v4761
        %v4770 = vadd.f32 %v4752, %v4762
        %v4771 = vadd.f32 %v4753, %v4763
        %v4772 = vadd.f32 %v4754, %v4764
        %v4773 = vadd.f32 %v4755, %v4761
        %v4774 = vadd.f32 %v4756, %v4762
        %v4775 = vadd.f32 %v4757, %v4763
        %v4776 = vadd.f32 %v4758, %v4764
        %v4777 = vmax.f32 %v4769, 0.0
        %v4778 = vmax.f32 %v4770, 0.0
        %v4779 = vmax.f32 %v4771, 0.0
        %v4780 = vmax.f32 %v4772, 0.0
        %v4781 = vmax.f32 %v4773, 0.0
        %v4782 = vmax.f32 %v4774, 0.0
        %v4783 = vmax.f32 %v4775, 0.0
        %v4784 = vmax.f32 %v4776, 0.0
        %v4793 = vrot.slane %v4777, 7
        %v4794 = vrot.slane %v4778, 7
        %v4795 = vrot.slane %v4779, 7
        %v4796 = vrot.slane %v4780, 7
        %v4797 = vrot.slane %v4781, 7
        %v4798 = vsel %vm742, %v4793, %v4797
        %v4799 = vrot.slane %v4782, 7
        %v4800 = vsel %vm742, %v4794, %v4799
        %v4801 = vrot.slane %v4783, 7
        %v4802 = vsel %vm742, %v4795, %v4801
        %v4803 = vrot.slane %v4784, 7
        %v4804 = vsel %vm742, %v4796, %v4803
        %4813 = vst [vmem:[#allocation3] sm:$0xfe] %v4793
        %4814 = vst [vmem:[#allocation3 + $0x8] sm:$0xfe] %v4794
        %4815 = vst [vmem:[#allocation3 + $0x10] sm:$0xfe] %v4795
        %4816 = vst [vmem:[#allocation3 + $0x18] sm:$0xfe] %v4796
        %4817 = vst [vmem:[#allocation3 + $0x20] sm:$0x7f] %v4798
        %4818 = vst [vmem:[#allocation3 + $0x28] sm:$0x7f] %v4800
        %4819 = vst [vmem:[#allocation3 + $0x30] sm:$0x7f] %v4802
        %4820 = vst [vmem:[#allocation3 + $0x38] sm:$0x7f] %v4804
        %v4821 = vld [vmem:[#allocation3] sm:$0xff]
        %v4822 = vld [vmem:[#allocation3 + $0x8] sm:$0xff]
        %v4823 = vld [vmem:[#allocation3 + $0x10] sm:$0xff]
        %v4824 = vld [vmem:[#allocation3 + $0x18] sm:$0xff]
        %v4825 = vld [vmem:[#allocation3 + $0x20] sm:$0x3f]
        %v4826 = vld [vmem:[#allocation3 + $0x28] sm:$0x3f]
        %v4827 = vld [vmem:[#allocation3 + $0x30] sm:$0x3f]
        %v4828 = vld [vmem:[#allocation3 + $0x38] sm:$0x3f]
        %v4829 = vld [vmem:[%s7] sm:$0xff]
        %v4830 = vld [vmem:[%s7 + $0x8] sm:$0xff]
        %v4831 = vld [vmem:[%s7 + $0x10] sm:$0xff]
        %v4832 = vld [vmem:[%s7 + $0x18] sm:$0xff]
        %v4833 = vld [vmem:[%s7 + $0x20] sm:$0xff]
        %v4834 = vld [vmem:[%s7 + $0x28] sm:$0xff]
        %v4835 = vld [vmem:[%s7 + $0x30] sm:$0xff]
        %v4836 = vld [vmem:[%s7 + $0x38] sm:$0xff]
        %v4837 = vld [vmem:[%s7 + $0x40] sm:$0xff]
        %v4838 = vld [vmem:[%s7 + $0x48] sm:$0xff]
        %v4839 = vld [vmem:[%s7 + $0x50] sm:$0xff]
        %v4840 = vld [vmem:[%s7 + $0x58] sm:$0xff]
        %v4841 = vld [vmem:[%s7 + $0x60] sm:$0xff]
        %v4842 = vld [vmem:[%s7 + $0x68] sm:$0xff]
        %v4843 = vld [vmem:[%s7 + $0x70] sm:$0xff]
        %v4844 = vld [vmem:[%s7 + $0x78] sm:$0xff]
        %v4845 = vld [vmem:[%s7 + $0x80] sm:$0xff]
        %v4846 = vld [vmem:[%s7 + $0x88] sm:$0xff]
        %v4847 = vld [vmem:[%s7 + $0x90] sm:$0xff]
        %v4848 = vld [vmem:[%s7 + $0x98] sm:$0xff]
        %v4849 = vld [vmem:[%s7 + $0xa0] sm:$0xff]
        %v4850 = vld [vmem:[%s7 + $0xa8] sm:$0xff]
        %v4851 = vld [vmem:[%s7 + $0xb0] sm:$0xff]
        %v4852 = vld [vmem:[%s7 + $0xb8] sm:$0xff]
        %v4853 = vld [vmem:[%s7 + $0xc0] sm:$0xff]
        %v4854 = vld [vmem:[%s7 + $0xc8] sm:$0xff]
        %v4855 = vld [vmem:[%s7 + $0xd0] sm:$0xff]
        %v4856 = vld [vmem:[%s7 + $0xd8] sm:$0xff]
        %v4857 = vld [vmem:[%s7 + $0xe0] sm:$0xff]
        %v4858 = vld [vmem:[%s7 + $0xe8] sm:$0xff]
        %v4859 = vld [vmem:[%s7 + $0xf0] sm:$0xff]
        %v4860 = vld [vmem:[%s7 + $0xf8] sm:$0xff]
        %v4861 = vld [vmem:[%s7 + $0x100] sm:$0xff]
        %v4862 = vld [vmem:[%s7 + $0x108] sm:$0xff]
        %v4863 = vld [vmem:[%s7 + $0x110] sm:$0xff]
        %v4864 = vld [vmem:[%s7 + $0x118] sm:$0xff]
        %v4865 = vld [vmem:[%s7 + $0x120] sm:$0xff]
        %v4866 = vld [vmem:[%s7 + $0x128] sm:$0xff]
        %v4867 = vld [vmem:[%s7 + $0x130] sm:$0xff]
        %v4868 = vld [vmem:[%s7 + $0x138] sm:$0xff]
        %v4869 = vld [vmem:[%s7 + $0x140] sm:$0xff]
        %v4870 = vld [vmem:[%s7 + $0x148] sm:$0xff]
        %v4871 = vld [vmem:[%s7 + $0x150] sm:$0xff]
        %v4872 = vld [vmem:[%s7 + $0x158] sm:$0xff]
        %v4873 = vld [vmem:[%s7 + $0x160] sm:$0xff]
        %v4874 = vld [vmem:[%s7 + $0x168] sm:$0xff]
        %v4875 = vld [vmem:[%s7 + $0x170] sm:$0xff]
        %v4876 = vld [vmem:[%s7 + $0x178] sm:$0xff]
        %v4877 = vld [vmem:[%s7 + $0x180] sm:$0xff]
        %v4878 = vld [vmem:[%s7 + $0x188] sm:$0xff]
        %v4879 = vld [vmem:[%s7 + $0x190] sm:$0xff]
        %v4880 = vld [vmem:[%s7 + $0x198] sm:$0xff]
        %v4881 = vld [vmem:[%s7 + $0x1a0] sm:$0xff]
        %v4882 = vld [vmem:[%s7 + $0x1a8] sm:$0xff]
        %v4883 = vld [vmem:[%s7 + $0x1b0] sm:$0xff]
        %v4884 = vld [vmem:[%s7 + $0x1b8] sm:$0xff]
        %v4885 = vld [vmem:[%s7 + $0x1c0] sm:$0xff]
        %v4886 = vld [vmem:[%s7 + $0x1c8] sm:$0xff]
        %v4887 = vld [vmem:[%s7 + $0x1d0] sm:$0xff]
        %v4888 = vld [vmem:[%s7 + $0x1d8] sm:$0xff]
        %v4889 = vld [vmem:[%s7 + $0x1e0] sm:$0xff]
        %v4890 = vld [vmem:[%s7 + $0x1e8] sm:$0xff]
        %v4891 = vld [vmem:[%s7 + $0x1f0] sm:$0xff]
        %v4892 = vld [vmem:[%s7 + $0x1f8] sm:$0xff]
        %v4893 = vld [vmem:[#allocation3] sm:$0xfe]
        %v4894 = vld [vmem:[#allocation3 + $0x8] sm:$0xfe]
        %v4895 = vld [vmem:[#allocation3 + $0x10] sm:$0xfe]
        %v4896 = vld [vmem:[#allocation3 + $0x18] sm:$0xfe]
        %v4897 = vld [vmem:[#allocation3 + $0x20] sm:$0x7f]
        %v4898 = vld [vmem:[#allocation3 + $0x28] sm:$0x7f]
        %v4899 = vld [vmem:[#allocation3 + $0x30] sm:$0x7f]
        %v4900 = vld [vmem:[#allocation3 + $0x38] sm:$0x7f]
        %s4901 = scalar_lea.vmem %s7, 512
        %v4902 = vld [vmem:[%s4901] sm:$0xff]
        %v4903 = vld [vmem:[%s4901 + $0x8] sm:$0xff]
        %v4904 = vld [vmem:[%s4901 + $0x10] sm:$0xff]
        %v4905 = vld [vmem:[%s4901 + $0x18] sm:$0xff]
        %v4906 = vld [vmem:[%s4901 + $0x20] sm:$0xff]
        %v4907 = vld [vmem:[%s4901 + $0x28] sm:$0xff]
        %v4908 = vld [vmem:[%s4901 + $0x30] sm:$0xff]
        %v4909 = vld [vmem:[%s4901 + $0x38] sm:$0xff]
        %v4910 = vld [vmem:[%s4901 + $0x40] sm:$0xff]
        %v4911 = vld [vmem:[%s4901 + $0x48] sm:$0xff]
        %v4912 = vld [vmem:[%s4901 + $0x50] sm:$0xff]
        %v4913 = vld [vmem:[%s4901 + $0x58] sm:$0xff]
        %v4914 = vld [vmem:[%s4901 + $0x60] sm:$0xff]
        %v4915 = vld [vmem:[%s4901 + $0x68] sm:$0xff]
        %v4916 = vld [vmem:[%s4901 + $0x70] sm:$0xff]
        %v4917 = vld [vmem:[%s4901 + $0x78] sm:$0xff]
        %v4918 = vld [vmem:[%s4901 + $0x80] sm:$0xff]
        %v4919 = vld [vmem:[%s4901 + $0x88] sm:$0xff]
        %v4920 = vld [vmem:[%s4901 + $0x90] sm:$0xff]
        %v4921 = vld [vmem:[%s4901 + $0x98] sm:$0xff]
        %v4922 = vld [vmem:[%s4901 + $0xa0] sm:$0xff]
        %v4923 = vld [vmem:[%s4901 + $0xa8] sm:$0xff]
        %v4924 = vld [vmem:[%s4901 + $0xb0] sm:$0xff]
        %v4925 = vld [vmem:[%s4901 + $0xb8] sm:$0xff]
        %v4926 = vld [vmem:[%s4901 + $0xc0] sm:$0xff]
        %v4927 = vld [vmem:[%s4901 + $0xc8] sm:$0xff]
        %v4928 = vld [vmem:[%s4901 + $0xd0] sm:$0xff]
        %v4929 = vld [vmem:[%s4901 + $0xd8] sm:$0xff]
        %v4930 = vld [vmem:[%s4901 + $0xe0] sm:$0xff]
        %v4931 = vld [vmem:[%s4901 + $0xe8] sm:$0xff]
        %v4932 = vld [vmem:[%s4901 + $0xf0] sm:$0xff]
        %v4933 = vld [vmem:[%s4901 + $0xf8] sm:$0xff]
        %v4934 = vld [vmem:[%s4901 + $0x100] sm:$0xff]
        %v4935 = vld [vmem:[%s4901 + $0x108] sm:$0xff]
        %v4936 = vld [vmem:[%s4901 + $0x110] sm:$0xff]
        %v4937 = vld [vmem:[%s4901 + $0x118] sm:$0xff]
        %v4938 = vld [vmem:[%s4901 + $0x120] sm:$0xff]
        %v4939 = vld [vmem:[%s4901 + $0x128] sm:$0xff]
        %v4940 = vld [vmem:[%s4901 + $0x130] sm:$0xff]
        %v4941 = vld [vmem:[%s4901 + $0x138] sm:$0xff]
        %v4942 = vld [vmem:[%s4901 + $0x140] sm:$0xff]
        %v4943 = vld [vmem:[%s4901 + $0x148] sm:$0xff]
        %v4944 = vld [vmem:[%s4901 + $0x150] sm:$0xff]
        %v4945 = vld [vmem:[%s4901 + $0x158] sm:$0xff]
        %v4946 = vld [vmem:[%s4901 + $0x160] sm:$0xff]
        %v4947 = vld [vmem:[%s4901 + $0x168] sm:$0xff]
        %v4948 = vld [vmem:[%s4901 + $0x170] sm:$0xff]
        %v4949 = vld [vmem:[%s4901 + $0x178] sm:$0xff]
        %v4950 = vld [vmem:[%s4901 + $0x180] sm:$0xff]
        %v4951 = vld [vmem:[%s4901 + $0x188] sm:$0xff]
        %v4952 = vld [vmem:[%s4901 + $0x190] sm:$0xff]
        %v4953 = vld [vmem:[%s4901 + $0x198] sm:$0xff]
        %v4954 = vld [vmem:[%s4901 + $0x1a0] sm:$0xff]
        %v4955 = vld [vmem:[%s4901 + $0x1a8] sm:$0xff]
        %v4956 = vld [vmem:[%s4901 + $0x1b0] sm:$0xff]
        %v4957 = vld [vmem:[%s4901 + $0x1b8] sm:$0xff]
        %v4958 = vld [vmem:[%s4901 + $0x1c0] sm:$0xff]
        %v4959 = vld [vmem:[%s4901 + $0x1c8] sm:$0xff]
        %v4960 = vld [vmem:[%s4901 + $0x1d0] sm:$0xff]
        %v4961 = vld [vmem:[%s4901 + $0x1d8] sm:$0xff]
        %v4962 = vld [vmem:[%s4901 + $0x1e0] sm:$0xff]
        %v4963 = vld [vmem:[%s4901 + $0x1e8] sm:$0xff]
        %v4964 = vld [vmem:[%s4901 + $0x1f0] sm:$0xff]
        %v4965 = vld [vmem:[%s4901 + $0x1f8] sm:$0xff]
        %v4974 = vrot.slane %v4893, 1
        %v4975 = vrot.slane %v4897, 1
        %v4976 = vsel %vm1308, %v4974, %v4975
        %v4977 = vrot.slane %v4894, 1
        %v4978 = vrot.slane %v4898, 1
        %v4979 = vsel %vm1308, %v4977, %v4978
        %v4980 = vrot.slane %v4895, 1
        %v4981 = vrot.slane %v4899, 1
        %v4982 = vsel %vm1308, %v4980, %v4981
        %v4983 = vrot.slane %v4896, 1
        %v4984 = vrot.slane %v4900, 1
        %v4985 = vsel %vm1308, %v4983, %v4984
        %4994 = vmatpush.msra.mxu0 %v4917
        %4995 = vmatpush.msra.mxu0 %v4916
        %4996 = vmatpush.msra.mxu0 %v4915
        %4997 = vmatpush.msra.mxu0 %v4914
        %4998 = vmatpush.msra.mxu0 %v4913
        %4999 = vmatpush.msra.mxu0 %v4912
        %5000 = vmatpush.msra.mxu0 %v4911
        %5001 = vmatpush.msra.mxu0 %v4910
        %5002 = vmatpush.msra.mxu0 %v4909
        %5003 = vmatpush.msra.mxu0 %v4908
        %5004 = vmatpush.msra.mxu0 %v4907
        %5005 = vmatpush.msra.mxu0 %v4906
        %5006 = vmatpush.msra.mxu0 %v4905
        %5007 = vmatpush.msra.mxu0 %v4904
        %5008 = vmatpush.msra.mxu0 %v4903
        %5009 = vmatpush.msra.mxu0 %v4902
        %5010 = vmatmul.f32.gmra.mxu0 %v4976
        %v5011 = vpop.f32.mrf.mxu0
        %v5012 = vadd.f32 0.0, %v5011
        %5013 = vmatmul.f32.gmra.mxu0 %v4975
        %v5014 = vpop.f32.mrf.mxu0
        %v5015 = vadd.f32 0.0, %v5014
        %5016 = vdwg.mxu0
        %5017 = vmatpush.msra.mxu0 %v4933
        %5018 = vmatpush.msra.mxu0 %v4932
        %5019 = vmatpush.msra.mxu0 %v4931
        %5020 = vmatpush.msra.mxu0 %v4930
        %5021 = vmatpush.msra.mxu0 %v4929
        %5022 = vmatpush.msra.mxu0 %v4928
        %5023 = vmatpush.msra.mxu0 %v4927
        %5024 = vmatpush.msra.mxu0 %v4926
        %5025 = vmatpush.msra.mxu0 %v4925
        %5026 = vmatpush.msra.mxu0 %v4924
        %5027 = vmatpush.msra.mxu0 %v4923
        %5028 = vmatpush.msra.mxu0 %v4922
        %5029 = vmatpush.msra.mxu0 %v4921
        %5030 = vmatpush.msra.mxu0 %v4920
        %5031 = vmatpush.msra.mxu0 %v4919
        %5032 = vmatpush.msra.mxu0 %v4918
        %5033 = vmatmul.f32.gmra.mxu0 %v4979
        %v5034 = vpop.f32.mrf.mxu0
        %v5035 = vadd.f32 %v5012, %v5034
        %5036 = vmatmul.f32.gmra.mxu0 %v4978
        %v5037 = vpop.f32.mrf.mxu0
        %v5038 = vadd.f32 %v5015, %v5037
        %5039 = vdwg.mxu0
        %5040 = vmatpush.msra.mxu0 %v4949
        %5041 = vmatpush.msra.mxu0 %v4948
        %5042 = vmatpush.msra.mxu0 %v4947
        %5043 = vmatpush.msra.mxu0 %v4946
        %5044 = vmatpush.msra.mxu0 %v4945
        %5045 = vmatpush.msra.mxu0 %v4944
        %5046 = vmatpush.msra.mxu0 %v4943
        %5047 = vmatpush.msra.mxu0 %v4942
        %5048 = vmatpush.msra.mxu0 %v4941
        %5049 = vmatpush.msra.mxu0 %v4940
        %5050 = vmatpush.msra.mxu0 %v4939
        %5051 = vmatpush.msra.mxu0 %v4938
        %5052 = vmatpush.msra.mxu0 %v4937
        %5053 = vmatpush.msra.mxu0 %v4936
        %5054 = vmatpush.msra.mxu0 %v4935
        %5055 = vmatpush.msra.mxu0 %v4934
        %5056 = vmatmul.f32.gmra.mxu0 %v4982
        %v5057 = vpop.f32.mrf.mxu0
        %v5058 = vadd.f32 %v5035, %v5057
        %5059 = vmatmul.f32.gmra.mxu0 %v4981
        %v5060 = vpop.f32.mrf.mxu0
        %v5061 = vadd.f32 %v5038, %v5060
        %5062 = vdwg.mxu0
        %5063 = vmatpush.msra.mxu0 %v4965
        %5064 = vmatpush.msra.mxu0 %v4964
        %5065 = vmatpush.msra.mxu0 %v4963
        %5066 = vmatpush.msra.mxu0 %v4962
        %5067 = vmatpush.msra.mxu0 %v4961
        %5068 = vmatpush.msra.mxu0 %v4960
        %5069 = vmatpush.msra.mxu0 %v4959
        %5070 = vmatpush.msra.mxu0 %v4958
        %5071 = vmatpush.msra.mxu0 %v4957
        %5072 = vmatpush.msra.mxu0 %v4956
        %5073 = vmatpush.msra.mxu0 %v4955
        %5074 = vmatpush.msra.mxu0 %v4954
        %5075 = vmatpush.msra.mxu0 %v4953
        %5076 = vmatpush.msra.mxu0 %v4952
        %5077 = vmatpush.msra.mxu0 %v4951
        %5078 = vmatpush.msra.mxu0 %v4950
        %5079 = vmatmul.f32.gmra.mxu0 %v4985
        %v5080 = vpop.f32.mrf.mxu0
        %v5081 = vadd.f32 %v5058, %v5080
        %5082 = vmatmul.f32.gmra.mxu0 %v4984
        %v5083 = vpop.f32.mrf.mxu0
        %v5084 = vadd.f32 %v5061, %v5083
        %5085 = vdwg.mxu0
        %5086 = vmatpush.msra.mxu0 %v4844
        %5087 = vmatpush.msra.mxu0 %v4843
        %5088 = vmatpush.msra.mxu0 %v4842
        %5089 = vmatpush.msra.mxu0 %v4841
        %5090 = vmatpush.msra.mxu0 %v4840
        %5091 = vmatpush.msra.mxu0 %v4839
        %5092 = vmatpush.msra.mxu0 %v4838
        %5093 = vmatpush.msra.mxu0 %v4837
        %5094 = vmatpush.msra.mxu0 %v4836
        %5095 = vmatpush.msra.mxu0 %v4835
        %5096 = vmatpush.msra.mxu0 %v4834
        %5097 = vmatpush.msra.mxu0 %v4833
        %5098 = vmatpush.msra.mxu0 %v4832
        %5099 = vmatpush.msra.mxu0 %v4831
        %5100 = vmatpush.msra.mxu0 %v4830
        %5101 = vmatpush.msra.mxu0 %v4829
        %5102 = vmatmul.f32.gmra.mxu0 %v4821
        %v5103 = vpop.f32.mrf.mxu0
        %v5104 = vadd.f32 %v5081, %v5103
        %5105 = vmatmul.f32.gmra.mxu0 %v4825
        %v5106 = vpop.f32.mrf.mxu0
        %v5107 = vadd.f32 %v5084, %v5106
        %5108 = vdwg.mxu0
        %5109 = vmatpush.msra.mxu0 %v4860
        %5110 = vmatpush.msra.mxu0 %v4859
        %5111 = vmatpush.msra.mxu0 %v4858
        %5112 = vmatpush.msra.mxu0 %v4857
        %5113 = vmatpush.msra.mxu0 %v4856
        %5114 = vmatpush.msra.mxu0 %v4855
        %5115 = vmatpush.msra.mxu0 %v4854
        %5116 = vmatpush.msra.mxu0 %v4853
        %5117 = vmatpush.msra.mxu0 %v4852
        %5118 = vmatpush.msra.mxu0 %v4851
        %5119 = vmatpush.msra.mxu0 %v4850
        %5120 = vmatpush.msra.mxu0 %v4849
        %5121 = vmatpush.msra.mxu0 %v4848
        %5122 = vmatpush.msra.mxu0 %v4847
        %5123 = vmatpush.msra.mxu0 %v4846
        %5124 = vmatpush.msra.mxu0 %v4845
        %5125 = vmatmul.f32.gmra.mxu0 %v4822
        %v5126 = vpop.f32.mrf.mxu0
        %v5127 = vadd.f32 %v5104, %v5126
        %5128 = vmatmul.f32.gmra.mxu0 %v4826
        %v5129 = vpop.f32.mrf.mxu0
        %v5130 = vadd.f32 %v5107, %v5129
        %5131 = vdwg.mxu0
        %5132 = vmatpush.msra.mxu0 %v4876
        %5133 = vmatpush.msra.mxu0 %v4875
        %5134 = vmatpush.msra.mxu0 %v4874
        %5135 = vmatpush.msra.mxu0 %v4873
        %5136 = vmatpush.msra.mxu0 %v4872
        %5137 = vmatpush.msra.mxu0 %v4871
        %5138 = vmatpush.msra.mxu0 %v4870
        %5139 = vmatpush.msra.mxu0 %v4869
        %5140 = vmatpush.msra.mxu0 %v4868
        %5141 = vmatpush.msra.mxu0 %v4867
        %5142 = vmatpush.msra.mxu0 %v4866
        %5143 = vmatpush.msra.mxu0 %v4865
        %5144 = vmatpush.msra.mxu0 %v4864
        %5145 = vmatpush.msra.mxu0 %v4863
        %5146 = vmatpush.msra.mxu0 %v4862
        %5147 = vmatpush.msra.mxu0 %v4861
        %5148 = vmatmul.f32.gmra.mxu0 %v4823
        %v5149 = vpop.f32.mrf.mxu0
        %v5150 = vadd.f32 %v5127, %v5149
        %5151 = vmatmul.f32.gmra.mxu0 %v4827
        %v5152 = vpop.f32.mrf.mxu0
        %v5153 = vadd.f32 %v5130, %v5152
        %5154 = vdwg.mxu0
        %5155 = vmatpush.msra.mxu0 %v4892
        %5156 = vmatpush.msra.mxu0 %v4891
        %5157 = vmatpush.msra.mxu0 %v4890
        %5158 = vmatpush.msra.mxu0 %v4889
        %5159 = vmatpush.msra.mxu0 %v4888
        %5160 = vmatpush.msra.mxu0 %v4887
        %5161 = vmatpush.msra.mxu0 %v4886
        %5162 = vmatpush.msra.mxu0 %v4885
        %5163 = vmatpush.msra.mxu0 %v4884
        %5164 = vmatpush.msra.mxu0 %v4883
        %5165 = vmatpush.msra.mxu0 %v4882
        %5166 = vmatpush.msra.mxu0 %v4881
        %5167 = vmatpush.msra.mxu0 %v4880
        %5168 = vmatpush.msra.mxu0 %v4879
        %5169 = vmatpush.msra.mxu0 %v4878
        %5170 = vmatpush.msra.mxu0 %v4877
        %5171 = vmatmul.f32.gmra.mxu0 %v4824
        %v5172 = vpop.f32.mrf.mxu0
        %v5173 = vadd.f32 %v5150, %v5172
        %5174 = vmatmul.f32.gmra.mxu0 %v4828
        %v5175 = vpop.f32.mrf.mxu0
        %v5176 = vadd.f32 %v5153, %v5175
        %5177 = vdwg.mxu0
        %v5178 = vld [vmem:[#allocation3] sm:$0xfc]
        %v5179 = vld [vmem:[#allocation3 + $0x8] sm:$0xfc]
        %v5180 = vld [vmem:[#allocation3 + $0x10] sm:$0xfc]
        %v5181 = vld [vmem:[#allocation3 + $0x18] sm:$0xfc]
        %v5182 = vld [vmem:[#allocation3 + $0x20] sm:$0xff]
        %v5183 = vld [vmem:[#allocation3 + $0x28] sm:$0xff]
        %v5184 = vld [vmem:[#allocation3 + $0x30] sm:$0xff]
        %v5185 = vld [vmem:[#allocation3 + $0x38] sm:$0xff]
        %s5186 = scalar_lea.vmem %s7, 1024
        %v5187 = vld [vmem:[%s5186] sm:$0xff]
        %v5188 = vld [vmem:[%s5186 + $0x8] sm:$0xff]
        %v5189 = vld [vmem:[%s5186 + $0x10] sm:$0xff]
        %v5190 = vld [vmem:[%s5186 + $0x18] sm:$0xff]
        %v5191 = vld [vmem:[%s5186 + $0x20] sm:$0xff]
        %v5192 = vld [vmem:[%s5186 + $0x28] sm:$0xff]
        %v5193 = vld [vmem:[%s5186 + $0x30] sm:$0xff]
        %v5194 = vld [vmem:[%s5186 + $0x38] sm:$0xff]
        %v5195 = vld [vmem:[%s5186 + $0x40] sm:$0xff]
        %v5196 = vld [vmem:[%s5186 + $0x48] sm:$0xff]
        %v5197 = vld [vmem:[%s5186 + $0x50] sm:$0xff]
        %v5198 = vld [vmem:[%s5186 + $0x58] sm:$0xff]
        %v5199 = vld [vmem:[%s5186 + $0x60] sm:$0xff]
        %v5200 = vld [vmem:[%s5186 + $0x68] sm:$0xff]
        %v5201 = vld [vmem:[%s5186 + $0x70] sm:$0xff]
        %v5202 = vld [vmem:[%s5186 + $0x78] sm:$0xff]
        %v5203 = vld [vmem:[%s5186 + $0x80] sm:$0xff]
        %v5204 = vld [vmem:[%s5186 + $0x88] sm:$0xff]
        %v5205 = vld [vmem:[%s5186 + $0x90] sm:$0xff]
        %v5206 = vld [vmem:[%s5186 + $0x98] sm:$0xff]
        %v5207 = vld [vmem:[%s5186 + $0xa0] sm:$0xff]
        %v5208 = vld [vmem:[%s5186 + $0xa8] sm:$0xff]
        %v5209 = vld [vmem:[%s5186 + $0xb0] sm:$0xff]
        %v5210 = vld [vmem:[%s5186 + $0xb8] sm:$0xff]
        %v5211 = vld [vmem:[%s5186 + $0xc0] sm:$0xff]
        %v5212 = vld [vmem:[%s5186 + $0xc8] sm:$0xff]
        %v5213 = vld [vmem:[%s5186 + $0xd0] sm:$0xff]
        %v5214 = vld [vmem:[%s5186 + $0xd8] sm:$0xff]
        %v5215 = vld [vmem:[%s5186 + $0xe0] sm:$0xff]
        %v5216 = vld [vmem:[%s5186 + $0xe8] sm:$0xff]
        %v5217 = vld [vmem:[%s5186 + $0xf0] sm:$0xff]
        %v5218 = vld [vmem:[%s5186 + $0xf8] sm:$0xff]
        %v5219 = vld [vmem:[%s5186 + $0x100] sm:$0xff]
        %v5220 = vld [vmem:[%s5186 + $0x108] sm:$0xff]
        %v5221 = vld [vmem:[%s5186 + $0x110] sm:$0xff]
        %v5222 = vld [vmem:[%s5186 + $0x118] sm:$0xff]
        %v5223 = vld [vmem:[%s5186 + $0x120] sm:$0xff]
        %v5224 = vld [vmem:[%s5186 + $0x128] sm:$0xff]
        %v5225 = vld [vmem:[%s5186 + $0x130] sm:$0xff]
        %v5226 = vld [vmem:[%s5186 + $0x138] sm:$0xff]
        %v5227 = vld [vmem:[%s5186 + $0x140] sm:$0xff]
        %v5228 = vld [vmem:[%s5186 + $0x148] sm:$0xff]
        %v5229 = vld [vmem:[%s5186 + $0x150] sm:$0xff]
        %v5230 = vld [vmem:[%s5186 + $0x158] sm:$0xff]
        %v5231 = vld [vmem:[%s5186 + $0x160] sm:$0xff]
        %v5232 = vld [vmem:[%s5186 + $0x168] sm:$0xff]
        %v5233 = vld [vmem:[%s5186 + $0x170] sm:$0xff]
        %v5234 = vld [vmem:[%s5186 + $0x178] sm:$0xff]
        %v5235 = vld [vmem:[%s5186 + $0x180] sm:$0xff]
        %v5236 = vld [vmem:[%s5186 + $0x188] sm:$0xff]
        %v5237 = vld [vmem:[%s5186 + $0x190] sm:$0xff]
        %v5238 = vld [vmem:[%s5186 + $0x198] sm:$0xff]
        %v5239 = vld [vmem:[%s5186 + $0x1a0] sm:$0xff]
        %v5240 = vld [vmem:[%s5186 + $0x1a8] sm:$0xff]
        %v5241 = vld [vmem:[%s5186 + $0x1b0] sm:$0xff]
        %v5242 = vld [vmem:[%s5186 + $0x1b8] sm:$0xff]
        %v5243 = vld [vmem:[%s5186 + $0x1c0] sm:$0xff]
        %v5244 = vld [vmem:[%s5186 + $0x1c8] sm:$0xff]
        %v5245 = vld [vmem:[%s5186 + $0x1d0] sm:$0xff]
        %v5246 = vld [vmem:[%s5186 + $0x1d8] sm:$0xff]
        %v5247 = vld [vmem:[%s5186 + $0x1e0] sm:$0xff]
        %v5248 = vld [vmem:[%s5186 + $0x1e8] sm:$0xff]
        %v5249 = vld [vmem:[%s5186 + $0x1f0] sm:$0xff]
        %v5250 = vld [vmem:[%s5186 + $0x1f8] sm:$0xff]
        %v5259 = vrot.slane %v5178, 2
        %v5260 = vrot.slane %v5182, 2
        %v5261 = vsel %vm2338, %v5259, %v5260
        %v5262 = vrot.slane %v5179, 2
        %v5263 = vrot.slane %v5183, 2
        %v5264 = vsel %vm2338, %v5262, %v5263
        %v5265 = vrot.slane %v5180, 2
        %v5266 = vrot.slane %v5184, 2
        %v5267 = vsel %vm2338, %v5265, %v5266
        %v5268 = vrot.slane %v5181, 2
        %v5269 = vrot.slane %v5185, 2
        %v5270 = vsel %vm2338, %v5268, %v5269
        %5279 = vmatpush.msra.mxu0 %v5202
        %5280 = vmatpush.msra.mxu0 %v5201
        %5281 = vmatpush.msra.mxu0 %v5200
        %5282 = vmatpush.msra.mxu0 %v5199
        %5283 = vmatpush.msra.mxu0 %v5198
        %5284 = vmatpush.msra.mxu0 %v5197
        %5285 = vmatpush.msra.mxu0 %v5196
        %5286 = vmatpush.msra.mxu0 %v5195
        %5287 = vmatpush.msra.mxu0 %v5194
        %5288 = vmatpush.msra.mxu0 %v5193
        %5289 = vmatpush.msra.mxu0 %v5192
        %5290 = vmatpush.msra.mxu0 %v5191
        %5291 = vmatpush.msra.mxu0 %v5190
        %5292 = vmatpush.msra.mxu0 %v5189
        %5293 = vmatpush.msra.mxu0 %v5188
        %5294 = vmatpush.msra.mxu0 %v5187
        %5295 = vmatmul.f32.gmra.mxu0 %v5261
        %v5296 = vpop.f32.mrf.mxu0
        %v5297 = vadd.f32 0.0, %v5296
        %5298 = vmatmul.f32.gmra.mxu0 %v5260
        %v5299 = vpop.f32.mrf.mxu0
        %v5300 = vadd.f32 0.0, %v5299
        %5301 = vdwg.mxu0
        %5302 = vmatpush.msra.mxu0 %v5218
        %5303 = vmatpush.msra.mxu0 %v5217
        %5304 = vmatpush.msra.mxu0 %v5216
        %5305 = vmatpush.msra.mxu0 %v5215
        %5306 = vmatpush.msra.mxu0 %v5214
        %5307 = vmatpush.msra.mxu0 %v5213
        %5308 = vmatpush.msra.mxu0 %v5212
        %5309 = vmatpush.msra.mxu0 %v5211
        %5310 = vmatpush.msra.mxu0 %v5210
        %5311 = vmatpush.msra.mxu0 %v5209
        %5312 = vmatpush.msra.mxu0 %v5208
        %5313 = vmatpush.msra.mxu0 %v5207
        %5314 = vmatpush.msra.mxu0 %v5206
        %5315 = vmatpush.msra.mxu0 %v5205
        %5316 = vmatpush.msra.mxu0 %v5204
        %5317 = vmatpush.msra.mxu0 %v5203
        %5318 = vmatmul.f32.gmra.mxu0 %v5264
        %v5319 = vpop.f32.mrf.mxu0
        %v5320 = vadd.f32 %v5297, %v5319
        %5321 = vmatmul.f32.gmra.mxu0 %v5263
        %v5322 = vpop.f32.mrf.mxu0
        %v5323 = vadd.f32 %v5300, %v5322
        %5324 = vdwg.mxu0
        %5325 = vmatpush.msra.mxu0 %v5234
        %5326 = vmatpush.msra.mxu0 %v5233
        %5327 = vmatpush.msra.mxu0 %v5232
        %5328 = vmatpush.msra.mxu0 %v5231
        %5329 = vmatpush.msra.mxu0 %v5230
        %5330 = vmatpush.msra.mxu0 %v5229
        %5331 = vmatpush.msra.mxu0 %v5228
        %5332 = vmatpush.msra.mxu0 %v5227
        %5333 = vmatpush.msra.mxu0 %v5226
        %5334 = vmatpush.msra.mxu0 %v5225
        %5335 = vmatpush.msra.mxu0 %v5224
        %5336 = vmatpush.msra.mxu0 %v5223
        %5337 = vmatpush.msra.mxu0 %v5222
        %5338 = vmatpush.msra.mxu0 %v5221
        %5339 = vmatpush.msra.mxu0 %v5220
        %5340 = vmatpush.msra.mxu0 %v5219
        %5341 = vmatmul.f32.gmra.mxu0 %v5267
        %v5342 = vpop.f32.mrf.mxu0
        %v5343 = vadd.f32 %v5320, %v5342
        %5344 = vmatmul.f32.gmra.mxu0 %v5266
        %v5345 = vpop.f32.mrf.mxu0
        %v5346 = vadd.f32 %v5323, %v5345
        %5347 = vdwg.mxu0
        %5348 = vmatpush.msra.mxu0 %v5250
        %5349 = vmatpush.msra.mxu0 %v5249
        %5350 = vmatpush.msra.mxu0 %v5248
        %5351 = vmatpush.msra.mxu0 %v5247
        %5352 = vmatpush.msra.mxu0 %v5246
        %5353 = vmatpush.msra.mxu0 %v5245
        %5354 = vmatpush.msra.mxu0 %v5244
        %5355 = vmatpush.msra.mxu0 %v5243
        %5356 = vmatpush.msra.mxu0 %v5242
        %5357 = vmatpush.msra.mxu0 %v5241
        %5358 = vmatpush.msra.mxu0 %v5240
        %5359 = vmatpush.msra.mxu0 %v5239
        %5360 = vmatpush.msra.mxu0 %v5238
        %5361 = vmatpush.msra.mxu0 %v5237
        %5362 = vmatpush.msra.mxu0 %v5236
        %5363 = vmatpush.msra.mxu0 %v5235
        %5364 = vmatmul.f32.gmra.mxu0 %v5270
        %v5365 = vpop.f32.mrf.mxu0
        %v5366 = vadd.f32 %v5343, %v5365
        %5367 = vmatmul.f32.gmra.mxu0 %v5269
        %v5368 = vpop.f32.mrf.mxu0
        %v5369 = vadd.f32 %v5346, %v5368
        %5370 = vdwg.mxu0
        %v5371 = vadd.f32 %v5173, %v5366
        %v5372 = vadd.f32 %v5176, %v5369
        %v5373 = vld [vmem:[%s8] sm:$0x1]
        %v5375 = vperm.slane %v5373, 0
        %v5377 = vadd.f32 %v5371, %v5375
        %v5378 = vadd.f32 %v5372, %v5375
        %5379 = vst.msk [vmem:[%s349] sm:$0xff] %vm350, %v5377
        %5380 = vst.msk [vmem:[%s349 + $0x8] sm:$0x3f] %vm372, %v5378
        %p5381 = scmp.lt.s32.totalorder %s21, 1
        %s5382 = scalar_select %p5381, %s21, 1
        %s5383 = smul.addr %s5382, 2
        %s5384 = smul.addr %s5383, 8
        %s5385 = scalar_lea.vmem %s9, %s5384
        // Predicated region
        $region61: #{lstmcnn_forward.3} parent=55 // pred_check
          %p5386 = pneg %p233
        $region62: #{lstmcnn_forward.3} parent=55 // pred_check_branch
          %5388 = sbr.rel (%p5386) target = $region64
        $region63: #{lstmcnn_forward.3} parent=55 // pred_region
          _
        $region64: #{lstmcnn_forward.3} parent=55 // pred_fallthru
          _
      $region56: #{lstmcnn_forward.3} parent=5 // pred_fallthru
        _
      %p5389 = scmp.le.s32.totalorder 2, %s16
      // Predicated region
      $region65: #{lstmcnn_forward.3} parent=5 // pred_check
        %p5390 = pneg %p5389
      $region66: #{lstmcnn_forward.3} parent=5 // pred_check_branch
        %5392 = sbr.rel (%p5390) target = $region68
      $region67: #{lstmcnn_forward.3} parent=5 // pred_region
        %s5393 = ssub.s32 %s16, 2
        // Predicated region
        $region69: #{lstmcnn_forward.3} parent=67 // pred_check
          %p5394 = pneg %p239
        $region70: #{lstmcnn_forward.3} parent=67 // pred_check_branch
          %5396 = sbr.rel (%p5394) target = $region72
        $region71: #{lstmcnn_forward.3} parent=67 // pred_region
          %p5397 = scmp.lt.s32.totalorder %s22, 1
          %s5398 = scalar_select %p5397, %s22, 1
          %s5399 = smul.addr %s5398, 2
          %s5400 = smul.addr %s5399, 8
          %s5401 = scalar_lea.vmem %s9, %s5400
        $region72: #{lstmcnn_forward.3} parent=67 // pred_fallthru
          _
      $region68: #{lstmcnn_forward.3} parent=5 // pred_fallthru
        _
    $region6: #{lstmcnn_forward.3} parent=1 // loop_footer
      %s20 = sadd.s32 1, %s16
    $region7: #{lstmcnn_forward.3} parent=1 // loop_footer_branch
      %15 = sbr.rel target = $region3
    $region8: #{lstmcnn_forward.3} parent=1 // loop_exit
      _
    %5402 = vsyncpa [#allocation6], 1
    %s5403 = scalar_lea.sflag [#allocation6], 1
    %5404 = vsyncpa %s5403, 1

</llo_original>
